<compile_context>
chip_gen: v5e
topology: v5e:2x2
jax: 0.10.0
libtpu: 0.0.40
codegen_flags: <defaults>
</compile_context>

<pallas_src>
import functools

import numpy as np
import jax
import jax.numpy as jnp
from jax import lax
from jax.experimental import pallas as pl
from jax.experimental.pallas import tpu as pltpu

NEG_SLOPE = 0.01  # nn.LeakyReLU() default negative_slope


def _phase_decomposition(kernel_size):
    """Static sub-pixel decomposition of ConvTranspose2d(stride=2, pad=K//2-1)."""
    K = kernel_size
    assert K % 2 == 0 and K >= 2, "CNNDoubler requires an even kernel_size"
    pad = K // 2 - 1
    # Weight tap kh lands on output phase (kh - pad) % 2 at input offset (kh - pad) // 2.
    info = [(kh, (kh - pad) % 2, (kh - pad) // 2) for kh in range(K)]
    offs = [o for _, _, o in info]
    halo_lo = max(0, max(offs))   # zero halo needed before index 0
    halo_hi = max(0, -min(offs))  # zero halo needed after index H-1
    taps = {0: [], 1: []}
    for kh, r, off in info:
        taps[r].append((halo_lo - off, kh))  # (shift in padded coords, weight tap)
    T = K // 2
    assert len(taps[0]) == T and len(taps[1]) == T
    shifts = tuple(tuple(sh for sh, _ in taps[r]) for r in (0, 1))            # (2, T)
    kh_idx = np.array([[kh for _, kh in taps[r]] for r in (0, 1)], np.int32)  # (2, T)
    return halo_lo, halo_hi, T, shifts, kh_idx


def _doubler_kernel(x_ref, w_ref, b_ref, o_ref, *, H, W, C_out, T, shifts):
    # x_ref: (1, Hp, Wp, C_in)      halo-padded NHWC image for one batch element
    # w_ref: (4*T*T, C_out, C_in)   sub-kernel for flattened (r, s, a, c)
    # b_ref: (1, 1, C_out)
    # o_ref: (4, 1, H, W, C_out)    phase-major output, phase p = 2*r + s
    xp = x_ref[0].astype(jnp.float32)        # (Hp, Wp, C_in)
    bias = b_ref[...].astype(jnp.float32)    # (1, 1, C_out)

    for r in range(2):
        for s in range(2):
            acc = jnp.zeros((H, W, C_out), jnp.float32)
            for a in range(T):
                sh = shifts[r][a]                                  # static int
                for c in range(T):
                    sw = shifts[s][c]                              # static int
                    idx = ((r * 2 + s) * T + a) * T + c            # static int
                    xs = xp[sh:sh + H, sw:sw + W, :]               # (H, W, C_in)
                    wt = w_ref[idx].astype(jnp.float32)            # (C_out, C_in)
                    wt_b = jnp.broadcast_to(wt[None], (H,) + wt.shape)
                    # Batched matmul over H, contracting C_in -> (H, W, C_out).
                    acc = acc + lax.dot_general(
                        xs, wt_b,
                        dimension_numbers=(((2,), (2,)), ((0,), (0,))),
                        preferred_element_type=jnp.float32)
            y = acc + bias
            y = jnp.where(y >= 0, y, NEG_SLOPE * y)                # LeakyReLU
            o_ref[r * 2 + s, 0] = y.astype(o_ref.dtype)


def cnn_doubler(x, weight, bias):
    """LeakyReLU(ConvTranspose2d(x; weight, bias, stride=2, padding=K//2-1)).

    x:      (B, C_in, H, W)      NCHW, as in the PyTorch module
    weight: (C_in, C_out, K, K)  PyTorch ConvTranspose2d weight layout
    bias:   (C_out,)
    returns (B, C_out, 2H, 2W)
    """
    B, C_in, H, W = x.shape
    wc_in, C_out, K, K2 = weight.shape
    assert K == K2 and wc_in == C_in
    halo_lo, halo_hi, T, shifts, kh_idx = _phase_decomposition(K)

    # --- wrapper-side layout plumbing only (no compute) ---
    x_nhwc = jnp.transpose(x, (0, 2, 3, 1))
    x_pad = jnp.pad(x_nhwc, ((0, 0), (halo_lo, halo_hi), (halo_lo, halo_hi), (0, 0)))
    Hp = H + halo_lo + halo_hi
    Wp = W + halo_lo + halo_hi

    # Per-phase sub-kernels, stored (C_out, C_in) and flattened over (r, s, a, c).
    w_perm = jnp.transpose(weight, (2, 3, 1, 0))                          # (K, K, Co, Ci)
    w_sub = w_perm[kh_idx[:, None, :, None], kh_idx[None, :, None, :]]    # (2,2,T,T,Co,Ci)
    w_sub = w_sub.reshape(4 * T * T, C_out, C_in)
    b_vec = bias.reshape(1, 1, C_out)

    kernel = functools.partial(
        _doubler_kernel, H=H, W=W, C_out=C_out, T=T, shifts=shifts)

    o = pl.pallas_call(
        kernel,
        out_shape=jax.ShapeDtypeStruct((4, B, H, W, C_out), x.dtype),
        grid_spec=pltpu.PrefetchScalarGridSpec(
            num_scalar_prefetch=0,
            grid=(B,),
            in_specs=[
                pl.BlockSpec((1, Hp, Wp, C_in), lambda b: (b, 0, 0, 0)),
                pl.BlockSpec((4 * T * T, C_out, C_in), lambda b: (0, 0, 0)),
                pl.BlockSpec((1, 1, C_out), lambda b: (0, 0, 0)),
            ],
            out_specs=pl.BlockSpec((4, 1, H, W, C_out), lambda b: (0, b, 0, 0, 0)),
        ),
        compiler_params=pltpu.CompilerParams(
            dimension_semantics=("parallel",),   # batch images are independent
        ),
    )(x_pad, w_sub, b_vec)

    # Interleave phases: out[b, co, 2i+r, 2j+s] = o[2r+s, b, i, j, co].
    o = o.reshape(2, 2, B, H, W, C_out)
    out = jnp.transpose(o, (2, 5, 3, 0, 4, 1)).reshape(B, C_out, 2 * H, 2 * W)
    return out


if __name__ == "__main__":
    key = jax.random.PRNGKey(0)
    k1, k2, k3 = jax.random.split(key, 3)

    # Small shapes consistent with the module: in_channels=4, out_channels=8,
    # kernel_size=4 (stride=2, padding=1) on 2x4x16x16 images -> 2x8x32x32.
    B, C_in, C_out, H, W, K = 2, 4, 8, 16, 16, 4
    x = jax.random.normal(k1, (B, C_in, H, W), dtype=jnp.float32)
    weight = 0.1 * jax.random.normal(k2, (C_in, C_out, K, K), dtype=jnp.float32)
    bias = 0.1 * jax.random.normal(k3, (C_out,), dtype=jnp.float32)

    out = cnn_doubler(x, weight, bias)
    jax.block_until_ready(out)

    # Pure-JAX reference: ConvTranspose2d == conv with lhs_dilation=stride,
    # padding K-1-p, and the spatially flipped, channel-swapped kernel; then LeakyReLU.
    q = K - 1 - (K // 2 - 1)
    rhs = jnp.transpose(weight[:, :, ::-1, ::-1], (1, 0, 2, 3))  # (C_out, C_in, K, K)
    ref = lax.conv_general_dilated(
        x, rhs, window_strides=(1, 1), padding=[(q, q), (q, q)],
        lhs_dilation=(2, 2), rhs_dilation=(1, 1),
        dimension_numbers=("NCHW", "OIHW", "NCHW"),
        precision=jax.lax.Precision.HIGHEST)
    ref = ref + bias[None, :, None, None]
    ref = jnp.where(ref >= 0, ref, NEG_SLOPE * ref)

    assert out.shape == (B, C_out, 2 * H, 2 * W), out.shape
    # Loose-ish tolerance: the in-kernel MXU matmul may use bf16 passes for f32
    # operands; structural bugs would produce O(0.1-1) errors and still fail.
    max_err = float(jnp.max(jnp.abs(out - ref)))
    assert jnp.allclose(out, ref, rtol=1e-2, atol=1e-2), max_err

    print("KERNEL_OK")
</pallas_src>

<mosaic_0001>
module attributes {stable_mosaic.version = 11 : i64} {
  func.func @_doubler_kernel(%arg0: i32, %arg1: memref<1x18x18x4xf32, #tpu.memory_space<vmem>>, %arg2: memref<16x8x4xf32, #tpu.memory_space<vmem>>, %arg3: memref<1x1x8xf32, #tpu.memory_space<vmem>>, %arg4: memref<4x1x16x16x8xf32, #tpu.memory_space<vmem>>) attributes {dimension_semantics = [#tpu.dimension_semantics<parallel>], iteration_bounds = array<i64: 2>, scalar_prefetch = 0 : i64, scratch_operands = 0 : i64, tpu.core_type = #tpu.core_type<tc>, window_params = [{transform_indices = @transform_0, window_bounds = array<i64: 1, 18, 18, 4>}, {pipeline_mode = #tpu.pipeline_mode<synchronous>, transform_indices = @transform_1, window_bounds = array<i64: 16, 8, 4>}, {pipeline_mode = #tpu.pipeline_mode<synchronous>, transform_indices = @transform_2, window_bounds = array<i64: 1, 1, 8>}, {transform_indices = @transform_3, window_bounds = array<i64: 4, 1, 16, 16, 8>}]} {
    %c0 = arith.constant 0 : index
    %c0_0 = arith.constant 0 : index
    %c0_1 = arith.constant 0 : index
    %c0_2 = arith.constant 0 : index
    %0 = vector.load %arg1[%c0, %c0_0, %c0_1, %c0_2] : memref<1x18x18x4xf32, #tpu.memory_space<vmem>>, vector<1x18x18x4xf32>
    %1 = vector.shape_cast %0 : vector<1x18x18x4xf32> to vector<18x18x4xf32>
    %c0_3 = arith.constant 0 : index
    %c0_4 = arith.constant 0 : index
    %c0_5 = arith.constant 0 : index
    %2 = vector.load %arg3[%c0_3, %c0_4, %c0_5] : memref<1x1x8xf32, #tpu.memory_space<vmem>>, vector<1x1x8xf32>
    %cst = arith.constant 0.000000e+00 : f32
    %3 = vector.broadcast %cst : f32 to vector<16x16x8xf32>
    %4 = vector.extract_strided_slice %1 {offsets = [1, 1, 0], sizes = [16, 16, 4], strides = [1, 1, 1]} : vector<18x18x4xf32> to vector<16x16x4xf32>
    %c0_6 = arith.constant 0 : index
    %c0_7 = arith.constant 0 : index
    %c0_8 = arith.constant 0 : index
    %5 = vector.load %arg2[%c0_6, %c0_7, %c0_8] : memref<16x8x4xf32, #tpu.memory_space<vmem>>, vector<1x8x4xf32>
    %6 = vector.shape_cast %5 : vector<1x8x4xf32> to vector<8x4xf32>
    %7 = vector.shape_cast %6 : vector<8x4xf32> to vector<1x8x4xf32>
    %8 = vector.shape_cast %7 : vector<1x8x4xf32> to vector<1x8x4xf32>
    %9 = vector.broadcast %8 : vector<1x8x4xf32> to vector<16x8x4xf32>
    %cst_9 = arith.constant dense<0.000000e+00> : vector<16x16x8xf32>
    %10 = tpu.matmul %4, %9, %cst_9 {dimension_numbers = #tpu.dot_dimension_numbers<[2], [2], [1], [1], [0, 0, 0, 1, 1, 1], [0], [0]>} : vector<16x16x4xf32>, vector<16x8x4xf32>, vector<16x16x8xf32> -> vector<16x16x8xf32>
    %11 = arith.addf %3, %10 : vector<16x16x8xf32>
    %12 = vector.extract_strided_slice %1 {offsets = [1, 0, 0], sizes = [16, 16, 4], strides = [1, 1, 1]} : vector<18x18x4xf32> to vector<16x16x4xf32>
    %c1 = arith.constant 1 : index
    %c0_10 = arith.constant 0 : index
    %c0_11 = arith.constant 0 : index
    %13 = vector.load %arg2[%c1, %c0_10, %c0_11] : memref<16x8x4xf32, #tpu.memory_space<vmem>>, vector<1x8x4xf32>
    %14 = vector.shape_cast %13 : vector<1x8x4xf32> to vector<8x4xf32>
    %15 = vector.shape_cast %14 : vector<8x4xf32> to vector<1x8x4xf32>
    %16 = vector.shape_cast %15 : vector<1x8x4xf32> to vector<1x8x4xf32>
    %17 = vector.broadcast %16 : vector<1x8x4xf32> to vector<16x8x4xf32>
    %cst_12 = arith.constant dense<0.000000e+00> : vector<16x16x8xf32>
    %18 = tpu.matmul %12, %17, %cst_12 {dimension_numbers = #tpu.dot_dimension_numbers<[2], [2], [1], [1], [0, 0, 0, 1, 1, 1], [0], [0]>} : vector<16x16x4xf32>, vector<16x8x4xf32>, vector<16x16x8xf32> -> vector<16x16x8xf32>
    %19 = arith.addf %11, %18 : vector<16x16x8xf32>
    %20 = vector.extract_strided_slice %1 {offsets = [0, 1, 0], sizes = [16, 16, 4], strides = [1, 1, 1]} : vector<18x18x4xf32> to vector<16x16x4xf32>
    %c2 = arith.constant 2 : index
    %c0_13 = arith.constant 0 : index
    %c0_14 = arith.constant 0 : index
    %21 = vector.load %arg2[%c2, %c0_13, %c0_14] : memref<16x8x4xf32, #tpu.memory_space<vmem>>, vector<1x8x4xf32>
    %22 = vector.shape_cast %21 : vector<1x8x4xf32> to vector<8x4xf32>
    %23 = vector.shape_cast %22 : vector<8x4xf32> to vector<1x8x4xf32>
    %24 = vector.shape_cast %23 : vector<1x8x4xf32> to vector<1x8x4xf32>
    %25 = vector.broadcast %24 : vector<1x8x4xf32> to vector<16x8x4xf32>
    %cst_15 = arith.constant dense<0.000000e+00> : vector<16x16x8xf32>
    %26 = tpu.matmul %20, %25, %cst_15 {dimension_numbers = #tpu.dot_dimension_numbers<[2], [2], [1], [1], [0, 0, 0, 1, 1, 1], [0], [0]>} : vector<16x16x4xf32>, vector<16x8x4xf32>, vector<16x16x8xf32> -> vector<16x16x8xf32>
    %27 = arith.addf %19, %26 : vector<16x16x8xf32>
    %28 = vector.extract_strided_slice %1 {offsets = [0, 0, 0], sizes = [16, 16, 4], strides = [1, 1, 1]} : vector<18x18x4xf32> to vector<16x16x4xf32>
    %c3 = arith.constant 3 : index
    %c0_16 = arith.constant 0 : index
    %c0_17 = arith.constant 0 : index
    %29 = vector.load %arg2[%c3, %c0_16, %c0_17] : memref<16x8x4xf32, #tpu.memory_space<vmem>>, vector<1x8x4xf32>
    %30 = vector.shape_cast %29 : vector<1x8x4xf32> to vector<8x4xf32>
    %31 = vector.shape_cast %30 : vector<8x4xf32> to vector<1x8x4xf32>
    %32 = vector.shape_cast %31 : vector<1x8x4xf32> to vector<1x8x4xf32>
    %33 = vector.broadcast %32 : vector<1x8x4xf32> to vector<16x8x4xf32>
    %cst_18 = arith.constant dense<0.000000e+00> : vector<16x16x8xf32>
    %34 = tpu.matmul %28, %33, %cst_18 {dimension_numbers = #tpu.dot_dimension_numbers<[2], [2], [1], [1], [0, 0, 0, 1, 1, 1], [0], [0]>} : vector<16x16x4xf32>, vector<16x8x4xf32>, vector<16x16x8xf32> -> vector<16x16x8xf32>
    %35 = arith.addf %27, %34 : vector<16x16x8xf32>
    %36 = vector.broadcast %2 : vector<1x1x8xf32> to vector<16x16x8xf32>
    %37 = arith.addf %35, %36 : vector<16x16x8xf32>
    %cst_19 = arith.constant 0.000000e+00 : f32
    %38 = vector.broadcast %cst_19 : f32 to vector<16x16x8xf32>
    %39 = arith.cmpf oge, %37, %38 : vector<16x16x8xf32>
    %cst_20 = arith.constant 0.00999999977 : f32
    %40 = vector.broadcast %cst_20 : f32 to vector<16x16x8xf32>
    %41 = arith.mulf %40, %37 : vector<16x16x8xf32>
    %42 = arith.select %39, %37, %41 : vector<16x16x8xi1>, vector<16x16x8xf32>
    %c0_21 = arith.constant 0 : index
    %c0_22 = arith.constant 0 : index
    %c0_23 = arith.constant 0 : index
    %c0_24 = arith.constant 0 : index
    %c0_25 = arith.constant 0 : index
    %43 = vector.load %arg4[%c0_21, %c0_22, %c0_23, %c0_24, %c0_25] : memref<4x1x16x16x8xf32, #tpu.memory_space<vmem>>, vector<1x1x16x16x8xf32>
    %44 = vector.shape_cast %43 : vector<1x1x16x16x8xf32> to vector<16x16x8xf32>
    %45 = vector.shape_cast %42 : vector<16x16x8xf32> to vector<1x1x16x16x8xf32>
    tpu.vector_store %arg4[%c0_21, %c0_22, %c0_23, %c0_24, %c0_25], %45 {strides = array<i32>} : memref<4x1x16x16x8xf32, #tpu.memory_space<vmem>>, vector<1x1x16x16x8xf32>,
    %cst_26 = arith.constant 0.000000e+00 : f32
    %46 = vector.broadcast %cst_26 : f32 to vector<16x16x8xf32>
    %47 = vector.extract_strided_slice %1 {offsets = [1, 2, 0], sizes = [16, 16, 4], strides = [1, 1, 1]} : vector<18x18x4xf32> to vector<16x16x4xf32>
    %c4 = arith.constant 4 : index
    %c0_27 = arith.constant 0 : index
    %c0_28 = arith.constant 0 : index
    %48 = vector.load %arg2[%c4, %c0_27, %c0_28] : memref<16x8x4xf32, #tpu.memory_space<vmem>>, vector<1x8x4xf32>
    %49 = vector.shape_cast %48 : vector<1x8x4xf32> to vector<8x4xf32>
    %50 = vector.shape_cast %49 : vector<8x4xf32> to vector<1x8x4xf32>
    %51 = vector.shape_cast %50 : vector<1x8x4xf32> to vector<1x8x4xf32>
    %52 = vector.broadcast %51 : vector<1x8x4xf32> to vector<16x8x4xf32>
    %cst_29 = arith.constant dense<0.000000e+00> : vector<16x16x8xf32>
    %53 = tpu.matmul %47, %52, %cst_29 {dimension_numbers = #tpu.dot_dimension_numbers<[2], [2], [1], [1], [0, 0, 0, 1, 1, 1], [0], [0]>} : vector<16x16x4xf32>, vector<16x8x4xf32>, vector<16x16x8xf32> -> vector<16x16x8xf32>
    %54 = arith.addf %46, %53 : vector<16x16x8xf32>
    %55 = vector.extract_strided_slice %1 {offsets = [1, 1, 0], sizes = [16, 16, 4], strides = [1, 1, 1]} : vector<18x18x4xf32> to vector<16x16x4xf32>
    %c5 = arith.constant 5 : index
    %c0_30 = arith.constant 0 : index
    %c0_31 = arith.constant 0 : index
    %56 = vector.load %arg2[%c5, %c0_30, %c0_31] : memref<16x8x4xf32, #tpu.memory_space<vmem>>, vector<1x8x4xf32>
    %57 = vector.shape_cast %56 : vector<1x8x4xf32> to vector<8x4xf32>
    %58 = vector.shape_cast %57 : vector<8x4xf32> to vector<1x8x4xf32>
    %59 = vector.shape_cast %58 : vector<1x8x4xf32> to vector<1x8x4xf32>
    %60 = vector.broadcast %59 : vector<1x8x4xf32> to vector<16x8x4xf32>
    %cst_32 = arith.constant dense<0.000000e+00> : vector<16x16x8xf32>
    %61 = tpu.matmul %55, %60, %cst_32 {dimension_numbers = #tpu.dot_dimension_numbers<[2], [2], [1], [1], [0, 0, 0, 1, 1, 1], [0], [0]>} : vector<16x16x4xf32>, vector<16x8x4xf32>, vector<16x16x8xf32> -> vector<16x16x8xf32>
    %62 = arith.addf %54, %61 : vector<16x16x8xf32>
    %63 = vector.extract_strided_slice %1 {offsets = [0, 2, 0], sizes = [16, 16, 4], strides = [1, 1, 1]} : vector<18x18x4xf32> to vector<16x16x4xf32>
    %c6 = arith.constant 6 : index
    %c0_33 = arith.constant 0 : index
    %c0_34 = arith.constant 0 : index
    %64 = vector.load %arg2[%c6, %c0_33, %c0_34] : memref<16x8x4xf32, #tpu.memory_space<vmem>>, vector<1x8x4xf32>
    %65 = vector.shape_cast %64 : vector<1x8x4xf32> to vector<8x4xf32>
    %66 = vector.shape_cast %65 : vector<8x4xf32> to vector<1x8x4xf32>
    %67 = vector.shape_cast %66 : vector<1x8x4xf32> to vector<1x8x4xf32>
    %68 = vector.broadcast %67 : vector<1x8x4xf32> to vector<16x8x4xf32>
    %cst_35 = arith.constant dense<0.000000e+00> : vector<16x16x8xf32>
    %69 = tpu.matmul %63, %68, %cst_35 {dimension_numbers = #tpu.dot_dimension_numbers<[2], [2], [1], [1], [0, 0, 0, 1, 1, 1], [0], [0]>} : vector<16x16x4xf32>, vector<16x8x4xf32>, vector<16x16x8xf32> -> vector<16x16x8xf32>
    %70 = arith.addf %62, %69 : vector<16x16x8xf32>
    %71 = vector.extract_strided_slice %1 {offsets = [0, 1, 0], sizes = [16, 16, 4], strides = [1, 1, 1]} : vector<18x18x4xf32> to vector<16x16x4xf32>
    %c7 = arith.constant 7 : index
    %c0_36 = arith.constant 0 : index
    %c0_37 = arith.constant 0 : index
    %72 = vector.load %arg2[%c7, %c0_36, %c0_37] : memref<16x8x4xf32, #tpu.memory_space<vmem>>, vector<1x8x4xf32>
    %73 = vector.shape_cast %72 : vector<1x8x4xf32> to vector<8x4xf32>
    %74 = vector.shape_cast %73 : vector<8x4xf32> to vector<1x8x4xf32>
    %75 = vector.shape_cast %74 : vector<1x8x4xf32> to vector<1x8x4xf32>
    %76 = vector.broadcast %75 : vector<1x8x4xf32> to vector<16x8x4xf32>
    %cst_38 = arith.constant dense<0.000000e+00> : vector<16x16x8xf32>
    %77 = tpu.matmul %71, %76, %cst_38 {dimension_numbers = #tpu.dot_dimension_numbers<[2], [2], [1], [1], [0, 0, 0, 1, 1, 1], [0], [0]>} : vector<16x16x4xf32>, vector<16x8x4xf32>, vector<16x16x8xf32> -> vector<16x16x8xf32>
    %78 = arith.addf %70, %77 : vector<16x16x8xf32>
    %79 = vector.broadcast %2 : vector<1x1x8xf32> to vector<16x16x8xf32>
    %80 = arith.addf %78, %79 : vector<16x16x8xf32>
    %cst_39 = arith.constant 0.000000e+00 : f32
    %81 = vector.broadcast %cst_39 : f32 to vector<16x16x8xf32>
    %82 = arith.cmpf oge, %80, %81 : vector<16x16x8xf32>
    %cst_40 = arith.constant 0.00999999977 : f32
    %83 = vector.broadcast %cst_40 : f32 to vector<16x16x8xf32>
    %84 = arith.mulf %83, %80 : vector<16x16x8xf32>
    %85 = arith.select %82, %80, %84 : vector<16x16x8xi1>, vector<16x16x8xf32>
    %c1_41 = arith.constant 1 : index
    %c0_42 = arith.constant 0 : index
    %c0_43 = arith.constant 0 : index
    %c0_44 = arith.constant 0 : index
    %c0_45 = arith.constant 0 : index
    %86 = vector.load %arg4[%c1_41, %c0_42, %c0_43, %c0_44, %c0_45] : memref<4x1x16x16x8xf32, #tpu.memory_space<vmem>>, vector<1x1x16x16x8xf32>
    %87 = vector.shape_cast %86 : vector<1x1x16x16x8xf32> to vector<16x16x8xf32>
    %88 = vector.shape_cast %85 : vector<16x16x8xf32> to vector<1x1x16x16x8xf32>
    tpu.vector_store %arg4[%c1_41, %c0_42, %c0_43, %c0_44, %c0_45], %88 {strides = array<i32>} : memref<4x1x16x16x8xf32, #tpu.memory_space<vmem>>, vector<1x1x16x16x8xf32>,
    %cst_46 = arith.constant 0.000000e+00 : f32
    %89 = vector.broadcast %cst_46 : f32 to vector<16x16x8xf32>
    %90 = vector.extract_strided_slice %1 {offsets = [2, 1, 0], sizes = [16, 16, 4], strides = [1, 1, 1]} : vector<18x18x4xf32> to vector<16x16x4xf32>
    %c8 = arith.constant 8 : index
    %c0_47 = arith.constant 0 : index
    %c0_48 = arith.constant 0 : index
    %91 = vector.load %arg2[%c8, %c0_47, %c0_48] : memref<16x8x4xf32, #tpu.memory_space<vmem>>, vector<1x8x4xf32>
    %92 = vector.shape_cast %91 : vector<1x8x4xf32> to vector<8x4xf32>
    %93 = vector.shape_cast %92 : vector<8x4xf32> to vector<1x8x4xf32>
    %94 = vector.shape_cast %93 : vector<1x8x4xf32> to vector<1x8x4xf32>
    %95 = vector.broadcast %94 : vector<1x8x4xf32> to vector<16x8x4xf32>
    %cst_49 = arith.constant dense<0.000000e+00> : vector<16x16x8xf32>
    %96 = tpu.matmul %90, %95, %cst_49 {dimension_numbers = #tpu.dot_dimension_numbers<[2], [2], [1], [1], [0, 0, 0, 1, 1, 1], [0], [0]>} : vector<16x16x4xf32>, vector<16x8x4xf32>, vector<16x16x8xf32> -> vector<16x16x8xf32>
    %97 = arith.addf %89, %96 : vector<16x16x8xf32>
    %98 = vector.extract_strided_slice %1 {offsets = [2, 0, 0], sizes = [16, 16, 4], strides = [1, 1, 1]} : vector<18x18x4xf32> to vector<16x16x4xf32>
    %c9 = arith.constant 9 : index
    %c0_50 = arith.constant 0 : index
    %c0_51 = arith.constant 0 : index
    %99 = vector.load %arg2[%c9, %c0_50, %c0_51] : memref<16x8x4xf32, #tpu.memory_space<vmem>>, vector<1x8x4xf32>
    %100 = vector.shape_cast %99 : vector<1x8x4xf32> to vector<8x4xf32>
    %101 = vector.shape_cast %100 : vector<8x4xf32> to vector<1x8x4xf32>
    %102 = vector.shape_cast %101 : vector<1x8x4xf32> to vector<1x8x4xf32>
    %103 = vector.broadcast %102 : vector<1x8x4xf32> to vector<16x8x4xf32>
    %cst_52 = arith.constant dense<0.000000e+00> : vector<16x16x8xf32>
    %104 = tpu.matmul %98, %103, %cst_52 {dimension_numbers = #tpu.dot_dimension_numbers<[2], [2], [1], [1], [0, 0, 0, 1, 1, 1], [0], [0]>} : vector<16x16x4xf32>, vector<16x8x4xf32>, vector<16x16x8xf32> -> vector<16x16x8xf32>
    %105 = arith.addf %97, %104 : vector<16x16x8xf32>
    %106 = vector.extract_strided_slice %1 {offsets = [1, 1, 0], sizes = [16, 16, 4], strides = [1, 1, 1]} : vector<18x18x4xf32> to vector<16x16x4xf32>
    %c10 = arith.constant 10 : index
    %c0_53 = arith.constant 0 : index
    %c0_54 = arith.constant 0 : index
    %107 = vector.load %arg2[%c10, %c0_53, %c0_54] : memref<16x8x4xf32, #tpu.memory_space<vmem>>, vector<1x8x4xf32>
    %108 = vector.shape_cast %107 : vector<1x8x4xf32> to vector<8x4xf32>
    %109 = vector.shape_cast %108 : vector<8x4xf32> to vector<1x8x4xf32>
    %110 = vector.shape_cast %109 : vector<1x8x4xf32> to vector<1x8x4xf32>
    %111 = vector.broadcast %110 : vector<1x8x4xf32> to vector<16x8x4xf32>
    %cst_55 = arith.constant dense<0.000000e+00> : vector<16x16x8xf32>
    %112 = tpu.matmul %106, %111, %cst_55 {dimension_numbers = #tpu.dot_dimension_numbers<[2], [2], [1], [1], [0, 0, 0, 1, 1, 1], [0], [0]>} : vector<16x16x4xf32>, vector<16x8x4xf32>, vector<16x16x8xf32> -> vector<16x16x8xf32>
    %113 = arith.addf %105, %112 : vector<16x16x8xf32>
    %114 = vector.extract_strided_slice %1 {offsets = [1, 0, 0], sizes = [16, 16, 4], strides = [1, 1, 1]} : vector<18x18x4xf32> to vector<16x16x4xf32>
    %c11 = arith.constant 11 : index
    %c0_56 = arith.constant 0 : index
    %c0_57 = arith.constant 0 : index
    %115 = vector.load %arg2[%c11, %c0_56, %c0_57] : memref<16x8x4xf32, #tpu.memory_space<vmem>>, vector<1x8x4xf32>
    %116 = vector.shape_cast %115 : vector<1x8x4xf32> to vector<8x4xf32>
    %117 = vector.shape_cast %116 : vector<8x4xf32> to vector<1x8x4xf32>
    %118 = vector.shape_cast %117 : vector<1x8x4xf32> to vector<1x8x4xf32>
    %119 = vector.broadcast %118 : vector<1x8x4xf32> to vector<16x8x4xf32>
    %cst_58 = arith.constant dense<0.000000e+00> : vector<16x16x8xf32>
    %120 = tpu.matmul %114, %119, %cst_58 {dimension_numbers = #tpu.dot_dimension_numbers<[2], [2], [1], [1], [0, 0, 0, 1, 1, 1], [0], [0]>} : vector<16x16x4xf32>, vector<16x8x4xf32>, vector<16x16x8xf32> -> vector<16x16x8xf32>
    %121 = arith.addf %113, %120 : vector<16x16x8xf32>
    %122 = vector.broadcast %2 : vector<1x1x8xf32> to vector<16x16x8xf32>
    %123 = arith.addf %121, %122 : vector<16x16x8xf32>
    %cst_59 = arith.constant 0.000000e+00 : f32
    %124 = vector.broadcast %cst_59 : f32 to vector<16x16x8xf32>
    %125 = arith.cmpf oge, %123, %124 : vector<16x16x8xf32>
    %cst_60 = arith.constant 0.00999999977 : f32
    %126 = vector.broadcast %cst_60 : f32 to vector<16x16x8xf32>
    %127 = arith.mulf %126, %123 : vector<16x16x8xf32>
    %128 = arith.select %125, %123, %127 : vector<16x16x8xi1>, vector<16x16x8xf32>
    %c2_61 = arith.constant 2 : index
    %c0_62 = arith.constant 0 : index
    %c0_63 = arith.constant 0 : index
    %c0_64 = arith.constant 0 : index
    %c0_65 = arith.constant 0 : index
    %129 = vector.load %arg4[%c2_61, %c0_62, %c0_63, %c0_64, %c0_65] : memref<4x1x16x16x8xf32, #tpu.memory_space<vmem>>, vector<1x1x16x16x8xf32>
    %130 = vector.shape_cast %129 : vector<1x1x16x16x8xf32> to vector<16x16x8xf32>
    %131 = vector.shape_cast %128 : vector<16x16x8xf32> to vector<1x1x16x16x8xf32>
    tpu.vector_store %arg4[%c2_61, %c0_62, %c0_63, %c0_64, %c0_65], %131 {strides = array<i32>} : memref<4x1x16x16x8xf32, #tpu.memory_space<vmem>>, vector<1x1x16x16x8xf32>,
    %cst_66 = arith.constant 0.000000e+00 : f32
    %132 = vector.broadcast %cst_66 : f32 to vector<16x16x8xf32>
    %133 = vector.extract_strided_slice %1 {offsets = [2, 2, 0], sizes = [16, 16, 4], strides = [1, 1, 1]} : vector<18x18x4xf32> to vector<16x16x4xf32>
    %c12 = arith.constant 12 : index
    %c0_67 = arith.constant 0 : index
    %c0_68 = arith.constant 0 : index
    %134 = vector.load %arg2[%c12, %c0_67, %c0_68] : memref<16x8x4xf32, #tpu.memory_space<vmem>>, vector<1x8x4xf32>
    %135 = vector.shape_cast %134 : vector<1x8x4xf32> to vector<8x4xf32>
    %136 = vector.shape_cast %135 : vector<8x4xf32> to vector<1x8x4xf32>
    %137 = vector.shape_cast %136 : vector<1x8x4xf32> to vector<1x8x4xf32>
    %138 = vector.broadcast %137 : vector<1x8x4xf32> to vector<16x8x4xf32>
    %cst_69 = arith.constant dense<0.000000e+00> : vector<16x16x8xf32>
    %139 = tpu.matmul %133, %138, %cst_69 {dimension_numbers = #tpu.dot_dimension_numbers<[2], [2], [1], [1], [0, 0, 0, 1, 1, 1], [0], [0]>} : vector<16x16x4xf32>, vector<16x8x4xf32>, vector<16x16x8xf32> -> vector<16x16x8xf32>
    %140 = arith.addf %132, %139 : vector<16x16x8xf32>
    %141 = vector.extract_strided_slice %1 {offsets = [2, 1, 0], sizes = [16, 16, 4], strides = [1, 1, 1]} : vector<18x18x4xf32> to vector<16x16x4xf32>
    %c13 = arith.constant 13 : index
    %c0_70 = arith.constant 0 : index
    %c0_71 = arith.constant 0 : index
    %142 = vector.load %arg2[%c13, %c0_70, %c0_71] : memref<16x8x4xf32, #tpu.memory_space<vmem>>, vector<1x8x4xf32>
    %143 = vector.shape_cast %142 : vector<1x8x4xf32> to vector<8x4xf32>
    %144 = vector.shape_cast %143 : vector<8x4xf32> to vector<1x8x4xf32>
    %145 = vector.shape_cast %144 : vector<1x8x4xf32> to vector<1x8x4xf32>
    %146 = vector.broadcast %145 : vector<1x8x4xf32> to vector<16x8x4xf32>
    %cst_72 = arith.constant dense<0.000000e+00> : vector<16x16x8xf32>
    %147 = tpu.matmul %141, %146, %cst_72 {dimension_numbers = #tpu.dot_dimension_numbers<[2], [2], [1], [1], [0, 0, 0, 1, 1, 1], [0], [0]>} : vector<16x16x4xf32>, vector<16x8x4xf32>, vector<16x16x8xf32> -> vector<16x16x8xf32>
    %148 = arith.addf %140, %147 : vector<16x16x8xf32>
    %149 = vector.extract_strided_slice %1 {offsets = [1, 2, 0], sizes = [16, 16, 4], strides = [1, 1, 1]} : vector<18x18x4xf32> to vector<16x16x4xf32>
    %c14 = arith.constant 14 : index
    %c0_73 = arith.constant 0 : index
    %c0_74 = arith.constant 0 : index
    %150 = vector.load %arg2[%c14, %c0_73, %c0_74] : memref<16x8x4xf32, #tpu.memory_space<vmem>>, vector<1x8x4xf32>
    %151 = vector.shape_cast %150 : vector<1x8x4xf32> to vector<8x4xf32>
    %152 = vector.shape_cast %151 : vector<8x4xf32> to vector<1x8x4xf32>
    %153 = vector.shape_cast %152 : vector<1x8x4xf32> to vector<1x8x4xf32>
    %154 = vector.broadcast %153 : vector<1x8x4xf32> to vector<16x8x4xf32>
    %cst_75 = arith.constant dense<0.000000e+00> : vector<16x16x8xf32>
    %155 = tpu.matmul %149, %154, %cst_75 {dimension_numbers = #tpu.dot_dimension_numbers<[2], [2], [1], [1], [0, 0, 0, 1, 1, 1], [0], [0]>} : vector<16x16x4xf32>, vector<16x8x4xf32>, vector<16x16x8xf32> -> vector<16x16x8xf32>
    %156 = arith.addf %148, %155 : vector<16x16x8xf32>
    %157 = vector.extract_strided_slice %1 {offsets = [1, 1, 0], sizes = [16, 16, 4], strides = [1, 1, 1]} : vector<18x18x4xf32> to vector<16x16x4xf32>
    %c15 = arith.constant 15 : index
    %c0_76 = arith.constant 0 : index
    %c0_77 = arith.constant 0 : index
    %158 = vector.load %arg2[%c15, %c0_76, %c0_77] : memref<16x8x4xf32, #tpu.memory_space<vmem>>, vector<1x8x4xf32>
    %159 = vector.shape_cast %158 : vector<1x8x4xf32> to vector<8x4xf32>
    %160 = vector.shape_cast %159 : vector<8x4xf32> to vector<1x8x4xf32>
    %161 = vector.shape_cast %160 : vector<1x8x4xf32> to vector<1x8x4xf32>
    %162 = vector.broadcast %161 : vector<1x8x4xf32> to vector<16x8x4xf32>
    %cst_78 = arith.constant dense<0.000000e+00> : vector<16x16x8xf32>
    %163 = tpu.matmul %157, %162, %cst_78 {dimension_numbers = #tpu.dot_dimension_numbers<[2], [2], [1], [1], [0, 0, 0, 1, 1, 1], [0], [0]>} : vector<16x16x4xf32>, vector<16x8x4xf32>, vector<16x16x8xf32> -> vector<16x16x8xf32>
    %164 = arith.addf %156, %163 : vector<16x16x8xf32>
    %165 = vector.broadcast %2 : vector<1x1x8xf32> to vector<16x16x8xf32>
    %166 = arith.addf %164, %165 : vector<16x16x8xf32>
    %cst_79 = arith.constant 0.000000e+00 : f32
    %167 = vector.broadcast %cst_79 : f32 to vector<16x16x8xf32>
    %168 = arith.cmpf oge, %166, %167 : vector<16x16x8xf32>
    %cst_80 = arith.constant 0.00999999977 : f32
    %169 = vector.broadcast %cst_80 : f32 to vector<16x16x8xf32>
    %170 = arith.mulf %169, %166 : vector<16x16x8xf32>
    %171 = arith.select %168, %166, %170 : vector<16x16x8xi1>, vector<16x16x8xf32>
    %c3_81 = arith.constant 3 : index
    %c0_82 = arith.constant 0 : index
    %c0_83 = arith.constant 0 : index
    %c0_84 = arith.constant 0 : index
    %c0_85 = arith.constant 0 : index
    %172 = vector.load %arg4[%c3_81, %c0_82, %c0_83, %c0_84, %c0_85] : memref<4x1x16x16x8xf32, #tpu.memory_space<vmem>>, vector<1x1x16x16x8xf32>
    %173 = vector.shape_cast %172 : vector<1x1x16x16x8xf32> to vector<16x16x8xf32>
    %174 = vector.shape_cast %171 : vector<16x16x8xf32> to vector<1x1x16x16x8xf32>
    tpu.vector_store %arg4[%c3_81, %c0_82, %c0_83, %c0_84, %c0_85], %174 {strides = array<i32>} : memref<4x1x16x16x8xf32, #tpu.memory_space<vmem>>, vector<1x1x16x16x8xf32>,
    return
  }
  func.func @transform_0(%arg0: i32) -> (i32, i32, i32, i32) {
    %c0_i32 = arith.constant 0 : i32
    %c0_i32_0 = arith.constant 0 : i32
    %c0_i32_1 = arith.constant 0 : i32
    %c0_i32_2 = arith.constant 0 : i32
    return %arg0, %c0_i32, %c0_i32_0, %c0_i32_1 : i32, i32, i32, i32
  }
  func.func @transform_1(%arg0: i32) -> (i32, i32, i32) {
    %c0_i32 = arith.constant 0 : i32
    %c0_i32_0 = arith.constant 0 : i32
    %c0_i32_1 = arith.constant 0 : i32
    %c0_i32_2 = arith.constant 0 : i32
    return %c0_i32, %c0_i32_0, %c0_i32_1 : i32, i32, i32
  }
  func.func @transform_2(%arg0: i32) -> (i32, i32, i32) {
    %c0_i32 = arith.constant 0 : i32
    %c0_i32_0 = arith.constant 0 : i32
    %c0_i32_1 = arith.constant 0 : i32
    %c0_i32_2 = arith.constant 0 : i32
    return %c0_i32, %c0_i32_0, %c0_i32_1 : i32, i32, i32
  }
  func.func @transform_3(%arg0: i32) -> (i32, i32, i32, i32, i32) {
    %c0_i32 = arith.constant 0 : i32
    %c0_i32_0 = arith.constant 0 : i32
    %c0_i32_1 = arith.constant 0 : i32
    %c0_i32_2 = arith.constant 0 : i32
    %c0_i32_3 = arith.constant 0 : i32
    return %c0_i32, %arg0, %c0_i32_0, %c0_i32_1, %c0_i32_2 : i32, i32, i32, i32, i32
  }
}

</mosaic_0001>

<llo_original>
// kernel: tpu_custom_call.1
$region0: #{tpu_custom_call.1}
  #allocation0 [shape = 'u32[]', space=smem, size = 0x4, offset = 0x4, fixed_abs, tag = 'smem constant byte address 0x4 - core index']
  #allocation1 [shape = 'u32[72,128]{1,0:T(1,128)}', space=vmem, size = 0x9000, scoped, tag = 'internal scratch']
  %s0 = inlined_call_operand.vmem [shape: f32[2,18,18,4], index: 0, kind: input, shape index: {}]
  %s1 = inlined_call_operand.vmem [shape: f32[16,8,4], index: 1, kind: input, shape index: {}]
  %s2 = inlined_call_operand.vmem [shape: f32[1,1,8], index: 2, kind: input, shape index: {}]
  %s3 = inlined_call_operand.vmem [shape: f32[4,2,16,16,8], index: 3, kind: output, shape index: {}]
  %s4 = sld [smem:[#allocation0]]
  $region79: #{tpu_custom_call.1} parent=0
    _
  %s6 = ssub.s32 1, %s4
  %s7 = scalar_select 0, %s6, %s4
  $region1: #{tpu_custom_call.1} parent=0
    #allocation2 [shape = 'u8[1048576]{0}', space=vmem, size = 0x100000, scoped, tag = 'output window, operand 0']
    loop: start=0, step=1, limit=4
    $region2: #{tpu_custom_call.1} parent=1 // loop_pre_header
      _
    $region3: #{tpu_custom_call.1} parent=1 // loop_header
      %s9 = sphi 0, %s13
      %p10 = scmp.ge.s32.totalorder %s9, 4
      %s19 = sphi 0, %s21
      %s22 = sphi 0, %s19
      %s23 = sphi 0, %s22
      %s39 = sphi 0, %s23
      %s43 = sphi 0, %s43
      %s45 = sphi 0, %s43
      %s46 = sphi 0, %s45
      %s60 = sphi 0, %s46
      %s64 = sphi 0, %s64
      %s66 = sphi 0, %s64
      %s67 = sphi 0, %s66
      %s81 = sphi 0, %s67
      %s87 = sphi 0, %s89
      %s90 = sphi 0, %s87
      %s91 = sphi 0, %s90
      %s107 = sphi 0, %s91
    $region4: #{tpu_custom_call.1} parent=1 // loop_header_branch
      %12 = sbr.rel (%p10) target = $region8
    $region5: #{tpu_custom_call.1} parent=1 // loop_body
      %s14 = ssub.s32 %s9, 1
      %s15 = ssub.s32 %s9, 2
      %s16 = sadd.s32 %s9, 1
      %s17 = ssub.s32 %s9, %s16
      %p18 = scmp.eq.s32.totalorder %s17, 0
      %s20 = sadd.s32 %s19, 1
      %s21 = scalar_select %p18, %s19, %s20
      %p24 = pneg %p18
      %p25 = scmp.eq.s32.totalorder %s9, 1
      %p26 = por %p24, %p25
      %p27 = scmp.ne.s32.totalorder %s19, %s22
      %p28 = scmp.eq.s32.totalorder %s9, 0
      %p29 = por %p27, %p28
      %p30 = scmp.ne.s32.totalorder %s19, %s22
      %p31 = scmp.eq.s32.totalorder %s14, 1
      %p32 = por %p30, %p31
      %p33 = scmp.ne.s32.totalorder %s22, %s23
      %p34 = scmp.eq.s32.totalorder %s14, 0
      %p35 = por %p33, %p34
      %p36 = scmp.ne.s32.totalorder %s22, %s23
      %p37 = scmp.eq.s32.totalorder %s15, 1
      %p38 = por %p36, %p37
      %p40 = scmp.ne.s32.totalorder %s23, %s39
      %p41 = scmp.eq.s32.totalorder %s15, 0
      %p42 = por %p40, %p41
      %s44 = sadd.s32 %s43, 1
      %p47 = scmp.eq.s32.totalorder %s9, 1
      %p48 = scmp.ne.s32.totalorder %s43, %s45
      %p49 = scmp.eq.s32.totalorder %s9, 0
      %p50 = por %p48, %p49
      %p51 = scmp.ne.s32.totalorder %s43, %s45
      %p52 = scmp.eq.s32.totalorder %s14, 1
      %p53 = por %p51, %p52
      %p54 = scmp.ne.s32.totalorder %s45, %s46
      %p55 = scmp.eq.s32.totalorder %s14, 0
      %p56 = por %p54, %p55
      %p57 = scmp.ne.s32.totalorder %s45, %s46
      %p58 = scmp.eq.s32.totalorder %s15, 1
      %p59 = por %p57, %p58
      %p61 = scmp.ne.s32.totalorder %s46, %s60
      %p62 = scmp.eq.s32.totalorder %s15, 0
      %p63 = por %p61, %p62
      %s65 = sadd.s32 %s64, 1
      %p68 = scmp.eq.s32.totalorder %s9, 1
      %p69 = scmp.ne.s32.totalorder %s64, %s66
      %p70 = scmp.eq.s32.totalorder %s9, 0
      %p71 = por %p69, %p70
      %p72 = scmp.ne.s32.totalorder %s64, %s66
      %p73 = scmp.eq.s32.totalorder %s14, 1
      %p74 = por %p72, %p73
      %p75 = scmp.ne.s32.totalorder %s66, %s67
      %p76 = scmp.eq.s32.totalorder %s14, 0
      %p77 = por %p75, %p76
      %p78 = scmp.ne.s32.totalorder %s66, %s67
      %p79 = scmp.eq.s32.totalorder %s15, 1
      %p80 = por %p78, %p79
      %p82 = scmp.ne.s32.totalorder %s67, %s81
      %p83 = scmp.eq.s32.totalorder %s15, 0
      %p84 = por %p82, %p83
      %s85 = ssub.s32 %s9, %s16
      %p86 = scmp.eq.s32.totalorder %s85, 0
      %s88 = sadd.s32 %s87, 1
      %s89 = scalar_select %p86, %s87, %s88
      %p92 = pneg %p86
      %p93 = scmp.eq.s32.totalorder %s9, 1
      %p94 = por %p92, %p93
      %p95 = scmp.ne.s32.totalorder %s87, %s90
      %p96 = scmp.eq.s32.totalorder %s9, 0
      %p97 = por %p95, %p96
      %p98 = scmp.ne.s32.totalorder %s87, %s90
      %p99 = scmp.eq.s32.totalorder %s14, 1
      %p100 = por %p98, %p99
      %p101 = scmp.ne.s32.totalorder %s90, %s91
      %p102 = scmp.eq.s32.totalorder %s14, 0
      %p103 = por %p101, %p102
      %p104 = scmp.ne.s32.totalorder %s90, %s91
      %p105 = scmp.eq.s32.totalorder %s15, 1
      %p106 = por %p104, %p105
      %p108 = scmp.ne.s32.totalorder %s91, %s107
      %p109 = scmp.eq.s32.totalorder %s15, 0
      %p110 = por %p108, %p109
      %p111 = scmp.le.s32.totalorder 1, %s9
      %p112 = scmp.lt.s32.totalorder %s9, 3
      %p113 = pnand %p111, %p112
      %p114 = pneg %p113
      // Predicated region
      $region9: #{tpu_custom_call.1} parent=5 // pred_check
        _
      $region10: #{tpu_custom_call.1} parent=5 // pred_check_branch
        %116 = sbr.rel (%p113) target = $region12
      $region11: #{tpu_custom_call.1} parent=5 // pred_region
        %s117 = ssub.s32 %s9, 1
        // Predicated region
        $region13: #{tpu_custom_call.1} parent=11 // pred_check
          %p118 = pneg %p56
        $region14: #{tpu_custom_call.1} parent=11 // pred_check_branch
          %120 = sbr.rel (%p118) target = $region16
        $region15: #{tpu_custom_call.1} parent=11 // pred_region
          _
        $region16: #{tpu_custom_call.1} parent=11 // pred_fallthru
          _
        // Predicated region
        $region17: #{tpu_custom_call.1} parent=11 // pred_check
          %p121 = pneg %p77
        $region18: #{tpu_custom_call.1} parent=11 // pred_check_branch
          %123 = sbr.rel (%p121) target = $region20
        $region19: #{tpu_custom_call.1} parent=11 // pred_region
          _
        $region20: #{tpu_custom_call.1} parent=11 // pred_fallthru
          _
      $region12: #{tpu_custom_call.1} parent=5 // pred_fallthru
        _
      %p124 = scmp.lt.s32.totalorder %s9, 2
      // Predicated region
      $region21: #{tpu_custom_call.1} parent=5 // pred_check
        %p125 = pneg %p124
      $region22: #{tpu_custom_call.1} parent=5 // pred_check_branch
        %127 = sbr.rel (%p125) target = $region24
      $region23: #{tpu_custom_call.1} parent=5 // pred_region
        // Predicated region
        $region25: #{tpu_custom_call.1} parent=23 // pred_check
          %p128 = pneg %p29
        $region26: #{tpu_custom_call.1} parent=23 // pred_check_branch
          %130 = sbr.rel (%p128) target = $region28
        $region27: #{tpu_custom_call.1} parent=23 // pred_region
          %p131 = scmp.lt.s32.totalorder %s9, 1
          %s132 = scalar_select %p131, %s9, 1
          %s133 = smul.addr %s132, 54
          %s134 = smul.addr %s133, 8
          %s135 = scalar_lea.vmem %s0, %s134
        $region28: #{tpu_custom_call.1} parent=23 // pred_fallthru
          _
      $region24: #{tpu_custom_call.1} parent=5 // pred_fallthru
        _
      %p136 = scmp.le.s32.totalorder 1, %s9
      %p137 = scmp.lt.s32.totalorder %s9, 3
      %p138 = pnand %p136, %p137
      %p139 = pneg %p138
      // Predicated region
      $region29: #{tpu_custom_call.1} parent=5 // pred_check
        _
      $region30: #{tpu_custom_call.1} parent=5 // pred_check_branch
        %141 = sbr.rel (%p138) target = $region32
      $region31: #{tpu_custom_call.1} parent=5 // pred_region
        %s142 = ssub.s32 %s9, 1
        %p143 = scmp.lt.s32.totalorder %s14, 1
        %s144 = scalar_select %p143, %s14, 1
        %s145 = smul.addr %s144, 54
        %s146 = smul.addr %s145, 8
        %s147 = scalar_lea.vmem %s0, %s146
        %p148 = pneg %p35
        %p149 = pneg %p32
        %p150 = pneg %p56
        %p151 = pneg %p53
        %p152 = pneg %p77
        %p153 = pneg %p74
        %p154 = pneg %p103
        %p155 = pneg %p100
        %s156 = sand.u32 %s90, 1
        %s157 = sand.u32 %s90, 1
        %s158 = smul.addr %s157, 1024
        %s159 = scalar_lea.vmem [#allocation2], %s158
        %p160 = scmp.lt.s32.totalorder %s14, 1
        %s161 = scalar_select %p160, %s14, 1
        %s162 = smul.addr %s161, 54
        %s163 = smul.addr %s162, 8
        %s164 = scalar_lea.vmem %s0, %s163
        %v165 = vld [vmem:[%s164] sm:$0xff]
        %v166 = vld [vmem:[%s164 + $0x8] sm:$0xff]
        %v167 = vld [vmem:[%s164 + $0x10] sm:$0x3]
        %v168 = vld [vmem:[%s164 + $0x18] sm:$0xff]
        %v169 = vld [vmem:[%s164 + $0x20] sm:$0xff]
        %v170 = vld [vmem:[%s164 + $0x28] sm:$0x3]
        %v171 = vld [vmem:[%s164 + $0x30] sm:$0xff]
        %v172 = vld [vmem:[%s164 + $0x38] sm:$0xff]
        %v173 = vld [vmem:[%s164 + $0x40] sm:$0x3]
        %v174 = vld [vmem:[%s164 + $0x48] sm:$0xff]
        %v175 = vld [vmem:[%s164 + $0x50] sm:$0xff]
        %v176 = vld [vmem:[%s164 + $0x58] sm:$0x3]
        %v177 = vld [vmem:[%s164 + $0x60] sm:$0xff]
        %v178 = vld [vmem:[%s164 + $0x68] sm:$0xff]
        %v179 = vld [vmem:[%s164 + $0x70] sm:$0x3]
        %v180 = vld [vmem:[%s164 + $0x78] sm:$0xff]
        %v181 = vld [vmem:[%s164 + $0x80] sm:$0xff]
        %v182 = vld [vmem:[%s164 + $0x88] sm:$0x3]
        %v183 = vld [vmem:[%s164 + $0x90] sm:$0xff]
        %v184 = vld [vmem:[%s164 + $0x98] sm:$0xff]
        %v185 = vld [vmem:[%s164 + $0xa0] sm:$0x3]
        %v186 = vld [vmem:[%s164 + $0xa8] sm:$0xff]
        %v187 = vld [vmem:[%s164 + $0xb0] sm:$0xff]
        %v188 = vld [vmem:[%s164 + $0xb8] sm:$0x3]
        %v189 = vld [vmem:[%s164 + $0xc0] sm:$0xff]
        %v190 = vld [vmem:[%s164 + $0xc8] sm:$0xff]
        %v191 = vld [vmem:[%s164 + $0xd0] sm:$0x3]
        %v192 = vld [vmem:[%s164 + $0xd8] sm:$0xff]
        %v193 = vld [vmem:[%s164 + $0xe0] sm:$0xff]
        %v194 = vld [vmem:[%s164 + $0xe8] sm:$0x3]
        %v195 = vld [vmem:[%s164 + $0xf0] sm:$0xff]
        %v196 = vld [vmem:[%s164 + $0xf8] sm:$0xff]
        %v197 = vld [vmem:[%s164 + $0x100] sm:$0x3]
        %v198 = vld [vmem:[%s164 + $0x108] sm:$0xff]
        %v199 = vld [vmem:[%s164 + $0x110] sm:$0xff]
        %v200 = vld [vmem:[%s164 + $0x118] sm:$0x3]
        %v201 = vld [vmem:[%s164 + $0x120] sm:$0xff]
        %v202 = vld [vmem:[%s164 + $0x128] sm:$0xff]
        %v203 = vld [vmem:[%s164 + $0x130] sm:$0x3]
        %v204 = vld [vmem:[%s164 + $0x138] sm:$0xff]
        %v205 = vld [vmem:[%s164 + $0x140] sm:$0xff]
        %v206 = vld [vmem:[%s164 + $0x148] sm:$0x3]
        %v207 = vld [vmem:[%s164 + $0x150] sm:$0xff]
        %v208 = vld [vmem:[%s164 + $0x158] sm:$0xff]
        %v209 = vld [vmem:[%s164 + $0x160] sm:$0x3]
        %v210 = vld [vmem:[%s164 + $0x168] sm:$0xff]
        %v211 = vld [vmem:[%s164 + $0x170] sm:$0xff]
        %v212 = vld [vmem:[%s164 + $0x178] sm:$0x3]
        %v213 = vld [vmem:[%s164 + $0x180] sm:$0xff]
        %v214 = vld [vmem:[%s164 + $0x188] sm:$0xff]
        %v215 = vld [vmem:[%s164 + $0x190] sm:$0x3]
        %v216 = vld [vmem:[%s164 + $0x198] sm:$0xff]
        %v217 = vld [vmem:[%s164 + $0x1a0] sm:$0xff]
        %v218 = vld [vmem:[%s164 + $0x1a8] sm:$0x3]
        %v219 = vld [vmem:[%s2] sm:$0x1]
        %v220 = vld [vmem:[%s1] sm:$0xff]
        %s221 = scalar_lea.vmem %s1, 8
        %v222 = vld [vmem:[%s221] sm:$0xff]
        %vm223 = vcmask 31744
        %v225 = vsel %vm223, %v168, 0
        %v228 = vsel %vm223, %v169, 0
        %v231 = vsel %vm223, %v222, 0
        %233 = vmatpush.xpose.msra.mxu0 0.0
        %234 = vmatpush.xpose.msra.mxu0 0.0
        %235 = vmatpush.xpose.msra.mxu0 0.0
        %236 = vmatpush.xpose.msra.mxu0 0.0
        %237 = vmatpush.xpose.msra.mxu0 0.0
        %238 = vmatpush.xpose.msra.mxu0 0.0
        %239 = vmatpush.xpose.msra.mxu0 0.0
        %240 = vmatpush.xpose.msra.mxu0 0.0
        %241 = vmatpush.xpose.msra.mxu0 0.0
        %242 = vmatpush.xpose.msra.mxu0 0.0
        %243 = vmatpush.xpose.msra.mxu0 0.0
        %244 = vmatpush.xpose.msra.mxu0 0.0
        %245 = vmatpush.xpose.msra.mxu0 0.0
        %246 = vmatpush.xpose.msra.mxu0 0.0
        %247 = vmatpush.xpose.msra.mxu0 0.0
        %248 = vmatpush.xpose.msra.mxu0 %v231
        %249 = vmatmul.f32.gmra.mxu0 %v225
        %v250 = vpop.f32.mrf.mxu0
        %v251 = vadd.f32 0.0, %v250
        %252 = vmatmul.f32.gmra.mxu0 %v228
        %v253 = vpop.f32.mrf.mxu0
        %v254 = vadd.f32 0.0, %v253
        %255 = vdwg.mxu0
        %v257 = vsel %vm223, %v171, 0
        %v260 = vsel %vm223, %v172, 0
        %262 = vmatpush.xpose.msra.mxu0 0.0
        %263 = vmatpush.xpose.msra.mxu0 0.0
        %264 = vmatpush.xpose.msra.mxu0 0.0
        %265 = vmatpush.xpose.msra.mxu0 0.0
        %266 = vmatpush.xpose.msra.mxu0 0.0
        %267 = vmatpush.xpose.msra.mxu0 0.0
        %268 = vmatpush.xpose.msra.mxu0 0.0
        %269 = vmatpush.xpose.msra.mxu0 0.0
        %270 = vmatpush.xpose.msra.mxu0 0.0
        %271 = vmatpush.xpose.msra.mxu0 0.0
        %272 = vmatpush.xpose.msra.mxu0 0.0
        %273 = vmatpush.xpose.msra.mxu0 0.0
        %274 = vmatpush.xpose.msra.mxu0 0.0
        %275 = vmatpush.xpose.msra.mxu0 0.0
        %276 = vmatpush.xpose.msra.mxu0 0.0
        %277 = vmatpush.xpose.msra.mxu0 %v231
        %278 = vmatmul.f32.gmra.mxu0 %v257
        %v279 = vpop.f32.mrf.mxu0
        %v280 = vadd.f32 0.0, %v279
        %281 = vmatmul.f32.gmra.mxu0 %v260
        %v282 = vpop.f32.mrf.mxu0
        %v283 = vadd.f32 0.0, %v282
        %284 = vdwg.mxu0
        %v286 = vsel %vm223, %v174, 0
        %v289 = vsel %vm223, %v175, 0
        %291 = vmatpush.xpose.msra.mxu0 0.0
        %292 = vmatpush.xpose.msra.mxu0 0.0
        %293 = vmatpush.xpose.msra.mxu0 0.0
        %294 = vmatpush.xpose.msra.mxu0 0.0
        %295 = vmatpush.xpose.msra.mxu0 0.0
        %296 = vmatpush.xpose.msra.mxu0 0.0
        %297 = vmatpush.xpose.msra.mxu0 0.0
        %298 = vmatpush.xpose.msra.mxu0 0.0
        %299 = vmatpush.xpose.msra.mxu0 0.0
        %300 = vmatpush.xpose.msra.mxu0 0.0
        %301 = vmatpush.xpose.msra.mxu0 0.0
        %302 = vmatpush.xpose.msra.mxu0 0.0
        %303 = vmatpush.xpose.msra.mxu0 0.0
        %304 = vmatpush.xpose.msra.mxu0 0.0
        %305 = vmatpush.xpose.msra.mxu0 0.0
        %306 = vmatpush.xpose.msra.mxu0 %v231
        %307 = vmatmul.f32.gmra.mxu0 %v286
        %v308 = vpop.f32.mrf.mxu0
        %v309 = vadd.f32 0.0, %v308
        %310 = vmatmul.f32.gmra.mxu0 %v289
        %v311 = vpop.f32.mrf.mxu0
        %v312 = vadd.f32 0.0, %v311
        %313 = vdwg.mxu0
        %v315 = vsel %vm223, %v177, 0
        %v318 = vsel %vm223, %v178, 0
        %320 = vmatpush.xpose.msra.mxu0 0.0
        %321 = vmatpush.xpose.msra.mxu0 0.0
        %322 = vmatpush.xpose.msra.mxu0 0.0
        %323 = vmatpush.xpose.msra.mxu0 0.0
        %324 = vmatpush.xpose.msra.mxu0 0.0
        %325 = vmatpush.xpose.msra.mxu0 0.0
        %326 = vmatpush.xpose.msra.mxu0 0.0
        %327 = vmatpush.xpose.msra.mxu0 0.0
        %328 = vmatpush.xpose.msra.mxu0 0.0
        %329 = vmatpush.xpose.msra.mxu0 0.0
        %330 = vmatpush.xpose.msra.mxu0 0.0
        %331 = vmatpush.xpose.msra.mxu0 0.0
        %332 = vmatpush.xpose.msra.mxu0 0.0
        %333 = vmatpush.xpose.msra.mxu0 0.0
        %334 = vmatpush.xpose.msra.mxu0 0.0
        %335 = vmatpush.xpose.msra.mxu0 %v231
        %336 = vmatmul.f32.gmra.mxu0 %v315
        %v337 = vpop.f32.mrf.mxu0
        %v338 = vadd.f32 0.0, %v337
        %339 = vmatmul.f32.gmra.mxu0 %v318
        %v340 = vpop.f32.mrf.mxu0
        %v341 = vadd.f32 0.0, %v340
        %342 = vdwg.mxu0
        %v344 = vsel %vm223, %v180, 0
        %v347 = vsel %vm223, %v181, 0
        %349 = vmatpush.xpose.msra.mxu0 0.0
        %350 = vmatpush.xpose.msra.mxu0 0.0
        %351 = vmatpush.xpose.msra.mxu0 0.0
        %352 = vmatpush.xpose.msra.mxu0 0.0
        %353 = vmatpush.xpose.msra.mxu0 0.0
        %354 = vmatpush.xpose.msra.mxu0 0.0
        %355 = vmatpush.xpose.msra.mxu0 0.0
        %356 = vmatpush.xpose.msra.mxu0 0.0
        %357 = vmatpush.xpose.msra.mxu0 0.0
        %358 = vmatpush.xpose.msra.mxu0 0.0
        %359 = vmatpush.xpose.msra.mxu0 0.0
        %360 = vmatpush.xpose.msra.mxu0 0.0
        %361 = vmatpush.xpose.msra.mxu0 0.0
        %362 = vmatpush.xpose.msra.mxu0 0.0
        %363 = vmatpush.xpose.msra.mxu0 0.0
        %364 = vmatpush.xpose.msra.mxu0 %v231
        %365 = vmatmul.f32.gmra.mxu0 %v344
        %v366 = vpop.f32.mrf.mxu0
        %v367 = vadd.f32 0.0, %v366
        %368 = vmatmul.f32.gmra.mxu0 %v347
        %v369 = vpop.f32.mrf.mxu0
        %v370 = vadd.f32 0.0, %v369
        %371 = vdwg.mxu0
        %v373 = vsel %vm223, %v183, 0
        %v376 = vsel %vm223, %v184, 0
        %378 = vmatpush.xpose.msra.mxu0 0.0
        %379 = vmatpush.xpose.msra.mxu0 0.0
        %380 = vmatpush.xpose.msra.mxu0 0.0
        %381 = vmatpush.xpose.msra.mxu0 0.0
        %382 = vmatpush.xpose.msra.mxu0 0.0
        %383 = vmatpush.xpose.msra.mxu0 0.0
        %384 = vmatpush.xpose.msra.mxu0 0.0
        %385 = vmatpush.xpose.msra.mxu0 0.0
        %386 = vmatpush.xpose.msra.mxu0 0.0
        %387 = vmatpush.xpose.msra.mxu0 0.0
        %388 = vmatpush.xpose.msra.mxu0 0.0
        %389 = vmatpush.xpose.msra.mxu0 0.0
        %390 = vmatpush.xpose.msra.mxu0 0.0
        %391 = vmatpush.xpose.msra.mxu0 0.0
        %392 = vmatpush.xpose.msra.mxu0 0.0
        %393 = vmatpush.xpose.msra.mxu0 %v231
        %394 = vmatmul.f32.gmra.mxu0 %v373
        %v395 = vpop.f32.mrf.mxu0
        %v396 = vadd.f32 0.0, %v395
        %397 = vmatmul.f32.gmra.mxu0 %v376
        %v398 = vpop.f32.mrf.mxu0
        %v399 = vadd.f32 0.0, %v398
        %400 = vdwg.mxu0
        %v402 = vsel %vm223, %v186, 0
        %v405 = vsel %vm223, %v187, 0
        %407 = vmatpush.xpose.msra.mxu0 0.0
        %408 = vmatpush.xpose.msra.mxu0 0.0
        %409 = vmatpush.xpose.msra.mxu0 0.0
        %410 = vmatpush.xpose.msra.mxu0 0.0
        %411 = vmatpush.xpose.msra.mxu0 0.0
        %412 = vmatpush.xpose.msra.mxu0 0.0
        %413 = vmatpush.xpose.msra.mxu0 0.0
        %414 = vmatpush.xpose.msra.mxu0 0.0
        %415 = vmatpush.xpose.msra.mxu0 0.0
        %416 = vmatpush.xpose.msra.mxu0 0.0
        %417 = vmatpush.xpose.msra.mxu0 0.0
        %418 = vmatpush.xpose.msra.mxu0 0.0
        %419 = vmatpush.xpose.msra.mxu0 0.0
        %420 = vmatpush.xpose.msra.mxu0 0.0
        %421 = vmatpush.xpose.msra.mxu0 0.0
        %422 = vmatpush.xpose.msra.mxu0 %v231
        %423 = vmatmul.f32.gmra.mxu0 %v402
        %v424 = vpop.f32.mrf.mxu0
        %v425 = vadd.f32 0.0, %v424
        %426 = vmatmul.f32.gmra.mxu0 %v405
        %v427 = vpop.f32.mrf.mxu0
        %v428 = vadd.f32 0.0, %v427
        %429 = vdwg.mxu0
        %v431 = vsel %vm223, %v189, 0
        %v434 = vsel %vm223, %v190, 0
        %436 = vmatpush.xpose.msra.mxu0 0.0
        %437 = vmatpush.xpose.msra.mxu0 0.0
        %438 = vmatpush.xpose.msra.mxu0 0.0
        %439 = vmatpush.xpose.msra.mxu0 0.0
        %440 = vmatpush.xpose.msra.mxu0 0.0
        %441 = vmatpush.xpose.msra.mxu0 0.0
        %442 = vmatpush.xpose.msra.mxu0 0.0
        %443 = vmatpush.xpose.msra.mxu0 0.0
        %444 = vmatpush.xpose.msra.mxu0 0.0
        %445 = vmatpush.xpose.msra.mxu0 0.0
        %446 = vmatpush.xpose.msra.mxu0 0.0
        %447 = vmatpush.xpose.msra.mxu0 0.0
        %448 = vmatpush.xpose.msra.mxu0 0.0
        %449 = vmatpush.xpose.msra.mxu0 0.0
        %450 = vmatpush.xpose.msra.mxu0 0.0
        %451 = vmatpush.xpose.msra.mxu0 %v231
        %452 = vmatmul.f32.gmra.mxu0 %v431
        %v453 = vpop.f32.mrf.mxu0
        %v454 = vadd.f32 0.0, %v453
        %455 = vmatmul.f32.gmra.mxu0 %v434
        %v456 = vpop.f32.mrf.mxu0
        %v457 = vadd.f32 0.0, %v456
        %458 = vdwg.mxu0
        %v460 = vsel %vm223, %v192, 0
        %v463 = vsel %vm223, %v193, 0
        %465 = vmatpush.xpose.msra.mxu0 0.0
        %466 = vmatpush.xpose.msra.mxu0 0.0
        %467 = vmatpush.xpose.msra.mxu0 0.0
        %468 = vmatpush.xpose.msra.mxu0 0.0
        %469 = vmatpush.xpose.msra.mxu0 0.0
        %470 = vmatpush.xpose.msra.mxu0 0.0
        %471 = vmatpush.xpose.msra.mxu0 0.0
        %472 = vmatpush.xpose.msra.mxu0 0.0
        %473 = vmatpush.xpose.msra.mxu0 0.0
        %474 = vmatpush.xpose.msra.mxu0 0.0
        %475 = vmatpush.xpose.msra.mxu0 0.0
        %476 = vmatpush.xpose.msra.mxu0 0.0
        %477 = vmatpush.xpose.msra.mxu0 0.0
        %478 = vmatpush.xpose.msra.mxu0 0.0
        %479 = vmatpush.xpose.msra.mxu0 0.0
        %480 = vmatpush.xpose.msra.mxu0 %v231
        %481 = vmatmul.f32.gmra.mxu0 %v460
        %v482 = vpop.f32.mrf.mxu0
        %v483 = vadd.f32 0.0, %v482
        %484 = vmatmul.f32.gmra.mxu0 %v463
        %v485 = vpop.f32.mrf.mxu0
        %v486 = vadd.f32 0.0, %v485
        %487 = vdwg.mxu0
        %v489 = vsel %vm223, %v195, 0
        %v492 = vsel %vm223, %v196, 0
        %494 = vmatpush.xpose.msra.mxu0 0.0
        %495 = vmatpush.xpose.msra.mxu0 0.0
        %496 = vmatpush.xpose.msra.mxu0 0.0
        %497 = vmatpush.xpose.msra.mxu0 0.0
        %498 = vmatpush.xpose.msra.mxu0 0.0
        %499 = vmatpush.xpose.msra.mxu0 0.0
        %500 = vmatpush.xpose.msra.mxu0 0.0
        %501 = vmatpush.xpose.msra.mxu0 0.0
        %502 = vmatpush.xpose.msra.mxu0 0.0
        %503 = vmatpush.xpose.msra.mxu0 0.0
        %504 = vmatpush.xpose.msra.mxu0 0.0
        %505 = vmatpush.xpose.msra.mxu0 0.0
        %506 = vmatpush.xpose.msra.mxu0 0.0
        %507 = vmatpush.xpose.msra.mxu0 0.0
        %508 = vmatpush.xpose.msra.mxu0 0.0
        %509 = vmatpush.xpose.msra.mxu0 %v231
        %510 = vmatmul.f32.gmra.mxu0 %v489
        %v511 = vpop.f32.mrf.mxu0
        %v512 = vadd.f32 0.0, %v511
        %513 = vmatmul.f32.gmra.mxu0 %v492
        %v514 = vpop.f32.mrf.mxu0
        %v515 = vadd.f32 0.0, %v514
        %516 = vdwg.mxu0
        %v518 = vsel %vm223, %v198, 0
        %v521 = vsel %vm223, %v199, 0
        %523 = vmatpush.xpose.msra.mxu0 0.0
        %524 = vmatpush.xpose.msra.mxu0 0.0
        %525 = vmatpush.xpose.msra.mxu0 0.0
        %526 = vmatpush.xpose.msra.mxu0 0.0
        %527 = vmatpush.xpose.msra.mxu0 0.0
        %528 = vmatpush.xpose.msra.mxu0 0.0
        %529 = vmatpush.xpose.msra.mxu0 0.0
        %530 = vmatpush.xpose.msra.mxu0 0.0
        %531 = vmatpush.xpose.msra.mxu0 0.0
        %532 = vmatpush.xpose.msra.mxu0 0.0
        %533 = vmatpush.xpose.msra.mxu0 0.0
        %534 = vmatpush.xpose.msra.mxu0 0.0
        %535 = vmatpush.xpose.msra.mxu0 0.0
        %536 = vmatpush.xpose.msra.mxu0 0.0
        %537 = vmatpush.xpose.msra.mxu0 0.0
        %538 = vmatpush.xpose.msra.mxu0 %v231
        %539 = vmatmul.f32.gmra.mxu0 %v518
        %v540 = vpop.f32.mrf.mxu0
        %v541 = vadd.f32 0.0, %v540
        %542 = vmatmul.f32.gmra.mxu0 %v521
        %v543 = vpop.f32.mrf.mxu0
        %v544 = vadd.f32 0.0, %v543
        %545 = vdwg.mxu0
        %v547 = vsel %vm223, %v201, 0
        %v550 = vsel %vm223, %v202, 0
        %552 = vmatpush.xpose.msra.mxu0 0.0
        %553 = vmatpush.xpose.msra.mxu0 0.0
        %554 = vmatpush.xpose.msra.mxu0 0.0
        %555 = vmatpush.xpose.msra.mxu0 0.0
        %556 = vmatpush.xpose.msra.mxu0 0.0
        %557 = vmatpush.xpose.msra.mxu0 0.0
        %558 = vmatpush.xpose.msra.mxu0 0.0
        %559 = vmatpush.xpose.msra.mxu0 0.0
        %560 = vmatpush.xpose.msra.mxu0 0.0
        %561 = vmatpush.xpose.msra.mxu0 0.0
        %562 = vmatpush.xpose.msra.mxu0 0.0
        %563 = vmatpush.xpose.msra.mxu0 0.0
        %564 = vmatpush.xpose.msra.mxu0 0.0
        %565 = vmatpush.xpose.msra.mxu0 0.0
        %566 = vmatpush.xpose.msra.mxu0 0.0
        %567 = vmatpush.xpose.msra.mxu0 %v231
        %568 = vmatmul.f32.gmra.mxu0 %v547
        %v569 = vpop.f32.mrf.mxu0
        %v570 = vadd.f32 0.0, %v569
        %571 = vmatmul.f32.gmra.mxu0 %v550
        %v572 = vpop.f32.mrf.mxu0
        %v573 = vadd.f32 0.0, %v572
        %574 = vdwg.mxu0
        %v576 = vsel %vm223, %v204, 0
        %v579 = vsel %vm223, %v205, 0
        %581 = vmatpush.xpose.msra.mxu0 0.0
        %582 = vmatpush.xpose.msra.mxu0 0.0
        %583 = vmatpush.xpose.msra.mxu0 0.0
        %584 = vmatpush.xpose.msra.mxu0 0.0
        %585 = vmatpush.xpose.msra.mxu0 0.0
        %586 = vmatpush.xpose.msra.mxu0 0.0
        %587 = vmatpush.xpose.msra.mxu0 0.0
        %588 = vmatpush.xpose.msra.mxu0 0.0
        %589 = vmatpush.xpose.msra.mxu0 0.0
        %590 = vmatpush.xpose.msra.mxu0 0.0
        %591 = vmatpush.xpose.msra.mxu0 0.0
        %592 = vmatpush.xpose.msra.mxu0 0.0
        %593 = vmatpush.xpose.msra.mxu0 0.0
        %594 = vmatpush.xpose.msra.mxu0 0.0
        %595 = vmatpush.xpose.msra.mxu0 0.0
        %596 = vmatpush.xpose.msra.mxu0 %v231
        %597 = vmatmul.f32.gmra.mxu0 %v576
        %v598 = vpop.f32.mrf.mxu0
        %v599 = vadd.f32 0.0, %v598
        %600 = vmatmul.f32.gmra.mxu0 %v579
        %v601 = vpop.f32.mrf.mxu0
        %v602 = vadd.f32 0.0, %v601
        %603 = vdwg.mxu0
        %v605 = vsel %vm223, %v207, 0
        %v608 = vsel %vm223, %v208, 0
        %610 = vmatpush.xpose.msra.mxu0 0.0
        %611 = vmatpush.xpose.msra.mxu0 0.0
        %612 = vmatpush.xpose.msra.mxu0 0.0
        %613 = vmatpush.xpose.msra.mxu0 0.0
        %614 = vmatpush.xpose.msra.mxu0 0.0
        %615 = vmatpush.xpose.msra.mxu0 0.0
        %616 = vmatpush.xpose.msra.mxu0 0.0
        %617 = vmatpush.xpose.msra.mxu0 0.0
        %618 = vmatpush.xpose.msra.mxu0 0.0
        %619 = vmatpush.xpose.msra.mxu0 0.0
        %620 = vmatpush.xpose.msra.mxu0 0.0
        %621 = vmatpush.xpose.msra.mxu0 0.0
        %622 = vmatpush.xpose.msra.mxu0 0.0
        %623 = vmatpush.xpose.msra.mxu0 0.0
        %624 = vmatpush.xpose.msra.mxu0 0.0
        %625 = vmatpush.xpose.msra.mxu0 %v231
        %626 = vmatmul.f32.gmra.mxu0 %v605
        %v627 = vpop.f32.mrf.mxu0
        %v628 = vadd.f32 0.0, %v627
        %629 = vmatmul.f32.gmra.mxu0 %v608
        %v630 = vpop.f32.mrf.mxu0
        %v631 = vadd.f32 0.0, %v630
        %632 = vdwg.mxu0
        %v634 = vsel %vm223, %v210, 0
        %v637 = vsel %vm223, %v211, 0
        %639 = vmatpush.xpose.msra.mxu0 0.0
        %640 = vmatpush.xpose.msra.mxu0 0.0
        %641 = vmatpush.xpose.msra.mxu0 0.0
        %642 = vmatpush.xpose.msra.mxu0 0.0
        %643 = vmatpush.xpose.msra.mxu0 0.0
        %644 = vmatpush.xpose.msra.mxu0 0.0
        %645 = vmatpush.xpose.msra.mxu0 0.0
        %646 = vmatpush.xpose.msra.mxu0 0.0
        %647 = vmatpush.xpose.msra.mxu0 0.0
        %648 = vmatpush.xpose.msra.mxu0 0.0
        %649 = vmatpush.xpose.msra.mxu0 0.0
        %650 = vmatpush.xpose.msra.mxu0 0.0
        %651 = vmatpush.xpose.msra.mxu0 0.0
        %652 = vmatpush.xpose.msra.mxu0 0.0
        %653 = vmatpush.xpose.msra.mxu0 0.0
        %654 = vmatpush.xpose.msra.mxu0 %v231
        %655 = vmatmul.f32.gmra.mxu0 %v634
        %v656 = vpop.f32.mrf.mxu0
        %v657 = vadd.f32 0.0, %v656
        %658 = vmatmul.f32.gmra.mxu0 %v637
        %v659 = vpop.f32.mrf.mxu0
        %v660 = vadd.f32 0.0, %v659
        %661 = vdwg.mxu0
        %v663 = vsel %vm223, %v213, 0
        %v666 = vsel %vm223, %v214, 0
        %668 = vmatpush.xpose.msra.mxu0 0.0
        %669 = vmatpush.xpose.msra.mxu0 0.0
        %670 = vmatpush.xpose.msra.mxu0 0.0
        %671 = vmatpush.xpose.msra.mxu0 0.0
        %672 = vmatpush.xpose.msra.mxu0 0.0
        %673 = vmatpush.xpose.msra.mxu0 0.0
        %674 = vmatpush.xpose.msra.mxu0 0.0
        %675 = vmatpush.xpose.msra.mxu0 0.0
        %676 = vmatpush.xpose.msra.mxu0 0.0
        %677 = vmatpush.xpose.msra.mxu0 0.0
        %678 = vmatpush.xpose.msra.mxu0 0.0
        %679 = vmatpush.xpose.msra.mxu0 0.0
        %680 = vmatpush.xpose.msra.mxu0 0.0
        %681 = vmatpush.xpose.msra.mxu0 0.0
        %682 = vmatpush.xpose.msra.mxu0 0.0
        %683 = vmatpush.xpose.msra.mxu0 %v231
        %684 = vmatmul.f32.gmra.mxu0 %v663
        %v685 = vpop.f32.mrf.mxu0
        %v686 = vadd.f32 0.0, %v685
        %687 = vmatmul.f32.gmra.mxu0 %v666
        %v688 = vpop.f32.mrf.mxu0
        %v689 = vadd.f32 0.0, %v688
        %690 = vdwg.mxu0
        %vm692 = vcmask 1046528
        %v693 = vrot.slane %v168, 1
        %v694 = vrot.slane %v169, 1
        %v695 = vsel %vm692, %v693, %v694
        %v696 = vrot.slane %v170, 1
        %v697 = vsel %vm692, %v694, %v696
        %v698 = vsel %vm223, %v695, 0
        %v700 = vsel %vm223, %v697, 0
        %v703 = vsel %vm223, %v220, 0
        %705 = vmatpush.xpose.msra.mxu0 0.0
        %706 = vmatpush.xpose.msra.mxu0 0.0
        %707 = vmatpush.xpose.msra.mxu0 0.0
        %708 = vmatpush.xpose.msra.mxu0 0.0
        %709 = vmatpush.xpose.msra.mxu0 0.0
        %710 = vmatpush.xpose.msra.mxu0 0.0
        %711 = vmatpush.xpose.msra.mxu0 0.0
        %712 = vmatpush.xpose.msra.mxu0 0.0
        %713 = vmatpush.xpose.msra.mxu0 0.0
        %714 = vmatpush.xpose.msra.mxu0 0.0
        %715 = vmatpush.xpose.msra.mxu0 0.0
        %716 = vmatpush.xpose.msra.mxu0 0.0
        %717 = vmatpush.xpose.msra.mxu0 0.0
        %718 = vmatpush.xpose.msra.mxu0 0.0
        %719 = vmatpush.xpose.msra.mxu0 0.0
        %720 = vmatpush.xpose.msra.mxu0 %v703
        %721 = vmatmul.f32.gmra.mxu0 %v698
        %v722 = vpop.f32.mrf.mxu0
        %v723 = vadd.f32 %v251, %v722
        %724 = vmatmul.f32.gmra.mxu0 %v700
        %v725 = vpop.f32.mrf.mxu0
        %v726 = vadd.f32 %v254, %v725
        %727 = vdwg.mxu0
        %v729 = vrot.slane %v171, 1
        %v730 = vrot.slane %v172, 1
        %v731 = vsel %vm692, %v729, %v730
        %v732 = vrot.slane %v173, 1
        %v733 = vsel %vm692, %v730, %v732
        %v734 = vsel %vm223, %v731, 0
        %v736 = vsel %vm223, %v733, 0
        %738 = vmatpush.xpose.msra.mxu0 0.0
        %739 = vmatpush.xpose.msra.mxu0 0.0
        %740 = vmatpush.xpose.msra.mxu0 0.0
        %741 = vmatpush.xpose.msra.mxu0 0.0
        %742 = vmatpush.xpose.msra.mxu0 0.0
        %743 = vmatpush.xpose.msra.mxu0 0.0
        %744 = vmatpush.xpose.msra.mxu0 0.0
        %745 = vmatpush.xpose.msra.mxu0 0.0
        %746 = vmatpush.xpose.msra.mxu0 0.0
        %747 = vmatpush.xpose.msra.mxu0 0.0
        %748 = vmatpush.xpose.msra.mxu0 0.0
        %749 = vmatpush.xpose.msra.mxu0 0.0
        %750 = vmatpush.xpose.msra.mxu0 0.0
        %751 = vmatpush.xpose.msra.mxu0 0.0
        %752 = vmatpush.xpose.msra.mxu0 0.0
        %753 = vmatpush.xpose.msra.mxu0 %v703
        %754 = vmatmul.f32.gmra.mxu0 %v734
        %v755 = vpop.f32.mrf.mxu0
        %v756 = vadd.f32 %v280, %v755
        %757 = vmatmul.f32.gmra.mxu0 %v736
        %v758 = vpop.f32.mrf.mxu0
        %v759 = vadd.f32 %v283, %v758
        %760 = vdwg.mxu0
        %v762 = vrot.slane %v174, 1
        %v763 = vrot.slane %v175, 1
        %v764 = vsel %vm692, %v762, %v763
        %v765 = vrot.slane %v176, 1
        %v766 = vsel %vm692, %v763, %v765
        %v767 = vsel %vm223, %v764, 0
        %v769 = vsel %vm223, %v766, 0
        %771 = vmatpush.xpose.msra.mxu0 0.0
        %772 = vmatpush.xpose.msra.mxu0 0.0
        %773 = vmatpush.xpose.msra.mxu0 0.0
        %774 = vmatpush.xpose.msra.mxu0 0.0
        %775 = vmatpush.xpose.msra.mxu0 0.0
        %776 = vmatpush.xpose.msra.mxu0 0.0
        %777 = vmatpush.xpose.msra.mxu0 0.0
        %778 = vmatpush.xpose.msra.mxu0 0.0
        %779 = vmatpush.xpose.msra.mxu0 0.0
        %780 = vmatpush.xpose.msra.mxu0 0.0
        %781 = vmatpush.xpose.msra.mxu0 0.0
        %782 = vmatpush.xpose.msra.mxu0 0.0
        %783 = vmatpush.xpose.msra.mxu0 0.0
        %784 = vmatpush.xpose.msra.mxu0 0.0
        %785 = vmatpush.xpose.msra.mxu0 0.0
        %786 = vmatpush.xpose.msra.mxu0 %v703
        %787 = vmatmul.f32.gmra.mxu0 %v767
        %v788 = vpop.f32.mrf.mxu0
        %v789 = vadd.f32 %v309, %v788
        %790 = vmatmul.f32.gmra.mxu0 %v769
        %v791 = vpop.f32.mrf.mxu0
        %v792 = vadd.f32 %v312, %v791
        %793 = vdwg.mxu0
        %v795 = vrot.slane %v177, 1
        %v796 = vrot.slane %v178, 1
        %v797 = vsel %vm692, %v795, %v796
        %v798 = vrot.slane %v179, 1
        %v799 = vsel %vm692, %v796, %v798
        %v800 = vsel %vm223, %v797, 0
        %v802 = vsel %vm223, %v799, 0
        %804 = vmatpush.xpose.msra.mxu0 0.0
        %805 = vmatpush.xpose.msra.mxu0 0.0
        %806 = vmatpush.xpose.msra.mxu0 0.0
        %807 = vmatpush.xpose.msra.mxu0 0.0
        %808 = vmatpush.xpose.msra.mxu0 0.0
        %809 = vmatpush.xpose.msra.mxu0 0.0
        %810 = vmatpush.xpose.msra.mxu0 0.0
        %811 = vmatpush.xpose.msra.mxu0 0.0
        %812 = vmatpush.xpose.msra.mxu0 0.0
        %813 = vmatpush.xpose.msra.mxu0 0.0
        %814 = vmatpush.xpose.msra.mxu0 0.0
        %815 = vmatpush.xpose.msra.mxu0 0.0
        %816 = vmatpush.xpose.msra.mxu0 0.0
        %817 = vmatpush.xpose.msra.mxu0 0.0
        %818 = vmatpush.xpose.msra.mxu0 0.0
        %819 = vmatpush.xpose.msra.mxu0 %v703
        %820 = vmatmul.f32.gmra.mxu0 %v800
        %v821 = vpop.f32.mrf.mxu0
        %v822 = vadd.f32 %v338, %v821
        %823 = vmatmul.f32.gmra.mxu0 %v802
        %v824 = vpop.f32.mrf.mxu0
        %v825 = vadd.f32 %v341, %v824
        %826 = vdwg.mxu0
        %v828 = vrot.slane %v180, 1
        %v829 = vrot.slane %v181, 1
        %v830 = vsel %vm692, %v828, %v829
        %v831 = vrot.slane %v182, 1
        %v832 = vsel %vm692, %v829, %v831
        %v833 = vsel %vm223, %v830, 0
        %v835 = vsel %vm223, %v832, 0
        %837 = vmatpush.xpose.msra.mxu0 0.0
        %838 = vmatpush.xpose.msra.mxu0 0.0
        %839 = vmatpush.xpose.msra.mxu0 0.0
        %840 = vmatpush.xpose.msra.mxu0 0.0
        %841 = vmatpush.xpose.msra.mxu0 0.0
        %842 = vmatpush.xpose.msra.mxu0 0.0
        %843 = vmatpush.xpose.msra.mxu0 0.0
        %844 = vmatpush.xpose.msra.mxu0 0.0
        %845 = vmatpush.xpose.msra.mxu0 0.0
        %846 = vmatpush.xpose.msra.mxu0 0.0
        %847 = vmatpush.xpose.msra.mxu0 0.0
        %848 = vmatpush.xpose.msra.mxu0 0.0
        %849 = vmatpush.xpose.msra.mxu0 0.0
        %850 = vmatpush.xpose.msra.mxu0 0.0
        %851 = vmatpush.xpose.msra.mxu0 0.0
        %852 = vmatpush.xpose.msra.mxu0 %v703
        %853 = vmatmul.f32.gmra.mxu0 %v833
        %v854 = vpop.f32.mrf.mxu0
        %v855 = vadd.f32 %v367, %v854
        %856 = vmatmul.f32.gmra.mxu0 %v835
        %v857 = vpop.f32.mrf.mxu0
        %v858 = vadd.f32 %v370, %v857
        %859 = vdwg.mxu0
        %v861 = vrot.slane %v183, 1
        %v862 = vrot.slane %v184, 1
        %v863 = vsel %vm692, %v861, %v862
        %v864 = vrot.slane %v185, 1
        %v865 = vsel %vm692, %v862, %v864
        %v866 = vsel %vm223, %v863, 0
        %v868 = vsel %vm223, %v865, 0
        %870 = vmatpush.xpose.msra.mxu0 0.0
        %871 = vmatpush.xpose.msra.mxu0 0.0
        %872 = vmatpush.xpose.msra.mxu0 0.0
        %873 = vmatpush.xpose.msra.mxu0 0.0
        %874 = vmatpush.xpose.msra.mxu0 0.0
        %875 = vmatpush.xpose.msra.mxu0 0.0
        %876 = vmatpush.xpose.msra.mxu0 0.0
        %877 = vmatpush.xpose.msra.mxu0 0.0
        %878 = vmatpush.xpose.msra.mxu0 0.0
        %879 = vmatpush.xpose.msra.mxu0 0.0
        %880 = vmatpush.xpose.msra.mxu0 0.0
        %881 = vmatpush.xpose.msra.mxu0 0.0
        %882 = vmatpush.xpose.msra.mxu0 0.0
        %883 = vmatpush.xpose.msra.mxu0 0.0
        %884 = vmatpush.xpose.msra.mxu0 0.0
        %885 = vmatpush.xpose.msra.mxu0 %v703
        %886 = vmatmul.f32.gmra.mxu0 %v866
        %v887 = vpop.f32.mrf.mxu0
        %v888 = vadd.f32 %v396, %v887
        %889 = vmatmul.f32.gmra.mxu0 %v868
        %v890 = vpop.f32.mrf.mxu0
        %v891 = vadd.f32 %v399, %v890
        %892 = vdwg.mxu0
        %v894 = vrot.slane %v186, 1
        %v895 = vrot.slane %v187, 1
        %v896 = vsel %vm692, %v894, %v895
        %v897 = vrot.slane %v188, 1
        %v898 = vsel %vm692, %v895, %v897
        %v899 = vsel %vm223, %v896, 0
        %v901 = vsel %vm223, %v898, 0
        %903 = vmatpush.xpose.msra.mxu0 0.0
        %904 = vmatpush.xpose.msra.mxu0 0.0
        %905 = vmatpush.xpose.msra.mxu0 0.0
        %906 = vmatpush.xpose.msra.mxu0 0.0
        %907 = vmatpush.xpose.msra.mxu0 0.0
        %908 = vmatpush.xpose.msra.mxu0 0.0
        %909 = vmatpush.xpose.msra.mxu0 0.0
        %910 = vmatpush.xpose.msra.mxu0 0.0
        %911 = vmatpush.xpose.msra.mxu0 0.0
        %912 = vmatpush.xpose.msra.mxu0 0.0
        %913 = vmatpush.xpose.msra.mxu0 0.0
        %914 = vmatpush.xpose.msra.mxu0 0.0
        %915 = vmatpush.xpose.msra.mxu0 0.0
        %916 = vmatpush.xpose.msra.mxu0 0.0
        %917 = vmatpush.xpose.msra.mxu0 0.0
        %918 = vmatpush.xpose.msra.mxu0 %v703
        %919 = vmatmul.f32.gmra.mxu0 %v899
        %v920 = vpop.f32.mrf.mxu0
        %v921 = vadd.f32 %v425, %v920
        %922 = vmatmul.f32.gmra.mxu0 %v901
        %v923 = vpop.f32.mrf.mxu0
        %v924 = vadd.f32 %v428, %v923
        %925 = vdwg.mxu0
        %v927 = vrot.slane %v189, 1
        %v928 = vrot.slane %v190, 1
        %v929 = vsel %vm692, %v927, %v928
        %v930 = vrot.slane %v191, 1
        %v931 = vsel %vm692, %v928, %v930
        %v932 = vsel %vm223, %v929, 0
        %v934 = vsel %vm223, %v931, 0
        %936 = vmatpush.xpose.msra.mxu0 0.0
        %937 = vmatpush.xpose.msra.mxu0 0.0
        %938 = vmatpush.xpose.msra.mxu0 0.0
        %939 = vmatpush.xpose.msra.mxu0 0.0
        %940 = vmatpush.xpose.msra.mxu0 0.0
        %941 = vmatpush.xpose.msra.mxu0 0.0
        %942 = vmatpush.xpose.msra.mxu0 0.0
        %943 = vmatpush.xpose.msra.mxu0 0.0
        %944 = vmatpush.xpose.msra.mxu0 0.0
        %945 = vmatpush.xpose.msra.mxu0 0.0
        %946 = vmatpush.xpose.msra.mxu0 0.0
        %947 = vmatpush.xpose.msra.mxu0 0.0
        %948 = vmatpush.xpose.msra.mxu0 0.0
        %949 = vmatpush.xpose.msra.mxu0 0.0
        %950 = vmatpush.xpose.msra.mxu0 0.0
        %951 = vmatpush.xpose.msra.mxu0 %v703
        %952 = vmatmul.f32.gmra.mxu0 %v932
        %v953 = vpop.f32.mrf.mxu0
        %v954 = vadd.f32 %v454, %v953
        %955 = vmatmul.f32.gmra.mxu0 %v934
        %v956 = vpop.f32.mrf.mxu0
        %v957 = vadd.f32 %v457, %v956
        %958 = vdwg.mxu0
        %v960 = vrot.slane %v192, 1
        %v961 = vrot.slane %v193, 1
        %v962 = vsel %vm692, %v960, %v961
        %v963 = vrot.slane %v194, 1
        %v964 = vsel %vm692, %v961, %v963
        %v965 = vsel %vm223, %v962, 0
        %v967 = vsel %vm223, %v964, 0
        %969 = vmatpush.xpose.msra.mxu0 0.0
        %970 = vmatpush.xpose.msra.mxu0 0.0
        %971 = vmatpush.xpose.msra.mxu0 0.0
        %972 = vmatpush.xpose.msra.mxu0 0.0
        %973 = vmatpush.xpose.msra.mxu0 0.0
        %974 = vmatpush.xpose.msra.mxu0 0.0
        %975 = vmatpush.xpose.msra.mxu0 0.0
        %976 = vmatpush.xpose.msra.mxu0 0.0
        %977 = vmatpush.xpose.msra.mxu0 0.0
        %978 = vmatpush.xpose.msra.mxu0 0.0
        %979 = vmatpush.xpose.msra.mxu0 0.0
        %980 = vmatpush.xpose.msra.mxu0 0.0
        %981 = vmatpush.xpose.msra.mxu0 0.0
        %982 = vmatpush.xpose.msra.mxu0 0.0
        %983 = vmatpush.xpose.msra.mxu0 0.0
        %984 = vmatpush.xpose.msra.mxu0 %v703
        %985 = vmatmul.f32.gmra.mxu0 %v965
        %v986 = vpop.f32.mrf.mxu0
        %v987 = vadd.f32 %v483, %v986
        %988 = vmatmul.f32.gmra.mxu0 %v967
        %v989 = vpop.f32.mrf.mxu0
        %v990 = vadd.f32 %v486, %v989
        %991 = vdwg.mxu0
        %v993 = vrot.slane %v195, 1
        %v994 = vrot.slane %v196, 1
        %v995 = vsel %vm692, %v993, %v994
        %v996 = vrot.slane %v197, 1
        %v997 = vsel %vm692, %v994, %v996
        %v998 = vsel %vm223, %v995, 0
        %v1000 = vsel %vm223, %v997, 0
        %1002 = vmatpush.xpose.msra.mxu0 0.0
        %1003 = vmatpush.xpose.msra.mxu0 0.0
        %1004 = vmatpush.xpose.msra.mxu0 0.0
        %1005 = vmatpush.xpose.msra.mxu0 0.0
        %1006 = vmatpush.xpose.msra.mxu0 0.0
        %1007 = vmatpush.xpose.msra.mxu0 0.0
        %1008 = vmatpush.xpose.msra.mxu0 0.0
        %1009 = vmatpush.xpose.msra.mxu0 0.0
        %1010 = vmatpush.xpose.msra.mxu0 0.0
        %1011 = vmatpush.xpose.msra.mxu0 0.0
        %1012 = vmatpush.xpose.msra.mxu0 0.0
        %1013 = vmatpush.xpose.msra.mxu0 0.0
        %1014 = vmatpush.xpose.msra.mxu0 0.0
        %1015 = vmatpush.xpose.msra.mxu0 0.0
        %1016 = vmatpush.xpose.msra.mxu0 0.0
        %1017 = vmatpush.xpose.msra.mxu0 %v703
        %1018 = vmatmul.f32.gmra.mxu0 %v998
        %v1019 = vpop.f32.mrf.mxu0
        %v1020 = vadd.f32 %v512, %v1019
        %1021 = vmatmul.f32.gmra.mxu0 %v1000
        %v1022 = vpop.f32.mrf.mxu0
        %v1023 = vadd.f32 %v515, %v1022
        %1024 = vdwg.mxu0
        %v1026 = vrot.slane %v198, 1
        %v1027 = vrot.slane %v199, 1
        %v1028 = vsel %vm692, %v1026, %v1027
        %v1029 = vrot.slane %v200, 1
        %v1030 = vsel %vm692, %v1027, %v1029
        %v1031 = vsel %vm223, %v1028, 0
        %v1033 = vsel %vm223, %v1030, 0
        %1035 = vmatpush.xpose.msra.mxu0 0.0
        %1036 = vmatpush.xpose.msra.mxu0 0.0
        %1037 = vmatpush.xpose.msra.mxu0 0.0
        %1038 = vmatpush.xpose.msra.mxu0 0.0
        %1039 = vmatpush.xpose.msra.mxu0 0.0
        %1040 = vmatpush.xpose.msra.mxu0 0.0
        %1041 = vmatpush.xpose.msra.mxu0 0.0
        %1042 = vmatpush.xpose.msra.mxu0 0.0
        %1043 = vmatpush.xpose.msra.mxu0 0.0
        %1044 = vmatpush.xpose.msra.mxu0 0.0
        %1045 = vmatpush.xpose.msra.mxu0 0.0
        %1046 = vmatpush.xpose.msra.mxu0 0.0
        %1047 = vmatpush.xpose.msra.mxu0 0.0
        %1048 = vmatpush.xpose.msra.mxu0 0.0
        %1049 = vmatpush.xpose.msra.mxu0 0.0
        %1050 = vmatpush.xpose.msra.mxu0 %v703
        %1051 = vmatmul.f32.gmra.mxu0 %v1031
        %v1052 = vpop.f32.mrf.mxu0
        %v1053 = vadd.f32 %v541, %v1052
        %1054 = vmatmul.f32.gmra.mxu0 %v1033
        %v1055 = vpop.f32.mrf.mxu0
        %v1056 = vadd.f32 %v544, %v1055
        %1057 = vdwg.mxu0
        %v1059 = vrot.slane %v201, 1
        %v1060 = vrot.slane %v202, 1
        %v1061 = vsel %vm692, %v1059, %v1060
        %v1062 = vrot.slane %v203, 1
        %v1063 = vsel %vm692, %v1060, %v1062
        %v1064 = vsel %vm223, %v1061, 0
        %v1066 = vsel %vm223, %v1063, 0
        %1068 = vmatpush.xpose.msra.mxu0 0.0
        %1069 = vmatpush.xpose.msra.mxu0 0.0
        %1070 = vmatpush.xpose.msra.mxu0 0.0
        %1071 = vmatpush.xpose.msra.mxu0 0.0
        %1072 = vmatpush.xpose.msra.mxu0 0.0
        %1073 = vmatpush.xpose.msra.mxu0 0.0
        %1074 = vmatpush.xpose.msra.mxu0 0.0
        %1075 = vmatpush.xpose.msra.mxu0 0.0
        %1076 = vmatpush.xpose.msra.mxu0 0.0
        %1077 = vmatpush.xpose.msra.mxu0 0.0
        %1078 = vmatpush.xpose.msra.mxu0 0.0
        %1079 = vmatpush.xpose.msra.mxu0 0.0
        %1080 = vmatpush.xpose.msra.mxu0 0.0
        %1081 = vmatpush.xpose.msra.mxu0 0.0
        %1082 = vmatpush.xpose.msra.mxu0 0.0
        %1083 = vmatpush.xpose.msra.mxu0 %v703
        %1084 = vmatmul.f32.gmra.mxu0 %v1064
        %v1085 = vpop.f32.mrf.mxu0
        %v1086 = vadd.f32 %v570, %v1085
        %1087 = vmatmul.f32.gmra.mxu0 %v1066
        %v1088 = vpop.f32.mrf.mxu0
        %v1089 = vadd.f32 %v573, %v1088
        %1090 = vdwg.mxu0
        %v1092 = vrot.slane %v204, 1
        %v1093 = vrot.slane %v205, 1
        %v1094 = vsel %vm692, %v1092, %v1093
        %v1095 = vrot.slane %v206, 1
        %v1096 = vsel %vm692, %v1093, %v1095
        %v1097 = vsel %vm223, %v1094, 0
        %v1099 = vsel %vm223, %v1096, 0
        %1101 = vmatpush.xpose.msra.mxu0 0.0
        %1102 = vmatpush.xpose.msra.mxu0 0.0
        %1103 = vmatpush.xpose.msra.mxu0 0.0
        %1104 = vmatpush.xpose.msra.mxu0 0.0
        %1105 = vmatpush.xpose.msra.mxu0 0.0
        %1106 = vmatpush.xpose.msra.mxu0 0.0
        %1107 = vmatpush.xpose.msra.mxu0 0.0
        %1108 = vmatpush.xpose.msra.mxu0 0.0
        %1109 = vmatpush.xpose.msra.mxu0 0.0
        %1110 = vmatpush.xpose.msra.mxu0 0.0
        %1111 = vmatpush.xpose.msra.mxu0 0.0
        %1112 = vmatpush.xpose.msra.mxu0 0.0
        %1113 = vmatpush.xpose.msra.mxu0 0.0
        %1114 = vmatpush.xpose.msra.mxu0 0.0
        %1115 = vmatpush.xpose.msra.mxu0 0.0
        %1116 = vmatpush.xpose.msra.mxu0 %v703
        %1117 = vmatmul.f32.gmra.mxu0 %v1097
        %v1118 = vpop.f32.mrf.mxu0
        %v1119 = vadd.f32 %v599, %v1118
        %1120 = vmatmul.f32.gmra.mxu0 %v1099
        %v1121 = vpop.f32.mrf.mxu0
        %v1122 = vadd.f32 %v602, %v1121
        %1123 = vdwg.mxu0
        %v1125 = vrot.slane %v207, 1
        %v1126 = vrot.slane %v208, 1
        %v1127 = vsel %vm692, %v1125, %v1126
        %v1128 = vrot.slane %v209, 1
        %v1129 = vsel %vm692, %v1126, %v1128
        %v1130 = vsel %vm223, %v1127, 0
        %v1132 = vsel %vm223, %v1129, 0
        %1134 = vmatpush.xpose.msra.mxu0 0.0
        %1135 = vmatpush.xpose.msra.mxu0 0.0
        %1136 = vmatpush.xpose.msra.mxu0 0.0
        %1137 = vmatpush.xpose.msra.mxu0 0.0
        %1138 = vmatpush.xpose.msra.mxu0 0.0
        %1139 = vmatpush.xpose.msra.mxu0 0.0
        %1140 = vmatpush.xpose.msra.mxu0 0.0
        %1141 = vmatpush.xpose.msra.mxu0 0.0
        %1142 = vmatpush.xpose.msra.mxu0 0.0
        %1143 = vmatpush.xpose.msra.mxu0 0.0
        %1144 = vmatpush.xpose.msra.mxu0 0.0
        %1145 = vmatpush.xpose.msra.mxu0 0.0
        %1146 = vmatpush.xpose.msra.mxu0 0.0
        %1147 = vmatpush.xpose.msra.mxu0 0.0
        %1148 = vmatpush.xpose.msra.mxu0 0.0
        %1149 = vmatpush.xpose.msra.mxu0 %v703
        %1150 = vmatmul.f32.gmra.mxu0 %v1130
        %v1151 = vpop.f32.mrf.mxu0
        %v1152 = vadd.f32 %v628, %v1151
        %1153 = vmatmul.f32.gmra.mxu0 %v1132
        %v1154 = vpop.f32.mrf.mxu0
        %v1155 = vadd.f32 %v631, %v1154
        %1156 = vdwg.mxu0
        %v1158 = vrot.slane %v210, 1
        %v1159 = vrot.slane %v211, 1
        %v1160 = vsel %vm692, %v1158, %v1159
        %v1161 = vrot.slane %v212, 1
        %v1162 = vsel %vm692, %v1159, %v1161
        %v1163 = vsel %vm223, %v1160, 0
        %v1165 = vsel %vm223, %v1162, 0
        %1167 = vmatpush.xpose.msra.mxu0 0.0
        %1168 = vmatpush.xpose.msra.mxu0 0.0
        %1169 = vmatpush.xpose.msra.mxu0 0.0
        %1170 = vmatpush.xpose.msra.mxu0 0.0
        %1171 = vmatpush.xpose.msra.mxu0 0.0
        %1172 = vmatpush.xpose.msra.mxu0 0.0
        %1173 = vmatpush.xpose.msra.mxu0 0.0
        %1174 = vmatpush.xpose.msra.mxu0 0.0
        %1175 = vmatpush.xpose.msra.mxu0 0.0
        %1176 = vmatpush.xpose.msra.mxu0 0.0
        %1177 = vmatpush.xpose.msra.mxu0 0.0
        %1178 = vmatpush.xpose.msra.mxu0 0.0
        %1179 = vmatpush.xpose.msra.mxu0 0.0
        %1180 = vmatpush.xpose.msra.mxu0 0.0
        %1181 = vmatpush.xpose.msra.mxu0 0.0
        %1182 = vmatpush.xpose.msra.mxu0 %v703
        %1183 = vmatmul.f32.gmra.mxu0 %v1163
        %v1184 = vpop.f32.mrf.mxu0
        %v1185 = vadd.f32 %v657, %v1184
        %1186 = vmatmul.f32.gmra.mxu0 %v1165
        %v1187 = vpop.f32.mrf.mxu0
        %v1188 = vadd.f32 %v660, %v1187
        %1189 = vdwg.mxu0
        %v1191 = vrot.slane %v213, 1
        %v1192 = vrot.slane %v214, 1
        %v1193 = vsel %vm692, %v1191, %v1192
        %v1194 = vrot.slane %v215, 1
        %v1195 = vsel %vm692, %v1192, %v1194
        %v1196 = vsel %vm223, %v1193, 0
        %v1198 = vsel %vm223, %v1195, 0
        %1200 = vmatpush.xpose.msra.mxu0 0.0
        %1201 = vmatpush.xpose.msra.mxu0 0.0
        %1202 = vmatpush.xpose.msra.mxu0 0.0
        %1203 = vmatpush.xpose.msra.mxu0 0.0
        %1204 = vmatpush.xpose.msra.mxu0 0.0
        %1205 = vmatpush.xpose.msra.mxu0 0.0
        %1206 = vmatpush.xpose.msra.mxu0 0.0
        %1207 = vmatpush.xpose.msra.mxu0 0.0
        %1208 = vmatpush.xpose.msra.mxu0 0.0
        %1209 = vmatpush.xpose.msra.mxu0 0.0
        %1210 = vmatpush.xpose.msra.mxu0 0.0
        %1211 = vmatpush.xpose.msra.mxu0 0.0
        %1212 = vmatpush.xpose.msra.mxu0 0.0
        %1213 = vmatpush.xpose.msra.mxu0 0.0
        %1214 = vmatpush.xpose.msra.mxu0 0.0
        %1215 = vmatpush.xpose.msra.mxu0 %v703
        %1216 = vmatmul.f32.gmra.mxu0 %v1196
        %v1217 = vpop.f32.mrf.mxu0
        %v1218 = vadd.f32 %v686, %v1217
        %1219 = vmatmul.f32.gmra.mxu0 %v1198
        %v1220 = vpop.f32.mrf.mxu0
        %v1221 = vadd.f32 %v689, %v1220
        %1222 = vdwg.mxu0
        %s1223 = scalar_lea.vmem %s1, 16
        %v1224 = vld [vmem:[%s1223] sm:$0xff]
        %v1228 = vrot.slane %v165, 1
        %v1229 = vrot.slane %v166, 1
        %v1230 = vsel %vm692, %v1228, %v1229
        %v1231 = vrot.slane %v167, 1
        %v1232 = vsel %vm692, %v1229, %v1231
        %v1233 = vsel %vm223, %v1230, 0
        %v1235 = vsel %vm223, %v1232, 0
        %v1238 = vsel %vm223, %v1224, 0
        %1240 = vmatpush.xpose.msra.mxu0 0.0
        %1241 = vmatpush.xpose.msra.mxu0 0.0
        %1242 = vmatpush.xpose.msra.mxu0 0.0
        %1243 = vmatpush.xpose.msra.mxu0 0.0
        %1244 = vmatpush.xpose.msra.mxu0 0.0
        %1245 = vmatpush.xpose.msra.mxu0 0.0
        %1246 = vmatpush.xpose.msra.mxu0 0.0
        %1247 = vmatpush.xpose.msra.mxu0 0.0
        %1248 = vmatpush.xpose.msra.mxu0 0.0
        %1249 = vmatpush.xpose.msra.mxu0 0.0
        %1250 = vmatpush.xpose.msra.mxu0 0.0
        %1251 = vmatpush.xpose.msra.mxu0 0.0
        %1252 = vmatpush.xpose.msra.mxu0 0.0
        %1253 = vmatpush.xpose.msra.mxu0 0.0
        %1254 = vmatpush.xpose.msra.mxu0 0.0
        %1255 = vmatpush.xpose.msra.mxu0 %v1238
        %1256 = vmatmul.f32.gmra.mxu0 %v1233
        %v1257 = vpop.f32.mrf.mxu0
        %v1258 = vadd.f32 0.0, %v1257
        %1259 = vmatmul.f32.gmra.mxu0 %v1235
        %v1260 = vpop.f32.mrf.mxu0
        %v1261 = vadd.f32 0.0, %v1260
        %1262 = vdwg.mxu0
        %1263 = vmatpush.xpose.msra.mxu0 0.0
        %1264 = vmatpush.xpose.msra.mxu0 0.0
        %1265 = vmatpush.xpose.msra.mxu0 0.0
        %1266 = vmatpush.xpose.msra.mxu0 0.0
        %1267 = vmatpush.xpose.msra.mxu0 0.0
        %1268 = vmatpush.xpose.msra.mxu0 0.0
        %1269 = vmatpush.xpose.msra.mxu0 0.0
        %1270 = vmatpush.xpose.msra.mxu0 0.0
        %1271 = vmatpush.xpose.msra.mxu0 0.0
        %1272 = vmatpush.xpose.msra.mxu0 0.0
        %1273 = vmatpush.xpose.msra.mxu0 0.0
        %1274 = vmatpush.xpose.msra.mxu0 0.0
        %1275 = vmatpush.xpose.msra.mxu0 0.0
        %1276 = vmatpush.xpose.msra.mxu0 0.0
        %1277 = vmatpush.xpose.msra.mxu0 0.0
        %1278 = vmatpush.xpose.msra.mxu0 %v1238
        %1279 = vmatmul.f32.gmra.mxu0 %v698
        %v1280 = vpop.f32.mrf.mxu0
        %v1281 = vadd.f32 0.0, %v1280
        %1282 = vmatmul.f32.gmra.mxu0 %v700
        %v1283 = vpop.f32.mrf.mxu0
        %v1284 = vadd.f32 0.0, %v1283
        %1285 = vdwg.mxu0
        %1286 = vmatpush.xpose.msra.mxu0 0.0
        %1287 = vmatpush.xpose.msra.mxu0 0.0
        %1288 = vmatpush.xpose.msra.mxu0 0.0
        %1289 = vmatpush.xpose.msra.mxu0 0.0
        %1290 = vmatpush.xpose.msra.mxu0 0.0
        %1291 = vmatpush.xpose.msra.mxu0 0.0
        %1292 = vmatpush.xpose.msra.mxu0 0.0
        %1293 = vmatpush.xpose.msra.mxu0 0.0
        %1294 = vmatpush.xpose.msra.mxu0 0.0
        %1295 = vmatpush.xpose.msra.mxu0 0.0
        %1296 = vmatpush.xpose.msra.mxu0 0.0
        %1297 = vmatpush.xpose.msra.mxu0 0.0
        %1298 = vmatpush.xpose.msra.mxu0 0.0
        %1299 = vmatpush.xpose.msra.mxu0 0.0
        %1300 = vmatpush.xpose.msra.mxu0 0.0
        %1301 = vmatpush.xpose.msra.mxu0 %v1238
        %1302 = vmatmul.f32.gmra.mxu0 %v734
        %v1303 = vpop.f32.mrf.mxu0
        %v1304 = vadd.f32 0.0, %v1303
        %1305 = vmatmul.f32.gmra.mxu0 %v736
        %v1306 = vpop.f32.mrf.mxu0
        %v1307 = vadd.f32 0.0, %v1306
        %1308 = vdwg.mxu0
        %1309 = vmatpush.xpose.msra.mxu0 0.0
        %1310 = vmatpush.xpose.msra.mxu0 0.0
        %1311 = vmatpush.xpose.msra.mxu0 0.0
        %1312 = vmatpush.xpose.msra.mxu0 0.0
        %1313 = vmatpush.xpose.msra.mxu0 0.0
        %1314 = vmatpush.xpose.msra.mxu0 0.0
        %1315 = vmatpush.xpose.msra.mxu0 0.0
        %1316 = vmatpush.xpose.msra.mxu0 0.0
        %1317 = vmatpush.xpose.msra.mxu0 0.0
        %1318 = vmatpush.xpose.msra.mxu0 0.0
        %1319 = vmatpush.xpose.msra.mxu0 0.0
        %1320 = vmatpush.xpose.msra.mxu0 0.0
        %1321 = vmatpush.xpose.msra.mxu0 0.0
        %1322 = vmatpush.xpose.msra.mxu0 0.0
        %1323 = vmatpush.xpose.msra.mxu0 0.0
        %1324 = vmatpush.xpose.msra.mxu0 %v1238
        %1325 = vmatmul.f32.gmra.mxu0 %v767
        %v1326 = vpop.f32.mrf.mxu0
        %v1327 = vadd.f32 0.0, %v1326
        %1328 = vmatmul.f32.gmra.mxu0 %v769
        %v1329 = vpop.f32.mrf.mxu0
        %v1330 = vadd.f32 0.0, %v1329
        %1331 = vdwg.mxu0
        %1332 = vmatpush.xpose.msra.mxu0 0.0
        %1333 = vmatpush.xpose.msra.mxu0 0.0
        %1334 = vmatpush.xpose.msra.mxu0 0.0
        %1335 = vmatpush.xpose.msra.mxu0 0.0
        %1336 = vmatpush.xpose.msra.mxu0 0.0
        %1337 = vmatpush.xpose.msra.mxu0 0.0
        %1338 = vmatpush.xpose.msra.mxu0 0.0
        %1339 = vmatpush.xpose.msra.mxu0 0.0
        %1340 = vmatpush.xpose.msra.mxu0 0.0
        %1341 = vmatpush.xpose.msra.mxu0 0.0
        %1342 = vmatpush.xpose.msra.mxu0 0.0
        %1343 = vmatpush.xpose.msra.mxu0 0.0
        %1344 = vmatpush.xpose.msra.mxu0 0.0
        %1345 = vmatpush.xpose.msra.mxu0 0.0
        %1346 = vmatpush.xpose.msra.mxu0 0.0
        %1347 = vmatpush.xpose.msra.mxu0 %v1238
        %1348 = vmatmul.f32.gmra.mxu0 %v800
        %v1349 = vpop.f32.mrf.mxu0
        %v1350 = vadd.f32 0.0, %v1349
        %1351 = vmatmul.f32.gmra.mxu0 %v802
        %v1352 = vpop.f32.mrf.mxu0
        %v1353 = vadd.f32 0.0, %v1352
        %1354 = vdwg.mxu0
        %1355 = vmatpush.xpose.msra.mxu0 0.0
        %1356 = vmatpush.xpose.msra.mxu0 0.0
        %1357 = vmatpush.xpose.msra.mxu0 0.0
        %1358 = vmatpush.xpose.msra.mxu0 0.0
        %1359 = vmatpush.xpose.msra.mxu0 0.0
        %1360 = vmatpush.xpose.msra.mxu0 0.0
        %1361 = vmatpush.xpose.msra.mxu0 0.0
        %1362 = vmatpush.xpose.msra.mxu0 0.0
        %1363 = vmatpush.xpose.msra.mxu0 0.0
        %1364 = vmatpush.xpose.msra.mxu0 0.0
        %1365 = vmatpush.xpose.msra.mxu0 0.0
        %1366 = vmatpush.xpose.msra.mxu0 0.0
        %1367 = vmatpush.xpose.msra.mxu0 0.0
        %1368 = vmatpush.xpose.msra.mxu0 0.0
        %1369 = vmatpush.xpose.msra.mxu0 0.0
        %1370 = vmatpush.xpose.msra.mxu0 %v1238
        %1371 = vmatmul.f32.gmra.mxu0 %v833
        %v1372 = vpop.f32.mrf.mxu0
        %v1373 = vadd.f32 0.0, %v1372
        %1374 = vmatmul.f32.gmra.mxu0 %v835
        %v1375 = vpop.f32.mrf.mxu0
        %v1376 = vadd.f32 0.0, %v1375
        %1377 = vdwg.mxu0
        %1378 = vmatpush.xpose.msra.mxu0 0.0
        %1379 = vmatpush.xpose.msra.mxu0 0.0
        %1380 = vmatpush.xpose.msra.mxu0 0.0
        %1381 = vmatpush.xpose.msra.mxu0 0.0
        %1382 = vmatpush.xpose.msra.mxu0 0.0
        %1383 = vmatpush.xpose.msra.mxu0 0.0
        %1384 = vmatpush.xpose.msra.mxu0 0.0
        %1385 = vmatpush.xpose.msra.mxu0 0.0
        %1386 = vmatpush.xpose.msra.mxu0 0.0
        %1387 = vmatpush.xpose.msra.mxu0 0.0
        %1388 = vmatpush.xpose.msra.mxu0 0.0
        %1389 = vmatpush.xpose.msra.mxu0 0.0
        %1390 = vmatpush.xpose.msra.mxu0 0.0
        %1391 = vmatpush.xpose.msra.mxu0 0.0
        %1392 = vmatpush.xpose.msra.mxu0 0.0
        %1393 = vmatpush.xpose.msra.mxu0 %v1238
        %1394 = vmatmul.f32.gmra.mxu0 %v866
        %v1395 = vpop.f32.mrf.mxu0
        %v1396 = vadd.f32 0.0, %v1395
        %1397 = vmatmul.f32.gmra.mxu0 %v868
        %v1398 = vpop.f32.mrf.mxu0
        %v1399 = vadd.f32 0.0, %v1398
        %1400 = vdwg.mxu0
        %1401 = vmatpush.xpose.msra.mxu0 0.0
        %1402 = vmatpush.xpose.msra.mxu0 0.0
        %1403 = vmatpush.xpose.msra.mxu0 0.0
        %1404 = vmatpush.xpose.msra.mxu0 0.0
        %1405 = vmatpush.xpose.msra.mxu0 0.0
        %1406 = vmatpush.xpose.msra.mxu0 0.0
        %1407 = vmatpush.xpose.msra.mxu0 0.0
        %1408 = vmatpush.xpose.msra.mxu0 0.0
        %1409 = vmatpush.xpose.msra.mxu0 0.0
        %1410 = vmatpush.xpose.msra.mxu0 0.0
        %1411 = vmatpush.xpose.msra.mxu0 0.0
        %1412 = vmatpush.xpose.msra.mxu0 0.0
        %1413 = vmatpush.xpose.msra.mxu0 0.0
        %1414 = vmatpush.xpose.msra.mxu0 0.0
        %1415 = vmatpush.xpose.msra.mxu0 0.0
        %1416 = vmatpush.xpose.msra.mxu0 %v1238
        %1417 = vmatmul.f32.gmra.mxu0 %v899
        %v1418 = vpop.f32.mrf.mxu0
        %v1419 = vadd.f32 0.0, %v1418
        %1420 = vmatmul.f32.gmra.mxu0 %v901
        %v1421 = vpop.f32.mrf.mxu0
        %v1422 = vadd.f32 0.0, %v1421
        %1423 = vdwg.mxu0
        %1424 = vmatpush.xpose.msra.mxu0 0.0
        %1425 = vmatpush.xpose.msra.mxu0 0.0
        %1426 = vmatpush.xpose.msra.mxu0 0.0
        %1427 = vmatpush.xpose.msra.mxu0 0.0
        %1428 = vmatpush.xpose.msra.mxu0 0.0
        %1429 = vmatpush.xpose.msra.mxu0 0.0
        %1430 = vmatpush.xpose.msra.mxu0 0.0
        %1431 = vmatpush.xpose.msra.mxu0 0.0
        %1432 = vmatpush.xpose.msra.mxu0 0.0
        %1433 = vmatpush.xpose.msra.mxu0 0.0
        %1434 = vmatpush.xpose.msra.mxu0 0.0
        %1435 = vmatpush.xpose.msra.mxu0 0.0
        %1436 = vmatpush.xpose.msra.mxu0 0.0
        %1437 = vmatpush.xpose.msra.mxu0 0.0
        %1438 = vmatpush.xpose.msra.mxu0 0.0
        %1439 = vmatpush.xpose.msra.mxu0 %v1238
        %1440 = vmatmul.f32.gmra.mxu0 %v932
        %v1441 = vpop.f32.mrf.mxu0
        %v1442 = vadd.f32 0.0, %v1441
        %1443 = vmatmul.f32.gmra.mxu0 %v934
        %v1444 = vpop.f32.mrf.mxu0
        %v1445 = vadd.f32 0.0, %v1444
        %1446 = vdwg.mxu0
        %1447 = vmatpush.xpose.msra.mxu0 0.0
        %1448 = vmatpush.xpose.msra.mxu0 0.0
        %1449 = vmatpush.xpose.msra.mxu0 0.0
        %1450 = vmatpush.xpose.msra.mxu0 0.0
        %1451 = vmatpush.xpose.msra.mxu0 0.0
        %1452 = vmatpush.xpose.msra.mxu0 0.0
        %1453 = vmatpush.xpose.msra.mxu0 0.0
        %1454 = vmatpush.xpose.msra.mxu0 0.0
        %1455 = vmatpush.xpose.msra.mxu0 0.0
        %1456 = vmatpush.xpose.msra.mxu0 0.0
        %1457 = vmatpush.xpose.msra.mxu0 0.0
        %1458 = vmatpush.xpose.msra.mxu0 0.0
        %1459 = vmatpush.xpose.msra.mxu0 0.0
        %1460 = vmatpush.xpose.msra.mxu0 0.0
        %1461 = vmatpush.xpose.msra.mxu0 0.0
        %1462 = vmatpush.xpose.msra.mxu0 %v1238
        %1463 = vmatmul.f32.gmra.mxu0 %v965
        %v1464 = vpop.f32.mrf.mxu0
        %v1465 = vadd.f32 0.0, %v1464
        %1466 = vmatmul.f32.gmra.mxu0 %v967
        %v1467 = vpop.f32.mrf.mxu0
        %v1468 = vadd.f32 0.0, %v1467
        %1469 = vdwg.mxu0
        %1470 = vmatpush.xpose.msra.mxu0 0.0
        %1471 = vmatpush.xpose.msra.mxu0 0.0
        %1472 = vmatpush.xpose.msra.mxu0 0.0
        %1473 = vmatpush.xpose.msra.mxu0 0.0
        %1474 = vmatpush.xpose.msra.mxu0 0.0
        %1475 = vmatpush.xpose.msra.mxu0 0.0
        %1476 = vmatpush.xpose.msra.mxu0 0.0
        %1477 = vmatpush.xpose.msra.mxu0 0.0
        %1478 = vmatpush.xpose.msra.mxu0 0.0
        %1479 = vmatpush.xpose.msra.mxu0 0.0
        %1480 = vmatpush.xpose.msra.mxu0 0.0
        %1481 = vmatpush.xpose.msra.mxu0 0.0
        %1482 = vmatpush.xpose.msra.mxu0 0.0
        %1483 = vmatpush.xpose.msra.mxu0 0.0
        %1484 = vmatpush.xpose.msra.mxu0 0.0
        %1485 = vmatpush.xpose.msra.mxu0 %v1238
        %1486 = vmatmul.f32.gmra.mxu0 %v998
        %v1487 = vpop.f32.mrf.mxu0
        %v1488 = vadd.f32 0.0, %v1487
        %1489 = vmatmul.f32.gmra.mxu0 %v1000
        %v1490 = vpop.f32.mrf.mxu0
        %v1491 = vadd.f32 0.0, %v1490
        %1492 = vdwg.mxu0
        %1493 = vmatpush.xpose.msra.mxu0 0.0
        %1494 = vmatpush.xpose.msra.mxu0 0.0
        %1495 = vmatpush.xpose.msra.mxu0 0.0
        %1496 = vmatpush.xpose.msra.mxu0 0.0
        %1497 = vmatpush.xpose.msra.mxu0 0.0
        %1498 = vmatpush.xpose.msra.mxu0 0.0
        %1499 = vmatpush.xpose.msra.mxu0 0.0
        %1500 = vmatpush.xpose.msra.mxu0 0.0
        %1501 = vmatpush.xpose.msra.mxu0 0.0
        %1502 = vmatpush.xpose.msra.mxu0 0.0
        %1503 = vmatpush.xpose.msra.mxu0 0.0
        %1504 = vmatpush.xpose.msra.mxu0 0.0
        %1505 = vmatpush.xpose.msra.mxu0 0.0
        %1506 = vmatpush.xpose.msra.mxu0 0.0
        %1507 = vmatpush.xpose.msra.mxu0 0.0
        %1508 = vmatpush.xpose.msra.mxu0 %v1238
        %1509 = vmatmul.f32.gmra.mxu0 %v1031
        %v1510 = vpop.f32.mrf.mxu0
        %v1511 = vadd.f32 0.0, %v1510
        %1512 = vmatmul.f32.gmra.mxu0 %v1033
        %v1513 = vpop.f32.mrf.mxu0
        %v1514 = vadd.f32 0.0, %v1513
        %1515 = vdwg.mxu0
        %1516 = vmatpush.xpose.msra.mxu0 0.0
        %1517 = vmatpush.xpose.msra.mxu0 0.0
        %1518 = vmatpush.xpose.msra.mxu0 0.0
        %1519 = vmatpush.xpose.msra.mxu0 0.0
        %1520 = vmatpush.xpose.msra.mxu0 0.0
        %1521 = vmatpush.xpose.msra.mxu0 0.0
        %1522 = vmatpush.xpose.msra.mxu0 0.0
        %1523 = vmatpush.xpose.msra.mxu0 0.0
        %1524 = vmatpush.xpose.msra.mxu0 0.0
        %1525 = vmatpush.xpose.msra.mxu0 0.0
        %1526 = vmatpush.xpose.msra.mxu0 0.0
        %1527 = vmatpush.xpose.msra.mxu0 0.0
        %1528 = vmatpush.xpose.msra.mxu0 0.0
        %1529 = vmatpush.xpose.msra.mxu0 0.0
        %1530 = vmatpush.xpose.msra.mxu0 0.0
        %1531 = vmatpush.xpose.msra.mxu0 %v1238
        %1532 = vmatmul.f32.gmra.mxu0 %v1064
        %v1533 = vpop.f32.mrf.mxu0
        %v1534 = vadd.f32 0.0, %v1533
        %1535 = vmatmul.f32.gmra.mxu0 %v1066
        %v1536 = vpop.f32.mrf.mxu0
        %v1537 = vadd.f32 0.0, %v1536
        %1538 = vdwg.mxu0
        %1539 = vmatpush.xpose.msra.mxu0 0.0
        %1540 = vmatpush.xpose.msra.mxu0 0.0
        %1541 = vmatpush.xpose.msra.mxu0 0.0
        %1542 = vmatpush.xpose.msra.mxu0 0.0
        %1543 = vmatpush.xpose.msra.mxu0 0.0
        %1544 = vmatpush.xpose.msra.mxu0 0.0
        %1545 = vmatpush.xpose.msra.mxu0 0.0
        %1546 = vmatpush.xpose.msra.mxu0 0.0
        %1547 = vmatpush.xpose.msra.mxu0 0.0
        %1548 = vmatpush.xpose.msra.mxu0 0.0
        %1549 = vmatpush.xpose.msra.mxu0 0.0
        %1550 = vmatpush.xpose.msra.mxu0 0.0
        %1551 = vmatpush.xpose.msra.mxu0 0.0
        %1552 = vmatpush.xpose.msra.mxu0 0.0
        %1553 = vmatpush.xpose.msra.mxu0 0.0
        %1554 = vmatpush.xpose.msra.mxu0 %v1238
        %1555 = vmatmul.f32.gmra.mxu0 %v1097
        %v1556 = vpop.f32.mrf.mxu0
        %v1557 = vadd.f32 0.0, %v1556
        %1558 = vmatmul.f32.gmra.mxu0 %v1099
        %v1559 = vpop.f32.mrf.mxu0
        %v1560 = vadd.f32 0.0, %v1559
        %1561 = vdwg.mxu0
        %1562 = vmatpush.xpose.msra.mxu0 0.0
        %1563 = vmatpush.xpose.msra.mxu0 0.0
        %1564 = vmatpush.xpose.msra.mxu0 0.0
        %1565 = vmatpush.xpose.msra.mxu0 0.0
        %1566 = vmatpush.xpose.msra.mxu0 0.0
        %1567 = vmatpush.xpose.msra.mxu0 0.0
        %1568 = vmatpush.xpose.msra.mxu0 0.0
        %1569 = vmatpush.xpose.msra.mxu0 0.0
        %1570 = vmatpush.xpose.msra.mxu0 0.0
        %1571 = vmatpush.xpose.msra.mxu0 0.0
        %1572 = vmatpush.xpose.msra.mxu0 0.0
        %1573 = vmatpush.xpose.msra.mxu0 0.0
        %1574 = vmatpush.xpose.msra.mxu0 0.0
        %1575 = vmatpush.xpose.msra.mxu0 0.0
        %1576 = vmatpush.xpose.msra.mxu0 0.0
        %1577 = vmatpush.xpose.msra.mxu0 %v1238
        %1578 = vmatmul.f32.gmra.mxu0 %v1130
        %v1579 = vpop.f32.mrf.mxu0
        %v1580 = vadd.f32 0.0, %v1579
        %1581 = vmatmul.f32.gmra.mxu0 %v1132
        %v1582 = vpop.f32.mrf.mxu0
        %v1583 = vadd.f32 0.0, %v1582
        %1584 = vdwg.mxu0
        %1585 = vmatpush.xpose.msra.mxu0 0.0
        %1586 = vmatpush.xpose.msra.mxu0 0.0
        %1587 = vmatpush.xpose.msra.mxu0 0.0
        %1588 = vmatpush.xpose.msra.mxu0 0.0
        %1589 = vmatpush.xpose.msra.mxu0 0.0
        %1590 = vmatpush.xpose.msra.mxu0 0.0
        %1591 = vmatpush.xpose.msra.mxu0 0.0
        %1592 = vmatpush.xpose.msra.mxu0 0.0
        %1593 = vmatpush.xpose.msra.mxu0 0.0
        %1594 = vmatpush.xpose.msra.mxu0 0.0
        %1595 = vmatpush.xpose.msra.mxu0 0.0
        %1596 = vmatpush.xpose.msra.mxu0 0.0
        %1597 = vmatpush.xpose.msra.mxu0 0.0
        %1598 = vmatpush.xpose.msra.mxu0 0.0
        %1599 = vmatpush.xpose.msra.mxu0 0.0
        %1600 = vmatpush.xpose.msra.mxu0 %v1238
        %1601 = vmatmul.f32.gmra.mxu0 %v1163
        %v1602 = vpop.f32.mrf.mxu0
        %v1603 = vadd.f32 0.0, %v1602
        %1604 = vmatmul.f32.gmra.mxu0 %v1165
        %v1605 = vpop.f32.mrf.mxu0
        %v1606 = vadd.f32 0.0, %v1605
        %1607 = vdwg.mxu0
        %v1608 = vadd.f32 %v723, %v1258
        %v1609 = vadd.f32 %v726, %v1261
        %v1610 = vadd.f32 %v756, %v1281
        %v1611 = vadd.f32 %v759, %v1284
        %v1612 = vadd.f32 %v789, %v1304
        %v1613 = vadd.f32 %v792, %v1307
        %v1614 = vadd.f32 %v822, %v1327
        %v1615 = vadd.f32 %v825, %v1330
        %v1616 = vadd.f32 %v855, %v1350
        %v1617 = vadd.f32 %v858, %v1353
        %v1618 = vadd.f32 %v888, %v1373
        %v1619 = vadd.f32 %v891, %v1376
        %v1620 = vadd.f32 %v921, %v1396
        %v1621 = vadd.f32 %v924, %v1399
        %v1622 = vadd.f32 %v954, %v1419
        %v1623 = vadd.f32 %v957, %v1422
        %v1624 = vadd.f32 %v987, %v1442
        %v1625 = vadd.f32 %v990, %v1445
        %v1626 = vadd.f32 %v1020, %v1465
        %v1627 = vadd.f32 %v1023, %v1468
        %v1628 = vadd.f32 %v1053, %v1488
        %v1629 = vadd.f32 %v1056, %v1491
        %v1630 = vadd.f32 %v1086, %v1511
        %v1631 = vadd.f32 %v1089, %v1514
        %v1632 = vadd.f32 %v1119, %v1534
        %v1633 = vadd.f32 %v1122, %v1537
        %v1634 = vadd.f32 %v1152, %v1557
        %v1635 = vadd.f32 %v1155, %v1560
        %v1636 = vadd.f32 %v1185, %v1580
        %v1637 = vadd.f32 %v1188, %v1583
        %v1638 = vadd.f32 %v1218, %v1603
        %v1639 = vadd.f32 %v1221, %v1606
        %s1640 = scalar_lea.vmem %s1, 24
        %v1641 = vld [vmem:[%s1640] sm:$0xff]
        %v1642 = vsel %vm223, %v165, 0
        %v1644 = vsel %vm223, %v166, 0
        %v1647 = vsel %vm223, %v1641, 0
        %1649 = vmatpush.xpose.msra.mxu0 0.0
        %1650 = vmatpush.xpose.msra.mxu0 0.0
        %1651 = vmatpush.xpose.msra.mxu0 0.0
        %1652 = vmatpush.xpose.msra.mxu0 0.0
        %1653 = vmatpush.xpose.msra.mxu0 0.0
        %1654 = vmatpush.xpose.msra.mxu0 0.0
        %1655 = vmatpush.xpose.msra.mxu0 0.0
        %1656 = vmatpush.xpose.msra.mxu0 0.0
        %1657 = vmatpush.xpose.msra.mxu0 0.0
        %1658 = vmatpush.xpose.msra.mxu0 0.0
        %1659 = vmatpush.xpose.msra.mxu0 0.0
        %1660 = vmatpush.xpose.msra.mxu0 0.0
        %1661 = vmatpush.xpose.msra.mxu0 0.0
        %1662 = vmatpush.xpose.msra.mxu0 0.0
        %1663 = vmatpush.xpose.msra.mxu0 0.0
        %1664 = vmatpush.xpose.msra.mxu0 %v1647
        %1665 = vmatmul.f32.gmra.mxu0 %v1642
        %v1666 = vpop.f32.mrf.mxu0
        %v1667 = vadd.f32 0.0, %v1666
        %1668 = vmatmul.f32.gmra.mxu0 %v1644
        %v1669 = vpop.f32.mrf.mxu0
        %v1670 = vadd.f32 0.0, %v1669
        %1671 = vdwg.mxu0
        %1672 = vmatpush.xpose.msra.mxu0 0.0
        %1673 = vmatpush.xpose.msra.mxu0 0.0
        %1674 = vmatpush.xpose.msra.mxu0 0.0
        %1675 = vmatpush.xpose.msra.mxu0 0.0
        %1676 = vmatpush.xpose.msra.mxu0 0.0
        %1677 = vmatpush.xpose.msra.mxu0 0.0
        %1678 = vmatpush.xpose.msra.mxu0 0.0
        %1679 = vmatpush.xpose.msra.mxu0 0.0
        %1680 = vmatpush.xpose.msra.mxu0 0.0
        %1681 = vmatpush.xpose.msra.mxu0 0.0
        %1682 = vmatpush.xpose.msra.mxu0 0.0
        %1683 = vmatpush.xpose.msra.mxu0 0.0
        %1684 = vmatpush.xpose.msra.mxu0 0.0
        %1685 = vmatpush.xpose.msra.mxu0 0.0
        %1686 = vmatpush.xpose.msra.mxu0 0.0
        %1687 = vmatpush.xpose.msra.mxu0 %v1647
        %1688 = vmatmul.f32.gmra.mxu0 %v225
        %v1689 = vpop.f32.mrf.mxu0
        %v1690 = vadd.f32 0.0, %v1689
        %1691 = vmatmul.f32.gmra.mxu0 %v228
        %v1692 = vpop.f32.mrf.mxu0
        %v1693 = vadd.f32 0.0, %v1692
        %1694 = vdwg.mxu0
        %1695 = vmatpush.xpose.msra.mxu0 0.0
        %1696 = vmatpush.xpose.msra.mxu0 0.0
        %1697 = vmatpush.xpose.msra.mxu0 0.0
        %1698 = vmatpush.xpose.msra.mxu0 0.0
        %1699 = vmatpush.xpose.msra.mxu0 0.0
        %1700 = vmatpush.xpose.msra.mxu0 0.0
        %1701 = vmatpush.xpose.msra.mxu0 0.0
        %1702 = vmatpush.xpose.msra.mxu0 0.0
        %1703 = vmatpush.xpose.msra.mxu0 0.0
        %1704 = vmatpush.xpose.msra.mxu0 0.0
        %1705 = vmatpush.xpose.msra.mxu0 0.0
        %1706 = vmatpush.xpose.msra.mxu0 0.0
        %1707 = vmatpush.xpose.msra.mxu0 0.0
        %1708 = vmatpush.xpose.msra.mxu0 0.0
        %1709 = vmatpush.xpose.msra.mxu0 0.0
        %1710 = vmatpush.xpose.msra.mxu0 %v1647
        %1711 = vmatmul.f32.gmra.mxu0 %v257
        %v1712 = vpop.f32.mrf.mxu0
        %v1713 = vadd.f32 0.0, %v1712
        %1714 = vmatmul.f32.gmra.mxu0 %v260
        %v1715 = vpop.f32.mrf.mxu0
        %v1716 = vadd.f32 0.0, %v1715
        %1717 = vdwg.mxu0
        %1718 = vmatpush.xpose.msra.mxu0 0.0
        %1719 = vmatpush.xpose.msra.mxu0 0.0
        %1720 = vmatpush.xpose.msra.mxu0 0.0
        %1721 = vmatpush.xpose.msra.mxu0 0.0
        %1722 = vmatpush.xpose.msra.mxu0 0.0
        %1723 = vmatpush.xpose.msra.mxu0 0.0
        %1724 = vmatpush.xpose.msra.mxu0 0.0
        %1725 = vmatpush.xpose.msra.mxu0 0.0
        %1726 = vmatpush.xpose.msra.mxu0 0.0
        %1727 = vmatpush.xpose.msra.mxu0 0.0
        %1728 = vmatpush.xpose.msra.mxu0 0.0
        %1729 = vmatpush.xpose.msra.mxu0 0.0
        %1730 = vmatpush.xpose.msra.mxu0 0.0
        %1731 = vmatpush.xpose.msra.mxu0 0.0
        %1732 = vmatpush.xpose.msra.mxu0 0.0
        %1733 = vmatpush.xpose.msra.mxu0 %v1647
        %1734 = vmatmul.f32.gmra.mxu0 %v286
        %v1735 = vpop.f32.mrf.mxu0
        %v1736 = vadd.f32 0.0, %v1735
        %1737 = vmatmul.f32.gmra.mxu0 %v289
        %v1738 = vpop.f32.mrf.mxu0
        %v1739 = vadd.f32 0.0, %v1738
        %1740 = vdwg.mxu0
        %1741 = vmatpush.xpose.msra.mxu0 0.0
        %1742 = vmatpush.xpose.msra.mxu0 0.0
        %1743 = vmatpush.xpose.msra.mxu0 0.0
        %1744 = vmatpush.xpose.msra.mxu0 0.0
        %1745 = vmatpush.xpose.msra.mxu0 0.0
        %1746 = vmatpush.xpose.msra.mxu0 0.0
        %1747 = vmatpush.xpose.msra.mxu0 0.0
        %1748 = vmatpush.xpose.msra.mxu0 0.0
        %1749 = vmatpush.xpose.msra.mxu0 0.0
        %1750 = vmatpush.xpose.msra.mxu0 0.0
        %1751 = vmatpush.xpose.msra.mxu0 0.0
        %1752 = vmatpush.xpose.msra.mxu0 0.0
        %1753 = vmatpush.xpose.msra.mxu0 0.0
        %1754 = vmatpush.xpose.msra.mxu0 0.0
        %1755 = vmatpush.xpose.msra.mxu0 0.0
        %1756 = vmatpush.xpose.msra.mxu0 %v1647
        %1757 = vmatmul.f32.gmra.mxu0 %v315
        %v1758 = vpop.f32.mrf.mxu0
        %v1759 = vadd.f32 0.0, %v1758
        %1760 = vmatmul.f32.gmra.mxu0 %v318
        %v1761 = vpop.f32.mrf.mxu0
        %v1762 = vadd.f32 0.0, %v1761
        %1763 = vdwg.mxu0
        %1764 = vmatpush.xpose.msra.mxu0 0.0
        %1765 = vmatpush.xpose.msra.mxu0 0.0
        %1766 = vmatpush.xpose.msra.mxu0 0.0
        %1767 = vmatpush.xpose.msra.mxu0 0.0
        %1768 = vmatpush.xpose.msra.mxu0 0.0
        %1769 = vmatpush.xpose.msra.mxu0 0.0
        %1770 = vmatpush.xpose.msra.mxu0 0.0
        %1771 = vmatpush.xpose.msra.mxu0 0.0
        %1772 = vmatpush.xpose.msra.mxu0 0.0
        %1773 = vmatpush.xpose.msra.mxu0 0.0
        %1774 = vmatpush.xpose.msra.mxu0 0.0
        %1775 = vmatpush.xpose.msra.mxu0 0.0
        %1776 = vmatpush.xpose.msra.mxu0 0.0
        %1777 = vmatpush.xpose.msra.mxu0 0.0
        %1778 = vmatpush.xpose.msra.mxu0 0.0
        %1779 = vmatpush.xpose.msra.mxu0 %v1647
        %1780 = vmatmul.f32.gmra.mxu0 %v344
        %v1781 = vpop.f32.mrf.mxu0
        %v1782 = vadd.f32 0.0, %v1781
        %1783 = vmatmul.f32.gmra.mxu0 %v347
        %v1784 = vpop.f32.mrf.mxu0
        %v1785 = vadd.f32 0.0, %v1784
        %1786 = vdwg.mxu0
        %1787 = vmatpush.xpose.msra.mxu0 0.0
        %1788 = vmatpush.xpose.msra.mxu0 0.0
        %1789 = vmatpush.xpose.msra.mxu0 0.0
        %1790 = vmatpush.xpose.msra.mxu0 0.0
        %1791 = vmatpush.xpose.msra.mxu0 0.0
        %1792 = vmatpush.xpose.msra.mxu0 0.0
        %1793 = vmatpush.xpose.msra.mxu0 0.0
        %1794 = vmatpush.xpose.msra.mxu0 0.0
        %1795 = vmatpush.xpose.msra.mxu0 0.0
        %1796 = vmatpush.xpose.msra.mxu0 0.0
        %1797 = vmatpush.xpose.msra.mxu0 0.0
        %1798 = vmatpush.xpose.msra.mxu0 0.0
        %1799 = vmatpush.xpose.msra.mxu0 0.0
        %1800 = vmatpush.xpose.msra.mxu0 0.0
        %1801 = vmatpush.xpose.msra.mxu0 0.0
        %1802 = vmatpush.xpose.msra.mxu0 %v1647
        %1803 = vmatmul.f32.gmra.mxu0 %v373
        %v1804 = vpop.f32.mrf.mxu0
        %v1805 = vadd.f32 0.0, %v1804
        %1806 = vmatmul.f32.gmra.mxu0 %v376
        %v1807 = vpop.f32.mrf.mxu0
        %v1808 = vadd.f32 0.0, %v1807
        %1809 = vdwg.mxu0
        %1810 = vmatpush.xpose.msra.mxu0 0.0
        %1811 = vmatpush.xpose.msra.mxu0 0.0
        %1812 = vmatpush.xpose.msra.mxu0 0.0
        %1813 = vmatpush.xpose.msra.mxu0 0.0
        %1814 = vmatpush.xpose.msra.mxu0 0.0
        %1815 = vmatpush.xpose.msra.mxu0 0.0
        %1816 = vmatpush.xpose.msra.mxu0 0.0
        %1817 = vmatpush.xpose.msra.mxu0 0.0
        %1818 = vmatpush.xpose.msra.mxu0 0.0
        %1819 = vmatpush.xpose.msra.mxu0 0.0
        %1820 = vmatpush.xpose.msra.mxu0 0.0
        %1821 = vmatpush.xpose.msra.mxu0 0.0
        %1822 = vmatpush.xpose.msra.mxu0 0.0
        %1823 = vmatpush.xpose.msra.mxu0 0.0
        %1824 = vmatpush.xpose.msra.mxu0 0.0
        %1825 = vmatpush.xpose.msra.mxu0 %v1647
        %1826 = vmatmul.f32.gmra.mxu0 %v402
        %v1827 = vpop.f32.mrf.mxu0
        %v1828 = vadd.f32 0.0, %v1827
        %1829 = vmatmul.f32.gmra.mxu0 %v405
        %v1830 = vpop.f32.mrf.mxu0
        %v1831 = vadd.f32 0.0, %v1830
        %1832 = vdwg.mxu0
        %1833 = vmatpush.xpose.msra.mxu0 0.0
        %1834 = vmatpush.xpose.msra.mxu0 0.0
        %1835 = vmatpush.xpose.msra.mxu0 0.0
        %1836 = vmatpush.xpose.msra.mxu0 0.0
        %1837 = vmatpush.xpose.msra.mxu0 0.0
        %1838 = vmatpush.xpose.msra.mxu0 0.0
        %1839 = vmatpush.xpose.msra.mxu0 0.0
        %1840 = vmatpush.xpose.msra.mxu0 0.0
        %1841 = vmatpush.xpose.msra.mxu0 0.0
        %1842 = vmatpush.xpose.msra.mxu0 0.0
        %1843 = vmatpush.xpose.msra.mxu0 0.0
        %1844 = vmatpush.xpose.msra.mxu0 0.0
        %1845 = vmatpush.xpose.msra.mxu0 0.0
        %1846 = vmatpush.xpose.msra.mxu0 0.0
        %1847 = vmatpush.xpose.msra.mxu0 0.0
        %1848 = vmatpush.xpose.msra.mxu0 %v1647
        %1849 = vmatmul.f32.gmra.mxu0 %v431
        %v1850 = vpop.f32.mrf.mxu0
        %v1851 = vadd.f32 0.0, %v1850
        %1852 = vmatmul.f32.gmra.mxu0 %v434
        %v1853 = vpop.f32.mrf.mxu0
        %v1854 = vadd.f32 0.0, %v1853
        %1855 = vdwg.mxu0
        %1856 = vmatpush.xpose.msra.mxu0 0.0
        %1857 = vmatpush.xpose.msra.mxu0 0.0
        %1858 = vmatpush.xpose.msra.mxu0 0.0
        %1859 = vmatpush.xpose.msra.mxu0 0.0
        %1860 = vmatpush.xpose.msra.mxu0 0.0
        %1861 = vmatpush.xpose.msra.mxu0 0.0
        %1862 = vmatpush.xpose.msra.mxu0 0.0
        %1863 = vmatpush.xpose.msra.mxu0 0.0
        %1864 = vmatpush.xpose.msra.mxu0 0.0
        %1865 = vmatpush.xpose.msra.mxu0 0.0
        %1866 = vmatpush.xpose.msra.mxu0 0.0
        %1867 = vmatpush.xpose.msra.mxu0 0.0
        %1868 = vmatpush.xpose.msra.mxu0 0.0
        %1869 = vmatpush.xpose.msra.mxu0 0.0
        %1870 = vmatpush.xpose.msra.mxu0 0.0
        %1871 = vmatpush.xpose.msra.mxu0 %v1647
        %1872 = vmatmul.f32.gmra.mxu0 %v460
        %v1873 = vpop.f32.mrf.mxu0
        %v1874 = vadd.f32 0.0, %v1873
        %1875 = vmatmul.f32.gmra.mxu0 %v463
        %v1876 = vpop.f32.mrf.mxu0
        %v1877 = vadd.f32 0.0, %v1876
        %1878 = vdwg.mxu0
        %1879 = vmatpush.xpose.msra.mxu0 0.0
        %1880 = vmatpush.xpose.msra.mxu0 0.0
        %1881 = vmatpush.xpose.msra.mxu0 0.0
        %1882 = vmatpush.xpose.msra.mxu0 0.0
        %1883 = vmatpush.xpose.msra.mxu0 0.0
        %1884 = vmatpush.xpose.msra.mxu0 0.0
        %1885 = vmatpush.xpose.msra.mxu0 0.0
        %1886 = vmatpush.xpose.msra.mxu0 0.0
        %1887 = vmatpush.xpose.msra.mxu0 0.0
        %1888 = vmatpush.xpose.msra.mxu0 0.0
        %1889 = vmatpush.xpose.msra.mxu0 0.0
        %1890 = vmatpush.xpose.msra.mxu0 0.0
        %1891 = vmatpush.xpose.msra.mxu0 0.0
        %1892 = vmatpush.xpose.msra.mxu0 0.0
        %1893 = vmatpush.xpose.msra.mxu0 0.0
        %1894 = vmatpush.xpose.msra.mxu0 %v1647
        %1895 = vmatmul.f32.gmra.mxu0 %v489
        %v1896 = vpop.f32.mrf.mxu0
        %v1897 = vadd.f32 0.0, %v1896
        %1898 = vmatmul.f32.gmra.mxu0 %v492
        %v1899 = vpop.f32.mrf.mxu0
        %v1900 = vadd.f32 0.0, %v1899
        %1901 = vdwg.mxu0
        %1902 = vmatpush.xpose.msra.mxu0 0.0
        %1903 = vmatpush.xpose.msra.mxu0 0.0
        %1904 = vmatpush.xpose.msra.mxu0 0.0
        %1905 = vmatpush.xpose.msra.mxu0 0.0
        %1906 = vmatpush.xpose.msra.mxu0 0.0
        %1907 = vmatpush.xpose.msra.mxu0 0.0
        %1908 = vmatpush.xpose.msra.mxu0 0.0
        %1909 = vmatpush.xpose.msra.mxu0 0.0
        %1910 = vmatpush.xpose.msra.mxu0 0.0
        %1911 = vmatpush.xpose.msra.mxu0 0.0
        %1912 = vmatpush.xpose.msra.mxu0 0.0
        %1913 = vmatpush.xpose.msra.mxu0 0.0
        %1914 = vmatpush.xpose.msra.mxu0 0.0
        %1915 = vmatpush.xpose.msra.mxu0 0.0
        %1916 = vmatpush.xpose.msra.mxu0 0.0
        %1917 = vmatpush.xpose.msra.mxu0 %v1647
        %1918 = vmatmul.f32.gmra.mxu0 %v518
        %v1919 = vpop.f32.mrf.mxu0
        %v1920 = vadd.f32 0.0, %v1919
        %1921 = vmatmul.f32.gmra.mxu0 %v521
        %v1922 = vpop.f32.mrf.mxu0
        %v1923 = vadd.f32 0.0, %v1922
        %1924 = vdwg.mxu0
        %1925 = vmatpush.xpose.msra.mxu0 0.0
        %1926 = vmatpush.xpose.msra.mxu0 0.0
        %1927 = vmatpush.xpose.msra.mxu0 0.0
        %1928 = vmatpush.xpose.msra.mxu0 0.0
        %1929 = vmatpush.xpose.msra.mxu0 0.0
        %1930 = vmatpush.xpose.msra.mxu0 0.0
        %1931 = vmatpush.xpose.msra.mxu0 0.0
        %1932 = vmatpush.xpose.msra.mxu0 0.0
        %1933 = vmatpush.xpose.msra.mxu0 0.0
        %1934 = vmatpush.xpose.msra.mxu0 0.0
        %1935 = vmatpush.xpose.msra.mxu0 0.0
        %1936 = vmatpush.xpose.msra.mxu0 0.0
        %1937 = vmatpush.xpose.msra.mxu0 0.0
        %1938 = vmatpush.xpose.msra.mxu0 0.0
        %1939 = vmatpush.xpose.msra.mxu0 0.0
        %1940 = vmatpush.xpose.msra.mxu0 %v1647
        %1941 = vmatmul.f32.gmra.mxu0 %v547
        %v1942 = vpop.f32.mrf.mxu0
        %v1943 = vadd.f32 0.0, %v1942
        %1944 = vmatmul.f32.gmra.mxu0 %v550
        %v1945 = vpop.f32.mrf.mxu0
        %v1946 = vadd.f32 0.0, %v1945
        %1947 = vdwg.mxu0
        %1948 = vmatpush.xpose.msra.mxu0 0.0
        %1949 = vmatpush.xpose.msra.mxu0 0.0
        %1950 = vmatpush.xpose.msra.mxu0 0.0
        %1951 = vmatpush.xpose.msra.mxu0 0.0
        %1952 = vmatpush.xpose.msra.mxu0 0.0
        %1953 = vmatpush.xpose.msra.mxu0 0.0
        %1954 = vmatpush.xpose.msra.mxu0 0.0
        %1955 = vmatpush.xpose.msra.mxu0 0.0
        %1956 = vmatpush.xpose.msra.mxu0 0.0
        %1957 = vmatpush.xpose.msra.mxu0 0.0
        %1958 = vmatpush.xpose.msra.mxu0 0.0
        %1959 = vmatpush.xpose.msra.mxu0 0.0
        %1960 = vmatpush.xpose.msra.mxu0 0.0
        %1961 = vmatpush.xpose.msra.mxu0 0.0
        %1962 = vmatpush.xpose.msra.mxu0 0.0
        %1963 = vmatpush.xpose.msra.mxu0 %v1647
        %1964 = vmatmul.f32.gmra.mxu0 %v576
        %v1965 = vpop.f32.mrf.mxu0
        %v1966 = vadd.f32 0.0, %v1965
        %1967 = vmatmul.f32.gmra.mxu0 %v579
        %v1968 = vpop.f32.mrf.mxu0
        %v1969 = vadd.f32 0.0, %v1968
        %1970 = vdwg.mxu0
        %1971 = vmatpush.xpose.msra.mxu0 0.0
        %1972 = vmatpush.xpose.msra.mxu0 0.0
        %1973 = vmatpush.xpose.msra.mxu0 0.0
        %1974 = vmatpush.xpose.msra.mxu0 0.0
        %1975 = vmatpush.xpose.msra.mxu0 0.0
        %1976 = vmatpush.xpose.msra.mxu0 0.0
        %1977 = vmatpush.xpose.msra.mxu0 0.0
        %1978 = vmatpush.xpose.msra.mxu0 0.0
        %1979 = vmatpush.xpose.msra.mxu0 0.0
        %1980 = vmatpush.xpose.msra.mxu0 0.0
        %1981 = vmatpush.xpose.msra.mxu0 0.0
        %1982 = vmatpush.xpose.msra.mxu0 0.0
        %1983 = vmatpush.xpose.msra.mxu0 0.0
        %1984 = vmatpush.xpose.msra.mxu0 0.0
        %1985 = vmatpush.xpose.msra.mxu0 0.0
        %1986 = vmatpush.xpose.msra.mxu0 %v1647
        %1987 = vmatmul.f32.gmra.mxu0 %v605
        %v1988 = vpop.f32.mrf.mxu0
        %v1989 = vadd.f32 0.0, %v1988
        %1990 = vmatmul.f32.gmra.mxu0 %v608
        %v1991 = vpop.f32.mrf.mxu0
        %v1992 = vadd.f32 0.0, %v1991
        %1993 = vdwg.mxu0
        %1994 = vmatpush.xpose.msra.mxu0 0.0
        %1995 = vmatpush.xpose.msra.mxu0 0.0
        %1996 = vmatpush.xpose.msra.mxu0 0.0
        %1997 = vmatpush.xpose.msra.mxu0 0.0
        %1998 = vmatpush.xpose.msra.mxu0 0.0
        %1999 = vmatpush.xpose.msra.mxu0 0.0
        %2000 = vmatpush.xpose.msra.mxu0 0.0
        %2001 = vmatpush.xpose.msra.mxu0 0.0
        %2002 = vmatpush.xpose.msra.mxu0 0.0
        %2003 = vmatpush.xpose.msra.mxu0 0.0
        %2004 = vmatpush.xpose.msra.mxu0 0.0
        %2005 = vmatpush.xpose.msra.mxu0 0.0
        %2006 = vmatpush.xpose.msra.mxu0 0.0
        %2007 = vmatpush.xpose.msra.mxu0 0.0
        %2008 = vmatpush.xpose.msra.mxu0 0.0
        %2009 = vmatpush.xpose.msra.mxu0 %v1647
        %2010 = vmatmul.f32.gmra.mxu0 %v634
        %v2011 = vpop.f32.mrf.mxu0
        %v2012 = vadd.f32 0.0, %v2011
        %2013 = vmatmul.f32.gmra.mxu0 %v637
        %v2014 = vpop.f32.mrf.mxu0
        %v2015 = vadd.f32 0.0, %v2014
        %2016 = vdwg.mxu0
        %v2017 = vadd.f32 %v1608, %v1667
        %v2018 = vadd.f32 %v1609, %v1670
        %v2019 = vadd.f32 %v1610, %v1690
        %v2020 = vadd.f32 %v1611, %v1693
        %v2021 = vadd.f32 %v1612, %v1713
        %v2022 = vadd.f32 %v1613, %v1716
        %v2023 = vadd.f32 %v1614, %v1736
        %v2024 = vadd.f32 %v1615, %v1739
        %v2025 = vadd.f32 %v1616, %v1759
        %v2026 = vadd.f32 %v1617, %v1762
        %v2027 = vadd.f32 %v1618, %v1782
        %v2028 = vadd.f32 %v1619, %v1785
        %v2029 = vadd.f32 %v1620, %v1805
        %v2030 = vadd.f32 %v1621, %v1808
        %v2031 = vadd.f32 %v1622, %v1828
        %v2032 = vadd.f32 %v1623, %v1831
        %v2033 = vadd.f32 %v1624, %v1851
        %v2034 = vadd.f32 %v1625, %v1854
        %v2035 = vadd.f32 %v1626, %v1874
        %v2036 = vadd.f32 %v1627, %v1877
        %v2037 = vadd.f32 %v1628, %v1897
        %v2038 = vadd.f32 %v1629, %v1900
        %v2039 = vadd.f32 %v1630, %v1920
        %v2040 = vadd.f32 %v1631, %v1923
        %v2041 = vadd.f32 %v1632, %v1943
        %v2042 = vadd.f32 %v1633, %v1946
        %v2043 = vadd.f32 %v1634, %v1966
        %v2044 = vadd.f32 %v1635, %v1969
        %v2045 = vadd.f32 %v1636, %v1989
        %v2046 = vadd.f32 %v1637, %v1992
        %v2047 = vadd.f32 %v1638, %v2012
        %v2048 = vadd.f32 %v1639, %v2015
        %v2050 = vperm.slane %v219, 0
        %v2052 = vadd.f32 %v2017, %v2050
        %v2053 = vadd.f32 %v2018, %v2050
        %v2054 = vadd.f32 %v2019, %v2050
        %v2055 = vadd.f32 %v2020, %v2050
        %v2056 = vadd.f32 %v2021, %v2050
        %v2057 = vadd.f32 %v2022, %v2050
        %v2058 = vadd.f32 %v2023, %v2050
        %v2059 = vadd.f32 %v2024, %v2050
        %v2060 = vadd.f32 %v2025, %v2050
        %v2061 = vadd.f32 %v2026, %v2050
        %v2062 = vadd.f32 %v2027, %v2050
        %v2063 = vadd.f32 %v2028, %v2050
        %v2064 = vadd.f32 %v2029, %v2050
        %v2065 = vadd.f32 %v2030, %v2050
        %v2066 = vadd.f32 %v2031, %v2050
        %v2067 = vadd.f32 %v2032, %v2050
        %v2068 = vadd.f32 %v2033, %v2050
        %v2069 = vadd.f32 %v2034, %v2050
        %v2070 = vadd.f32 %v2035, %v2050
        %v2071 = vadd.f32 %v2036, %v2050
        %v2072 = vadd.f32 %v2037, %v2050
        %v2073 = vadd.f32 %v2038, %v2050
        %v2074 = vadd.f32 %v2039, %v2050
        %v2075 = vadd.f32 %v2040, %v2050
        %v2076 = vadd.f32 %v2041, %v2050
        %v2077 = vadd.f32 %v2042, %v2050
        %v2078 = vadd.f32 %v2043, %v2050
        %v2079 = vadd.f32 %v2044, %v2050
        %v2080 = vadd.f32 %v2045, %v2050
        %v2081 = vadd.f32 %v2046, %v2050
        %v2082 = vadd.f32 %v2047, %v2050
        %v2083 = vadd.f32 %v2048, %v2050
        %vm2084 = vcmp.ge.f32.partialorder %v2052, 0.0
        %vm2085 = vcmp.ge.f32.partialorder %v2053, 0.0
        %vm2086 = vcmp.ge.f32.partialorder %v2054, 0.0
        %vm2087 = vcmp.ge.f32.partialorder %v2055, 0.0
        %vm2088 = vcmp.ge.f32.partialorder %v2056, 0.0
        %vm2089 = vcmp.ge.f32.partialorder %v2057, 0.0
        %vm2090 = vcmp.ge.f32.partialorder %v2058, 0.0
        %vm2091 = vcmp.ge.f32.partialorder %v2059, 0.0
        %vm2092 = vcmp.ge.f32.partialorder %v2060, 0.0
        %vm2093 = vcmp.ge.f32.partialorder %v2061, 0.0
        %vm2094 = vcmp.ge.f32.partialorder %v2062, 0.0
        %vm2095 = vcmp.ge.f32.partialorder %v2063, 0.0
        %vm2096 = vcmp.ge.f32.partialorder %v2064, 0.0
        %vm2097 = vcmp.ge.f32.partialorder %v2065, 0.0
        %vm2098 = vcmp.ge.f32.partialorder %v2066, 0.0
        %vm2099 = vcmp.ge.f32.partialorder %v2067, 0.0
        %vm2100 = vcmp.ge.f32.partialorder %v2068, 0.0
        %vm2101 = vcmp.ge.f32.partialorder %v2069, 0.0
        %vm2102 = vcmp.ge.f32.partialorder %v2070, 0.0
        %vm2103 = vcmp.ge.f32.partialorder %v2071, 0.0
        %vm2104 = vcmp.ge.f32.partialorder %v2072, 0.0
        %vm2105 = vcmp.ge.f32.partialorder %v2073, 0.0
        %vm2106 = vcmp.ge.f32.partialorder %v2074, 0.0
        %vm2107 = vcmp.ge.f32.partialorder %v2075, 0.0
        %vm2108 = vcmp.ge.f32.partialorder %v2076, 0.0
        %vm2109 = vcmp.ge.f32.partialorder %v2077, 0.0
        %vm2110 = vcmp.ge.f32.partialorder %v2078, 0.0
        %vm2111 = vcmp.ge.f32.partialorder %v2079, 0.0
        %vm2112 = vcmp.ge.f32.partialorder %v2080, 0.0
        %vm2113 = vcmp.ge.f32.partialorder %v2081, 0.0
        %vm2114 = vcmp.ge.f32.partialorder %v2082, 0.0
        %vm2115 = vcmp.ge.f32.partialorder %v2083, 0.0
        %v2116 = vmul.f32 %v2052, 0.01
        %v2117 = vmul.f32 %v2053, 0.01
        %v2118 = vmul.f32 %v2054, 0.01
        %v2119 = vmul.f32 %v2055, 0.01
        %v2120 = vmul.f32 %v2056, 0.01
        %v2121 = vmul.f32 %v2057, 0.01
        %v2122 = vmul.f32 %v2058, 0.01
        %v2123 = vmul.f32 %v2059, 0.01
        %v2124 = vmul.f32 %v2060, 0.01
        %v2125 = vmul.f32 %v2061, 0.01
        %v2126 = vmul.f32 %v2062, 0.01
        %v2127 = vmul.f32 %v2063, 0.01
        %v2128 = vmul.f32 %v2064, 0.01
        %v2129 = vmul.f32 %v2065, 0.01
        %v2130 = vmul.f32 %v2066, 0.01
        %v2131 = vmul.f32 %v2067, 0.01
        %v2132 = vmul.f32 %v2068, 0.01
        %v2133 = vmul.f32 %v2069, 0.01
        %v2134 = vmul.f32 %v2070, 0.01
        %v2135 = vmul.f32 %v2071, 0.01
        %v2136 = vmul.f32 %v2072, 0.01
        %v2137 = vmul.f32 %v2073, 0.01
        %v2138 = vmul.f32 %v2074, 0.01
        %v2139 = vmul.f32 %v2075, 0.01
        %v2140 = vmul.f32 %v2076, 0.01
        %v2141 = vmul.f32 %v2077, 0.01
        %v2142 = vmul.f32 %v2078, 0.01
        %v2143 = vmul.f32 %v2079, 0.01
        %v2144 = vmul.f32 %v2080, 0.01
        %v2145 = vmul.f32 %v2081, 0.01
        %v2146 = vmul.f32 %v2082, 0.01
        %v2147 = vmul.f32 %v2083, 0.01
        %v2148 = vsel %vm2084, %v2052, %v2116
        %v2149 = vsel %vm2085, %v2053, %v2117
        %v2150 = vsel %vm2086, %v2054, %v2118
        %v2151 = vsel %vm2087, %v2055, %v2119
        %v2152 = vsel %vm2088, %v2056, %v2120
        %v2153 = vsel %vm2089, %v2057, %v2121
        %v2154 = vsel %vm2090, %v2058, %v2122
        %v2155 = vsel %vm2091, %v2059, %v2123
        %v2156 = vsel %vm2092, %v2060, %v2124
        %v2157 = vsel %vm2093, %v2061, %v2125
        %v2158 = vsel %vm2094, %v2062, %v2126
        %v2159 = vsel %vm2095, %v2063, %v2127
        %v2160 = vsel %vm2096, %v2064, %v2128
        %v2161 = vsel %vm2097, %v2065, %v2129
        %v2162 = vsel %vm2098, %v2066, %v2130
        %v2163 = vsel %vm2099, %v2067, %v2131
        %v2164 = vsel %vm2100, %v2068, %v2132
        %v2165 = vsel %vm2101, %v2069, %v2133
        %v2166 = vsel %vm2102, %v2070, %v2134
        %v2167 = vsel %vm2103, %v2071, %v2135
        %v2168 = vsel %vm2104, %v2072, %v2136
        %v2169 = vsel %vm2105, %v2073, %v2137
        %v2170 = vsel %vm2106, %v2074, %v2138
        %v2171 = vsel %vm2107, %v2075, %v2139
        %v2172 = vsel %vm2108, %v2076, %v2140
        %v2173 = vsel %vm2109, %v2077, %v2141
        %v2174 = vsel %vm2110, %v2078, %v2142
        %v2175 = vsel %vm2111, %v2079, %v2143
        %v2176 = vsel %vm2112, %v2080, %v2144
        %v2177 = vsel %vm2113, %v2081, %v2145
        %v2178 = vsel %vm2114, %v2082, %v2146
        %v2179 = vsel %vm2115, %v2083, %v2147
        %vm2180 = vcmask 64512
        %2181 = vst.msk [vmem:[%s159] sm:$0xff] %vm2180, %v2148
        %2182 = vst.msk [vmem:[%s159 + $0x8] sm:$0xff] %vm2180, %v2149
        %2183 = vst.msk [vmem:[%s159 + $0x10] sm:$0xff] %vm2180, %v2150
        %2184 = vst.msk [vmem:[%s159 + $0x18] sm:$0xff] %vm2180, %v2151
        %2185 = vst.msk [vmem:[%s159 + $0x20] sm:$0xff] %vm2180, %v2152
        %2186 = vst.msk [vmem:[%s159 + $0x28] sm:$0xff] %vm2180, %v2153
        %2187 = vst.msk [vmem:[%s159 + $0x30] sm:$0xff] %vm2180, %v2154
        %2188 = vst.msk [vmem:[%s159 + $0x38] sm:$0xff] %vm2180, %v2155
        %2189 = vst.msk [vmem:[%s159 + $0x40] sm:$0xff] %vm2180, %v2156
        %2190 = vst.msk [vmem:[%s159 + $0x48] sm:$0xff] %vm2180, %v2157
        %2191 = vst.msk [vmem:[%s159 + $0x50] sm:$0xff] %vm2180, %v2158
        %2192 = vst.msk [vmem:[%s159 + $0x58] sm:$0xff] %vm2180, %v2159
        %2193 = vst.msk [vmem:[%s159 + $0x60] sm:$0xff] %vm2180, %v2160
        %2194 = vst.msk [vmem:[%s159 + $0x68] sm:$0xff] %vm2180, %v2161
        %2195 = vst.msk [vmem:[%s159 + $0x70] sm:$0xff] %vm2180, %v2162
        %2196 = vst.msk [vmem:[%s159 + $0x78] sm:$0xff] %vm2180, %v2163
        %2197 = vst.msk [vmem:[%s159 + $0x80] sm:$0xff] %vm2180, %v2164
        %2198 = vst.msk [vmem:[%s159 + $0x88] sm:$0xff] %vm2180, %v2165
        %2199 = vst.msk [vmem:[%s159 + $0x90] sm:$0xff] %vm2180, %v2166
        %2200 = vst.msk [vmem:[%s159 + $0x98] sm:$0xff] %vm2180, %v2167
        %2201 = vst.msk [vmem:[%s159 + $0xa0] sm:$0xff] %vm2180, %v2168
        %2202 = vst.msk [vmem:[%s159 + $0xa8] sm:$0xff] %vm2180, %v2169
        %2203 = vst.msk [vmem:[%s159 + $0xb0] sm:$0xff] %vm2180, %v2170
        %2204 = vst.msk [vmem:[%s159 + $0xb8] sm:$0xff] %vm2180, %v2171
        %2205 = vst.msk [vmem:[%s159 + $0xc0] sm:$0xff] %vm2180, %v2172
        %2206 = vst.msk [vmem:[%s159 + $0xc8] sm:$0xff] %vm2180, %v2173
        %2207 = vst.msk [vmem:[%s159 + $0xd0] sm:$0xff] %vm2180, %v2174
        %2208 = vst.msk [vmem:[%s159 + $0xd8] sm:$0xff] %vm2180, %v2175
        %2209 = vst.msk [vmem:[%s159 + $0xe0] sm:$0xff] %vm2180, %v2176
        %2210 = vst.msk [vmem:[%s159 + $0xe8] sm:$0xff] %vm2180, %v2177
        %2211 = vst.msk [vmem:[%s159 + $0xf0] sm:$0xff] %vm2180, %v2178
        %2212 = vst.msk [vmem:[%s159 + $0xf8] sm:$0xff] %vm2180, %v2179
        %s2213 = scalar_lea.vmem %s1, 32
        %v2214 = vld [vmem:[%s2213] sm:$0xff]
        %s2215 = scalar_lea.vmem %s1, 40
        %v2216 = vld [vmem:[%s2215] sm:$0xff]
        %v2218 = vsel %vm223, %v2216, 0
        %2220 = vmatpush.xpose.msra.mxu0 0.0
        %2221 = vmatpush.xpose.msra.mxu0 0.0
        %2222 = vmatpush.xpose.msra.mxu0 0.0
        %2223 = vmatpush.xpose.msra.mxu0 0.0
        %2224 = vmatpush.xpose.msra.mxu0 0.0
        %2225 = vmatpush.xpose.msra.mxu0 0.0
        %2226 = vmatpush.xpose.msra.mxu0 0.0
        %2227 = vmatpush.xpose.msra.mxu0 0.0
        %2228 = vmatpush.xpose.msra.mxu0 0.0
        %2229 = vmatpush.xpose.msra.mxu0 0.0
        %2230 = vmatpush.xpose.msra.mxu0 0.0
        %2231 = vmatpush.xpose.msra.mxu0 0.0
        %2232 = vmatpush.xpose.msra.mxu0 0.0
        %2233 = vmatpush.xpose.msra.mxu0 0.0
        %2234 = vmatpush.xpose.msra.mxu0 0.0
        %2235 = vmatpush.xpose.msra.mxu0 %v2218
        %2236 = vmatmul.f32.gmra.mxu0 %v698
        %v2237 = vpop.f32.mrf.mxu0
        %v2238 = vadd.f32 0.0, %v2237
        %2239 = vmatmul.f32.gmra.mxu0 %v700
        %v2240 = vpop.f32.mrf.mxu0
        %v2241 = vadd.f32 0.0, %v2240
        %2242 = vdwg.mxu0
        %2243 = vmatpush.xpose.msra.mxu0 0.0
        %2244 = vmatpush.xpose.msra.mxu0 0.0
        %2245 = vmatpush.xpose.msra.mxu0 0.0
        %2246 = vmatpush.xpose.msra.mxu0 0.0
        %2247 = vmatpush.xpose.msra.mxu0 0.0
        %2248 = vmatpush.xpose.msra.mxu0 0.0
        %2249 = vmatpush.xpose.msra.mxu0 0.0
        %2250 = vmatpush.xpose.msra.mxu0 0.0
        %2251 = vmatpush.xpose.msra.mxu0 0.0
        %2252 = vmatpush.xpose.msra.mxu0 0.0
        %2253 = vmatpush.xpose.msra.mxu0 0.0
        %2254 = vmatpush.xpose.msra.mxu0 0.0
        %2255 = vmatpush.xpose.msra.mxu0 0.0
        %2256 = vmatpush.xpose.msra.mxu0 0.0
        %2257 = vmatpush.xpose.msra.mxu0 0.0
        %2258 = vmatpush.xpose.msra.mxu0 %v2218
        %2259 = vmatmul.f32.gmra.mxu0 %v734
        %v2260 = vpop.f32.mrf.mxu0
        %v2261 = vadd.f32 0.0, %v2260
        %2262 = vmatmul.f32.gmra.mxu0 %v736
        %v2263 = vpop.f32.mrf.mxu0
        %v2264 = vadd.f32 0.0, %v2263
        %2265 = vdwg.mxu0
        %2266 = vmatpush.xpose.msra.mxu0 0.0
        %2267 = vmatpush.xpose.msra.mxu0 0.0
        %2268 = vmatpush.xpose.msra.mxu0 0.0
        %2269 = vmatpush.xpose.msra.mxu0 0.0
        %2270 = vmatpush.xpose.msra.mxu0 0.0
        %2271 = vmatpush.xpose.msra.mxu0 0.0
        %2272 = vmatpush.xpose.msra.mxu0 0.0
        %2273 = vmatpush.xpose.msra.mxu0 0.0
        %2274 = vmatpush.xpose.msra.mxu0 0.0
        %2275 = vmatpush.xpose.msra.mxu0 0.0
        %2276 = vmatpush.xpose.msra.mxu0 0.0
        %2277 = vmatpush.xpose.msra.mxu0 0.0
        %2278 = vmatpush.xpose.msra.mxu0 0.0
        %2279 = vmatpush.xpose.msra.mxu0 0.0
        %2280 = vmatpush.xpose.msra.mxu0 0.0
        %2281 = vmatpush.xpose.msra.mxu0 %v2218
        %2282 = vmatmul.f32.gmra.mxu0 %v767
        %v2283 = vpop.f32.mrf.mxu0
        %v2284 = vadd.f32 0.0, %v2283
        %2285 = vmatmul.f32.gmra.mxu0 %v769
        %v2286 = vpop.f32.mrf.mxu0
        %v2287 = vadd.f32 0.0, %v2286
        %2288 = vdwg.mxu0
        %2289 = vmatpush.xpose.msra.mxu0 0.0
        %2290 = vmatpush.xpose.msra.mxu0 0.0
        %2291 = vmatpush.xpose.msra.mxu0 0.0
        %2292 = vmatpush.xpose.msra.mxu0 0.0
        %2293 = vmatpush.xpose.msra.mxu0 0.0
        %2294 = vmatpush.xpose.msra.mxu0 0.0
        %2295 = vmatpush.xpose.msra.mxu0 0.0
        %2296 = vmatpush.xpose.msra.mxu0 0.0
        %2297 = vmatpush.xpose.msra.mxu0 0.0
        %2298 = vmatpush.xpose.msra.mxu0 0.0
        %2299 = vmatpush.xpose.msra.mxu0 0.0
        %2300 = vmatpush.xpose.msra.mxu0 0.0
        %2301 = vmatpush.xpose.msra.mxu0 0.0
        %2302 = vmatpush.xpose.msra.mxu0 0.0
        %2303 = vmatpush.xpose.msra.mxu0 0.0
        %2304 = vmatpush.xpose.msra.mxu0 %v2218
        %2305 = vmatmul.f32.gmra.mxu0 %v800
        %v2306 = vpop.f32.mrf.mxu0
        %v2307 = vadd.f32 0.0, %v2306
        %2308 = vmatmul.f32.gmra.mxu0 %v802
        %v2309 = vpop.f32.mrf.mxu0
        %v2310 = vadd.f32 0.0, %v2309
        %2311 = vdwg.mxu0
        %2312 = vmatpush.xpose.msra.mxu0 0.0
        %2313 = vmatpush.xpose.msra.mxu0 0.0
        %2314 = vmatpush.xpose.msra.mxu0 0.0
        %2315 = vmatpush.xpose.msra.mxu0 0.0
        %2316 = vmatpush.xpose.msra.mxu0 0.0
        %2317 = vmatpush.xpose.msra.mxu0 0.0
        %2318 = vmatpush.xpose.msra.mxu0 0.0
        %2319 = vmatpush.xpose.msra.mxu0 0.0
        %2320 = vmatpush.xpose.msra.mxu0 0.0
        %2321 = vmatpush.xpose.msra.mxu0 0.0
        %2322 = vmatpush.xpose.msra.mxu0 0.0
        %2323 = vmatpush.xpose.msra.mxu0 0.0
        %2324 = vmatpush.xpose.msra.mxu0 0.0
        %2325 = vmatpush.xpose.msra.mxu0 0.0
        %2326 = vmatpush.xpose.msra.mxu0 0.0
        %2327 = vmatpush.xpose.msra.mxu0 %v2218
        %2328 = vmatmul.f32.gmra.mxu0 %v833
        %v2329 = vpop.f32.mrf.mxu0
        %v2330 = vadd.f32 0.0, %v2329
        %2331 = vmatmul.f32.gmra.mxu0 %v835
        %v2332 = vpop.f32.mrf.mxu0
        %v2333 = vadd.f32 0.0, %v2332
        %2334 = vdwg.mxu0
        %2335 = vmatpush.xpose.msra.mxu0 0.0
        %2336 = vmatpush.xpose.msra.mxu0 0.0
        %2337 = vmatpush.xpose.msra.mxu0 0.0
        %2338 = vmatpush.xpose.msra.mxu0 0.0
        %2339 = vmatpush.xpose.msra.mxu0 0.0
        %2340 = vmatpush.xpose.msra.mxu0 0.0
        %2341 = vmatpush.xpose.msra.mxu0 0.0
        %2342 = vmatpush.xpose.msra.mxu0 0.0
        %2343 = vmatpush.xpose.msra.mxu0 0.0
        %2344 = vmatpush.xpose.msra.mxu0 0.0
        %2345 = vmatpush.xpose.msra.mxu0 0.0
        %2346 = vmatpush.xpose.msra.mxu0 0.0
        %2347 = vmatpush.xpose.msra.mxu0 0.0
        %2348 = vmatpush.xpose.msra.mxu0 0.0
        %2349 = vmatpush.xpose.msra.mxu0 0.0
        %2350 = vmatpush.xpose.msra.mxu0 %v2218
        %2351 = vmatmul.f32.gmra.mxu0 %v866
        %v2352 = vpop.f32.mrf.mxu0
        %v2353 = vadd.f32 0.0, %v2352
        %2354 = vmatmul.f32.gmra.mxu0 %v868
        %v2355 = vpop.f32.mrf.mxu0
        %v2356 = vadd.f32 0.0, %v2355
        %2357 = vdwg.mxu0
        %2358 = vmatpush.xpose.msra.mxu0 0.0
        %2359 = vmatpush.xpose.msra.mxu0 0.0
        %2360 = vmatpush.xpose.msra.mxu0 0.0
        %2361 = vmatpush.xpose.msra.mxu0 0.0
        %2362 = vmatpush.xpose.msra.mxu0 0.0
        %2363 = vmatpush.xpose.msra.mxu0 0.0
        %2364 = vmatpush.xpose.msra.mxu0 0.0
        %2365 = vmatpush.xpose.msra.mxu0 0.0
        %2366 = vmatpush.xpose.msra.mxu0 0.0
        %2367 = vmatpush.xpose.msra.mxu0 0.0
        %2368 = vmatpush.xpose.msra.mxu0 0.0
        %2369 = vmatpush.xpose.msra.mxu0 0.0
        %2370 = vmatpush.xpose.msra.mxu0 0.0
        %2371 = vmatpush.xpose.msra.mxu0 0.0
        %2372 = vmatpush.xpose.msra.mxu0 0.0
        %2373 = vmatpush.xpose.msra.mxu0 %v2218
        %2374 = vmatmul.f32.gmra.mxu0 %v899
        %v2375 = vpop.f32.mrf.mxu0
        %v2376 = vadd.f32 0.0, %v2375
        %2377 = vmatmul.f32.gmra.mxu0 %v901
        %v2378 = vpop.f32.mrf.mxu0
        %v2379 = vadd.f32 0.0, %v2378
        %2380 = vdwg.mxu0
        %2381 = vmatpush.xpose.msra.mxu0 0.0
        %2382 = vmatpush.xpose.msra.mxu0 0.0
        %2383 = vmatpush.xpose.msra.mxu0 0.0
        %2384 = vmatpush.xpose.msra.mxu0 0.0
        %2385 = vmatpush.xpose.msra.mxu0 0.0
        %2386 = vmatpush.xpose.msra.mxu0 0.0
        %2387 = vmatpush.xpose.msra.mxu0 0.0
        %2388 = vmatpush.xpose.msra.mxu0 0.0
        %2389 = vmatpush.xpose.msra.mxu0 0.0
        %2390 = vmatpush.xpose.msra.mxu0 0.0
        %2391 = vmatpush.xpose.msra.mxu0 0.0
        %2392 = vmatpush.xpose.msra.mxu0 0.0
        %2393 = vmatpush.xpose.msra.mxu0 0.0
        %2394 = vmatpush.xpose.msra.mxu0 0.0
        %2395 = vmatpush.xpose.msra.mxu0 0.0
        %2396 = vmatpush.xpose.msra.mxu0 %v2218
        %2397 = vmatmul.f32.gmra.mxu0 %v932
        %v2398 = vpop.f32.mrf.mxu0
        %v2399 = vadd.f32 0.0, %v2398
        %2400 = vmatmul.f32.gmra.mxu0 %v934
        %v2401 = vpop.f32.mrf.mxu0
        %v2402 = vadd.f32 0.0, %v2401
        %2403 = vdwg.mxu0
        %2404 = vmatpush.xpose.msra.mxu0 0.0
        %2405 = vmatpush.xpose.msra.mxu0 0.0
        %2406 = vmatpush.xpose.msra.mxu0 0.0
        %2407 = vmatpush.xpose.msra.mxu0 0.0
        %2408 = vmatpush.xpose.msra.mxu0 0.0
        %2409 = vmatpush.xpose.msra.mxu0 0.0
        %2410 = vmatpush.xpose.msra.mxu0 0.0
        %2411 = vmatpush.xpose.msra.mxu0 0.0
        %2412 = vmatpush.xpose.msra.mxu0 0.0
        %2413 = vmatpush.xpose.msra.mxu0 0.0
        %2414 = vmatpush.xpose.msra.mxu0 0.0
        %2415 = vmatpush.xpose.msra.mxu0 0.0
        %2416 = vmatpush.xpose.msra.mxu0 0.0
        %2417 = vmatpush.xpose.msra.mxu0 0.0
        %2418 = vmatpush.xpose.msra.mxu0 0.0
        %2419 = vmatpush.xpose.msra.mxu0 %v2218
        %2420 = vmatmul.f32.gmra.mxu0 %v965
        %v2421 = vpop.f32.mrf.mxu0
        %v2422 = vadd.f32 0.0, %v2421
        %2423 = vmatmul.f32.gmra.mxu0 %v967
        %v2424 = vpop.f32.mrf.mxu0
        %v2425 = vadd.f32 0.0, %v2424
        %2426 = vdwg.mxu0
        %2427 = vmatpush.xpose.msra.mxu0 0.0
        %2428 = vmatpush.xpose.msra.mxu0 0.0
        %2429 = vmatpush.xpose.msra.mxu0 0.0
        %2430 = vmatpush.xpose.msra.mxu0 0.0
        %2431 = vmatpush.xpose.msra.mxu0 0.0
        %2432 = vmatpush.xpose.msra.mxu0 0.0
        %2433 = vmatpush.xpose.msra.mxu0 0.0
        %2434 = vmatpush.xpose.msra.mxu0 0.0
        %2435 = vmatpush.xpose.msra.mxu0 0.0
        %2436 = vmatpush.xpose.msra.mxu0 0.0
        %2437 = vmatpush.xpose.msra.mxu0 0.0
        %2438 = vmatpush.xpose.msra.mxu0 0.0
        %2439 = vmatpush.xpose.msra.mxu0 0.0
        %2440 = vmatpush.xpose.msra.mxu0 0.0
        %2441 = vmatpush.xpose.msra.mxu0 0.0
        %2442 = vmatpush.xpose.msra.mxu0 %v2218
        %2443 = vmatmul.f32.gmra.mxu0 %v998
        %v2444 = vpop.f32.mrf.mxu0
        %v2445 = vadd.f32 0.0, %v2444
        %2446 = vmatmul.f32.gmra.mxu0 %v1000
        %v2447 = vpop.f32.mrf.mxu0
        %v2448 = vadd.f32 0.0, %v2447
        %2449 = vdwg.mxu0
        %2450 = vmatpush.xpose.msra.mxu0 0.0
        %2451 = vmatpush.xpose.msra.mxu0 0.0
        %2452 = vmatpush.xpose.msra.mxu0 0.0
        %2453 = vmatpush.xpose.msra.mxu0 0.0
        %2454 = vmatpush.xpose.msra.mxu0 0.0
        %2455 = vmatpush.xpose.msra.mxu0 0.0
        %2456 = vmatpush.xpose.msra.mxu0 0.0
        %2457 = vmatpush.xpose.msra.mxu0 0.0
        %2458 = vmatpush.xpose.msra.mxu0 0.0
        %2459 = vmatpush.xpose.msra.mxu0 0.0
        %2460 = vmatpush.xpose.msra.mxu0 0.0
        %2461 = vmatpush.xpose.msra.mxu0 0.0
        %2462 = vmatpush.xpose.msra.mxu0 0.0
        %2463 = vmatpush.xpose.msra.mxu0 0.0
        %2464 = vmatpush.xpose.msra.mxu0 0.0
        %2465 = vmatpush.xpose.msra.mxu0 %v2218
        %2466 = vmatmul.f32.gmra.mxu0 %v1031
        %v2467 = vpop.f32.mrf.mxu0
        %v2468 = vadd.f32 0.0, %v2467
        %2469 = vmatmul.f32.gmra.mxu0 %v1033
        %v2470 = vpop.f32.mrf.mxu0
        %v2471 = vadd.f32 0.0, %v2470
        %2472 = vdwg.mxu0
        %2473 = vmatpush.xpose.msra.mxu0 0.0
        %2474 = vmatpush.xpose.msra.mxu0 0.0
        %2475 = vmatpush.xpose.msra.mxu0 0.0
        %2476 = vmatpush.xpose.msra.mxu0 0.0
        %2477 = vmatpush.xpose.msra.mxu0 0.0
        %2478 = vmatpush.xpose.msra.mxu0 0.0
        %2479 = vmatpush.xpose.msra.mxu0 0.0
        %2480 = vmatpush.xpose.msra.mxu0 0.0
        %2481 = vmatpush.xpose.msra.mxu0 0.0
        %2482 = vmatpush.xpose.msra.mxu0 0.0
        %2483 = vmatpush.xpose.msra.mxu0 0.0
        %2484 = vmatpush.xpose.msra.mxu0 0.0
        %2485 = vmatpush.xpose.msra.mxu0 0.0
        %2486 = vmatpush.xpose.msra.mxu0 0.0
        %2487 = vmatpush.xpose.msra.mxu0 0.0
        %2488 = vmatpush.xpose.msra.mxu0 %v2218
        %2489 = vmatmul.f32.gmra.mxu0 %v1064
        %v2490 = vpop.f32.mrf.mxu0
        %v2491 = vadd.f32 0.0, %v2490
        %2492 = vmatmul.f32.gmra.mxu0 %v1066
        %v2493 = vpop.f32.mrf.mxu0
        %v2494 = vadd.f32 0.0, %v2493
        %2495 = vdwg.mxu0
        %2496 = vmatpush.xpose.msra.mxu0 0.0
        %2497 = vmatpush.xpose.msra.mxu0 0.0
        %2498 = vmatpush.xpose.msra.mxu0 0.0
        %2499 = vmatpush.xpose.msra.mxu0 0.0
        %2500 = vmatpush.xpose.msra.mxu0 0.0
        %2501 = vmatpush.xpose.msra.mxu0 0.0
        %2502 = vmatpush.xpose.msra.mxu0 0.0
        %2503 = vmatpush.xpose.msra.mxu0 0.0
        %2504 = vmatpush.xpose.msra.mxu0 0.0
        %2505 = vmatpush.xpose.msra.mxu0 0.0
        %2506 = vmatpush.xpose.msra.mxu0 0.0
        %2507 = vmatpush.xpose.msra.mxu0 0.0
        %2508 = vmatpush.xpose.msra.mxu0 0.0
        %2509 = vmatpush.xpose.msra.mxu0 0.0
        %2510 = vmatpush.xpose.msra.mxu0 0.0
        %2511 = vmatpush.xpose.msra.mxu0 %v2218
        %2512 = vmatmul.f32.gmra.mxu0 %v1097
        %v2513 = vpop.f32.mrf.mxu0
        %v2514 = vadd.f32 0.0, %v2513
        %2515 = vmatmul.f32.gmra.mxu0 %v1099
        %v2516 = vpop.f32.mrf.mxu0
        %v2517 = vadd.f32 0.0, %v2516
        %2518 = vdwg.mxu0
        %2519 = vmatpush.xpose.msra.mxu0 0.0
        %2520 = vmatpush.xpose.msra.mxu0 0.0
        %2521 = vmatpush.xpose.msra.mxu0 0.0
        %2522 = vmatpush.xpose.msra.mxu0 0.0
        %2523 = vmatpush.xpose.msra.mxu0 0.0
        %2524 = vmatpush.xpose.msra.mxu0 0.0
        %2525 = vmatpush.xpose.msra.mxu0 0.0
        %2526 = vmatpush.xpose.msra.mxu0 0.0
        %2527 = vmatpush.xpose.msra.mxu0 0.0
        %2528 = vmatpush.xpose.msra.mxu0 0.0
        %2529 = vmatpush.xpose.msra.mxu0 0.0
        %2530 = vmatpush.xpose.msra.mxu0 0.0
        %2531 = vmatpush.xpose.msra.mxu0 0.0
        %2532 = vmatpush.xpose.msra.mxu0 0.0
        %2533 = vmatpush.xpose.msra.mxu0 0.0
        %2534 = vmatpush.xpose.msra.mxu0 %v2218
        %2535 = vmatmul.f32.gmra.mxu0 %v1130
        %v2536 = vpop.f32.mrf.mxu0
        %v2537 = vadd.f32 0.0, %v2536
        %2538 = vmatmul.f32.gmra.mxu0 %v1132
        %v2539 = vpop.f32.mrf.mxu0
        %v2540 = vadd.f32 0.0, %v2539
        %2541 = vdwg.mxu0
        %2542 = vmatpush.xpose.msra.mxu0 0.0
        %2543 = vmatpush.xpose.msra.mxu0 0.0
        %2544 = vmatpush.xpose.msra.mxu0 0.0
        %2545 = vmatpush.xpose.msra.mxu0 0.0
        %2546 = vmatpush.xpose.msra.mxu0 0.0
        %2547 = vmatpush.xpose.msra.mxu0 0.0
        %2548 = vmatpush.xpose.msra.mxu0 0.0
        %2549 = vmatpush.xpose.msra.mxu0 0.0
        %2550 = vmatpush.xpose.msra.mxu0 0.0
        %2551 = vmatpush.xpose.msra.mxu0 0.0
        %2552 = vmatpush.xpose.msra.mxu0 0.0
        %2553 = vmatpush.xpose.msra.mxu0 0.0
        %2554 = vmatpush.xpose.msra.mxu0 0.0
        %2555 = vmatpush.xpose.msra.mxu0 0.0
        %2556 = vmatpush.xpose.msra.mxu0 0.0
        %2557 = vmatpush.xpose.msra.mxu0 %v2218
        %2558 = vmatmul.f32.gmra.mxu0 %v1163
        %v2559 = vpop.f32.mrf.mxu0
        %v2560 = vadd.f32 0.0, %v2559
        %2561 = vmatmul.f32.gmra.mxu0 %v1165
        %v2562 = vpop.f32.mrf.mxu0
        %v2563 = vadd.f32 0.0, %v2562
        %2564 = vdwg.mxu0
        %2565 = vmatpush.xpose.msra.mxu0 0.0
        %2566 = vmatpush.xpose.msra.mxu0 0.0
        %2567 = vmatpush.xpose.msra.mxu0 0.0
        %2568 = vmatpush.xpose.msra.mxu0 0.0
        %2569 = vmatpush.xpose.msra.mxu0 0.0
        %2570 = vmatpush.xpose.msra.mxu0 0.0
        %2571 = vmatpush.xpose.msra.mxu0 0.0
        %2572 = vmatpush.xpose.msra.mxu0 0.0
        %2573 = vmatpush.xpose.msra.mxu0 0.0
        %2574 = vmatpush.xpose.msra.mxu0 0.0
        %2575 = vmatpush.xpose.msra.mxu0 0.0
        %2576 = vmatpush.xpose.msra.mxu0 0.0
        %2577 = vmatpush.xpose.msra.mxu0 0.0
        %2578 = vmatpush.xpose.msra.mxu0 0.0
        %2579 = vmatpush.xpose.msra.mxu0 0.0
        %2580 = vmatpush.xpose.msra.mxu0 %v2218
        %2581 = vmatmul.f32.gmra.mxu0 %v1196
        %v2582 = vpop.f32.mrf.mxu0
        %v2583 = vadd.f32 0.0, %v2582
        %2584 = vmatmul.f32.gmra.mxu0 %v1198
        %v2585 = vpop.f32.mrf.mxu0
        %v2586 = vadd.f32 0.0, %v2585
        %2587 = vdwg.mxu0
        %vm2588 = vcmask 1045504
        %v2589 = vrot.slane %v168, 2
        %v2590 = vrot.slane %v169, 2
        %v2591 = vsel %vm2588, %v2589, %v2590
        %v2592 = vrot.slane %v170, 2
        %v2593 = vsel %vm2588, %v2590, %v2592
        %v2594 = vsel %vm223, %v2591, 0
        %v2596 = vsel %vm223, %v2593, 0
        %v2599 = vsel %vm223, %v2214, 0
        %2601 = vmatpush.xpose.msra.mxu0 0.0
        %2602 = vmatpush.xpose.msra.mxu0 0.0
        %2603 = vmatpush.xpose.msra.mxu0 0.0
        %2604 = vmatpush.xpose.msra.mxu0 0.0
        %2605 = vmatpush.xpose.msra.mxu0 0.0
        %2606 = vmatpush.xpose.msra.mxu0 0.0
        %2607 = vmatpush.xpose.msra.mxu0 0.0
        %2608 = vmatpush.xpose.msra.mxu0 0.0
        %2609 = vmatpush.xpose.msra.mxu0 0.0
        %2610 = vmatpush.xpose.msra.mxu0 0.0
        %2611 = vmatpush.xpose.msra.mxu0 0.0
        %2612 = vmatpush.xpose.msra.mxu0 0.0
        %2613 = vmatpush.xpose.msra.mxu0 0.0
        %2614 = vmatpush.xpose.msra.mxu0 0.0
        %2615 = vmatpush.xpose.msra.mxu0 0.0
        %2616 = vmatpush.xpose.msra.mxu0 %v2599
        %2617 = vmatmul.f32.gmra.mxu0 %v2594
        %v2618 = vpop.f32.mrf.mxu0
        %v2619 = vadd.f32 %v2238, %v2618
        %2620 = vmatmul.f32.gmra.mxu0 %v2596
        %v2621 = vpop.f32.mrf.mxu0
        %v2622 = vadd.f32 %v2241, %v2621
        %2623 = vdwg.mxu0
        %v2624 = vrot.slane %v171, 2
        %v2625 = vrot.slane %v172, 2
        %v2626 = vsel %vm2588, %v2624, %v2625
        %v2627 = vrot.slane %v173, 2
        %v2628 = vsel %vm2588, %v2625, %v2627
        %v2629 = vsel %vm223, %v2626, 0
        %v2631 = vsel %vm223, %v2628, 0
        %2633 = vmatpush.xpose.msra.mxu0 0.0
        %2634 = vmatpush.xpose.msra.mxu0 0.0
        %2635 = vmatpush.xpose.msra.mxu0 0.0
        %2636 = vmatpush.xpose.msra.mxu0 0.0
        %2637 = vmatpush.xpose.msra.mxu0 0.0
        %2638 = vmatpush.xpose.msra.mxu0 0.0
        %2639 = vmatpush.xpose.msra.mxu0 0.0
        %2640 = vmatpush.xpose.msra.mxu0 0.0
        %2641 = vmatpush.xpose.msra.mxu0 0.0
        %2642 = vmatpush.xpose.msra.mxu0 0.0
        %2643 = vmatpush.xpose.msra.mxu0 0.0
        %2644 = vmatpush.xpose.msra.mxu0 0.0
        %2645 = vmatpush.xpose.msra.mxu0 0.0
        %2646 = vmatpush.xpose.msra.mxu0 0.0
        %2647 = vmatpush.xpose.msra.mxu0 0.0
        %2648 = vmatpush.xpose.msra.mxu0 %v2599
        %2649 = vmatmul.f32.gmra.mxu0 %v2629
        %v2650 = vpop.f32.mrf.mxu0
        %v2651 = vadd.f32 %v2261, %v2650
        %2652 = vmatmul.f32.gmra.mxu0 %v2631
        %v2653 = vpop.f32.mrf.mxu0
        %v2654 = vadd.f32 %v2264, %v2653
        %2655 = vdwg.mxu0
        %v2656 = vrot.slane %v174, 2
        %v2657 = vrot.slane %v175, 2
        %v2658 = vsel %vm2588, %v2656, %v2657
        %v2659 = vrot.slane %v176, 2
        %v2660 = vsel %vm2588, %v2657, %v2659
        %v2661 = vsel %vm223, %v2658, 0
        %v2663 = vsel %vm223, %v2660, 0
        %2665 = vmatpush.xpose.msra.mxu0 0.0
        %2666 = vmatpush.xpose.msra.mxu0 0.0
        %2667 = vmatpush.xpose.msra.mxu0 0.0
        %2668 = vmatpush.xpose.msra.mxu0 0.0
        %2669 = vmatpush.xpose.msra.mxu0 0.0
        %2670 = vmatpush.xpose.msra.mxu0 0.0
        %2671 = vmatpush.xpose.msra.mxu0 0.0
        %2672 = vmatpush.xpose.msra.mxu0 0.0
        %2673 = vmatpush.xpose.msra.mxu0 0.0
        %2674 = vmatpush.xpose.msra.mxu0 0.0
        %2675 = vmatpush.xpose.msra.mxu0 0.0
        %2676 = vmatpush.xpose.msra.mxu0 0.0
        %2677 = vmatpush.xpose.msra.mxu0 0.0
        %2678 = vmatpush.xpose.msra.mxu0 0.0
        %2679 = vmatpush.xpose.msra.mxu0 0.0
        %2680 = vmatpush.xpose.msra.mxu0 %v2599
        %2681 = vmatmul.f32.gmra.mxu0 %v2661
        %v2682 = vpop.f32.mrf.mxu0
        %v2683 = vadd.f32 %v2284, %v2682
        %2684 = vmatmul.f32.gmra.mxu0 %v2663
        %v2685 = vpop.f32.mrf.mxu0
        %v2686 = vadd.f32 %v2287, %v2685
        %2687 = vdwg.mxu0
        %v2688 = vrot.slane %v177, 2
        %v2689 = vrot.slane %v178, 2
        %v2690 = vsel %vm2588, %v2688, %v2689
        %v2691 = vrot.slane %v179, 2
        %v2692 = vsel %vm2588, %v2689, %v2691
        %v2693 = vsel %vm223, %v2690, 0
        %v2695 = vsel %vm223, %v2692, 0
        %2697 = vmatpush.xpose.msra.mxu0 0.0
        %2698 = vmatpush.xpose.msra.mxu0 0.0
        %2699 = vmatpush.xpose.msra.mxu0 0.0
        %2700 = vmatpush.xpose.msra.mxu0 0.0
        %2701 = vmatpush.xpose.msra.mxu0 0.0
        %2702 = vmatpush.xpose.msra.mxu0 0.0
        %2703 = vmatpush.xpose.msra.mxu0 0.0
        %2704 = vmatpush.xpose.msra.mxu0 0.0
        %2705 = vmatpush.xpose.msra.mxu0 0.0
        %2706 = vmatpush.xpose.msra.mxu0 0.0
        %2707 = vmatpush.xpose.msra.mxu0 0.0
        %2708 = vmatpush.xpose.msra.mxu0 0.0
        %2709 = vmatpush.xpose.msra.mxu0 0.0
        %2710 = vmatpush.xpose.msra.mxu0 0.0
        %2711 = vmatpush.xpose.msra.mxu0 0.0
        %2712 = vmatpush.xpose.msra.mxu0 %v2599
        %2713 = vmatmul.f32.gmra.mxu0 %v2693
        %v2714 = vpop.f32.mrf.mxu0
        %v2715 = vadd.f32 %v2307, %v2714
        %2716 = vmatmul.f32.gmra.mxu0 %v2695
        %v2717 = vpop.f32.mrf.mxu0
        %v2718 = vadd.f32 %v2310, %v2717
        %2719 = vdwg.mxu0
        %v2720 = vrot.slane %v180, 2
        %v2721 = vrot.slane %v181, 2
        %v2722 = vsel %vm2588, %v2720, %v2721
        %v2723 = vrot.slane %v182, 2
        %v2724 = vsel %vm2588, %v2721, %v2723
        %v2725 = vsel %vm223, %v2722, 0
        %v2727 = vsel %vm223, %v2724, 0
        %2729 = vmatpush.xpose.msra.mxu0 0.0
        %2730 = vmatpush.xpose.msra.mxu0 0.0
        %2731 = vmatpush.xpose.msra.mxu0 0.0
        %2732 = vmatpush.xpose.msra.mxu0 0.0
        %2733 = vmatpush.xpose.msra.mxu0 0.0
        %2734 = vmatpush.xpose.msra.mxu0 0.0
        %2735 = vmatpush.xpose.msra.mxu0 0.0
        %2736 = vmatpush.xpose.msra.mxu0 0.0
        %2737 = vmatpush.xpose.msra.mxu0 0.0
        %2738 = vmatpush.xpose.msra.mxu0 0.0
        %2739 = vmatpush.xpose.msra.mxu0 0.0
        %2740 = vmatpush.xpose.msra.mxu0 0.0
        %2741 = vmatpush.xpose.msra.mxu0 0.0
        %2742 = vmatpush.xpose.msra.mxu0 0.0
        %2743 = vmatpush.xpose.msra.mxu0 0.0
        %2744 = vmatpush.xpose.msra.mxu0 %v2599
        %2745 = vmatmul.f32.gmra.mxu0 %v2725
        %v2746 = vpop.f32.mrf.mxu0
        %v2747 = vadd.f32 %v2330, %v2746
        %2748 = vmatmul.f32.gmra.mxu0 %v2727
        %v2749 = vpop.f32.mrf.mxu0
        %v2750 = vadd.f32 %v2333, %v2749
        %2751 = vdwg.mxu0
        %v2752 = vrot.slane %v183, 2
        %v2753 = vrot.slane %v184, 2
        %v2754 = vsel %vm2588, %v2752, %v2753
        %v2755 = vrot.slane %v185, 2
        %v2756 = vsel %vm2588, %v2753, %v2755
        %v2757 = vsel %vm223, %v2754, 0
        %v2759 = vsel %vm223, %v2756, 0
        %2761 = vmatpush.xpose.msra.mxu0 0.0
        %2762 = vmatpush.xpose.msra.mxu0 0.0
        %2763 = vmatpush.xpose.msra.mxu0 0.0
        %2764 = vmatpush.xpose.msra.mxu0 0.0
        %2765 = vmatpush.xpose.msra.mxu0 0.0
        %2766 = vmatpush.xpose.msra.mxu0 0.0
        %2767 = vmatpush.xpose.msra.mxu0 0.0
        %2768 = vmatpush.xpose.msra.mxu0 0.0
        %2769 = vmatpush.xpose.msra.mxu0 0.0
        %2770 = vmatpush.xpose.msra.mxu0 0.0
        %2771 = vmatpush.xpose.msra.mxu0 0.0
        %2772 = vmatpush.xpose.msra.mxu0 0.0
        %2773 = vmatpush.xpose.msra.mxu0 0.0
        %2774 = vmatpush.xpose.msra.mxu0 0.0
        %2775 = vmatpush.xpose.msra.mxu0 0.0
        %2776 = vmatpush.xpose.msra.mxu0 %v2599
        %2777 = vmatmul.f32.gmra.mxu0 %v2757
        %v2778 = vpop.f32.mrf.mxu0
        %v2779 = vadd.f32 %v2353, %v2778
        %2780 = vmatmul.f32.gmra.mxu0 %v2759
        %v2781 = vpop.f32.mrf.mxu0
        %v2782 = vadd.f32 %v2356, %v2781
        %2783 = vdwg.mxu0
        %v2784 = vrot.slane %v186, 2
        %v2785 = vrot.slane %v187, 2
        %v2786 = vsel %vm2588, %v2784, %v2785
        %v2787 = vrot.slane %v188, 2
        %v2788 = vsel %vm2588, %v2785, %v2787
        %v2789 = vsel %vm223, %v2786, 0
        %v2791 = vsel %vm223, %v2788, 0
        %2793 = vmatpush.xpose.msra.mxu0 0.0
        %2794 = vmatpush.xpose.msra.mxu0 0.0
        %2795 = vmatpush.xpose.msra.mxu0 0.0
        %2796 = vmatpush.xpose.msra.mxu0 0.0
        %2797 = vmatpush.xpose.msra.mxu0 0.0
        %2798 = vmatpush.xpose.msra.mxu0 0.0
        %2799 = vmatpush.xpose.msra.mxu0 0.0
        %2800 = vmatpush.xpose.msra.mxu0 0.0
        %2801 = vmatpush.xpose.msra.mxu0 0.0
        %2802 = vmatpush.xpose.msra.mxu0 0.0
        %2803 = vmatpush.xpose.msra.mxu0 0.0
        %2804 = vmatpush.xpose.msra.mxu0 0.0
        %2805 = vmatpush.xpose.msra.mxu0 0.0
        %2806 = vmatpush.xpose.msra.mxu0 0.0
        %2807 = vmatpush.xpose.msra.mxu0 0.0
        %2808 = vmatpush.xpose.msra.mxu0 %v2599
        %2809 = vmatmul.f32.gmra.mxu0 %v2789
        %v2810 = vpop.f32.mrf.mxu0
        %v2811 = vadd.f32 %v2376, %v2810
        %2812 = vmatmul.f32.gmra.mxu0 %v2791
        %v2813 = vpop.f32.mrf.mxu0
        %v2814 = vadd.f32 %v2379, %v2813
        %2815 = vdwg.mxu0
        %v2816 = vrot.slane %v189, 2
        %v2817 = vrot.slane %v190, 2
        %v2818 = vsel %vm2588, %v2816, %v2817
        %v2819 = vrot.slane %v191, 2
        %v2820 = vsel %vm2588, %v2817, %v2819
        %v2821 = vsel %vm223, %v2818, 0
        %v2823 = vsel %vm223, %v2820, 0
        %2825 = vmatpush.xpose.msra.mxu0 0.0
        %2826 = vmatpush.xpose.msra.mxu0 0.0
        %2827 = vmatpush.xpose.msra.mxu0 0.0
        %2828 = vmatpush.xpose.msra.mxu0 0.0
        %2829 = vmatpush.xpose.msra.mxu0 0.0
        %2830 = vmatpush.xpose.msra.mxu0 0.0
        %2831 = vmatpush.xpose.msra.mxu0 0.0
        %2832 = vmatpush.xpose.msra.mxu0 0.0
        %2833 = vmatpush.xpose.msra.mxu0 0.0
        %2834 = vmatpush.xpose.msra.mxu0 0.0
        %2835 = vmatpush.xpose.msra.mxu0 0.0
        %2836 = vmatpush.xpose.msra.mxu0 0.0
        %2837 = vmatpush.xpose.msra.mxu0 0.0
        %2838 = vmatpush.xpose.msra.mxu0 0.0
        %2839 = vmatpush.xpose.msra.mxu0 0.0
        %2840 = vmatpush.xpose.msra.mxu0 %v2599
        %2841 = vmatmul.f32.gmra.mxu0 %v2821
        %v2842 = vpop.f32.mrf.mxu0
        %v2843 = vadd.f32 %v2399, %v2842
        %2844 = vmatmul.f32.gmra.mxu0 %v2823
        %v2845 = vpop.f32.mrf.mxu0
        %v2846 = vadd.f32 %v2402, %v2845
        %2847 = vdwg.mxu0
        %v2848 = vrot.slane %v192, 2
        %v2849 = vrot.slane %v193, 2
        %v2850 = vsel %vm2588, %v2848, %v2849
        %v2851 = vrot.slane %v194, 2
        %v2852 = vsel %vm2588, %v2849, %v2851
        %v2853 = vsel %vm223, %v2850, 0
        %v2855 = vsel %vm223, %v2852, 0
        %2857 = vmatpush.xpose.msra.mxu0 0.0
        %2858 = vmatpush.xpose.msra.mxu0 0.0
        %2859 = vmatpush.xpose.msra.mxu0 0.0
        %2860 = vmatpush.xpose.msra.mxu0 0.0
        %2861 = vmatpush.xpose.msra.mxu0 0.0
        %2862 = vmatpush.xpose.msra.mxu0 0.0
        %2863 = vmatpush.xpose.msra.mxu0 0.0
        %2864 = vmatpush.xpose.msra.mxu0 0.0
        %2865 = vmatpush.xpose.msra.mxu0 0.0
        %2866 = vmatpush.xpose.msra.mxu0 0.0
        %2867 = vmatpush.xpose.msra.mxu0 0.0
        %2868 = vmatpush.xpose.msra.mxu0 0.0
        %2869 = vmatpush.xpose.msra.mxu0 0.0
        %2870 = vmatpush.xpose.msra.mxu0 0.0
        %2871 = vmatpush.xpose.msra.mxu0 0.0
        %2872 = vmatpush.xpose.msra.mxu0 %v2599
        %2873 = vmatmul.f32.gmra.mxu0 %v2853
        %v2874 = vpop.f32.mrf.mxu0
        %v2875 = vadd.f32 %v2422, %v2874
        %2876 = vmatmul.f32.gmra.mxu0 %v2855
        %v2877 = vpop.f32.mrf.mxu0
        %v2878 = vadd.f32 %v2425, %v2877
        %2879 = vdwg.mxu0
        %v2880 = vrot.slane %v195, 2
        %v2881 = vrot.slane %v196, 2
        %v2882 = vsel %vm2588, %v2880, %v2881
        %v2883 = vrot.slane %v197, 2
        %v2884 = vsel %vm2588, %v2881, %v2883
        %v2885 = vsel %vm223, %v2882, 0
        %v2887 = vsel %vm223, %v2884, 0
        %2889 = vmatpush.xpose.msra.mxu0 0.0
        %2890 = vmatpush.xpose.msra.mxu0 0.0
        %2891 = vmatpush.xpose.msra.mxu0 0.0
        %2892 = vmatpush.xpose.msra.mxu0 0.0
        %2893 = vmatpush.xpose.msra.mxu0 0.0
        %2894 = vmatpush.xpose.msra.mxu0 0.0
        %2895 = vmatpush.xpose.msra.mxu0 0.0
        %2896 = vmatpush.xpose.msra.mxu0 0.0
        %2897 = vmatpush.xpose.msra.mxu0 0.0
        %2898 = vmatpush.xpose.msra.mxu0 0.0
        %2899 = vmatpush.xpose.msra.mxu0 0.0
        %2900 = vmatpush.xpose.msra.mxu0 0.0
        %2901 = vmatpush.xpose.msra.mxu0 0.0
        %2902 = vmatpush.xpose.msra.mxu0 0.0
        %2903 = vmatpush.xpose.msra.mxu0 0.0
        %2904 = vmatpush.xpose.msra.mxu0 %v2599
        %2905 = vmatmul.f32.gmra.mxu0 %v2885
        %v2906 = vpop.f32.mrf.mxu0
        %v2907 = vadd.f32 %v2445, %v2906
        %2908 = vmatmul.f32.gmra.mxu0 %v2887
        %v2909 = vpop.f32.mrf.mxu0
        %v2910 = vadd.f32 %v2448, %v2909
        %2911 = vdwg.mxu0
        %v2912 = vrot.slane %v198, 2
        %v2913 = vrot.slane %v199, 2
        %v2914 = vsel %vm2588, %v2912, %v2913
        %v2915 = vrot.slane %v200, 2
        %v2916 = vsel %vm2588, %v2913, %v2915
        %v2917 = vsel %vm223, %v2914, 0
        %v2919 = vsel %vm223, %v2916, 0
        %2921 = vmatpush.xpose.msra.mxu0 0.0
        %2922 = vmatpush.xpose.msra.mxu0 0.0
        %2923 = vmatpush.xpose.msra.mxu0 0.0
        %2924 = vmatpush.xpose.msra.mxu0 0.0
        %2925 = vmatpush.xpose.msra.mxu0 0.0
        %2926 = vmatpush.xpose.msra.mxu0 0.0
        %2927 = vmatpush.xpose.msra.mxu0 0.0
        %2928 = vmatpush.xpose.msra.mxu0 0.0
        %2929 = vmatpush.xpose.msra.mxu0 0.0
        %2930 = vmatpush.xpose.msra.mxu0 0.0
        %2931 = vmatpush.xpose.msra.mxu0 0.0
        %2932 = vmatpush.xpose.msra.mxu0 0.0
        %2933 = vmatpush.xpose.msra.mxu0 0.0
        %2934 = vmatpush.xpose.msra.mxu0 0.0
        %2935 = vmatpush.xpose.msra.mxu0 0.0
        %2936 = vmatpush.xpose.msra.mxu0 %v2599
        %2937 = vmatmul.f32.gmra.mxu0 %v2917
        %v2938 = vpop.f32.mrf.mxu0
        %v2939 = vadd.f32 %v2468, %v2938
        %2940 = vmatmul.f32.gmra.mxu0 %v2919
        %v2941 = vpop.f32.mrf.mxu0
        %v2942 = vadd.f32 %v2471, %v2941
        %2943 = vdwg.mxu0
        %v2944 = vrot.slane %v201, 2
        %v2945 = vrot.slane %v202, 2
        %v2946 = vsel %vm2588, %v2944, %v2945
        %v2947 = vrot.slane %v203, 2
        %v2948 = vsel %vm2588, %v2945, %v2947
        %v2949 = vsel %vm223, %v2946, 0
        %v2951 = vsel %vm223, %v2948, 0
        %2953 = vmatpush.xpose.msra.mxu0 0.0
        %2954 = vmatpush.xpose.msra.mxu0 0.0
        %2955 = vmatpush.xpose.msra.mxu0 0.0
        %2956 = vmatpush.xpose.msra.mxu0 0.0
        %2957 = vmatpush.xpose.msra.mxu0 0.0
        %2958 = vmatpush.xpose.msra.mxu0 0.0
        %2959 = vmatpush.xpose.msra.mxu0 0.0
        %2960 = vmatpush.xpose.msra.mxu0 0.0
        %2961 = vmatpush.xpose.msra.mxu0 0.0
        %2962 = vmatpush.xpose.msra.mxu0 0.0
        %2963 = vmatpush.xpose.msra.mxu0 0.0
        %2964 = vmatpush.xpose.msra.mxu0 0.0
        %2965 = vmatpush.xpose.msra.mxu0 0.0
        %2966 = vmatpush.xpose.msra.mxu0 0.0
        %2967 = vmatpush.xpose.msra.mxu0 0.0
        %2968 = vmatpush.xpose.msra.mxu0 %v2599
        %2969 = vmatmul.f32.gmra.mxu0 %v2949
        %v2970 = vpop.f32.mrf.mxu0
        %v2971 = vadd.f32 %v2491, %v2970
        %2972 = vmatmul.f32.gmra.mxu0 %v2951
        %v2973 = vpop.f32.mrf.mxu0
        %v2974 = vadd.f32 %v2494, %v2973
        %2975 = vdwg.mxu0
        %v2976 = vrot.slane %v204, 2
        %v2977 = vrot.slane %v205, 2
        %v2978 = vsel %vm2588, %v2976, %v2977
        %v2979 = vrot.slane %v206, 2
        %v2980 = vsel %vm2588, %v2977, %v2979
        %v2981 = vsel %vm223, %v2978, 0
        %v2983 = vsel %vm223, %v2980, 0
        %2985 = vmatpush.xpose.msra.mxu0 0.0
        %2986 = vmatpush.xpose.msra.mxu0 0.0
        %2987 = vmatpush.xpose.msra.mxu0 0.0
        %2988 = vmatpush.xpose.msra.mxu0 0.0
        %2989 = vmatpush.xpose.msra.mxu0 0.0
        %2990 = vmatpush.xpose.msra.mxu0 0.0
        %2991 = vmatpush.xpose.msra.mxu0 0.0
        %2992 = vmatpush.xpose.msra.mxu0 0.0
        %2993 = vmatpush.xpose.msra.mxu0 0.0
        %2994 = vmatpush.xpose.msra.mxu0 0.0
        %2995 = vmatpush.xpose.msra.mxu0 0.0
        %2996 = vmatpush.xpose.msra.mxu0 0.0
        %2997 = vmatpush.xpose.msra.mxu0 0.0
        %2998 = vmatpush.xpose.msra.mxu0 0.0
        %2999 = vmatpush.xpose.msra.mxu0 0.0
        %3000 = vmatpush.xpose.msra.mxu0 %v2599
        %3001 = vmatmul.f32.gmra.mxu0 %v2981
        %v3002 = vpop.f32.mrf.mxu0
        %v3003 = vadd.f32 %v2514, %v3002
        %3004 = vmatmul.f32.gmra.mxu0 %v2983
        %v3005 = vpop.f32.mrf.mxu0
        %v3006 = vadd.f32 %v2517, %v3005
        %3007 = vdwg.mxu0
        %v3008 = vrot.slane %v207, 2
        %v3009 = vrot.slane %v208, 2
        %v3010 = vsel %vm2588, %v3008, %v3009
        %v3011 = vrot.slane %v209, 2
        %v3012 = vsel %vm2588, %v3009, %v3011
        %v3013 = vsel %vm223, %v3010, 0
        %v3015 = vsel %vm223, %v3012, 0
        %3017 = vmatpush.xpose.msra.mxu0 0.0
        %3018 = vmatpush.xpose.msra.mxu0 0.0
        %3019 = vmatpush.xpose.msra.mxu0 0.0
        %3020 = vmatpush.xpose.msra.mxu0 0.0
        %3021 = vmatpush.xpose.msra.mxu0 0.0
        %3022 = vmatpush.xpose.msra.mxu0 0.0
        %3023 = vmatpush.xpose.msra.mxu0 0.0
        %3024 = vmatpush.xpose.msra.mxu0 0.0
        %3025 = vmatpush.xpose.msra.mxu0 0.0
        %3026 = vmatpush.xpose.msra.mxu0 0.0
        %3027 = vmatpush.xpose.msra.mxu0 0.0
        %3028 = vmatpush.xpose.msra.mxu0 0.0
        %3029 = vmatpush.xpose.msra.mxu0 0.0
        %3030 = vmatpush.xpose.msra.mxu0 0.0
        %3031 = vmatpush.xpose.msra.mxu0 0.0
        %3032 = vmatpush.xpose.msra.mxu0 %v2599
        %3033 = vmatmul.f32.gmra.mxu0 %v3013
        %v3034 = vpop.f32.mrf.mxu0
        %v3035 = vadd.f32 %v2537, %v3034
        %3036 = vmatmul.f32.gmra.mxu0 %v3015
        %v3037 = vpop.f32.mrf.mxu0
        %v3038 = vadd.f32 %v2540, %v3037
        %3039 = vdwg.mxu0
        %v3040 = vrot.slane %v210, 2
        %v3041 = vrot.slane %v211, 2
        %v3042 = vsel %vm2588, %v3040, %v3041
        %v3043 = vrot.slane %v212, 2
        %v3044 = vsel %vm2588, %v3041, %v3043
        %v3045 = vsel %vm223, %v3042, 0
        %v3047 = vsel %vm223, %v3044, 0
        %3049 = vmatpush.xpose.msra.mxu0 0.0
        %3050 = vmatpush.xpose.msra.mxu0 0.0
        %3051 = vmatpush.xpose.msra.mxu0 0.0
        %3052 = vmatpush.xpose.msra.mxu0 0.0
        %3053 = vmatpush.xpose.msra.mxu0 0.0
        %3054 = vmatpush.xpose.msra.mxu0 0.0
        %3055 = vmatpush.xpose.msra.mxu0 0.0
        %3056 = vmatpush.xpose.msra.mxu0 0.0
        %3057 = vmatpush.xpose.msra.mxu0 0.0
        %3058 = vmatpush.xpose.msra.mxu0 0.0
        %3059 = vmatpush.xpose.msra.mxu0 0.0
        %3060 = vmatpush.xpose.msra.mxu0 0.0
        %3061 = vmatpush.xpose.msra.mxu0 0.0
        %3062 = vmatpush.xpose.msra.mxu0 0.0
        %3063 = vmatpush.xpose.msra.mxu0 0.0
        %3064 = vmatpush.xpose.msra.mxu0 %v2599
        %3065 = vmatmul.f32.gmra.mxu0 %v3045
        %v3066 = vpop.f32.mrf.mxu0
        %v3067 = vadd.f32 %v2560, %v3066
        %3068 = vmatmul.f32.gmra.mxu0 %v3047
        %v3069 = vpop.f32.mrf.mxu0
        %v3070 = vadd.f32 %v2563, %v3069
        %3071 = vdwg.mxu0
        %v3072 = vrot.slane %v213, 2
        %v3073 = vrot.slane %v214, 2
        %v3074 = vsel %vm2588, %v3072, %v3073
        %v3075 = vrot.slane %v215, 2
        %v3076 = vsel %vm2588, %v3073, %v3075
        %v3077 = vsel %vm223, %v3074, 0
        %v3079 = vsel %vm223, %v3076, 0
        %3081 = vmatpush.xpose.msra.mxu0 0.0
        %3082 = vmatpush.xpose.msra.mxu0 0.0
        %3083 = vmatpush.xpose.msra.mxu0 0.0
        %3084 = vmatpush.xpose.msra.mxu0 0.0
        %3085 = vmatpush.xpose.msra.mxu0 0.0
        %3086 = vmatpush.xpose.msra.mxu0 0.0
        %3087 = vmatpush.xpose.msra.mxu0 0.0
        %3088 = vmatpush.xpose.msra.mxu0 0.0
        %3089 = vmatpush.xpose.msra.mxu0 0.0
        %3090 = vmatpush.xpose.msra.mxu0 0.0
        %3091 = vmatpush.xpose.msra.mxu0 0.0
        %3092 = vmatpush.xpose.msra.mxu0 0.0
        %3093 = vmatpush.xpose.msra.mxu0 0.0
        %3094 = vmatpush.xpose.msra.mxu0 0.0
        %3095 = vmatpush.xpose.msra.mxu0 0.0
        %3096 = vmatpush.xpose.msra.mxu0 %v2599
        %3097 = vmatmul.f32.gmra.mxu0 %v3077
        %v3098 = vpop.f32.mrf.mxu0
        %v3099 = vadd.f32 %v2583, %v3098
        %3100 = vmatmul.f32.gmra.mxu0 %v3079
        %v3101 = vpop.f32.mrf.mxu0
        %v3102 = vadd.f32 %v2586, %v3101
        %3103 = vdwg.mxu0
        %s3104 = scalar_lea.vmem %s1, 48
        %v3105 = vld [vmem:[%s3104] sm:$0xff]
        %v3106 = vrot.slane %v165, 2
        %v3107 = vrot.slane %v166, 2
        %v3108 = vsel %vm2588, %v3106, %v3107
        %v3109 = vrot.slane %v167, 2
        %v3110 = vsel %vm2588, %v3107, %v3109
        %v3111 = vsel %vm223, %v3108, 0
        %v3113 = vsel %vm223, %v3110, 0
        %v3116 = vsel %vm223, %v3105, 0
        %3118 = vmatpush.xpose.msra.mxu0 0.0
        %3119 = vmatpush.xpose.msra.mxu0 0.0
        %3120 = vmatpush.xpose.msra.mxu0 0.0
        %3121 = vmatpush.xpose.msra.mxu0 0.0
        %3122 = vmatpush.xpose.msra.mxu0 0.0
        %3123 = vmatpush.xpose.msra.mxu0 0.0
        %3124 = vmatpush.xpose.msra.mxu0 0.0
        %3125 = vmatpush.xpose.msra.mxu0 0.0
        %3126 = vmatpush.xpose.msra.mxu0 0.0
        %3127 = vmatpush.xpose.msra.mxu0 0.0
        %3128 = vmatpush.xpose.msra.mxu0 0.0
        %3129 = vmatpush.xpose.msra.mxu0 0.0
        %3130 = vmatpush.xpose.msra.mxu0 0.0
        %3131 = vmatpush.xpose.msra.mxu0 0.0
        %3132 = vmatpush.xpose.msra.mxu0 0.0
        %3133 = vmatpush.xpose.msra.mxu0 %v3116
        %3134 = vmatmul.f32.gmra.mxu0 %v3111
        %v3135 = vpop.f32.mrf.mxu0
        %v3136 = vadd.f32 0.0, %v3135
        %3137 = vmatmul.f32.gmra.mxu0 %v3113
        %v3138 = vpop.f32.mrf.mxu0
        %v3139 = vadd.f32 0.0, %v3138
        %3140 = vdwg.mxu0
        %3141 = vmatpush.xpose.msra.mxu0 0.0
        %3142 = vmatpush.xpose.msra.mxu0 0.0
        %3143 = vmatpush.xpose.msra.mxu0 0.0
        %3144 = vmatpush.xpose.msra.mxu0 0.0
        %3145 = vmatpush.xpose.msra.mxu0 0.0
        %3146 = vmatpush.xpose.msra.mxu0 0.0
        %3147 = vmatpush.xpose.msra.mxu0 0.0
        %3148 = vmatpush.xpose.msra.mxu0 0.0
        %3149 = vmatpush.xpose.msra.mxu0 0.0
        %3150 = vmatpush.xpose.msra.mxu0 0.0
        %3151 = vmatpush.xpose.msra.mxu0 0.0
        %3152 = vmatpush.xpose.msra.mxu0 0.0
        %3153 = vmatpush.xpose.msra.mxu0 0.0
        %3154 = vmatpush.xpose.msra.mxu0 0.0
        %3155 = vmatpush.xpose.msra.mxu0 0.0
        %3156 = vmatpush.xpose.msra.mxu0 %v3116
        %3157 = vmatmul.f32.gmra.mxu0 %v2594
        %v3158 = vpop.f32.mrf.mxu0
        %v3159 = vadd.f32 0.0, %v3158
        %3160 = vmatmul.f32.gmra.mxu0 %v2596
        %v3161 = vpop.f32.mrf.mxu0
        %v3162 = vadd.f32 0.0, %v3161
        %3163 = vdwg.mxu0
        %3164 = vmatpush.xpose.msra.mxu0 0.0
        %3165 = vmatpush.xpose.msra.mxu0 0.0
        %3166 = vmatpush.xpose.msra.mxu0 0.0
        %3167 = vmatpush.xpose.msra.mxu0 0.0
        %3168 = vmatpush.xpose.msra.mxu0 0.0
        %3169 = vmatpush.xpose.msra.mxu0 0.0
        %3170 = vmatpush.xpose.msra.mxu0 0.0
        %3171 = vmatpush.xpose.msra.mxu0 0.0
        %3172 = vmatpush.xpose.msra.mxu0 0.0
        %3173 = vmatpush.xpose.msra.mxu0 0.0
        %3174 = vmatpush.xpose.msra.mxu0 0.0
        %3175 = vmatpush.xpose.msra.mxu0 0.0
        %3176 = vmatpush.xpose.msra.mxu0 0.0
        %3177 = vmatpush.xpose.msra.mxu0 0.0
        %3178 = vmatpush.xpose.msra.mxu0 0.0
        %3179 = vmatpush.xpose.msra.mxu0 %v3116
        %3180 = vmatmul.f32.gmra.mxu0 %v2629
        %v3181 = vpop.f32.mrf.mxu0
        %v3182 = vadd.f32 0.0, %v3181
        %3183 = vmatmul.f32.gmra.mxu0 %v2631
        %v3184 = vpop.f32.mrf.mxu0
        %v3185 = vadd.f32 0.0, %v3184
        %3186 = vdwg.mxu0
        %3187 = vmatpush.xpose.msra.mxu0 0.0
        %3188 = vmatpush.xpose.msra.mxu0 0.0
        %3189 = vmatpush.xpose.msra.mxu0 0.0
        %3190 = vmatpush.xpose.msra.mxu0 0.0
        %3191 = vmatpush.xpose.msra.mxu0 0.0
        %3192 = vmatpush.xpose.msra.mxu0 0.0
        %3193 = vmatpush.xpose.msra.mxu0 0.0
        %3194 = vmatpush.xpose.msra.mxu0 0.0
        %3195 = vmatpush.xpose.msra.mxu0 0.0
        %3196 = vmatpush.xpose.msra.mxu0 0.0
        %3197 = vmatpush.xpose.msra.mxu0 0.0
        %3198 = vmatpush.xpose.msra.mxu0 0.0
        %3199 = vmatpush.xpose.msra.mxu0 0.0
        %3200 = vmatpush.xpose.msra.mxu0 0.0
        %3201 = vmatpush.xpose.msra.mxu0 0.0
        %3202 = vmatpush.xpose.msra.mxu0 %v3116
        %3203 = vmatmul.f32.gmra.mxu0 %v2661
        %v3204 = vpop.f32.mrf.mxu0
        %v3205 = vadd.f32 0.0, %v3204
        %3206 = vmatmul.f32.gmra.mxu0 %v2663
        %v3207 = vpop.f32.mrf.mxu0
        %v3208 = vadd.f32 0.0, %v3207
        %3209 = vdwg.mxu0
        %3210 = vmatpush.xpose.msra.mxu0 0.0
        %3211 = vmatpush.xpose.msra.mxu0 0.0
        %3212 = vmatpush.xpose.msra.mxu0 0.0
        %3213 = vmatpush.xpose.msra.mxu0 0.0
        %3214 = vmatpush.xpose.msra.mxu0 0.0
        %3215 = vmatpush.xpose.msra.mxu0 0.0
        %3216 = vmatpush.xpose.msra.mxu0 0.0
        %3217 = vmatpush.xpose.msra.mxu0 0.0
        %3218 = vmatpush.xpose.msra.mxu0 0.0
        %3219 = vmatpush.xpose.msra.mxu0 0.0
        %3220 = vmatpush.xpose.msra.mxu0 0.0
        %3221 = vmatpush.xpose.msra.mxu0 0.0
        %3222 = vmatpush.xpose.msra.mxu0 0.0
        %3223 = vmatpush.xpose.msra.mxu0 0.0
        %3224 = vmatpush.xpose.msra.mxu0 0.0
        %3225 = vmatpush.xpose.msra.mxu0 %v3116
        %3226 = vmatmul.f32.gmra.mxu0 %v2693
        %v3227 = vpop.f32.mrf.mxu0
        %v3228 = vadd.f32 0.0, %v3227
        %3229 = vmatmul.f32.gmra.mxu0 %v2695
        %v3230 = vpop.f32.mrf.mxu0
        %v3231 = vadd.f32 0.0, %v3230
        %3232 = vdwg.mxu0
        %3233 = vmatpush.xpose.msra.mxu0 0.0
        %3234 = vmatpush.xpose.msra.mxu0 0.0
        %3235 = vmatpush.xpose.msra.mxu0 0.0
        %3236 = vmatpush.xpose.msra.mxu0 0.0
        %3237 = vmatpush.xpose.msra.mxu0 0.0
        %3238 = vmatpush.xpose.msra.mxu0 0.0
        %3239 = vmatpush.xpose.msra.mxu0 0.0
        %3240 = vmatpush.xpose.msra.mxu0 0.0
        %3241 = vmatpush.xpose.msra.mxu0 0.0
        %3242 = vmatpush.xpose.msra.mxu0 0.0
        %3243 = vmatpush.xpose.msra.mxu0 0.0
        %3244 = vmatpush.xpose.msra.mxu0 0.0
        %3245 = vmatpush.xpose.msra.mxu0 0.0
        %3246 = vmatpush.xpose.msra.mxu0 0.0
        %3247 = vmatpush.xpose.msra.mxu0 0.0
        %3248 = vmatpush.xpose.msra.mxu0 %v3116
        %3249 = vmatmul.f32.gmra.mxu0 %v2725
        %v3250 = vpop.f32.mrf.mxu0
        %v3251 = vadd.f32 0.0, %v3250
        %3252 = vmatmul.f32.gmra.mxu0 %v2727
        %v3253 = vpop.f32.mrf.mxu0
        %v3254 = vadd.f32 0.0, %v3253
        %3255 = vdwg.mxu0
        %3256 = vmatpush.xpose.msra.mxu0 0.0
        %3257 = vmatpush.xpose.msra.mxu0 0.0
        %3258 = vmatpush.xpose.msra.mxu0 0.0
        %3259 = vmatpush.xpose.msra.mxu0 0.0
        %3260 = vmatpush.xpose.msra.mxu0 0.0
        %3261 = vmatpush.xpose.msra.mxu0 0.0
        %3262 = vmatpush.xpose.msra.mxu0 0.0
        %3263 = vmatpush.xpose.msra.mxu0 0.0
        %3264 = vmatpush.xpose.msra.mxu0 0.0
        %3265 = vmatpush.xpose.msra.mxu0 0.0
        %3266 = vmatpush.xpose.msra.mxu0 0.0
        %3267 = vmatpush.xpose.msra.mxu0 0.0
        %3268 = vmatpush.xpose.msra.mxu0 0.0
        %3269 = vmatpush.xpose.msra.mxu0 0.0
        %3270 = vmatpush.xpose.msra.mxu0 0.0
        %3271 = vmatpush.xpose.msra.mxu0 %v3116
        %3272 = vmatmul.f32.gmra.mxu0 %v2757
        %v3273 = vpop.f32.mrf.mxu0
        %v3274 = vadd.f32 0.0, %v3273
        %3275 = vmatmul.f32.gmra.mxu0 %v2759
        %v3276 = vpop.f32.mrf.mxu0
        %v3277 = vadd.f32 0.0, %v3276
        %3278 = vdwg.mxu0
        %3279 = vmatpush.xpose.msra.mxu0 0.0
        %3280 = vmatpush.xpose.msra.mxu0 0.0
        %3281 = vmatpush.xpose.msra.mxu0 0.0
        %3282 = vmatpush.xpose.msra.mxu0 0.0
        %3283 = vmatpush.xpose.msra.mxu0 0.0
        %3284 = vmatpush.xpose.msra.mxu0 0.0
        %3285 = vmatpush.xpose.msra.mxu0 0.0
        %3286 = vmatpush.xpose.msra.mxu0 0.0
        %3287 = vmatpush.xpose.msra.mxu0 0.0
        %3288 = vmatpush.xpose.msra.mxu0 0.0
        %3289 = vmatpush.xpose.msra.mxu0 0.0
        %3290 = vmatpush.xpose.msra.mxu0 0.0
        %3291 = vmatpush.xpose.msra.mxu0 0.0
        %3292 = vmatpush.xpose.msra.mxu0 0.0
        %3293 = vmatpush.xpose.msra.mxu0 0.0
        %3294 = vmatpush.xpose.msra.mxu0 %v3116
        %3295 = vmatmul.f32.gmra.mxu0 %v2789
        %v3296 = vpop.f32.mrf.mxu0
        %v3297 = vadd.f32 0.0, %v3296
        %3298 = vmatmul.f32.gmra.mxu0 %v2791
        %v3299 = vpop.f32.mrf.mxu0
        %v3300 = vadd.f32 0.0, %v3299
        %3301 = vdwg.mxu0
        %3302 = vmatpush.xpose.msra.mxu0 0.0
        %3303 = vmatpush.xpose.msra.mxu0 0.0
        %3304 = vmatpush.xpose.msra.mxu0 0.0
        %3305 = vmatpush.xpose.msra.mxu0 0.0
        %3306 = vmatpush.xpose.msra.mxu0 0.0
        %3307 = vmatpush.xpose.msra.mxu0 0.0
        %3308 = vmatpush.xpose.msra.mxu0 0.0
        %3309 = vmatpush.xpose.msra.mxu0 0.0
        %3310 = vmatpush.xpose.msra.mxu0 0.0
        %3311 = vmatpush.xpose.msra.mxu0 0.0
        %3312 = vmatpush.xpose.msra.mxu0 0.0
        %3313 = vmatpush.xpose.msra.mxu0 0.0
        %3314 = vmatpush.xpose.msra.mxu0 0.0
        %3315 = vmatpush.xpose.msra.mxu0 0.0
        %3316 = vmatpush.xpose.msra.mxu0 0.0
        %3317 = vmatpush.xpose.msra.mxu0 %v3116
        %3318 = vmatmul.f32.gmra.mxu0 %v2821
        %v3319 = vpop.f32.mrf.mxu0
        %v3320 = vadd.f32 0.0, %v3319
        %3321 = vmatmul.f32.gmra.mxu0 %v2823
        %v3322 = vpop.f32.mrf.mxu0
        %v3323 = vadd.f32 0.0, %v3322
        %3324 = vdwg.mxu0
        %3325 = vmatpush.xpose.msra.mxu0 0.0
        %3326 = vmatpush.xpose.msra.mxu0 0.0
        %3327 = vmatpush.xpose.msra.mxu0 0.0
        %3328 = vmatpush.xpose.msra.mxu0 0.0
        %3329 = vmatpush.xpose.msra.mxu0 0.0
        %3330 = vmatpush.xpose.msra.mxu0 0.0
        %3331 = vmatpush.xpose.msra.mxu0 0.0
        %3332 = vmatpush.xpose.msra.mxu0 0.0
        %3333 = vmatpush.xpose.msra.mxu0 0.0
        %3334 = vmatpush.xpose.msra.mxu0 0.0
        %3335 = vmatpush.xpose.msra.mxu0 0.0
        %3336 = vmatpush.xpose.msra.mxu0 0.0
        %3337 = vmatpush.xpose.msra.mxu0 0.0
        %3338 = vmatpush.xpose.msra.mxu0 0.0
        %3339 = vmatpush.xpose.msra.mxu0 0.0
        %3340 = vmatpush.xpose.msra.mxu0 %v3116
        %3341 = vmatmul.f32.gmra.mxu0 %v2853
        %v3342 = vpop.f32.mrf.mxu0
        %v3343 = vadd.f32 0.0, %v3342
        %3344 = vmatmul.f32.gmra.mxu0 %v2855
        %v3345 = vpop.f32.mrf.mxu0
        %v3346 = vadd.f32 0.0, %v3345
        %3347 = vdwg.mxu0
        %3348 = vmatpush.xpose.msra.mxu0 0.0
        %3349 = vmatpush.xpose.msra.mxu0 0.0
        %3350 = vmatpush.xpose.msra.mxu0 0.0
        %3351 = vmatpush.xpose.msra.mxu0 0.0
        %3352 = vmatpush.xpose.msra.mxu0 0.0
        %3353 = vmatpush.xpose.msra.mxu0 0.0
        %3354 = vmatpush.xpose.msra.mxu0 0.0
        %3355 = vmatpush.xpose.msra.mxu0 0.0
        %3356 = vmatpush.xpose.msra.mxu0 0.0
        %3357 = vmatpush.xpose.msra.mxu0 0.0
        %3358 = vmatpush.xpose.msra.mxu0 0.0
        %3359 = vmatpush.xpose.msra.mxu0 0.0
        %3360 = vmatpush.xpose.msra.mxu0 0.0
        %3361 = vmatpush.xpose.msra.mxu0 0.0
        %3362 = vmatpush.xpose.msra.mxu0 0.0
        %3363 = vmatpush.xpose.msra.mxu0 %v3116
        %3364 = vmatmul.f32.gmra.mxu0 %v2885
        %v3365 = vpop.f32.mrf.mxu0
        %v3366 = vadd.f32 0.0, %v3365
        %3367 = vmatmul.f32.gmra.mxu0 %v2887
        %v3368 = vpop.f32.mrf.mxu0
        %v3369 = vadd.f32 0.0, %v3368
        %3370 = vdwg.mxu0
        %3371 = vmatpush.xpose.msra.mxu0 0.0
        %3372 = vmatpush.xpose.msra.mxu0 0.0
        %3373 = vmatpush.xpose.msra.mxu0 0.0
        %3374 = vmatpush.xpose.msra.mxu0 0.0
        %3375 = vmatpush.xpose.msra.mxu0 0.0
        %3376 = vmatpush.xpose.msra.mxu0 0.0
        %3377 = vmatpush.xpose.msra.mxu0 0.0
        %3378 = vmatpush.xpose.msra.mxu0 0.0
        %3379 = vmatpush.xpose.msra.mxu0 0.0
        %3380 = vmatpush.xpose.msra.mxu0 0.0
        %3381 = vmatpush.xpose.msra.mxu0 0.0
        %3382 = vmatpush.xpose.msra.mxu0 0.0
        %3383 = vmatpush.xpose.msra.mxu0 0.0
        %3384 = vmatpush.xpose.msra.mxu0 0.0
        %3385 = vmatpush.xpose.msra.mxu0 0.0
        %3386 = vmatpush.xpose.msra.mxu0 %v3116
        %3387 = vmatmul.f32.gmra.mxu0 %v2917
        %v3388 = vpop.f32.mrf.mxu0
        %v3389 = vadd.f32 0.0, %v3388
        %3390 = vmatmul.f32.gmra.mxu0 %v2919
        %v3391 = vpop.f32.mrf.mxu0
        %v3392 = vadd.f32 0.0, %v3391
        %3393 = vdwg.mxu0
        %3394 = vmatpush.xpose.msra.mxu0 0.0
        %3395 = vmatpush.xpose.msra.mxu0 0.0
        %3396 = vmatpush.xpose.msra.mxu0 0.0
        %3397 = vmatpush.xpose.msra.mxu0 0.0
        %3398 = vmatpush.xpose.msra.mxu0 0.0
        %3399 = vmatpush.xpose.msra.mxu0 0.0
        %3400 = vmatpush.xpose.msra.mxu0 0.0
        %3401 = vmatpush.xpose.msra.mxu0 0.0
        %3402 = vmatpush.xpose.msra.mxu0 0.0
        %3403 = vmatpush.xpose.msra.mxu0 0.0
        %3404 = vmatpush.xpose.msra.mxu0 0.0
        %3405 = vmatpush.xpose.msra.mxu0 0.0
        %3406 = vmatpush.xpose.msra.mxu0 0.0
        %3407 = vmatpush.xpose.msra.mxu0 0.0
        %3408 = vmatpush.xpose.msra.mxu0 0.0
        %3409 = vmatpush.xpose.msra.mxu0 %v3116
        %3410 = vmatmul.f32.gmra.mxu0 %v2949
        %v3411 = vpop.f32.mrf.mxu0
        %v3412 = vadd.f32 0.0, %v3411
        %3413 = vmatmul.f32.gmra.mxu0 %v2951
        %v3414 = vpop.f32.mrf.mxu0
        %v3415 = vadd.f32 0.0, %v3414
        %3416 = vdwg.mxu0
        %3417 = vmatpush.xpose.msra.mxu0 0.0
        %3418 = vmatpush.xpose.msra.mxu0 0.0
        %3419 = vmatpush.xpose.msra.mxu0 0.0
        %3420 = vmatpush.xpose.msra.mxu0 0.0
        %3421 = vmatpush.xpose.msra.mxu0 0.0
        %3422 = vmatpush.xpose.msra.mxu0 0.0
        %3423 = vmatpush.xpose.msra.mxu0 0.0
        %3424 = vmatpush.xpose.msra.mxu0 0.0
        %3425 = vmatpush.xpose.msra.mxu0 0.0
        %3426 = vmatpush.xpose.msra.mxu0 0.0
        %3427 = vmatpush.xpose.msra.mxu0 0.0
        %3428 = vmatpush.xpose.msra.mxu0 0.0
        %3429 = vmatpush.xpose.msra.mxu0 0.0
        %3430 = vmatpush.xpose.msra.mxu0 0.0
        %3431 = vmatpush.xpose.msra.mxu0 0.0
        %3432 = vmatpush.xpose.msra.mxu0 %v3116
        %3433 = vmatmul.f32.gmra.mxu0 %v2981
        %v3434 = vpop.f32.mrf.mxu0
        %v3435 = vadd.f32 0.0, %v3434
        %3436 = vmatmul.f32.gmra.mxu0 %v2983
        %v3437 = vpop.f32.mrf.mxu0
        %v3438 = vadd.f32 0.0, %v3437
        %3439 = vdwg.mxu0
        %3440 = vmatpush.xpose.msra.mxu0 0.0
        %3441 = vmatpush.xpose.msra.mxu0 0.0
        %3442 = vmatpush.xpose.msra.mxu0 0.0
        %3443 = vmatpush.xpose.msra.mxu0 0.0
        %3444 = vmatpush.xpose.msra.mxu0 0.0
        %3445 = vmatpush.xpose.msra.mxu0 0.0
        %3446 = vmatpush.xpose.msra.mxu0 0.0
        %3447 = vmatpush.xpose.msra.mxu0 0.0
        %3448 = vmatpush.xpose.msra.mxu0 0.0
        %3449 = vmatpush.xpose.msra.mxu0 0.0
        %3450 = vmatpush.xpose.msra.mxu0 0.0
        %3451 = vmatpush.xpose.msra.mxu0 0.0
        %3452 = vmatpush.xpose.msra.mxu0 0.0
        %3453 = vmatpush.xpose.msra.mxu0 0.0
        %3454 = vmatpush.xpose.msra.mxu0 0.0
        %3455 = vmatpush.xpose.msra.mxu0 %v3116
        %3456 = vmatmul.f32.gmra.mxu0 %v3013
        %v3457 = vpop.f32.mrf.mxu0
        %v3458 = vadd.f32 0.0, %v3457
        %3459 = vmatmul.f32.gmra.mxu0 %v3015
        %v3460 = vpop.f32.mrf.mxu0
        %v3461 = vadd.f32 0.0, %v3460
        %3462 = vdwg.mxu0
        %3463 = vmatpush.xpose.msra.mxu0 0.0
        %3464 = vmatpush.xpose.msra.mxu0 0.0
        %3465 = vmatpush.xpose.msra.mxu0 0.0
        %3466 = vmatpush.xpose.msra.mxu0 0.0
        %3467 = vmatpush.xpose.msra.mxu0 0.0
        %3468 = vmatpush.xpose.msra.mxu0 0.0
        %3469 = vmatpush.xpose.msra.mxu0 0.0
        %3470 = vmatpush.xpose.msra.mxu0 0.0
        %3471 = vmatpush.xpose.msra.mxu0 0.0
        %3472 = vmatpush.xpose.msra.mxu0 0.0
        %3473 = vmatpush.xpose.msra.mxu0 0.0
        %3474 = vmatpush.xpose.msra.mxu0 0.0
        %3475 = vmatpush.xpose.msra.mxu0 0.0
        %3476 = vmatpush.xpose.msra.mxu0 0.0
        %3477 = vmatpush.xpose.msra.mxu0 0.0
        %3478 = vmatpush.xpose.msra.mxu0 %v3116
        %3479 = vmatmul.f32.gmra.mxu0 %v3045
        %v3480 = vpop.f32.mrf.mxu0
        %v3481 = vadd.f32 0.0, %v3480
        %3482 = vmatmul.f32.gmra.mxu0 %v3047
        %v3483 = vpop.f32.mrf.mxu0
        %v3484 = vadd.f32 0.0, %v3483
        %3485 = vdwg.mxu0
        %v3486 = vadd.f32 %v2619, %v3136
        %v3487 = vadd.f32 %v2622, %v3139
        %v3488 = vadd.f32 %v2651, %v3159
        %v3489 = vadd.f32 %v2654, %v3162
        %v3490 = vadd.f32 %v2683, %v3182
        %v3491 = vadd.f32 %v2686, %v3185
        %v3492 = vadd.f32 %v2715, %v3205
        %v3493 = vadd.f32 %v2718, %v3208
        %v3494 = vadd.f32 %v2747, %v3228
        %v3495 = vadd.f32 %v2750, %v3231
        %v3496 = vadd.f32 %v2779, %v3251
        %v3497 = vadd.f32 %v2782, %v3254
        %v3498 = vadd.f32 %v2811, %v3274
        %v3499 = vadd.f32 %v2814, %v3277
        %v3500 = vadd.f32 %v2843, %v3297
        %v3501 = vadd.f32 %v2846, %v3300
        %v3502 = vadd.f32 %v2875, %v3320
        %v3503 = vadd.f32 %v2878, %v3323
        %v3504 = vadd.f32 %v2907, %v3343
        %v3505 = vadd.f32 %v2910, %v3346
        %v3506 = vadd.f32 %v2939, %v3366
        %v3507 = vadd.f32 %v2942, %v3369
        %v3508 = vadd.f32 %v2971, %v3389
        %v3509 = vadd.f32 %v2974, %v3392
        %v3510 = vadd.f32 %v3003, %v3412
        %v3511 = vadd.f32 %v3006, %v3415
        %v3512 = vadd.f32 %v3035, %v3435
        %v3513 = vadd.f32 %v3038, %v3438
        %v3514 = vadd.f32 %v3067, %v3458
        %v3515 = vadd.f32 %v3070, %v3461
        %v3516 = vadd.f32 %v3099, %v3481
        %v3517 = vadd.f32 %v3102, %v3484
        %s3518 = scalar_lea.vmem %s1, 56
        %v3519 = vld [vmem:[%s3518] sm:$0xff]
        %v3521 = vsel %vm223, %v3519, 0
        %3523 = vmatpush.xpose.msra.mxu0 0.0
        %3524 = vmatpush.xpose.msra.mxu0 0.0
        %3525 = vmatpush.xpose.msra.mxu0 0.0
        %3526 = vmatpush.xpose.msra.mxu0 0.0
        %3527 = vmatpush.xpose.msra.mxu0 0.0
        %3528 = vmatpush.xpose.msra.mxu0 0.0
        %3529 = vmatpush.xpose.msra.mxu0 0.0
        %3530 = vmatpush.xpose.msra.mxu0 0.0
        %3531 = vmatpush.xpose.msra.mxu0 0.0
        %3532 = vmatpush.xpose.msra.mxu0 0.0
        %3533 = vmatpush.xpose.msra.mxu0 0.0
        %3534 = vmatpush.xpose.msra.mxu0 0.0
        %3535 = vmatpush.xpose.msra.mxu0 0.0
        %3536 = vmatpush.xpose.msra.mxu0 0.0
        %3537 = vmatpush.xpose.msra.mxu0 0.0
        %3538 = vmatpush.xpose.msra.mxu0 %v3521
        %3539 = vmatmul.f32.gmra.mxu0 %v1233
        %v3540 = vpop.f32.mrf.mxu0
        %v3541 = vadd.f32 0.0, %v3540
        %3542 = vmatmul.f32.gmra.mxu0 %v1235
        %v3543 = vpop.f32.mrf.mxu0
        %v3544 = vadd.f32 0.0, %v3543
        %3545 = vdwg.mxu0
        %3546 = vmatpush.xpose.msra.mxu0 0.0
        %3547 = vmatpush.xpose.msra.mxu0 0.0
        %3548 = vmatpush.xpose.msra.mxu0 0.0
        %3549 = vmatpush.xpose.msra.mxu0 0.0
        %3550 = vmatpush.xpose.msra.mxu0 0.0
        %3551 = vmatpush.xpose.msra.mxu0 0.0
        %3552 = vmatpush.xpose.msra.mxu0 0.0
        %3553 = vmatpush.xpose.msra.mxu0 0.0
        %3554 = vmatpush.xpose.msra.mxu0 0.0
        %3555 = vmatpush.xpose.msra.mxu0 0.0
        %3556 = vmatpush.xpose.msra.mxu0 0.0
        %3557 = vmatpush.xpose.msra.mxu0 0.0
        %3558 = vmatpush.xpose.msra.mxu0 0.0
        %3559 = vmatpush.xpose.msra.mxu0 0.0
        %3560 = vmatpush.xpose.msra.mxu0 0.0
        %3561 = vmatpush.xpose.msra.mxu0 %v3521
        %3562 = vmatmul.f32.gmra.mxu0 %v698
        %v3563 = vpop.f32.mrf.mxu0
        %v3564 = vadd.f32 0.0, %v3563
        %3565 = vmatmul.f32.gmra.mxu0 %v700
        %v3566 = vpop.f32.mrf.mxu0
        %v3567 = vadd.f32 0.0, %v3566
        %3568 = vdwg.mxu0
        %3569 = vmatpush.xpose.msra.mxu0 0.0
        %3570 = vmatpush.xpose.msra.mxu0 0.0
        %3571 = vmatpush.xpose.msra.mxu0 0.0
        %3572 = vmatpush.xpose.msra.mxu0 0.0
        %3573 = vmatpush.xpose.msra.mxu0 0.0
        %3574 = vmatpush.xpose.msra.mxu0 0.0
        %3575 = vmatpush.xpose.msra.mxu0 0.0
        %3576 = vmatpush.xpose.msra.mxu0 0.0
        %3577 = vmatpush.xpose.msra.mxu0 0.0
        %3578 = vmatpush.xpose.msra.mxu0 0.0
        %3579 = vmatpush.xpose.msra.mxu0 0.0
        %3580 = vmatpush.xpose.msra.mxu0 0.0
        %3581 = vmatpush.xpose.msra.mxu0 0.0
        %3582 = vmatpush.xpose.msra.mxu0 0.0
        %3583 = vmatpush.xpose.msra.mxu0 0.0
        %3584 = vmatpush.xpose.msra.mxu0 %v3521
        %3585 = vmatmul.f32.gmra.mxu0 %v734
        %v3586 = vpop.f32.mrf.mxu0
        %v3587 = vadd.f32 0.0, %v3586
        %3588 = vmatmul.f32.gmra.mxu0 %v736
        %v3589 = vpop.f32.mrf.mxu0
        %v3590 = vadd.f32 0.0, %v3589
        %3591 = vdwg.mxu0
        %3592 = vmatpush.xpose.msra.mxu0 0.0
        %3593 = vmatpush.xpose.msra.mxu0 0.0
        %3594 = vmatpush.xpose.msra.mxu0 0.0
        %3595 = vmatpush.xpose.msra.mxu0 0.0
        %3596 = vmatpush.xpose.msra.mxu0 0.0
        %3597 = vmatpush.xpose.msra.mxu0 0.0
        %3598 = vmatpush.xpose.msra.mxu0 0.0
        %3599 = vmatpush.xpose.msra.mxu0 0.0
        %3600 = vmatpush.xpose.msra.mxu0 0.0
        %3601 = vmatpush.xpose.msra.mxu0 0.0
        %3602 = vmatpush.xpose.msra.mxu0 0.0
        %3603 = vmatpush.xpose.msra.mxu0 0.0
        %3604 = vmatpush.xpose.msra.mxu0 0.0
        %3605 = vmatpush.xpose.msra.mxu0 0.0
        %3606 = vmatpush.xpose.msra.mxu0 0.0
        %3607 = vmatpush.xpose.msra.mxu0 %v3521
        %3608 = vmatmul.f32.gmra.mxu0 %v767
        %v3609 = vpop.f32.mrf.mxu0
        %v3610 = vadd.f32 0.0, %v3609
        %3611 = vmatmul.f32.gmra.mxu0 %v769
        %v3612 = vpop.f32.mrf.mxu0
        %v3613 = vadd.f32 0.0, %v3612
        %3614 = vdwg.mxu0
        %3615 = vmatpush.xpose.msra.mxu0 0.0
        %3616 = vmatpush.xpose.msra.mxu0 0.0
        %3617 = vmatpush.xpose.msra.mxu0 0.0
        %3618 = vmatpush.xpose.msra.mxu0 0.0
        %3619 = vmatpush.xpose.msra.mxu0 0.0
        %3620 = vmatpush.xpose.msra.mxu0 0.0
        %3621 = vmatpush.xpose.msra.mxu0 0.0
        %3622 = vmatpush.xpose.msra.mxu0 0.0
        %3623 = vmatpush.xpose.msra.mxu0 0.0
        %3624 = vmatpush.xpose.msra.mxu0 0.0
        %3625 = vmatpush.xpose.msra.mxu0 0.0
        %3626 = vmatpush.xpose.msra.mxu0 0.0
        %3627 = vmatpush.xpose.msra.mxu0 0.0
        %3628 = vmatpush.xpose.msra.mxu0 0.0
        %3629 = vmatpush.xpose.msra.mxu0 0.0
        %3630 = vmatpush.xpose.msra.mxu0 %v3521
        %3631 = vmatmul.f32.gmra.mxu0 %v800
        %v3632 = vpop.f32.mrf.mxu0
        %v3633 = vadd.f32 0.0, %v3632
        %3634 = vmatmul.f32.gmra.mxu0 %v802
        %v3635 = vpop.f32.mrf.mxu0
        %v3636 = vadd.f32 0.0, %v3635
        %3637 = vdwg.mxu0
        %3638 = vmatpush.xpose.msra.mxu0 0.0
        %3639 = vmatpush.xpose.msra.mxu0 0.0
        %3640 = vmatpush.xpose.msra.mxu0 0.0
        %3641 = vmatpush.xpose.msra.mxu0 0.0
        %3642 = vmatpush.xpose.msra.mxu0 0.0
        %3643 = vmatpush.xpose.msra.mxu0 0.0
        %3644 = vmatpush.xpose.msra.mxu0 0.0
        %3645 = vmatpush.xpose.msra.mxu0 0.0
        %3646 = vmatpush.xpose.msra.mxu0 0.0
        %3647 = vmatpush.xpose.msra.mxu0 0.0
        %3648 = vmatpush.xpose.msra.mxu0 0.0
        %3649 = vmatpush.xpose.msra.mxu0 0.0
        %3650 = vmatpush.xpose.msra.mxu0 0.0
        %3651 = vmatpush.xpose.msra.mxu0 0.0
        %3652 = vmatpush.xpose.msra.mxu0 0.0
        %3653 = vmatpush.xpose.msra.mxu0 %v3521
        %3654 = vmatmul.f32.gmra.mxu0 %v833
        %v3655 = vpop.f32.mrf.mxu0
        %v3656 = vadd.f32 0.0, %v3655
        %3657 = vmatmul.f32.gmra.mxu0 %v835
        %v3658 = vpop.f32.mrf.mxu0
        %v3659 = vadd.f32 0.0, %v3658
        %3660 = vdwg.mxu0
        %3661 = vmatpush.xpose.msra.mxu0 0.0
        %3662 = vmatpush.xpose.msra.mxu0 0.0
        %3663 = vmatpush.xpose.msra.mxu0 0.0
        %3664 = vmatpush.xpose.msra.mxu0 0.0
        %3665 = vmatpush.xpose.msra.mxu0 0.0
        %3666 = vmatpush.xpose.msra.mxu0 0.0
        %3667 = vmatpush.xpose.msra.mxu0 0.0
        %3668 = vmatpush.xpose.msra.mxu0 0.0
        %3669 = vmatpush.xpose.msra.mxu0 0.0
        %3670 = vmatpush.xpose.msra.mxu0 0.0
        %3671 = vmatpush.xpose.msra.mxu0 0.0
        %3672 = vmatpush.xpose.msra.mxu0 0.0
        %3673 = vmatpush.xpose.msra.mxu0 0.0
        %3674 = vmatpush.xpose.msra.mxu0 0.0
        %3675 = vmatpush.xpose.msra.mxu0 0.0
        %3676 = vmatpush.xpose.msra.mxu0 %v3521
        %3677 = vmatmul.f32.gmra.mxu0 %v866
        %v3678 = vpop.f32.mrf.mxu0
        %v3679 = vadd.f32 0.0, %v3678
        %3680 = vmatmul.f32.gmra.mxu0 %v868
        %v3681 = vpop.f32.mrf.mxu0
        %v3682 = vadd.f32 0.0, %v3681
        %3683 = vdwg.mxu0
        %3684 = vmatpush.xpose.msra.mxu0 0.0
        %3685 = vmatpush.xpose.msra.mxu0 0.0
        %3686 = vmatpush.xpose.msra.mxu0 0.0
        %3687 = vmatpush.xpose.msra.mxu0 0.0
        %3688 = vmatpush.xpose.msra.mxu0 0.0
        %3689 = vmatpush.xpose.msra.mxu0 0.0
        %3690 = vmatpush.xpose.msra.mxu0 0.0
        %3691 = vmatpush.xpose.msra.mxu0 0.0
        %3692 = vmatpush.xpose.msra.mxu0 0.0
        %3693 = vmatpush.xpose.msra.mxu0 0.0
        %3694 = vmatpush.xpose.msra.mxu0 0.0
        %3695 = vmatpush.xpose.msra.mxu0 0.0
        %3696 = vmatpush.xpose.msra.mxu0 0.0
        %3697 = vmatpush.xpose.msra.mxu0 0.0
        %3698 = vmatpush.xpose.msra.mxu0 0.0
        %3699 = vmatpush.xpose.msra.mxu0 %v3521
        %3700 = vmatmul.f32.gmra.mxu0 %v899
        %v3701 = vpop.f32.mrf.mxu0
        %v3702 = vadd.f32 0.0, %v3701
        %3703 = vmatmul.f32.gmra.mxu0 %v901
        %v3704 = vpop.f32.mrf.mxu0
        %v3705 = vadd.f32 0.0, %v3704
        %3706 = vdwg.mxu0
        %3707 = vmatpush.xpose.msra.mxu0 0.0
        %3708 = vmatpush.xpose.msra.mxu0 0.0
        %3709 = vmatpush.xpose.msra.mxu0 0.0
        %3710 = vmatpush.xpose.msra.mxu0 0.0
        %3711 = vmatpush.xpose.msra.mxu0 0.0
        %3712 = vmatpush.xpose.msra.mxu0 0.0
        %3713 = vmatpush.xpose.msra.mxu0 0.0
        %3714 = vmatpush.xpose.msra.mxu0 0.0
        %3715 = vmatpush.xpose.msra.mxu0 0.0
        %3716 = vmatpush.xpose.msra.mxu0 0.0
        %3717 = vmatpush.xpose.msra.mxu0 0.0
        %3718 = vmatpush.xpose.msra.mxu0 0.0
        %3719 = vmatpush.xpose.msra.mxu0 0.0
        %3720 = vmatpush.xpose.msra.mxu0 0.0
        %3721 = vmatpush.xpose.msra.mxu0 0.0
        %3722 = vmatpush.xpose.msra.mxu0 %v3521
        %3723 = vmatmul.f32.gmra.mxu0 %v932
        %v3724 = vpop.f32.mrf.mxu0
        %v3725 = vadd.f32 0.0, %v3724
        %3726 = vmatmul.f32.gmra.mxu0 %v934
        %v3727 = vpop.f32.mrf.mxu0
        %v3728 = vadd.f32 0.0, %v3727
        %3729 = vdwg.mxu0
        %3730 = vmatpush.xpose.msra.mxu0 0.0
        %3731 = vmatpush.xpose.msra.mxu0 0.0
        %3732 = vmatpush.xpose.msra.mxu0 0.0
        %3733 = vmatpush.xpose.msra.mxu0 0.0
        %3734 = vmatpush.xpose.msra.mxu0 0.0
        %3735 = vmatpush.xpose.msra.mxu0 0.0
        %3736 = vmatpush.xpose.msra.mxu0 0.0
        %3737 = vmatpush.xpose.msra.mxu0 0.0
        %3738 = vmatpush.xpose.msra.mxu0 0.0
        %3739 = vmatpush.xpose.msra.mxu0 0.0
        %3740 = vmatpush.xpose.msra.mxu0 0.0
        %3741 = vmatpush.xpose.msra.mxu0 0.0
        %3742 = vmatpush.xpose.msra.mxu0 0.0
        %3743 = vmatpush.xpose.msra.mxu0 0.0
        %3744 = vmatpush.xpose.msra.mxu0 0.0
        %3745 = vmatpush.xpose.msra.mxu0 %v3521
        %3746 = vmatmul.f32.gmra.mxu0 %v965
        %v3747 = vpop.f32.mrf.mxu0
        %v3748 = vadd.f32 0.0, %v3747
        %3749 = vmatmul.f32.gmra.mxu0 %v967
        %v3750 = vpop.f32.mrf.mxu0
        %v3751 = vadd.f32 0.0, %v3750
        %3752 = vdwg.mxu0
        %3753 = vmatpush.xpose.msra.mxu0 0.0
        %3754 = vmatpush.xpose.msra.mxu0 0.0
        %3755 = vmatpush.xpose.msra.mxu0 0.0
        %3756 = vmatpush.xpose.msra.mxu0 0.0
        %3757 = vmatpush.xpose.msra.mxu0 0.0
        %3758 = vmatpush.xpose.msra.mxu0 0.0
        %3759 = vmatpush.xpose.msra.mxu0 0.0
        %3760 = vmatpush.xpose.msra.mxu0 0.0
        %3761 = vmatpush.xpose.msra.mxu0 0.0
        %3762 = vmatpush.xpose.msra.mxu0 0.0
        %3763 = vmatpush.xpose.msra.mxu0 0.0
        %3764 = vmatpush.xpose.msra.mxu0 0.0
        %3765 = vmatpush.xpose.msra.mxu0 0.0
        %3766 = vmatpush.xpose.msra.mxu0 0.0
        %3767 = vmatpush.xpose.msra.mxu0 0.0
        %3768 = vmatpush.xpose.msra.mxu0 %v3521
        %3769 = vmatmul.f32.gmra.mxu0 %v998
        %v3770 = vpop.f32.mrf.mxu0
        %v3771 = vadd.f32 0.0, %v3770
        %3772 = vmatmul.f32.gmra.mxu0 %v1000
        %v3773 = vpop.f32.mrf.mxu0
        %v3774 = vadd.f32 0.0, %v3773
        %3775 = vdwg.mxu0
        %3776 = vmatpush.xpose.msra.mxu0 0.0
        %3777 = vmatpush.xpose.msra.mxu0 0.0
        %3778 = vmatpush.xpose.msra.mxu0 0.0
        %3779 = vmatpush.xpose.msra.mxu0 0.0
        %3780 = vmatpush.xpose.msra.mxu0 0.0
        %3781 = vmatpush.xpose.msra.mxu0 0.0
        %3782 = vmatpush.xpose.msra.mxu0 0.0
        %3783 = vmatpush.xpose.msra.mxu0 0.0
        %3784 = vmatpush.xpose.msra.mxu0 0.0
        %3785 = vmatpush.xpose.msra.mxu0 0.0
        %3786 = vmatpush.xpose.msra.mxu0 0.0
        %3787 = vmatpush.xpose.msra.mxu0 0.0
        %3788 = vmatpush.xpose.msra.mxu0 0.0
        %3789 = vmatpush.xpose.msra.mxu0 0.0
        %3790 = vmatpush.xpose.msra.mxu0 0.0
        %3791 = vmatpush.xpose.msra.mxu0 %v3521
        %3792 = vmatmul.f32.gmra.mxu0 %v1031
        %v3793 = vpop.f32.mrf.mxu0
        %v3794 = vadd.f32 0.0, %v3793
        %3795 = vmatmul.f32.gmra.mxu0 %v1033
        %v3796 = vpop.f32.mrf.mxu0
        %v3797 = vadd.f32 0.0, %v3796
        %3798 = vdwg.mxu0
        %3799 = vmatpush.xpose.msra.mxu0 0.0
        %3800 = vmatpush.xpose.msra.mxu0 0.0
        %3801 = vmatpush.xpose.msra.mxu0 0.0
        %3802 = vmatpush.xpose.msra.mxu0 0.0
        %3803 = vmatpush.xpose.msra.mxu0 0.0
        %3804 = vmatpush.xpose.msra.mxu0 0.0
        %3805 = vmatpush.xpose.msra.mxu0 0.0
        %3806 = vmatpush.xpose.msra.mxu0 0.0
        %3807 = vmatpush.xpose.msra.mxu0 0.0
        %3808 = vmatpush.xpose.msra.mxu0 0.0
        %3809 = vmatpush.xpose.msra.mxu0 0.0
        %3810 = vmatpush.xpose.msra.mxu0 0.0
        %3811 = vmatpush.xpose.msra.mxu0 0.0
        %3812 = vmatpush.xpose.msra.mxu0 0.0
        %3813 = vmatpush.xpose.msra.mxu0 0.0
        %3814 = vmatpush.xpose.msra.mxu0 %v3521
        %3815 = vmatmul.f32.gmra.mxu0 %v1064
        %v3816 = vpop.f32.mrf.mxu0
        %v3817 = vadd.f32 0.0, %v3816
        %3818 = vmatmul.f32.gmra.mxu0 %v1066
        %v3819 = vpop.f32.mrf.mxu0
        %v3820 = vadd.f32 0.0, %v3819
        %3821 = vdwg.mxu0
        %3822 = vmatpush.xpose.msra.mxu0 0.0
        %3823 = vmatpush.xpose.msra.mxu0 0.0
        %3824 = vmatpush.xpose.msra.mxu0 0.0
        %3825 = vmatpush.xpose.msra.mxu0 0.0
        %3826 = vmatpush.xpose.msra.mxu0 0.0
        %3827 = vmatpush.xpose.msra.mxu0 0.0
        %3828 = vmatpush.xpose.msra.mxu0 0.0
        %3829 = vmatpush.xpose.msra.mxu0 0.0
        %3830 = vmatpush.xpose.msra.mxu0 0.0
        %3831 = vmatpush.xpose.msra.mxu0 0.0
        %3832 = vmatpush.xpose.msra.mxu0 0.0
        %3833 = vmatpush.xpose.msra.mxu0 0.0
        %3834 = vmatpush.xpose.msra.mxu0 0.0
        %3835 = vmatpush.xpose.msra.mxu0 0.0
        %3836 = vmatpush.xpose.msra.mxu0 0.0
        %3837 = vmatpush.xpose.msra.mxu0 %v3521
        %3838 = vmatmul.f32.gmra.mxu0 %v1097
        %v3839 = vpop.f32.mrf.mxu0
        %v3840 = vadd.f32 0.0, %v3839
        %3841 = vmatmul.f32.gmra.mxu0 %v1099
        %v3842 = vpop.f32.mrf.mxu0
        %v3843 = vadd.f32 0.0, %v3842
        %3844 = vdwg.mxu0
        %3845 = vmatpush.xpose.msra.mxu0 0.0
        %3846 = vmatpush.xpose.msra.mxu0 0.0
        %3847 = vmatpush.xpose.msra.mxu0 0.0
        %3848 = vmatpush.xpose.msra.mxu0 0.0
        %3849 = vmatpush.xpose.msra.mxu0 0.0
        %3850 = vmatpush.xpose.msra.mxu0 0.0
        %3851 = vmatpush.xpose.msra.mxu0 0.0
        %3852 = vmatpush.xpose.msra.mxu0 0.0
        %3853 = vmatpush.xpose.msra.mxu0 0.0
        %3854 = vmatpush.xpose.msra.mxu0 0.0
        %3855 = vmatpush.xpose.msra.mxu0 0.0
        %3856 = vmatpush.xpose.msra.mxu0 0.0
        %3857 = vmatpush.xpose.msra.mxu0 0.0
        %3858 = vmatpush.xpose.msra.mxu0 0.0
        %3859 = vmatpush.xpose.msra.mxu0 0.0
        %3860 = vmatpush.xpose.msra.mxu0 %v3521
        %3861 = vmatmul.f32.gmra.mxu0 %v1130
        %v3862 = vpop.f32.mrf.mxu0
        %v3863 = vadd.f32 0.0, %v3862
        %3864 = vmatmul.f32.gmra.mxu0 %v1132
        %v3865 = vpop.f32.mrf.mxu0
        %v3866 = vadd.f32 0.0, %v3865
        %3867 = vdwg.mxu0
        %3868 = vmatpush.xpose.msra.mxu0 0.0
        %3869 = vmatpush.xpose.msra.mxu0 0.0
        %3870 = vmatpush.xpose.msra.mxu0 0.0
        %3871 = vmatpush.xpose.msra.mxu0 0.0
        %3872 = vmatpush.xpose.msra.mxu0 0.0
        %3873 = vmatpush.xpose.msra.mxu0 0.0
        %3874 = vmatpush.xpose.msra.mxu0 0.0
        %3875 = vmatpush.xpose.msra.mxu0 0.0
        %3876 = vmatpush.xpose.msra.mxu0 0.0
        %3877 = vmatpush.xpose.msra.mxu0 0.0
        %3878 = vmatpush.xpose.msra.mxu0 0.0
        %3879 = vmatpush.xpose.msra.mxu0 0.0
        %3880 = vmatpush.xpose.msra.mxu0 0.0
        %3881 = vmatpush.xpose.msra.mxu0 0.0
        %3882 = vmatpush.xpose.msra.mxu0 0.0
        %3883 = vmatpush.xpose.msra.mxu0 %v3521
        %3884 = vmatmul.f32.gmra.mxu0 %v1163
        %v3885 = vpop.f32.mrf.mxu0
        %v3886 = vadd.f32 0.0, %v3885
        %3887 = vmatmul.f32.gmra.mxu0 %v1165
        %v3888 = vpop.f32.mrf.mxu0
        %v3889 = vadd.f32 0.0, %v3888
        %3890 = vdwg.mxu0
        %v3891 = vadd.f32 %v3486, %v3541
        %v3892 = vadd.f32 %v3487, %v3544
        %v3893 = vadd.f32 %v3488, %v3564
        %v3894 = vadd.f32 %v3489, %v3567
        %v3895 = vadd.f32 %v3490, %v3587
        %v3896 = vadd.f32 %v3491, %v3590
        %v3897 = vadd.f32 %v3492, %v3610
        %v3898 = vadd.f32 %v3493, %v3613
        %v3899 = vadd.f32 %v3494, %v3633
        %v3900 = vadd.f32 %v3495, %v3636
        %v3901 = vadd.f32 %v3496, %v3656
        %v3902 = vadd.f32 %v3497, %v3659
        %v3903 = vadd.f32 %v3498, %v3679
        %v3904 = vadd.f32 %v3499, %v3682
        %v3905 = vadd.f32 %v3500, %v3702
        %v3906 = vadd.f32 %v3501, %v3705
        %v3907 = vadd.f32 %v3502, %v3725
        %v3908 = vadd.f32 %v3503, %v3728
        %v3909 = vadd.f32 %v3504, %v3748
        %v3910 = vadd.f32 %v3505, %v3751
        %v3911 = vadd.f32 %v3506, %v3771
        %v3912 = vadd.f32 %v3507, %v3774
        %v3913 = vadd.f32 %v3508, %v3794
        %v3914 = vadd.f32 %v3509, %v3797
        %v3915 = vadd.f32 %v3510, %v3817
        %v3916 = vadd.f32 %v3511, %v3820
        %v3917 = vadd.f32 %v3512, %v3840
        %v3918 = vadd.f32 %v3513, %v3843
        %v3919 = vadd.f32 %v3514, %v3863
        %v3920 = vadd.f32 %v3515, %v3866
        %v3921 = vadd.f32 %v3516, %v3886
        %v3922 = vadd.f32 %v3517, %v3889
        %v3923 = vadd.f32 %v3891, %v2050
        %v3924 = vadd.f32 %v3892, %v2050
        %v3925 = vadd.f32 %v3893, %v2050
        %v3926 = vadd.f32 %v3894, %v2050
        %v3927 = vadd.f32 %v3895, %v2050
        %v3928 = vadd.f32 %v3896, %v2050
        %v3929 = vadd.f32 %v3897, %v2050
        %v3930 = vadd.f32 %v3898, %v2050
        %v3931 = vadd.f32 %v3899, %v2050
        %v3932 = vadd.f32 %v3900, %v2050
        %v3933 = vadd.f32 %v3901, %v2050
        %v3934 = vadd.f32 %v3902, %v2050
        %v3935 = vadd.f32 %v3903, %v2050
        %v3936 = vadd.f32 %v3904, %v2050
        %v3937 = vadd.f32 %v3905, %v2050
        %v3938 = vadd.f32 %v3906, %v2050
        %v3939 = vadd.f32 %v3907, %v2050
        %v3940 = vadd.f32 %v3908, %v2050
        %v3941 = vadd.f32 %v3909, %v2050
        %v3942 = vadd.f32 %v3910, %v2050
        %v3943 = vadd.f32 %v3911, %v2050
        %v3944 = vadd.f32 %v3912, %v2050
        %v3945 = vadd.f32 %v3913, %v2050
        %v3946 = vadd.f32 %v3914, %v2050
        %v3947 = vadd.f32 %v3915, %v2050
        %v3948 = vadd.f32 %v3916, %v2050
        %v3949 = vadd.f32 %v3917, %v2050
        %v3950 = vadd.f32 %v3918, %v2050
        %v3951 = vadd.f32 %v3919, %v2050
        %v3952 = vadd.f32 %v3920, %v2050
        %v3953 = vadd.f32 %v3921, %v2050
        %v3954 = vadd.f32 %v3922, %v2050
        %vm3955 = vcmp.ge.f32.partialorder %v3923, 0.0
        %vm3956 = vcmp.ge.f32.partialorder %v3924, 0.0
        %vm3957 = vcmp.ge.f32.partialorder %v3925, 0.0
        %vm3958 = vcmp.ge.f32.partialorder %v3926, 0.0
        %vm3959 = vcmp.ge.f32.partialorder %v3927, 0.0
        %vm3960 = vcmp.ge.f32.partialorder %v3928, 0.0
        %vm3961 = vcmp.ge.f32.partialorder %v3929, 0.0
        %vm3962 = vcmp.ge.f32.partialorder %v3930, 0.0
        %vm3963 = vcmp.ge.f32.partialorder %v3931, 0.0
        %vm3964 = vcmp.ge.f32.partialorder %v3932, 0.0
        %vm3965 = vcmp.ge.f32.partialorder %v3933, 0.0
        %vm3966 = vcmp.ge.f32.partialorder %v3934, 0.0
        %vm3967 = vcmp.ge.f32.partialorder %v3935, 0.0
        %vm3968 = vcmp.ge.f32.partialorder %v3936, 0.0
        %vm3969 = vcmp.ge.f32.partialorder %v3937, 0.0
        %vm3970 = vcmp.ge.f32.partialorder %v3938, 0.0
        %vm3971 = vcmp.ge.f32.partialorder %v3939, 0.0
        %vm3972 = vcmp.ge.f32.partialorder %v3940, 0.0
        %vm3973 = vcmp.ge.f32.partialorder %v3941, 0.0
        %vm3974 = vcmp.ge.f32.partialorder %v3942, 0.0
        %vm3975 = vcmp.ge.f32.partialorder %v3943, 0.0
        %vm3976 = vcmp.ge.f32.partialorder %v3944, 0.0
        %vm3977 = vcmp.ge.f32.partialorder %v3945, 0.0
        %vm3978 = vcmp.ge.f32.partialorder %v3946, 0.0
        %vm3979 = vcmp.ge.f32.partialorder %v3947, 0.0
        %vm3980 = vcmp.ge.f32.partialorder %v3948, 0.0
        %vm3981 = vcmp.ge.f32.partialorder %v3949, 0.0
        %vm3982 = vcmp.ge.f32.partialorder %v3950, 0.0
        %vm3983 = vcmp.ge.f32.partialorder %v3951, 0.0
        %vm3984 = vcmp.ge.f32.partialorder %v3952, 0.0
        %vm3985 = vcmp.ge.f32.partialorder %v3953, 0.0
        %vm3986 = vcmp.ge.f32.partialorder %v3954, 0.0
        %v3987 = vmul.f32 %v3923, 0.01
        %v3988 = vmul.f32 %v3924, 0.01
        %v3989 = vmul.f32 %v3925, 0.01
        %v3990 = vmul.f32 %v3926, 0.01
        %v3991 = vmul.f32 %v3927, 0.01
        %v3992 = vmul.f32 %v3928, 0.01
        %v3993 = vmul.f32 %v3929, 0.01
        %v3994 = vmul.f32 %v3930, 0.01
        %v3995 = vmul.f32 %v3931, 0.01
        %v3996 = vmul.f32 %v3932, 0.01
        %v3997 = vmul.f32 %v3933, 0.01
        %v3998 = vmul.f32 %v3934, 0.01
        %v3999 = vmul.f32 %v3935, 0.01
        %v4000 = vmul.f32 %v3936, 0.01
        %v4001 = vmul.f32 %v3937, 0.01
        %v4002 = vmul.f32 %v3938, 0.01
        %v4003 = vmul.f32 %v3939, 0.01
        %v4004 = vmul.f32 %v3940, 0.01
        %v4005 = vmul.f32 %v3941, 0.01
        %v4006 = vmul.f32 %v3942, 0.01
        %v4007 = vmul.f32 %v3943, 0.01
        %v4008 = vmul.f32 %v3944, 0.01
        %v4009 = vmul.f32 %v3945, 0.01
        %v4010 = vmul.f32 %v3946, 0.01
        %v4011 = vmul.f32 %v3947, 0.01
        %v4012 = vmul.f32 %v3948, 0.01
        %v4013 = vmul.f32 %v3949, 0.01
        %v4014 = vmul.f32 %v3950, 0.01
        %v4015 = vmul.f32 %v3951, 0.01
        %v4016 = vmul.f32 %v3952, 0.01
        %v4017 = vmul.f32 %v3953, 0.01
        %v4018 = vmul.f32 %v3954, 0.01
        %v4019 = vsel %vm3955, %v3923, %v3987
        %v4020 = vsel %vm3956, %v3924, %v3988
        %v4021 = vsel %vm3957, %v3925, %v3989
        %v4022 = vsel %vm3958, %v3926, %v3990
        %v4023 = vsel %vm3959, %v3927, %v3991
        %v4024 = vsel %vm3960, %v3928, %v3992
        %v4025 = vsel %vm3961, %v3929, %v3993
        %v4026 = vsel %vm3962, %v3930, %v3994
        %v4027 = vsel %vm3963, %v3931, %v3995
        %v4028 = vsel %vm3964, %v3932, %v3996
        %v4029 = vsel %vm3965, %v3933, %v3997
        %v4030 = vsel %vm3966, %v3934, %v3998
        %v4031 = vsel %vm3967, %v3935, %v3999
        %v4032 = vsel %vm3968, %v3936, %v4000
        %v4033 = vsel %vm3969, %v3937, %v4001
        %v4034 = vsel %vm3970, %v3938, %v4002
        %v4035 = vsel %vm3971, %v3939, %v4003
        %v4036 = vsel %vm3972, %v3940, %v4004
        %v4037 = vsel %vm3973, %v3941, %v4005
        %v4038 = vsel %vm3974, %v3942, %v4006
        %v4039 = vsel %vm3975, %v3943, %v4007
        %v4040 = vsel %vm3976, %v3944, %v4008
        %v4041 = vsel %vm3977, %v3945, %v4009
        %v4042 = vsel %vm3978, %v3946, %v4010
        %v4043 = vsel %vm3979, %v3947, %v4011
        %v4044 = vsel %vm3980, %v3948, %v4012
        %v4045 = vsel %vm3981, %v3949, %v4013
        %v4046 = vsel %vm3982, %v3950, %v4014
        %v4047 = vsel %vm3983, %v3951, %v4015
        %v4048 = vsel %vm3984, %v3952, %v4016
        %v4049 = vsel %vm3985, %v3953, %v4017
        %v4050 = vsel %vm3986, %v3954, %v4018
        %s4051 = scalar_lea.vmem %s159, 256 [#allocation2]
        %4052 = vst.msk [vmem:[%s4051] sm:$0xff] %vm2180, %v4019
        %4053 = vst.msk [vmem:[%s4051 + $0x8] sm:$0xff] %vm2180, %v4020
        %4054 = vst.msk [vmem:[%s4051 + $0x10] sm:$0xff] %vm2180, %v4021
        %4055 = vst.msk [vmem:[%s4051 + $0x18] sm:$0xff] %vm2180, %v4022
        %4056 = vst.msk [vmem:[%s4051 + $0x20] sm:$0xff] %vm2180, %v4023
        %4057 = vst.msk [vmem:[%s4051 + $0x28] sm:$0xff] %vm2180, %v4024
        %4058 = vst.msk [vmem:[%s4051 + $0x30] sm:$0xff] %vm2180, %v4025
        %4059 = vst.msk [vmem:[%s4051 + $0x38] sm:$0xff] %vm2180, %v4026
        %4060 = vst.msk [vmem:[%s4051 + $0x40] sm:$0xff] %vm2180, %v4027
        %4061 = vst.msk [vmem:[%s4051 + $0x48] sm:$0xff] %vm2180, %v4028
        %4062 = vst.msk [vmem:[%s4051 + $0x50] sm:$0xff] %vm2180, %v4029
        %4063 = vst.msk [vmem:[%s4051 + $0x58] sm:$0xff] %vm2180, %v4030
        %4064 = vst.msk [vmem:[%s4051 + $0x60] sm:$0xff] %vm2180, %v4031
        %4065 = vst.msk [vmem:[%s4051 + $0x68] sm:$0xff] %vm2180, %v4032
        %4066 = vst.msk [vmem:[%s4051 + $0x70] sm:$0xff] %vm2180, %v4033
        %4067 = vst.msk [vmem:[%s4051 + $0x78] sm:$0xff] %vm2180, %v4034
        %4068 = vst.msk [vmem:[%s4051 + $0x80] sm:$0xff] %vm2180, %v4035
        %4069 = vst.msk [vmem:[%s4051 + $0x88] sm:$0xff] %vm2180, %v4036
        %4070 = vst.msk [vmem:[%s4051 + $0x90] sm:$0xff] %vm2180, %v4037
        %4071 = vst.msk [vmem:[%s4051 + $0x98] sm:$0xff] %vm2180, %v4038
        %4072 = vst.msk [vmem:[%s4051 + $0xa0] sm:$0xff] %vm2180, %v4039
        %4073 = vst.msk [vmem:[%s4051 + $0xa8] sm:$0xff] %vm2180, %v4040
        %4074 = vst.msk [vmem:[%s4051 + $0xb0] sm:$0xff] %vm2180, %v4041
        %4075 = vst.msk [vmem:[%s4051 + $0xb8] sm:$0xff] %vm2180, %v4042
        %4076 = vst.msk [vmem:[%s4051 + $0xc0] sm:$0xff] %vm2180, %v4043
        %4077 = vst.msk [vmem:[%s4051 + $0xc8] sm:$0xff] %vm2180, %v4044
        %4078 = vst.msk [vmem:[%s4051 + $0xd0] sm:$0xff] %vm2180, %v4045
        %4079 = vst.msk [vmem:[%s4051 + $0xd8] sm:$0xff] %vm2180, %v4046
        %4080 = vst.msk [vmem:[%s4051 + $0xe0] sm:$0xff] %vm2180, %v4047
        %4081 = vst.msk [vmem:[%s4051 + $0xe8] sm:$0xff] %vm2180, %v4048
        %4082 = vst.msk [vmem:[%s4051 + $0xf0] sm:$0xff] %vm2180, %v4049
        %4083 = vst.msk [vmem:[%s4051 + $0xf8] sm:$0xff] %vm2180, %v4050
        %s4084 = scalar_lea.vmem %s1, 64
        %v4085 = vld [vmem:[%s4084] sm:$0xff]
        %s4086 = scalar_lea.vmem %s1, 72
        %v4087 = vld [vmem:[%s4086] sm:$0xff]
        %v4089 = vsel %vm223, %v4087, 0
        %4091 = vmatpush.xpose.msra.mxu0 0.0
        %4092 = vmatpush.xpose.msra.mxu0 0.0
        %4093 = vmatpush.xpose.msra.mxu0 0.0
        %4094 = vmatpush.xpose.msra.mxu0 0.0
        %4095 = vmatpush.xpose.msra.mxu0 0.0
        %4096 = vmatpush.xpose.msra.mxu0 0.0
        %4097 = vmatpush.xpose.msra.mxu0 0.0
        %4098 = vmatpush.xpose.msra.mxu0 0.0
        %4099 = vmatpush.xpose.msra.mxu0 0.0
        %4100 = vmatpush.xpose.msra.mxu0 0.0
        %4101 = vmatpush.xpose.msra.mxu0 0.0
        %4102 = vmatpush.xpose.msra.mxu0 0.0
        %4103 = vmatpush.xpose.msra.mxu0 0.0
        %4104 = vmatpush.xpose.msra.mxu0 0.0
        %4105 = vmatpush.xpose.msra.mxu0 0.0
        %4106 = vmatpush.xpose.msra.mxu0 %v4089
        %4107 = vmatmul.f32.gmra.mxu0 %v257
        %v4108 = vpop.f32.mrf.mxu0
        %v4109 = vadd.f32 0.0, %v4108
        %4110 = vmatmul.f32.gmra.mxu0 %v260
        %v4111 = vpop.f32.mrf.mxu0
        %v4112 = vadd.f32 0.0, %v4111
        %4113 = vdwg.mxu0
        %4114 = vmatpush.xpose.msra.mxu0 0.0
        %4115 = vmatpush.xpose.msra.mxu0 0.0
        %4116 = vmatpush.xpose.msra.mxu0 0.0
        %4117 = vmatpush.xpose.msra.mxu0 0.0
        %4118 = vmatpush.xpose.msra.mxu0 0.0
        %4119 = vmatpush.xpose.msra.mxu0 0.0
        %4120 = vmatpush.xpose.msra.mxu0 0.0
        %4121 = vmatpush.xpose.msra.mxu0 0.0
        %4122 = vmatpush.xpose.msra.mxu0 0.0
        %4123 = vmatpush.xpose.msra.mxu0 0.0
        %4124 = vmatpush.xpose.msra.mxu0 0.0
        %4125 = vmatpush.xpose.msra.mxu0 0.0
        %4126 = vmatpush.xpose.msra.mxu0 0.0
        %4127 = vmatpush.xpose.msra.mxu0 0.0
        %4128 = vmatpush.xpose.msra.mxu0 0.0
        %4129 = vmatpush.xpose.msra.mxu0 %v4089
        %4130 = vmatmul.f32.gmra.mxu0 %v286
        %v4131 = vpop.f32.mrf.mxu0
        %v4132 = vadd.f32 0.0, %v4131
        %4133 = vmatmul.f32.gmra.mxu0 %v289
        %v4134 = vpop.f32.mrf.mxu0
        %v4135 = vadd.f32 0.0, %v4134
        %4136 = vdwg.mxu0
        %4137 = vmatpush.xpose.msra.mxu0 0.0
        %4138 = vmatpush.xpose.msra.mxu0 0.0
        %4139 = vmatpush.xpose.msra.mxu0 0.0
        %4140 = vmatpush.xpose.msra.mxu0 0.0
        %4141 = vmatpush.xpose.msra.mxu0 0.0
        %4142 = vmatpush.xpose.msra.mxu0 0.0
        %4143 = vmatpush.xpose.msra.mxu0 0.0
        %4144 = vmatpush.xpose.msra.mxu0 0.0
        %4145 = vmatpush.xpose.msra.mxu0 0.0
        %4146 = vmatpush.xpose.msra.mxu0 0.0
        %4147 = vmatpush.xpose.msra.mxu0 0.0
        %4148 = vmatpush.xpose.msra.mxu0 0.0
        %4149 = vmatpush.xpose.msra.mxu0 0.0
        %4150 = vmatpush.xpose.msra.mxu0 0.0
        %4151 = vmatpush.xpose.msra.mxu0 0.0
        %4152 = vmatpush.xpose.msra.mxu0 %v4089
        %4153 = vmatmul.f32.gmra.mxu0 %v315
        %v4154 = vpop.f32.mrf.mxu0
        %v4155 = vadd.f32 0.0, %v4154
        %4156 = vmatmul.f32.gmra.mxu0 %v318
        %v4157 = vpop.f32.mrf.mxu0
        %v4158 = vadd.f32 0.0, %v4157
        %4159 = vdwg.mxu0
        %4160 = vmatpush.xpose.msra.mxu0 0.0
        %4161 = vmatpush.xpose.msra.mxu0 0.0
        %4162 = vmatpush.xpose.msra.mxu0 0.0
        %4163 = vmatpush.xpose.msra.mxu0 0.0
        %4164 = vmatpush.xpose.msra.mxu0 0.0
        %4165 = vmatpush.xpose.msra.mxu0 0.0
        %4166 = vmatpush.xpose.msra.mxu0 0.0
        %4167 = vmatpush.xpose.msra.mxu0 0.0
        %4168 = vmatpush.xpose.msra.mxu0 0.0
        %4169 = vmatpush.xpose.msra.mxu0 0.0
        %4170 = vmatpush.xpose.msra.mxu0 0.0
        %4171 = vmatpush.xpose.msra.mxu0 0.0
        %4172 = vmatpush.xpose.msra.mxu0 0.0
        %4173 = vmatpush.xpose.msra.mxu0 0.0
        %4174 = vmatpush.xpose.msra.mxu0 0.0
        %4175 = vmatpush.xpose.msra.mxu0 %v4089
        %4176 = vmatmul.f32.gmra.mxu0 %v344
        %v4177 = vpop.f32.mrf.mxu0
        %v4178 = vadd.f32 0.0, %v4177
        %4179 = vmatmul.f32.gmra.mxu0 %v347
        %v4180 = vpop.f32.mrf.mxu0
        %v4181 = vadd.f32 0.0, %v4180
        %4182 = vdwg.mxu0
        %4183 = vmatpush.xpose.msra.mxu0 0.0
        %4184 = vmatpush.xpose.msra.mxu0 0.0
        %4185 = vmatpush.xpose.msra.mxu0 0.0
        %4186 = vmatpush.xpose.msra.mxu0 0.0
        %4187 = vmatpush.xpose.msra.mxu0 0.0
        %4188 = vmatpush.xpose.msra.mxu0 0.0
        %4189 = vmatpush.xpose.msra.mxu0 0.0
        %4190 = vmatpush.xpose.msra.mxu0 0.0
        %4191 = vmatpush.xpose.msra.mxu0 0.0
        %4192 = vmatpush.xpose.msra.mxu0 0.0
        %4193 = vmatpush.xpose.msra.mxu0 0.0
        %4194 = vmatpush.xpose.msra.mxu0 0.0
        %4195 = vmatpush.xpose.msra.mxu0 0.0
        %4196 = vmatpush.xpose.msra.mxu0 0.0
        %4197 = vmatpush.xpose.msra.mxu0 0.0
        %4198 = vmatpush.xpose.msra.mxu0 %v4089
        %4199 = vmatmul.f32.gmra.mxu0 %v373
        %v4200 = vpop.f32.mrf.mxu0
        %v4201 = vadd.f32 0.0, %v4200
        %4202 = vmatmul.f32.gmra.mxu0 %v376
        %v4203 = vpop.f32.mrf.mxu0
        %v4204 = vadd.f32 0.0, %v4203
        %4205 = vdwg.mxu0
        %4206 = vmatpush.xpose.msra.mxu0 0.0
        %4207 = vmatpush.xpose.msra.mxu0 0.0
        %4208 = vmatpush.xpose.msra.mxu0 0.0
        %4209 = vmatpush.xpose.msra.mxu0 0.0
        %4210 = vmatpush.xpose.msra.mxu0 0.0
        %4211 = vmatpush.xpose.msra.mxu0 0.0
        %4212 = vmatpush.xpose.msra.mxu0 0.0
        %4213 = vmatpush.xpose.msra.mxu0 0.0
        %4214 = vmatpush.xpose.msra.mxu0 0.0
        %4215 = vmatpush.xpose.msra.mxu0 0.0
        %4216 = vmatpush.xpose.msra.mxu0 0.0
        %4217 = vmatpush.xpose.msra.mxu0 0.0
        %4218 = vmatpush.xpose.msra.mxu0 0.0
        %4219 = vmatpush.xpose.msra.mxu0 0.0
        %4220 = vmatpush.xpose.msra.mxu0 0.0
        %4221 = vmatpush.xpose.msra.mxu0 %v4089
        %4222 = vmatmul.f32.gmra.mxu0 %v402
        %v4223 = vpop.f32.mrf.mxu0
        %v4224 = vadd.f32 0.0, %v4223
        %4225 = vmatmul.f32.gmra.mxu0 %v405
        %v4226 = vpop.f32.mrf.mxu0
        %v4227 = vadd.f32 0.0, %v4226
        %4228 = vdwg.mxu0
        %4229 = vmatpush.xpose.msra.mxu0 0.0
        %4230 = vmatpush.xpose.msra.mxu0 0.0
        %4231 = vmatpush.xpose.msra.mxu0 0.0
        %4232 = vmatpush.xpose.msra.mxu0 0.0
        %4233 = vmatpush.xpose.msra.mxu0 0.0
        %4234 = vmatpush.xpose.msra.mxu0 0.0
        %4235 = vmatpush.xpose.msra.mxu0 0.0
        %4236 = vmatpush.xpose.msra.mxu0 0.0
        %4237 = vmatpush.xpose.msra.mxu0 0.0
        %4238 = vmatpush.xpose.msra.mxu0 0.0
        %4239 = vmatpush.xpose.msra.mxu0 0.0
        %4240 = vmatpush.xpose.msra.mxu0 0.0
        %4241 = vmatpush.xpose.msra.mxu0 0.0
        %4242 = vmatpush.xpose.msra.mxu0 0.0
        %4243 = vmatpush.xpose.msra.mxu0 0.0
        %4244 = vmatpush.xpose.msra.mxu0 %v4089
        %4245 = vmatmul.f32.gmra.mxu0 %v431
        %v4246 = vpop.f32.mrf.mxu0
        %v4247 = vadd.f32 0.0, %v4246
        %4248 = vmatmul.f32.gmra.mxu0 %v434
        %v4249 = vpop.f32.mrf.mxu0
        %v4250 = vadd.f32 0.0, %v4249
        %4251 = vdwg.mxu0
        %4252 = vmatpush.xpose.msra.mxu0 0.0
        %4253 = vmatpush.xpose.msra.mxu0 0.0
        %4254 = vmatpush.xpose.msra.mxu0 0.0
        %4255 = vmatpush.xpose.msra.mxu0 0.0
        %4256 = vmatpush.xpose.msra.mxu0 0.0
        %4257 = vmatpush.xpose.msra.mxu0 0.0
        %4258 = vmatpush.xpose.msra.mxu0 0.0
        %4259 = vmatpush.xpose.msra.mxu0 0.0
        %4260 = vmatpush.xpose.msra.mxu0 0.0
        %4261 = vmatpush.xpose.msra.mxu0 0.0
        %4262 = vmatpush.xpose.msra.mxu0 0.0
        %4263 = vmatpush.xpose.msra.mxu0 0.0
        %4264 = vmatpush.xpose.msra.mxu0 0.0
        %4265 = vmatpush.xpose.msra.mxu0 0.0
        %4266 = vmatpush.xpose.msra.mxu0 0.0
        %4267 = vmatpush.xpose.msra.mxu0 %v4089
        %4268 = vmatmul.f32.gmra.mxu0 %v460
        %v4269 = vpop.f32.mrf.mxu0
        %v4270 = vadd.f32 0.0, %v4269
        %4271 = vmatmul.f32.gmra.mxu0 %v463
        %v4272 = vpop.f32.mrf.mxu0
        %v4273 = vadd.f32 0.0, %v4272
        %4274 = vdwg.mxu0
        %4275 = vmatpush.xpose.msra.mxu0 0.0
        %4276 = vmatpush.xpose.msra.mxu0 0.0
        %4277 = vmatpush.xpose.msra.mxu0 0.0
        %4278 = vmatpush.xpose.msra.mxu0 0.0
        %4279 = vmatpush.xpose.msra.mxu0 0.0
        %4280 = vmatpush.xpose.msra.mxu0 0.0
        %4281 = vmatpush.xpose.msra.mxu0 0.0
        %4282 = vmatpush.xpose.msra.mxu0 0.0
        %4283 = vmatpush.xpose.msra.mxu0 0.0
        %4284 = vmatpush.xpose.msra.mxu0 0.0
        %4285 = vmatpush.xpose.msra.mxu0 0.0
        %4286 = vmatpush.xpose.msra.mxu0 0.0
        %4287 = vmatpush.xpose.msra.mxu0 0.0
        %4288 = vmatpush.xpose.msra.mxu0 0.0
        %4289 = vmatpush.xpose.msra.mxu0 0.0
        %4290 = vmatpush.xpose.msra.mxu0 %v4089
        %4291 = vmatmul.f32.gmra.mxu0 %v489
        %v4292 = vpop.f32.mrf.mxu0
        %v4293 = vadd.f32 0.0, %v4292
        %4294 = vmatmul.f32.gmra.mxu0 %v492
        %v4295 = vpop.f32.mrf.mxu0
        %v4296 = vadd.f32 0.0, %v4295
        %4297 = vdwg.mxu0
        %4298 = vmatpush.xpose.msra.mxu0 0.0
        %4299 = vmatpush.xpose.msra.mxu0 0.0
        %4300 = vmatpush.xpose.msra.mxu0 0.0
        %4301 = vmatpush.xpose.msra.mxu0 0.0
        %4302 = vmatpush.xpose.msra.mxu0 0.0
        %4303 = vmatpush.xpose.msra.mxu0 0.0
        %4304 = vmatpush.xpose.msra.mxu0 0.0
        %4305 = vmatpush.xpose.msra.mxu0 0.0
        %4306 = vmatpush.xpose.msra.mxu0 0.0
        %4307 = vmatpush.xpose.msra.mxu0 0.0
        %4308 = vmatpush.xpose.msra.mxu0 0.0
        %4309 = vmatpush.xpose.msra.mxu0 0.0
        %4310 = vmatpush.xpose.msra.mxu0 0.0
        %4311 = vmatpush.xpose.msra.mxu0 0.0
        %4312 = vmatpush.xpose.msra.mxu0 0.0
        %4313 = vmatpush.xpose.msra.mxu0 %v4089
        %4314 = vmatmul.f32.gmra.mxu0 %v518
        %v4315 = vpop.f32.mrf.mxu0
        %v4316 = vadd.f32 0.0, %v4315
        %4317 = vmatmul.f32.gmra.mxu0 %v521
        %v4318 = vpop.f32.mrf.mxu0
        %v4319 = vadd.f32 0.0, %v4318
        %4320 = vdwg.mxu0
        %4321 = vmatpush.xpose.msra.mxu0 0.0
        %4322 = vmatpush.xpose.msra.mxu0 0.0
        %4323 = vmatpush.xpose.msra.mxu0 0.0
        %4324 = vmatpush.xpose.msra.mxu0 0.0
        %4325 = vmatpush.xpose.msra.mxu0 0.0
        %4326 = vmatpush.xpose.msra.mxu0 0.0
        %4327 = vmatpush.xpose.msra.mxu0 0.0
        %4328 = vmatpush.xpose.msra.mxu0 0.0
        %4329 = vmatpush.xpose.msra.mxu0 0.0
        %4330 = vmatpush.xpose.msra.mxu0 0.0
        %4331 = vmatpush.xpose.msra.mxu0 0.0
        %4332 = vmatpush.xpose.msra.mxu0 0.0
        %4333 = vmatpush.xpose.msra.mxu0 0.0
        %4334 = vmatpush.xpose.msra.mxu0 0.0
        %4335 = vmatpush.xpose.msra.mxu0 0.0
        %4336 = vmatpush.xpose.msra.mxu0 %v4089
        %4337 = vmatmul.f32.gmra.mxu0 %v547
        %v4338 = vpop.f32.mrf.mxu0
        %v4339 = vadd.f32 0.0, %v4338
        %4340 = vmatmul.f32.gmra.mxu0 %v550
        %v4341 = vpop.f32.mrf.mxu0
        %v4342 = vadd.f32 0.0, %v4341
        %4343 = vdwg.mxu0
        %4344 = vmatpush.xpose.msra.mxu0 0.0
        %4345 = vmatpush.xpose.msra.mxu0 0.0
        %4346 = vmatpush.xpose.msra.mxu0 0.0
        %4347 = vmatpush.xpose.msra.mxu0 0.0
        %4348 = vmatpush.xpose.msra.mxu0 0.0
        %4349 = vmatpush.xpose.msra.mxu0 0.0
        %4350 = vmatpush.xpose.msra.mxu0 0.0
        %4351 = vmatpush.xpose.msra.mxu0 0.0
        %4352 = vmatpush.xpose.msra.mxu0 0.0
        %4353 = vmatpush.xpose.msra.mxu0 0.0
        %4354 = vmatpush.xpose.msra.mxu0 0.0
        %4355 = vmatpush.xpose.msra.mxu0 0.0
        %4356 = vmatpush.xpose.msra.mxu0 0.0
        %4357 = vmatpush.xpose.msra.mxu0 0.0
        %4358 = vmatpush.xpose.msra.mxu0 0.0
        %4359 = vmatpush.xpose.msra.mxu0 %v4089
        %4360 = vmatmul.f32.gmra.mxu0 %v576
        %v4361 = vpop.f32.mrf.mxu0
        %v4362 = vadd.f32 0.0, %v4361
        %4363 = vmatmul.f32.gmra.mxu0 %v579
        %v4364 = vpop.f32.mrf.mxu0
        %v4365 = vadd.f32 0.0, %v4364
        %4366 = vdwg.mxu0
        %4367 = vmatpush.xpose.msra.mxu0 0.0
        %4368 = vmatpush.xpose.msra.mxu0 0.0
        %4369 = vmatpush.xpose.msra.mxu0 0.0
        %4370 = vmatpush.xpose.msra.mxu0 0.0
        %4371 = vmatpush.xpose.msra.mxu0 0.0
        %4372 = vmatpush.xpose.msra.mxu0 0.0
        %4373 = vmatpush.xpose.msra.mxu0 0.0
        %4374 = vmatpush.xpose.msra.mxu0 0.0
        %4375 = vmatpush.xpose.msra.mxu0 0.0
        %4376 = vmatpush.xpose.msra.mxu0 0.0
        %4377 = vmatpush.xpose.msra.mxu0 0.0
        %4378 = vmatpush.xpose.msra.mxu0 0.0
        %4379 = vmatpush.xpose.msra.mxu0 0.0
        %4380 = vmatpush.xpose.msra.mxu0 0.0
        %4381 = vmatpush.xpose.msra.mxu0 0.0
        %4382 = vmatpush.xpose.msra.mxu0 %v4089
        %4383 = vmatmul.f32.gmra.mxu0 %v605
        %v4384 = vpop.f32.mrf.mxu0
        %v4385 = vadd.f32 0.0, %v4384
        %4386 = vmatmul.f32.gmra.mxu0 %v608
        %v4387 = vpop.f32.mrf.mxu0
        %v4388 = vadd.f32 0.0, %v4387
        %4389 = vdwg.mxu0
        %4390 = vmatpush.xpose.msra.mxu0 0.0
        %4391 = vmatpush.xpose.msra.mxu0 0.0
        %4392 = vmatpush.xpose.msra.mxu0 0.0
        %4393 = vmatpush.xpose.msra.mxu0 0.0
        %4394 = vmatpush.xpose.msra.mxu0 0.0
        %4395 = vmatpush.xpose.msra.mxu0 0.0
        %4396 = vmatpush.xpose.msra.mxu0 0.0
        %4397 = vmatpush.xpose.msra.mxu0 0.0
        %4398 = vmatpush.xpose.msra.mxu0 0.0
        %4399 = vmatpush.xpose.msra.mxu0 0.0
        %4400 = vmatpush.xpose.msra.mxu0 0.0
        %4401 = vmatpush.xpose.msra.mxu0 0.0
        %4402 = vmatpush.xpose.msra.mxu0 0.0
        %4403 = vmatpush.xpose.msra.mxu0 0.0
        %4404 = vmatpush.xpose.msra.mxu0 0.0
        %4405 = vmatpush.xpose.msra.mxu0 %v4089
        %4406 = vmatmul.f32.gmra.mxu0 %v634
        %v4407 = vpop.f32.mrf.mxu0
        %v4408 = vadd.f32 0.0, %v4407
        %4409 = vmatmul.f32.gmra.mxu0 %v637
        %v4410 = vpop.f32.mrf.mxu0
        %v4411 = vadd.f32 0.0, %v4410
        %4412 = vdwg.mxu0
        %4413 = vmatpush.xpose.msra.mxu0 0.0
        %4414 = vmatpush.xpose.msra.mxu0 0.0
        %4415 = vmatpush.xpose.msra.mxu0 0.0
        %4416 = vmatpush.xpose.msra.mxu0 0.0
        %4417 = vmatpush.xpose.msra.mxu0 0.0
        %4418 = vmatpush.xpose.msra.mxu0 0.0
        %4419 = vmatpush.xpose.msra.mxu0 0.0
        %4420 = vmatpush.xpose.msra.mxu0 0.0
        %4421 = vmatpush.xpose.msra.mxu0 0.0
        %4422 = vmatpush.xpose.msra.mxu0 0.0
        %4423 = vmatpush.xpose.msra.mxu0 0.0
        %4424 = vmatpush.xpose.msra.mxu0 0.0
        %4425 = vmatpush.xpose.msra.mxu0 0.0
        %4426 = vmatpush.xpose.msra.mxu0 0.0
        %4427 = vmatpush.xpose.msra.mxu0 0.0
        %4428 = vmatpush.xpose.msra.mxu0 %v4089
        %4429 = vmatmul.f32.gmra.mxu0 %v663
        %v4430 = vpop.f32.mrf.mxu0
        %v4431 = vadd.f32 0.0, %v4430
        %4432 = vmatmul.f32.gmra.mxu0 %v666
        %v4433 = vpop.f32.mrf.mxu0
        %v4434 = vadd.f32 0.0, %v4433
        %4435 = vdwg.mxu0
        %v4437 = vsel %vm223, %v216, 0
        %v4440 = vsel %vm223, %v217, 0
        %4442 = vmatpush.xpose.msra.mxu0 0.0
        %4443 = vmatpush.xpose.msra.mxu0 0.0
        %4444 = vmatpush.xpose.msra.mxu0 0.0
        %4445 = vmatpush.xpose.msra.mxu0 0.0
        %4446 = vmatpush.xpose.msra.mxu0 0.0
        %4447 = vmatpush.xpose.msra.mxu0 0.0
        %4448 = vmatpush.xpose.msra.mxu0 0.0
        %4449 = vmatpush.xpose.msra.mxu0 0.0
        %4450 = vmatpush.xpose.msra.mxu0 0.0
        %4451 = vmatpush.xpose.msra.mxu0 0.0
        %4452 = vmatpush.xpose.msra.mxu0 0.0
        %4453 = vmatpush.xpose.msra.mxu0 0.0
        %4454 = vmatpush.xpose.msra.mxu0 0.0
        %4455 = vmatpush.xpose.msra.mxu0 0.0
        %4456 = vmatpush.xpose.msra.mxu0 0.0
        %4457 = vmatpush.xpose.msra.mxu0 %v4089
        %4458 = vmatmul.f32.gmra.mxu0 %v4437
        %v4459 = vpop.f32.mrf.mxu0
        %v4460 = vadd.f32 0.0, %v4459
        %4461 = vmatmul.f32.gmra.mxu0 %v4440
        %v4462 = vpop.f32.mrf.mxu0
        %v4463 = vadd.f32 0.0, %v4462
        %4464 = vdwg.mxu0
        %v4466 = vsel %vm223, %v4085, 0
        %4468 = vmatpush.xpose.msra.mxu0 0.0
        %4469 = vmatpush.xpose.msra.mxu0 0.0
        %4470 = vmatpush.xpose.msra.mxu0 0.0
        %4471 = vmatpush.xpose.msra.mxu0 0.0
        %4472 = vmatpush.xpose.msra.mxu0 0.0
        %4473 = vmatpush.xpose.msra.mxu0 0.0
        %4474 = vmatpush.xpose.msra.mxu0 0.0
        %4475 = vmatpush.xpose.msra.mxu0 0.0
        %4476 = vmatpush.xpose.msra.mxu0 0.0
        %4477 = vmatpush.xpose.msra.mxu0 0.0
        %4478 = vmatpush.xpose.msra.mxu0 0.0
        %4479 = vmatpush.xpose.msra.mxu0 0.0
        %4480 = vmatpush.xpose.msra.mxu0 0.0
        %4481 = vmatpush.xpose.msra.mxu0 0.0
        %4482 = vmatpush.xpose.msra.mxu0 0.0
        %4483 = vmatpush.xpose.msra.mxu0 %v4466
        %4484 = vmatmul.f32.gmra.mxu0 %v734
        %v4485 = vpop.f32.mrf.mxu0
        %v4486 = vadd.f32 %v4109, %v4485
        %4487 = vmatmul.f32.gmra.mxu0 %v736
        %v4488 = vpop.f32.mrf.mxu0
        %v4489 = vadd.f32 %v4112, %v4488
        %4490 = vdwg.mxu0
        %4491 = vmatpush.xpose.msra.mxu0 0.0
        %4492 = vmatpush.xpose.msra.mxu0 0.0
        %4493 = vmatpush.xpose.msra.mxu0 0.0
        %4494 = vmatpush.xpose.msra.mxu0 0.0
        %4495 = vmatpush.xpose.msra.mxu0 0.0
        %4496 = vmatpush.xpose.msra.mxu0 0.0
        %4497 = vmatpush.xpose.msra.mxu0 0.0
        %4498 = vmatpush.xpose.msra.mxu0 0.0
        %4499 = vmatpush.xpose.msra.mxu0 0.0
        %4500 = vmatpush.xpose.msra.mxu0 0.0
        %4501 = vmatpush.xpose.msra.mxu0 0.0
        %4502 = vmatpush.xpose.msra.mxu0 0.0
        %4503 = vmatpush.xpose.msra.mxu0 0.0
        %4504 = vmatpush.xpose.msra.mxu0 0.0
        %4505 = vmatpush.xpose.msra.mxu0 0.0
        %4506 = vmatpush.xpose.msra.mxu0 %v4466
        %4507 = vmatmul.f32.gmra.mxu0 %v767
        %v4508 = vpop.f32.mrf.mxu0
        %v4509 = vadd.f32 %v4132, %v4508
        %4510 = vmatmul.f32.gmra.mxu0 %v769
        %v4511 = vpop.f32.mrf.mxu0
        %v4512 = vadd.f32 %v4135, %v4511
        %4513 = vdwg.mxu0
        %4514 = vmatpush.xpose.msra.mxu0 0.0
        %4515 = vmatpush.xpose.msra.mxu0 0.0
        %4516 = vmatpush.xpose.msra.mxu0 0.0
        %4517 = vmatpush.xpose.msra.mxu0 0.0
        %4518 = vmatpush.xpose.msra.mxu0 0.0
        %4519 = vmatpush.xpose.msra.mxu0 0.0
        %4520 = vmatpush.xpose.msra.mxu0 0.0
        %4521 = vmatpush.xpose.msra.mxu0 0.0
        %4522 = vmatpush.xpose.msra.mxu0 0.0
        %4523 = vmatpush.xpose.msra.mxu0 0.0
        %4524 = vmatpush.xpose.msra.mxu0 0.0
        %4525 = vmatpush.xpose.msra.mxu0 0.0
        %4526 = vmatpush.xpose.msra.mxu0 0.0
        %4527 = vmatpush.xpose.msra.mxu0 0.0
        %4528 = vmatpush.xpose.msra.mxu0 0.0
        %4529 = vmatpush.xpose.msra.mxu0 %v4466
        %4530 = vmatmul.f32.gmra.mxu0 %v800
        %v4531 = vpop.f32.mrf.mxu0
        %v4532 = vadd.f32 %v4155, %v4531
        %4533 = vmatmul.f32.gmra.mxu0 %v802
        %v4534 = vpop.f32.mrf.mxu0
        %v4535 = vadd.f32 %v4158, %v4534
        %4536 = vdwg.mxu0
        %4537 = vmatpush.xpose.msra.mxu0 0.0
        %4538 = vmatpush.xpose.msra.mxu0 0.0
        %4539 = vmatpush.xpose.msra.mxu0 0.0
        %4540 = vmatpush.xpose.msra.mxu0 0.0
        %4541 = vmatpush.xpose.msra.mxu0 0.0
        %4542 = vmatpush.xpose.msra.mxu0 0.0
        %4543 = vmatpush.xpose.msra.mxu0 0.0
        %4544 = vmatpush.xpose.msra.mxu0 0.0
        %4545 = vmatpush.xpose.msra.mxu0 0.0
        %4546 = vmatpush.xpose.msra.mxu0 0.0
        %4547 = vmatpush.xpose.msra.mxu0 0.0
        %4548 = vmatpush.xpose.msra.mxu0 0.0
        %4549 = vmatpush.xpose.msra.mxu0 0.0
        %4550 = vmatpush.xpose.msra.mxu0 0.0
        %4551 = vmatpush.xpose.msra.mxu0 0.0
        %4552 = vmatpush.xpose.msra.mxu0 %v4466
        %4553 = vmatmul.f32.gmra.mxu0 %v833
        %v4554 = vpop.f32.mrf.mxu0
        %v4555 = vadd.f32 %v4178, %v4554
        %4556 = vmatmul.f32.gmra.mxu0 %v835
        %v4557 = vpop.f32.mrf.mxu0
        %v4558 = vadd.f32 %v4181, %v4557
        %4559 = vdwg.mxu0
        %4560 = vmatpush.xpose.msra.mxu0 0.0
        %4561 = vmatpush.xpose.msra.mxu0 0.0
        %4562 = vmatpush.xpose.msra.mxu0 0.0
        %4563 = vmatpush.xpose.msra.mxu0 0.0
        %4564 = vmatpush.xpose.msra.mxu0 0.0
        %4565 = vmatpush.xpose.msra.mxu0 0.0
        %4566 = vmatpush.xpose.msra.mxu0 0.0
        %4567 = vmatpush.xpose.msra.mxu0 0.0
        %4568 = vmatpush.xpose.msra.mxu0 0.0
        %4569 = vmatpush.xpose.msra.mxu0 0.0
        %4570 = vmatpush.xpose.msra.mxu0 0.0
        %4571 = vmatpush.xpose.msra.mxu0 0.0
        %4572 = vmatpush.xpose.msra.mxu0 0.0
        %4573 = vmatpush.xpose.msra.mxu0 0.0
        %4574 = vmatpush.xpose.msra.mxu0 0.0
        %4575 = vmatpush.xpose.msra.mxu0 %v4466
        %4576 = vmatmul.f32.gmra.mxu0 %v866
        %v4577 = vpop.f32.mrf.mxu0
        %v4578 = vadd.f32 %v4201, %v4577
        %4579 = vmatmul.f32.gmra.mxu0 %v868
        %v4580 = vpop.f32.mrf.mxu0
        %v4581 = vadd.f32 %v4204, %v4580
        %4582 = vdwg.mxu0
        %4583 = vmatpush.xpose.msra.mxu0 0.0
        %4584 = vmatpush.xpose.msra.mxu0 0.0
        %4585 = vmatpush.xpose.msra.mxu0 0.0
        %4586 = vmatpush.xpose.msra.mxu0 0.0
        %4587 = vmatpush.xpose.msra.mxu0 0.0
        %4588 = vmatpush.xpose.msra.mxu0 0.0
        %4589 = vmatpush.xpose.msra.mxu0 0.0
        %4590 = vmatpush.xpose.msra.mxu0 0.0
        %4591 = vmatpush.xpose.msra.mxu0 0.0
        %4592 = vmatpush.xpose.msra.mxu0 0.0
        %4593 = vmatpush.xpose.msra.mxu0 0.0
        %4594 = vmatpush.xpose.msra.mxu0 0.0
        %4595 = vmatpush.xpose.msra.mxu0 0.0
        %4596 = vmatpush.xpose.msra.mxu0 0.0
        %4597 = vmatpush.xpose.msra.mxu0 0.0
        %4598 = vmatpush.xpose.msra.mxu0 %v4466
        %4599 = vmatmul.f32.gmra.mxu0 %v899
        %v4600 = vpop.f32.mrf.mxu0
        %v4601 = vadd.f32 %v4224, %v4600
        %4602 = vmatmul.f32.gmra.mxu0 %v901
        %v4603 = vpop.f32.mrf.mxu0
        %v4604 = vadd.f32 %v4227, %v4603
        %4605 = vdwg.mxu0
        %4606 = vmatpush.xpose.msra.mxu0 0.0
        %4607 = vmatpush.xpose.msra.mxu0 0.0
        %4608 = vmatpush.xpose.msra.mxu0 0.0
        %4609 = vmatpush.xpose.msra.mxu0 0.0
        %4610 = vmatpush.xpose.msra.mxu0 0.0
        %4611 = vmatpush.xpose.msra.mxu0 0.0
        %4612 = vmatpush.xpose.msra.mxu0 0.0
        %4613 = vmatpush.xpose.msra.mxu0 0.0
        %4614 = vmatpush.xpose.msra.mxu0 0.0
        %4615 = vmatpush.xpose.msra.mxu0 0.0
        %4616 = vmatpush.xpose.msra.mxu0 0.0
        %4617 = vmatpush.xpose.msra.mxu0 0.0
        %4618 = vmatpush.xpose.msra.mxu0 0.0
        %4619 = vmatpush.xpose.msra.mxu0 0.0
        %4620 = vmatpush.xpose.msra.mxu0 0.0
        %4621 = vmatpush.xpose.msra.mxu0 %v4466
        %4622 = vmatmul.f32.gmra.mxu0 %v932
        %v4623 = vpop.f32.mrf.mxu0
        %v4624 = vadd.f32 %v4247, %v4623
        %4625 = vmatmul.f32.gmra.mxu0 %v934
        %v4626 = vpop.f32.mrf.mxu0
        %v4627 = vadd.f32 %v4250, %v4626
        %4628 = vdwg.mxu0
        %4629 = vmatpush.xpose.msra.mxu0 0.0
        %4630 = vmatpush.xpose.msra.mxu0 0.0
        %4631 = vmatpush.xpose.msra.mxu0 0.0
        %4632 = vmatpush.xpose.msra.mxu0 0.0
        %4633 = vmatpush.xpose.msra.mxu0 0.0
        %4634 = vmatpush.xpose.msra.mxu0 0.0
        %4635 = vmatpush.xpose.msra.mxu0 0.0
        %4636 = vmatpush.xpose.msra.mxu0 0.0
        %4637 = vmatpush.xpose.msra.mxu0 0.0
        %4638 = vmatpush.xpose.msra.mxu0 0.0
        %4639 = vmatpush.xpose.msra.mxu0 0.0
        %4640 = vmatpush.xpose.msra.mxu0 0.0
        %4641 = vmatpush.xpose.msra.mxu0 0.0
        %4642 = vmatpush.xpose.msra.mxu0 0.0
        %4643 = vmatpush.xpose.msra.mxu0 0.0
        %4644 = vmatpush.xpose.msra.mxu0 %v4466
        %4645 = vmatmul.f32.gmra.mxu0 %v965
        %v4646 = vpop.f32.mrf.mxu0
        %v4647 = vadd.f32 %v4270, %v4646
        %4648 = vmatmul.f32.gmra.mxu0 %v967
        %v4649 = vpop.f32.mrf.mxu0
        %v4650 = vadd.f32 %v4273, %v4649
        %4651 = vdwg.mxu0
        %4652 = vmatpush.xpose.msra.mxu0 0.0
        %4653 = vmatpush.xpose.msra.mxu0 0.0
        %4654 = vmatpush.xpose.msra.mxu0 0.0
        %4655 = vmatpush.xpose.msra.mxu0 0.0
        %4656 = vmatpush.xpose.msra.mxu0 0.0
        %4657 = vmatpush.xpose.msra.mxu0 0.0
        %4658 = vmatpush.xpose.msra.mxu0 0.0
        %4659 = vmatpush.xpose.msra.mxu0 0.0
        %4660 = vmatpush.xpose.msra.mxu0 0.0
        %4661 = vmatpush.xpose.msra.mxu0 0.0
        %4662 = vmatpush.xpose.msra.mxu0 0.0
        %4663 = vmatpush.xpose.msra.mxu0 0.0
        %4664 = vmatpush.xpose.msra.mxu0 0.0
        %4665 = vmatpush.xpose.msra.mxu0 0.0
        %4666 = vmatpush.xpose.msra.mxu0 0.0
        %4667 = vmatpush.xpose.msra.mxu0 %v4466
        %4668 = vmatmul.f32.gmra.mxu0 %v998
        %v4669 = vpop.f32.mrf.mxu0
        %v4670 = vadd.f32 %v4293, %v4669
        %4671 = vmatmul.f32.gmra.mxu0 %v1000
        %v4672 = vpop.f32.mrf.mxu0
        %v4673 = vadd.f32 %v4296, %v4672
        %4674 = vdwg.mxu0
        %4675 = vmatpush.xpose.msra.mxu0 0.0
        %4676 = vmatpush.xpose.msra.mxu0 0.0
        %4677 = vmatpush.xpose.msra.mxu0 0.0
        %4678 = vmatpush.xpose.msra.mxu0 0.0
        %4679 = vmatpush.xpose.msra.mxu0 0.0
        %4680 = vmatpush.xpose.msra.mxu0 0.0
        %4681 = vmatpush.xpose.msra.mxu0 0.0
        %4682 = vmatpush.xpose.msra.mxu0 0.0
        %4683 = vmatpush.xpose.msra.mxu0 0.0
        %4684 = vmatpush.xpose.msra.mxu0 0.0
        %4685 = vmatpush.xpose.msra.mxu0 0.0
        %4686 = vmatpush.xpose.msra.mxu0 0.0
        %4687 = vmatpush.xpose.msra.mxu0 0.0
        %4688 = vmatpush.xpose.msra.mxu0 0.0
        %4689 = vmatpush.xpose.msra.mxu0 0.0
        %4690 = vmatpush.xpose.msra.mxu0 %v4466
        %4691 = vmatmul.f32.gmra.mxu0 %v1031
        %v4692 = vpop.f32.mrf.mxu0
        %v4693 = vadd.f32 %v4316, %v4692
        %4694 = vmatmul.f32.gmra.mxu0 %v1033
        %v4695 = vpop.f32.mrf.mxu0
        %v4696 = vadd.f32 %v4319, %v4695
        %4697 = vdwg.mxu0
        %4698 = vmatpush.xpose.msra.mxu0 0.0
        %4699 = vmatpush.xpose.msra.mxu0 0.0
        %4700 = vmatpush.xpose.msra.mxu0 0.0
        %4701 = vmatpush.xpose.msra.mxu0 0.0
        %4702 = vmatpush.xpose.msra.mxu0 0.0
        %4703 = vmatpush.xpose.msra.mxu0 0.0
        %4704 = vmatpush.xpose.msra.mxu0 0.0
        %4705 = vmatpush.xpose.msra.mxu0 0.0
        %4706 = vmatpush.xpose.msra.mxu0 0.0
        %4707 = vmatpush.xpose.msra.mxu0 0.0
        %4708 = vmatpush.xpose.msra.mxu0 0.0
        %4709 = vmatpush.xpose.msra.mxu0 0.0
        %4710 = vmatpush.xpose.msra.mxu0 0.0
        %4711 = vmatpush.xpose.msra.mxu0 0.0
        %4712 = vmatpush.xpose.msra.mxu0 0.0
        %4713 = vmatpush.xpose.msra.mxu0 %v4466
        %4714 = vmatmul.f32.gmra.mxu0 %v1064
        %v4715 = vpop.f32.mrf.mxu0
        %v4716 = vadd.f32 %v4339, %v4715
        %4717 = vmatmul.f32.gmra.mxu0 %v1066
        %v4718 = vpop.f32.mrf.mxu0
        %v4719 = vadd.f32 %v4342, %v4718
        %4720 = vdwg.mxu0
        %4721 = vmatpush.xpose.msra.mxu0 0.0
        %4722 = vmatpush.xpose.msra.mxu0 0.0
        %4723 = vmatpush.xpose.msra.mxu0 0.0
        %4724 = vmatpush.xpose.msra.mxu0 0.0
        %4725 = vmatpush.xpose.msra.mxu0 0.0
        %4726 = vmatpush.xpose.msra.mxu0 0.0
        %4727 = vmatpush.xpose.msra.mxu0 0.0
        %4728 = vmatpush.xpose.msra.mxu0 0.0
        %4729 = vmatpush.xpose.msra.mxu0 0.0
        %4730 = vmatpush.xpose.msra.mxu0 0.0
        %4731 = vmatpush.xpose.msra.mxu0 0.0
        %4732 = vmatpush.xpose.msra.mxu0 0.0
        %4733 = vmatpush.xpose.msra.mxu0 0.0
        %4734 = vmatpush.xpose.msra.mxu0 0.0
        %4735 = vmatpush.xpose.msra.mxu0 0.0
        %4736 = vmatpush.xpose.msra.mxu0 %v4466
        %4737 = vmatmul.f32.gmra.mxu0 %v1097
        %v4738 = vpop.f32.mrf.mxu0
        %v4739 = vadd.f32 %v4362, %v4738
        %4740 = vmatmul.f32.gmra.mxu0 %v1099
        %v4741 = vpop.f32.mrf.mxu0
        %v4742 = vadd.f32 %v4365, %v4741
        %4743 = vdwg.mxu0
        %4744 = vmatpush.xpose.msra.mxu0 0.0
        %4745 = vmatpush.xpose.msra.mxu0 0.0
        %4746 = vmatpush.xpose.msra.mxu0 0.0
        %4747 = vmatpush.xpose.msra.mxu0 0.0
        %4748 = vmatpush.xpose.msra.mxu0 0.0
        %4749 = vmatpush.xpose.msra.mxu0 0.0
        %4750 = vmatpush.xpose.msra.mxu0 0.0
        %4751 = vmatpush.xpose.msra.mxu0 0.0
        %4752 = vmatpush.xpose.msra.mxu0 0.0
        %4753 = vmatpush.xpose.msra.mxu0 0.0
        %4754 = vmatpush.xpose.msra.mxu0 0.0
        %4755 = vmatpush.xpose.msra.mxu0 0.0
        %4756 = vmatpush.xpose.msra.mxu0 0.0
        %4757 = vmatpush.xpose.msra.mxu0 0.0
        %4758 = vmatpush.xpose.msra.mxu0 0.0
        %4759 = vmatpush.xpose.msra.mxu0 %v4466
        %4760 = vmatmul.f32.gmra.mxu0 %v1130
        %v4761 = vpop.f32.mrf.mxu0
        %v4762 = vadd.f32 %v4385, %v4761
        %4763 = vmatmul.f32.gmra.mxu0 %v1132
        %v4764 = vpop.f32.mrf.mxu0
        %v4765 = vadd.f32 %v4388, %v4764
        %4766 = vdwg.mxu0
        %4767 = vmatpush.xpose.msra.mxu0 0.0
        %4768 = vmatpush.xpose.msra.mxu0 0.0
        %4769 = vmatpush.xpose.msra.mxu0 0.0
        %4770 = vmatpush.xpose.msra.mxu0 0.0
        %4771 = vmatpush.xpose.msra.mxu0 0.0
        %4772 = vmatpush.xpose.msra.mxu0 0.0
        %4773 = vmatpush.xpose.msra.mxu0 0.0
        %4774 = vmatpush.xpose.msra.mxu0 0.0
        %4775 = vmatpush.xpose.msra.mxu0 0.0
        %4776 = vmatpush.xpose.msra.mxu0 0.0
        %4777 = vmatpush.xpose.msra.mxu0 0.0
        %4778 = vmatpush.xpose.msra.mxu0 0.0
        %4779 = vmatpush.xpose.msra.mxu0 0.0
        %4780 = vmatpush.xpose.msra.mxu0 0.0
        %4781 = vmatpush.xpose.msra.mxu0 0.0
        %4782 = vmatpush.xpose.msra.mxu0 %v4466
        %4783 = vmatmul.f32.gmra.mxu0 %v1163
        %v4784 = vpop.f32.mrf.mxu0
        %v4785 = vadd.f32 %v4408, %v4784
        %4786 = vmatmul.f32.gmra.mxu0 %v1165
        %v4787 = vpop.f32.mrf.mxu0
        %v4788 = vadd.f32 %v4411, %v4787
        %4789 = vdwg.mxu0
        %4790 = vmatpush.xpose.msra.mxu0 0.0
        %4791 = vmatpush.xpose.msra.mxu0 0.0
        %4792 = vmatpush.xpose.msra.mxu0 0.0
        %4793 = vmatpush.xpose.msra.mxu0 0.0
        %4794 = vmatpush.xpose.msra.mxu0 0.0
        %4795 = vmatpush.xpose.msra.mxu0 0.0
        %4796 = vmatpush.xpose.msra.mxu0 0.0
        %4797 = vmatpush.xpose.msra.mxu0 0.0
        %4798 = vmatpush.xpose.msra.mxu0 0.0
        %4799 = vmatpush.xpose.msra.mxu0 0.0
        %4800 = vmatpush.xpose.msra.mxu0 0.0
        %4801 = vmatpush.xpose.msra.mxu0 0.0
        %4802 = vmatpush.xpose.msra.mxu0 0.0
        %4803 = vmatpush.xpose.msra.mxu0 0.0
        %4804 = vmatpush.xpose.msra.mxu0 0.0
        %4805 = vmatpush.xpose.msra.mxu0 %v4466
        %4806 = vmatmul.f32.gmra.mxu0 %v1196
        %v4807 = vpop.f32.mrf.mxu0
        %v4808 = vadd.f32 %v4431, %v4807
        %4809 = vmatmul.f32.gmra.mxu0 %v1198
        %v4810 = vpop.f32.mrf.mxu0
        %v4811 = vadd.f32 %v4434, %v4810
        %4812 = vdwg.mxu0
        %v4814 = vrot.slane %v216, 1
        %v4815 = vrot.slane %v217, 1
        %v4816 = vsel %vm692, %v4814, %v4815
        %v4817 = vrot.slane %v218, 1
        %v4818 = vsel %vm692, %v4815, %v4817
        %v4819 = vsel %vm223, %v4816, 0
        %v4821 = vsel %vm223, %v4818, 0
        %4823 = vmatpush.xpose.msra.mxu0 0.0
        %4824 = vmatpush.xpose.msra.mxu0 0.0
        %4825 = vmatpush.xpose.msra.mxu0 0.0
        %4826 = vmatpush.xpose.msra.mxu0 0.0
        %4827 = vmatpush.xpose.msra.mxu0 0.0
        %4828 = vmatpush.xpose.msra.mxu0 0.0
        %4829 = vmatpush.xpose.msra.mxu0 0.0
        %4830 = vmatpush.xpose.msra.mxu0 0.0
        %4831 = vmatpush.xpose.msra.mxu0 0.0
        %4832 = vmatpush.xpose.msra.mxu0 0.0
        %4833 = vmatpush.xpose.msra.mxu0 0.0
        %4834 = vmatpush.xpose.msra.mxu0 0.0
        %4835 = vmatpush.xpose.msra.mxu0 0.0
        %4836 = vmatpush.xpose.msra.mxu0 0.0
        %4837 = vmatpush.xpose.msra.mxu0 0.0
        %4838 = vmatpush.xpose.msra.mxu0 %v4466
        %4839 = vmatmul.f32.gmra.mxu0 %v4819
        %v4840 = vpop.f32.mrf.mxu0
        %v4841 = vadd.f32 %v4460, %v4840
        %4842 = vmatmul.f32.gmra.mxu0 %v4821
        %v4843 = vpop.f32.mrf.mxu0
        %v4844 = vadd.f32 %v4463, %v4843
        %4845 = vdwg.mxu0
        %s4846 = scalar_lea.vmem %s1, 80
        %v4847 = vld [vmem:[%s4846] sm:$0xff]
        %v4849 = vsel %vm223, %v4847, 0
        %4851 = vmatpush.xpose.msra.mxu0 0.0
        %4852 = vmatpush.xpose.msra.mxu0 0.0
        %4853 = vmatpush.xpose.msra.mxu0 0.0
        %4854 = vmatpush.xpose.msra.mxu0 0.0
        %4855 = vmatpush.xpose.msra.mxu0 0.0
        %4856 = vmatpush.xpose.msra.mxu0 0.0
        %4857 = vmatpush.xpose.msra.mxu0 0.0
        %4858 = vmatpush.xpose.msra.mxu0 0.0
        %4859 = vmatpush.xpose.msra.mxu0 0.0
        %4860 = vmatpush.xpose.msra.mxu0 0.0
        %4861 = vmatpush.xpose.msra.mxu0 0.0
        %4862 = vmatpush.xpose.msra.mxu0 0.0
        %4863 = vmatpush.xpose.msra.mxu0 0.0
        %4864 = vmatpush.xpose.msra.mxu0 0.0
        %4865 = vmatpush.xpose.msra.mxu0 0.0
        %4866 = vmatpush.xpose.msra.mxu0 %v4849
        %4867 = vmatmul.f32.gmra.mxu0 %v698
        %v4868 = vpop.f32.mrf.mxu0
        %v4869 = vadd.f32 0.0, %v4868
        %4870 = vmatmul.f32.gmra.mxu0 %v700
        %v4871 = vpop.f32.mrf.mxu0
        %v4872 = vadd.f32 0.0, %v4871
        %4873 = vdwg.mxu0
        %4874 = vmatpush.xpose.msra.mxu0 0.0
        %4875 = vmatpush.xpose.msra.mxu0 0.0
        %4876 = vmatpush.xpose.msra.mxu0 0.0
        %4877 = vmatpush.xpose.msra.mxu0 0.0
        %4878 = vmatpush.xpose.msra.mxu0 0.0
        %4879 = vmatpush.xpose.msra.mxu0 0.0
        %4880 = vmatpush.xpose.msra.mxu0 0.0
        %4881 = vmatpush.xpose.msra.mxu0 0.0
        %4882 = vmatpush.xpose.msra.mxu0 0.0
        %4883 = vmatpush.xpose.msra.mxu0 0.0
        %4884 = vmatpush.xpose.msra.mxu0 0.0
        %4885 = vmatpush.xpose.msra.mxu0 0.0
        %4886 = vmatpush.xpose.msra.mxu0 0.0
        %4887 = vmatpush.xpose.msra.mxu0 0.0
        %4888 = vmatpush.xpose.msra.mxu0 0.0
        %4889 = vmatpush.xpose.msra.mxu0 %v4849
        %4890 = vmatmul.f32.gmra.mxu0 %v734
        %v4891 = vpop.f32.mrf.mxu0
        %v4892 = vadd.f32 0.0, %v4891
        %4893 = vmatmul.f32.gmra.mxu0 %v736
        %v4894 = vpop.f32.mrf.mxu0
        %v4895 = vadd.f32 0.0, %v4894
        %4896 = vdwg.mxu0
        %4897 = vmatpush.xpose.msra.mxu0 0.0
        %4898 = vmatpush.xpose.msra.mxu0 0.0
        %4899 = vmatpush.xpose.msra.mxu0 0.0
        %4900 = vmatpush.xpose.msra.mxu0 0.0
        %4901 = vmatpush.xpose.msra.mxu0 0.0
        %4902 = vmatpush.xpose.msra.mxu0 0.0
        %4903 = vmatpush.xpose.msra.mxu0 0.0
        %4904 = vmatpush.xpose.msra.mxu0 0.0
        %4905 = vmatpush.xpose.msra.mxu0 0.0
        %4906 = vmatpush.xpose.msra.mxu0 0.0
        %4907 = vmatpush.xpose.msra.mxu0 0.0
        %4908 = vmatpush.xpose.msra.mxu0 0.0
        %4909 = vmatpush.xpose.msra.mxu0 0.0
        %4910 = vmatpush.xpose.msra.mxu0 0.0
        %4911 = vmatpush.xpose.msra.mxu0 0.0
        %4912 = vmatpush.xpose.msra.mxu0 %v4849
        %4913 = vmatmul.f32.gmra.mxu0 %v767
        %v4914 = vpop.f32.mrf.mxu0
        %v4915 = vadd.f32 0.0, %v4914
        %4916 = vmatmul.f32.gmra.mxu0 %v769
        %v4917 = vpop.f32.mrf.mxu0
        %v4918 = vadd.f32 0.0, %v4917
        %4919 = vdwg.mxu0
        %4920 = vmatpush.xpose.msra.mxu0 0.0
        %4921 = vmatpush.xpose.msra.mxu0 0.0
        %4922 = vmatpush.xpose.msra.mxu0 0.0
        %4923 = vmatpush.xpose.msra.mxu0 0.0
        %4924 = vmatpush.xpose.msra.mxu0 0.0
        %4925 = vmatpush.xpose.msra.mxu0 0.0
        %4926 = vmatpush.xpose.msra.mxu0 0.0
        %4927 = vmatpush.xpose.msra.mxu0 0.0
        %4928 = vmatpush.xpose.msra.mxu0 0.0
        %4929 = vmatpush.xpose.msra.mxu0 0.0
        %4930 = vmatpush.xpose.msra.mxu0 0.0
        %4931 = vmatpush.xpose.msra.mxu0 0.0
        %4932 = vmatpush.xpose.msra.mxu0 0.0
        %4933 = vmatpush.xpose.msra.mxu0 0.0
        %4934 = vmatpush.xpose.msra.mxu0 0.0
        %4935 = vmatpush.xpose.msra.mxu0 %v4849
        %4936 = vmatmul.f32.gmra.mxu0 %v800
        %v4937 = vpop.f32.mrf.mxu0
        %v4938 = vadd.f32 0.0, %v4937
        %4939 = vmatmul.f32.gmra.mxu0 %v802
        %v4940 = vpop.f32.mrf.mxu0
        %v4941 = vadd.f32 0.0, %v4940
        %4942 = vdwg.mxu0
        %4943 = vmatpush.xpose.msra.mxu0 0.0
        %4944 = vmatpush.xpose.msra.mxu0 0.0
        %4945 = vmatpush.xpose.msra.mxu0 0.0
        %4946 = vmatpush.xpose.msra.mxu0 0.0
        %4947 = vmatpush.xpose.msra.mxu0 0.0
        %4948 = vmatpush.xpose.msra.mxu0 0.0
        %4949 = vmatpush.xpose.msra.mxu0 0.0
        %4950 = vmatpush.xpose.msra.mxu0 0.0
        %4951 = vmatpush.xpose.msra.mxu0 0.0
        %4952 = vmatpush.xpose.msra.mxu0 0.0
        %4953 = vmatpush.xpose.msra.mxu0 0.0
        %4954 = vmatpush.xpose.msra.mxu0 0.0
        %4955 = vmatpush.xpose.msra.mxu0 0.0
        %4956 = vmatpush.xpose.msra.mxu0 0.0
        %4957 = vmatpush.xpose.msra.mxu0 0.0
        %4958 = vmatpush.xpose.msra.mxu0 %v4849
        %4959 = vmatmul.f32.gmra.mxu0 %v833
        %v4960 = vpop.f32.mrf.mxu0
        %v4961 = vadd.f32 0.0, %v4960
        %4962 = vmatmul.f32.gmra.mxu0 %v835
        %v4963 = vpop.f32.mrf.mxu0
        %v4964 = vadd.f32 0.0, %v4963
        %4965 = vdwg.mxu0
        %4966 = vmatpush.xpose.msra.mxu0 0.0
        %4967 = vmatpush.xpose.msra.mxu0 0.0
        %4968 = vmatpush.xpose.msra.mxu0 0.0
        %4969 = vmatpush.xpose.msra.mxu0 0.0
        %4970 = vmatpush.xpose.msra.mxu0 0.0
        %4971 = vmatpush.xpose.msra.mxu0 0.0
        %4972 = vmatpush.xpose.msra.mxu0 0.0
        %4973 = vmatpush.xpose.msra.mxu0 0.0
        %4974 = vmatpush.xpose.msra.mxu0 0.0
        %4975 = vmatpush.xpose.msra.mxu0 0.0
        %4976 = vmatpush.xpose.msra.mxu0 0.0
        %4977 = vmatpush.xpose.msra.mxu0 0.0
        %4978 = vmatpush.xpose.msra.mxu0 0.0
        %4979 = vmatpush.xpose.msra.mxu0 0.0
        %4980 = vmatpush.xpose.msra.mxu0 0.0
        %4981 = vmatpush.xpose.msra.mxu0 %v4849
        %4982 = vmatmul.f32.gmra.mxu0 %v866
        %v4983 = vpop.f32.mrf.mxu0
        %v4984 = vadd.f32 0.0, %v4983
        %4985 = vmatmul.f32.gmra.mxu0 %v868
        %v4986 = vpop.f32.mrf.mxu0
        %v4987 = vadd.f32 0.0, %v4986
        %4988 = vdwg.mxu0
        %4989 = vmatpush.xpose.msra.mxu0 0.0
        %4990 = vmatpush.xpose.msra.mxu0 0.0
        %4991 = vmatpush.xpose.msra.mxu0 0.0
        %4992 = vmatpush.xpose.msra.mxu0 0.0
        %4993 = vmatpush.xpose.msra.mxu0 0.0
        %4994 = vmatpush.xpose.msra.mxu0 0.0
        %4995 = vmatpush.xpose.msra.mxu0 0.0
        %4996 = vmatpush.xpose.msra.mxu0 0.0
        %4997 = vmatpush.xpose.msra.mxu0 0.0
        %4998 = vmatpush.xpose.msra.mxu0 0.0
        %4999 = vmatpush.xpose.msra.mxu0 0.0
        %5000 = vmatpush.xpose.msra.mxu0 0.0
        %5001 = vmatpush.xpose.msra.mxu0 0.0
        %5002 = vmatpush.xpose.msra.mxu0 0.0
        %5003 = vmatpush.xpose.msra.mxu0 0.0
        %5004 = vmatpush.xpose.msra.mxu0 %v4849
        %5005 = vmatmul.f32.gmra.mxu0 %v899
        %v5006 = vpop.f32.mrf.mxu0
        %v5007 = vadd.f32 0.0, %v5006
        %5008 = vmatmul.f32.gmra.mxu0 %v901
        %v5009 = vpop.f32.mrf.mxu0
        %v5010 = vadd.f32 0.0, %v5009
        %5011 = vdwg.mxu0
        %5012 = vmatpush.xpose.msra.mxu0 0.0
        %5013 = vmatpush.xpose.msra.mxu0 0.0
        %5014 = vmatpush.xpose.msra.mxu0 0.0
        %5015 = vmatpush.xpose.msra.mxu0 0.0
        %5016 = vmatpush.xpose.msra.mxu0 0.0
        %5017 = vmatpush.xpose.msra.mxu0 0.0
        %5018 = vmatpush.xpose.msra.mxu0 0.0
        %5019 = vmatpush.xpose.msra.mxu0 0.0
        %5020 = vmatpush.xpose.msra.mxu0 0.0
        %5021 = vmatpush.xpose.msra.mxu0 0.0
        %5022 = vmatpush.xpose.msra.mxu0 0.0
        %5023 = vmatpush.xpose.msra.mxu0 0.0
        %5024 = vmatpush.xpose.msra.mxu0 0.0
        %5025 = vmatpush.xpose.msra.mxu0 0.0
        %5026 = vmatpush.xpose.msra.mxu0 0.0
        %5027 = vmatpush.xpose.msra.mxu0 %v4849
        %5028 = vmatmul.f32.gmra.mxu0 %v932
        %v5029 = vpop.f32.mrf.mxu0
        %v5030 = vadd.f32 0.0, %v5029
        %5031 = vmatmul.f32.gmra.mxu0 %v934
        %v5032 = vpop.f32.mrf.mxu0
        %v5033 = vadd.f32 0.0, %v5032
        %5034 = vdwg.mxu0
        %5035 = vmatpush.xpose.msra.mxu0 0.0
        %5036 = vmatpush.xpose.msra.mxu0 0.0
        %5037 = vmatpush.xpose.msra.mxu0 0.0
        %5038 = vmatpush.xpose.msra.mxu0 0.0
        %5039 = vmatpush.xpose.msra.mxu0 0.0
        %5040 = vmatpush.xpose.msra.mxu0 0.0
        %5041 = vmatpush.xpose.msra.mxu0 0.0
        %5042 = vmatpush.xpose.msra.mxu0 0.0
        %5043 = vmatpush.xpose.msra.mxu0 0.0
        %5044 = vmatpush.xpose.msra.mxu0 0.0
        %5045 = vmatpush.xpose.msra.mxu0 0.0
        %5046 = vmatpush.xpose.msra.mxu0 0.0
        %5047 = vmatpush.xpose.msra.mxu0 0.0
        %5048 = vmatpush.xpose.msra.mxu0 0.0
        %5049 = vmatpush.xpose.msra.mxu0 0.0
        %5050 = vmatpush.xpose.msra.mxu0 %v4849
        %5051 = vmatmul.f32.gmra.mxu0 %v965
        %v5052 = vpop.f32.mrf.mxu0
        %v5053 = vadd.f32 0.0, %v5052
        %5054 = vmatmul.f32.gmra.mxu0 %v967
        %v5055 = vpop.f32.mrf.mxu0
        %v5056 = vadd.f32 0.0, %v5055
        %5057 = vdwg.mxu0
        %5058 = vmatpush.xpose.msra.mxu0 0.0
        %5059 = vmatpush.xpose.msra.mxu0 0.0
        %5060 = vmatpush.xpose.msra.mxu0 0.0
        %5061 = vmatpush.xpose.msra.mxu0 0.0
        %5062 = vmatpush.xpose.msra.mxu0 0.0
        %5063 = vmatpush.xpose.msra.mxu0 0.0
        %5064 = vmatpush.xpose.msra.mxu0 0.0
        %5065 = vmatpush.xpose.msra.mxu0 0.0
        %5066 = vmatpush.xpose.msra.mxu0 0.0
        %5067 = vmatpush.xpose.msra.mxu0 0.0
        %5068 = vmatpush.xpose.msra.mxu0 0.0
        %5069 = vmatpush.xpose.msra.mxu0 0.0
        %5070 = vmatpush.xpose.msra.mxu0 0.0
        %5071 = vmatpush.xpose.msra.mxu0 0.0
        %5072 = vmatpush.xpose.msra.mxu0 0.0
        %5073 = vmatpush.xpose.msra.mxu0 %v4849
        %5074 = vmatmul.f32.gmra.mxu0 %v998
        %v5075 = vpop.f32.mrf.mxu0
        %v5076 = vadd.f32 0.0, %v5075
        %5077 = vmatmul.f32.gmra.mxu0 %v1000
        %v5078 = vpop.f32.mrf.mxu0
        %v5079 = vadd.f32 0.0, %v5078
        %5080 = vdwg.mxu0
        %5081 = vmatpush.xpose.msra.mxu0 0.0
        %5082 = vmatpush.xpose.msra.mxu0 0.0
        %5083 = vmatpush.xpose.msra.mxu0 0.0
        %5084 = vmatpush.xpose.msra.mxu0 0.0
        %5085 = vmatpush.xpose.msra.mxu0 0.0
        %5086 = vmatpush.xpose.msra.mxu0 0.0
        %5087 = vmatpush.xpose.msra.mxu0 0.0
        %5088 = vmatpush.xpose.msra.mxu0 0.0
        %5089 = vmatpush.xpose.msra.mxu0 0.0
        %5090 = vmatpush.xpose.msra.mxu0 0.0
        %5091 = vmatpush.xpose.msra.mxu0 0.0
        %5092 = vmatpush.xpose.msra.mxu0 0.0
        %5093 = vmatpush.xpose.msra.mxu0 0.0
        %5094 = vmatpush.xpose.msra.mxu0 0.0
        %5095 = vmatpush.xpose.msra.mxu0 0.0
        %5096 = vmatpush.xpose.msra.mxu0 %v4849
        %5097 = vmatmul.f32.gmra.mxu0 %v1031
        %v5098 = vpop.f32.mrf.mxu0
        %v5099 = vadd.f32 0.0, %v5098
        %5100 = vmatmul.f32.gmra.mxu0 %v1033
        %v5101 = vpop.f32.mrf.mxu0
        %v5102 = vadd.f32 0.0, %v5101
        %5103 = vdwg.mxu0
        %5104 = vmatpush.xpose.msra.mxu0 0.0
        %5105 = vmatpush.xpose.msra.mxu0 0.0
        %5106 = vmatpush.xpose.msra.mxu0 0.0
        %5107 = vmatpush.xpose.msra.mxu0 0.0
        %5108 = vmatpush.xpose.msra.mxu0 0.0
        %5109 = vmatpush.xpose.msra.mxu0 0.0
        %5110 = vmatpush.xpose.msra.mxu0 0.0
        %5111 = vmatpush.xpose.msra.mxu0 0.0
        %5112 = vmatpush.xpose.msra.mxu0 0.0
        %5113 = vmatpush.xpose.msra.mxu0 0.0
        %5114 = vmatpush.xpose.msra.mxu0 0.0
        %5115 = vmatpush.xpose.msra.mxu0 0.0
        %5116 = vmatpush.xpose.msra.mxu0 0.0
        %5117 = vmatpush.xpose.msra.mxu0 0.0
        %5118 = vmatpush.xpose.msra.mxu0 0.0
        %5119 = vmatpush.xpose.msra.mxu0 %v4849
        %5120 = vmatmul.f32.gmra.mxu0 %v1064
        %v5121 = vpop.f32.mrf.mxu0
        %v5122 = vadd.f32 0.0, %v5121
        %5123 = vmatmul.f32.gmra.mxu0 %v1066
        %v5124 = vpop.f32.mrf.mxu0
        %v5125 = vadd.f32 0.0, %v5124
        %5126 = vdwg.mxu0
        %5127 = vmatpush.xpose.msra.mxu0 0.0
        %5128 = vmatpush.xpose.msra.mxu0 0.0
        %5129 = vmatpush.xpose.msra.mxu0 0.0
        %5130 = vmatpush.xpose.msra.mxu0 0.0
        %5131 = vmatpush.xpose.msra.mxu0 0.0
        %5132 = vmatpush.xpose.msra.mxu0 0.0
        %5133 = vmatpush.xpose.msra.mxu0 0.0
        %5134 = vmatpush.xpose.msra.mxu0 0.0
        %5135 = vmatpush.xpose.msra.mxu0 0.0
        %5136 = vmatpush.xpose.msra.mxu0 0.0
        %5137 = vmatpush.xpose.msra.mxu0 0.0
        %5138 = vmatpush.xpose.msra.mxu0 0.0
        %5139 = vmatpush.xpose.msra.mxu0 0.0
        %5140 = vmatpush.xpose.msra.mxu0 0.0
        %5141 = vmatpush.xpose.msra.mxu0 0.0
        %5142 = vmatpush.xpose.msra.mxu0 %v4849
        %5143 = vmatmul.f32.gmra.mxu0 %v1097
        %v5144 = vpop.f32.mrf.mxu0
        %v5145 = vadd.f32 0.0, %v5144
        %5146 = vmatmul.f32.gmra.mxu0 %v1099
        %v5147 = vpop.f32.mrf.mxu0
        %v5148 = vadd.f32 0.0, %v5147
        %5149 = vdwg.mxu0
        %5150 = vmatpush.xpose.msra.mxu0 0.0
        %5151 = vmatpush.xpose.msra.mxu0 0.0
        %5152 = vmatpush.xpose.msra.mxu0 0.0
        %5153 = vmatpush.xpose.msra.mxu0 0.0
        %5154 = vmatpush.xpose.msra.mxu0 0.0
        %5155 = vmatpush.xpose.msra.mxu0 0.0
        %5156 = vmatpush.xpose.msra.mxu0 0.0
        %5157 = vmatpush.xpose.msra.mxu0 0.0
        %5158 = vmatpush.xpose.msra.mxu0 0.0
        %5159 = vmatpush.xpose.msra.mxu0 0.0
        %5160 = vmatpush.xpose.msra.mxu0 0.0
        %5161 = vmatpush.xpose.msra.mxu0 0.0
        %5162 = vmatpush.xpose.msra.mxu0 0.0
        %5163 = vmatpush.xpose.msra.mxu0 0.0
        %5164 = vmatpush.xpose.msra.mxu0 0.0
        %5165 = vmatpush.xpose.msra.mxu0 %v4849
        %5166 = vmatmul.f32.gmra.mxu0 %v1130
        %v5167 = vpop.f32.mrf.mxu0
        %v5168 = vadd.f32 0.0, %v5167
        %5169 = vmatmul.f32.gmra.mxu0 %v1132
        %v5170 = vpop.f32.mrf.mxu0
        %v5171 = vadd.f32 0.0, %v5170
        %5172 = vdwg.mxu0
        %5173 = vmatpush.xpose.msra.mxu0 0.0
        %5174 = vmatpush.xpose.msra.mxu0 0.0
        %5175 = vmatpush.xpose.msra.mxu0 0.0
        %5176 = vmatpush.xpose.msra.mxu0 0.0
        %5177 = vmatpush.xpose.msra.mxu0 0.0
        %5178 = vmatpush.xpose.msra.mxu0 0.0
        %5179 = vmatpush.xpose.msra.mxu0 0.0
        %5180 = vmatpush.xpose.msra.mxu0 0.0
        %5181 = vmatpush.xpose.msra.mxu0 0.0
        %5182 = vmatpush.xpose.msra.mxu0 0.0
        %5183 = vmatpush.xpose.msra.mxu0 0.0
        %5184 = vmatpush.xpose.msra.mxu0 0.0
        %5185 = vmatpush.xpose.msra.mxu0 0.0
        %5186 = vmatpush.xpose.msra.mxu0 0.0
        %5187 = vmatpush.xpose.msra.mxu0 0.0
        %5188 = vmatpush.xpose.msra.mxu0 %v4849
        %5189 = vmatmul.f32.gmra.mxu0 %v1163
        %v5190 = vpop.f32.mrf.mxu0
        %v5191 = vadd.f32 0.0, %v5190
        %5192 = vmatmul.f32.gmra.mxu0 %v1165
        %v5193 = vpop.f32.mrf.mxu0
        %v5194 = vadd.f32 0.0, %v5193
        %5195 = vdwg.mxu0
        %5196 = vmatpush.xpose.msra.mxu0 0.0
        %5197 = vmatpush.xpose.msra.mxu0 0.0
        %5198 = vmatpush.xpose.msra.mxu0 0.0
        %5199 = vmatpush.xpose.msra.mxu0 0.0
        %5200 = vmatpush.xpose.msra.mxu0 0.0
        %5201 = vmatpush.xpose.msra.mxu0 0.0
        %5202 = vmatpush.xpose.msra.mxu0 0.0
        %5203 = vmatpush.xpose.msra.mxu0 0.0
        %5204 = vmatpush.xpose.msra.mxu0 0.0
        %5205 = vmatpush.xpose.msra.mxu0 0.0
        %5206 = vmatpush.xpose.msra.mxu0 0.0
        %5207 = vmatpush.xpose.msra.mxu0 0.0
        %5208 = vmatpush.xpose.msra.mxu0 0.0
        %5209 = vmatpush.xpose.msra.mxu0 0.0
        %5210 = vmatpush.xpose.msra.mxu0 0.0
        %5211 = vmatpush.xpose.msra.mxu0 %v4849
        %5212 = vmatmul.f32.gmra.mxu0 %v1196
        %v5213 = vpop.f32.mrf.mxu0
        %v5214 = vadd.f32 0.0, %v5213
        %5215 = vmatmul.f32.gmra.mxu0 %v1198
        %v5216 = vpop.f32.mrf.mxu0
        %v5217 = vadd.f32 0.0, %v5216
        %5218 = vdwg.mxu0
        %v5219 = vadd.f32 %v4486, %v4869
        %v5220 = vadd.f32 %v4489, %v4872
        %v5221 = vadd.f32 %v4509, %v4892
        %v5222 = vadd.f32 %v4512, %v4895
        %v5223 = vadd.f32 %v4532, %v4915
        %v5224 = vadd.f32 %v4535, %v4918
        %v5225 = vadd.f32 %v4555, %v4938
        %v5226 = vadd.f32 %v4558, %v4941
        %v5227 = vadd.f32 %v4578, %v4961
        %v5228 = vadd.f32 %v4581, %v4964
        %v5229 = vadd.f32 %v4601, %v4984
        %v5230 = vadd.f32 %v4604, %v4987
        %v5231 = vadd.f32 %v4624, %v5007
        %v5232 = vadd.f32 %v4627, %v5010
        %v5233 = vadd.f32 %v4647, %v5030
        %v5234 = vadd.f32 %v4650, %v5033
        %v5235 = vadd.f32 %v4670, %v5053
        %v5236 = vadd.f32 %v4673, %v5056
        %v5237 = vadd.f32 %v4693, %v5076
        %v5238 = vadd.f32 %v4696, %v5079
        %v5239 = vadd.f32 %v4716, %v5099
        %v5240 = vadd.f32 %v4719, %v5102
        %v5241 = vadd.f32 %v4739, %v5122
        %v5242 = vadd.f32 %v4742, %v5125
        %v5243 = vadd.f32 %v4762, %v5145
        %v5244 = vadd.f32 %v4765, %v5148
        %v5245 = vadd.f32 %v4785, %v5168
        %v5246 = vadd.f32 %v4788, %v5171
        %v5247 = vadd.f32 %v4808, %v5191
        %v5248 = vadd.f32 %v4811, %v5194
        %v5249 = vadd.f32 %v4841, %v5214
        %v5250 = vadd.f32 %v4844, %v5217
        %s5251 = scalar_lea.vmem %s1, 88
        %v5252 = vld [vmem:[%s5251] sm:$0xff]
        %v5254 = vsel %vm223, %v5252, 0
        %5256 = vmatpush.xpose.msra.mxu0 0.0
        %5257 = vmatpush.xpose.msra.mxu0 0.0
        %5258 = vmatpush.xpose.msra.mxu0 0.0
        %5259 = vmatpush.xpose.msra.mxu0 0.0
        %5260 = vmatpush.xpose.msra.mxu0 0.0
        %5261 = vmatpush.xpose.msra.mxu0 0.0
        %5262 = vmatpush.xpose.msra.mxu0 0.0
        %5263 = vmatpush.xpose.msra.mxu0 0.0
        %5264 = vmatpush.xpose.msra.mxu0 0.0
        %5265 = vmatpush.xpose.msra.mxu0 0.0
        %5266 = vmatpush.xpose.msra.mxu0 0.0
        %5267 = vmatpush.xpose.msra.mxu0 0.0
        %5268 = vmatpush.xpose.msra.mxu0 0.0
        %5269 = vmatpush.xpose.msra.mxu0 0.0
        %5270 = vmatpush.xpose.msra.mxu0 0.0
        %5271 = vmatpush.xpose.msra.mxu0 %v5254
        %5272 = vmatmul.f32.gmra.mxu0 %v225
        %v5273 = vpop.f32.mrf.mxu0
        %v5274 = vadd.f32 0.0, %v5273
        %5275 = vmatmul.f32.gmra.mxu0 %v228
        %v5276 = vpop.f32.mrf.mxu0
        %v5277 = vadd.f32 0.0, %v5276
        %5278 = vdwg.mxu0
        %5279 = vmatpush.xpose.msra.mxu0 0.0
        %5280 = vmatpush.xpose.msra.mxu0 0.0
        %5281 = vmatpush.xpose.msra.mxu0 0.0
        %5282 = vmatpush.xpose.msra.mxu0 0.0
        %5283 = vmatpush.xpose.msra.mxu0 0.0
        %5284 = vmatpush.xpose.msra.mxu0 0.0
        %5285 = vmatpush.xpose.msra.mxu0 0.0
        %5286 = vmatpush.xpose.msra.mxu0 0.0
        %5287 = vmatpush.xpose.msra.mxu0 0.0
        %5288 = vmatpush.xpose.msra.mxu0 0.0
        %5289 = vmatpush.xpose.msra.mxu0 0.0
        %5290 = vmatpush.xpose.msra.mxu0 0.0
        %5291 = vmatpush.xpose.msra.mxu0 0.0
        %5292 = vmatpush.xpose.msra.mxu0 0.0
        %5293 = vmatpush.xpose.msra.mxu0 0.0
        %5294 = vmatpush.xpose.msra.mxu0 %v5254
        %5295 = vmatmul.f32.gmra.mxu0 %v257
        %v5296 = vpop.f32.mrf.mxu0
        %v5297 = vadd.f32 0.0, %v5296
        %5298 = vmatmul.f32.gmra.mxu0 %v260
        %v5299 = vpop.f32.mrf.mxu0
        %v5300 = vadd.f32 0.0, %v5299
        %5301 = vdwg.mxu0
        %5302 = vmatpush.xpose.msra.mxu0 0.0
        %5303 = vmatpush.xpose.msra.mxu0 0.0
        %5304 = vmatpush.xpose.msra.mxu0 0.0
        %5305 = vmatpush.xpose.msra.mxu0 0.0
        %5306 = vmatpush.xpose.msra.mxu0 0.0
        %5307 = vmatpush.xpose.msra.mxu0 0.0
        %5308 = vmatpush.xpose.msra.mxu0 0.0
        %5309 = vmatpush.xpose.msra.mxu0 0.0
        %5310 = vmatpush.xpose.msra.mxu0 0.0
        %5311 = vmatpush.xpose.msra.mxu0 0.0
        %5312 = vmatpush.xpose.msra.mxu0 0.0
        %5313 = vmatpush.xpose.msra.mxu0 0.0
        %5314 = vmatpush.xpose.msra.mxu0 0.0
        %5315 = vmatpush.xpose.msra.mxu0 0.0
        %5316 = vmatpush.xpose.msra.mxu0 0.0
        %5317 = vmatpush.xpose.msra.mxu0 %v5254
        %5318 = vmatmul.f32.gmra.mxu0 %v286
        %v5319 = vpop.f32.mrf.mxu0
        %v5320 = vadd.f32 0.0, %v5319
        %5321 = vmatmul.f32.gmra.mxu0 %v289
        %v5322 = vpop.f32.mrf.mxu0
        %v5323 = vadd.f32 0.0, %v5322
        %5324 = vdwg.mxu0
        %5325 = vmatpush.xpose.msra.mxu0 0.0
        %5326 = vmatpush.xpose.msra.mxu0 0.0
        %5327 = vmatpush.xpose.msra.mxu0 0.0
        %5328 = vmatpush.xpose.msra.mxu0 0.0
        %5329 = vmatpush.xpose.msra.mxu0 0.0
        %5330 = vmatpush.xpose.msra.mxu0 0.0
        %5331 = vmatpush.xpose.msra.mxu0 0.0
        %5332 = vmatpush.xpose.msra.mxu0 0.0
        %5333 = vmatpush.xpose.msra.mxu0 0.0
        %5334 = vmatpush.xpose.msra.mxu0 0.0
        %5335 = vmatpush.xpose.msra.mxu0 0.0
        %5336 = vmatpush.xpose.msra.mxu0 0.0
        %5337 = vmatpush.xpose.msra.mxu0 0.0
        %5338 = vmatpush.xpose.msra.mxu0 0.0
        %5339 = vmatpush.xpose.msra.mxu0 0.0
        %5340 = vmatpush.xpose.msra.mxu0 %v5254
        %5341 = vmatmul.f32.gmra.mxu0 %v315
        %v5342 = vpop.f32.mrf.mxu0
        %v5343 = vadd.f32 0.0, %v5342
        %5344 = vmatmul.f32.gmra.mxu0 %v318
        %v5345 = vpop.f32.mrf.mxu0
        %v5346 = vadd.f32 0.0, %v5345
        %5347 = vdwg.mxu0
        %5348 = vmatpush.xpose.msra.mxu0 0.0
        %5349 = vmatpush.xpose.msra.mxu0 0.0
        %5350 = vmatpush.xpose.msra.mxu0 0.0
        %5351 = vmatpush.xpose.msra.mxu0 0.0
        %5352 = vmatpush.xpose.msra.mxu0 0.0
        %5353 = vmatpush.xpose.msra.mxu0 0.0
        %5354 = vmatpush.xpose.msra.mxu0 0.0
        %5355 = vmatpush.xpose.msra.mxu0 0.0
        %5356 = vmatpush.xpose.msra.mxu0 0.0
        %5357 = vmatpush.xpose.msra.mxu0 0.0
        %5358 = vmatpush.xpose.msra.mxu0 0.0
        %5359 = vmatpush.xpose.msra.mxu0 0.0
        %5360 = vmatpush.xpose.msra.mxu0 0.0
        %5361 = vmatpush.xpose.msra.mxu0 0.0
        %5362 = vmatpush.xpose.msra.mxu0 0.0
        %5363 = vmatpush.xpose.msra.mxu0 %v5254
        %5364 = vmatmul.f32.gmra.mxu0 %v344
        %v5365 = vpop.f32.mrf.mxu0
        %v5366 = vadd.f32 0.0, %v5365
        %5367 = vmatmul.f32.gmra.mxu0 %v347
        %v5368 = vpop.f32.mrf.mxu0
        %v5369 = vadd.f32 0.0, %v5368
        %5370 = vdwg.mxu0
        %5371 = vmatpush.xpose.msra.mxu0 0.0
        %5372 = vmatpush.xpose.msra.mxu0 0.0
        %5373 = vmatpush.xpose.msra.mxu0 0.0
        %5374 = vmatpush.xpose.msra.mxu0 0.0
        %5375 = vmatpush.xpose.msra.mxu0 0.0
        %5376 = vmatpush.xpose.msra.mxu0 0.0
        %5377 = vmatpush.xpose.msra.mxu0 0.0
        %5378 = vmatpush.xpose.msra.mxu0 0.0
        %5379 = vmatpush.xpose.msra.mxu0 0.0
        %5380 = vmatpush.xpose.msra.mxu0 0.0
        %5381 = vmatpush.xpose.msra.mxu0 0.0
        %5382 = vmatpush.xpose.msra.mxu0 0.0
        %5383 = vmatpush.xpose.msra.mxu0 0.0
        %5384 = vmatpush.xpose.msra.mxu0 0.0
        %5385 = vmatpush.xpose.msra.mxu0 0.0
        %5386 = vmatpush.xpose.msra.mxu0 %v5254
        %5387 = vmatmul.f32.gmra.mxu0 %v373
        %v5388 = vpop.f32.mrf.mxu0
        %v5389 = vadd.f32 0.0, %v5388
        %5390 = vmatmul.f32.gmra.mxu0 %v376
        %v5391 = vpop.f32.mrf.mxu0
        %v5392 = vadd.f32 0.0, %v5391
        %5393 = vdwg.mxu0
        %5394 = vmatpush.xpose.msra.mxu0 0.0
        %5395 = vmatpush.xpose.msra.mxu0 0.0
        %5396 = vmatpush.xpose.msra.mxu0 0.0
        %5397 = vmatpush.xpose.msra.mxu0 0.0
        %5398 = vmatpush.xpose.msra.mxu0 0.0
        %5399 = vmatpush.xpose.msra.mxu0 0.0
        %5400 = vmatpush.xpose.msra.mxu0 0.0
        %5401 = vmatpush.xpose.msra.mxu0 0.0
        %5402 = vmatpush.xpose.msra.mxu0 0.0
        %5403 = vmatpush.xpose.msra.mxu0 0.0
        %5404 = vmatpush.xpose.msra.mxu0 0.0
        %5405 = vmatpush.xpose.msra.mxu0 0.0
        %5406 = vmatpush.xpose.msra.mxu0 0.0
        %5407 = vmatpush.xpose.msra.mxu0 0.0
        %5408 = vmatpush.xpose.msra.mxu0 0.0
        %5409 = vmatpush.xpose.msra.mxu0 %v5254
        %5410 = vmatmul.f32.gmra.mxu0 %v402
        %v5411 = vpop.f32.mrf.mxu0
        %v5412 = vadd.f32 0.0, %v5411
        %5413 = vmatmul.f32.gmra.mxu0 %v405
        %v5414 = vpop.f32.mrf.mxu0
        %v5415 = vadd.f32 0.0, %v5414
        %5416 = vdwg.mxu0
        %5417 = vmatpush.xpose.msra.mxu0 0.0
        %5418 = vmatpush.xpose.msra.mxu0 0.0
        %5419 = vmatpush.xpose.msra.mxu0 0.0
        %5420 = vmatpush.xpose.msra.mxu0 0.0
        %5421 = vmatpush.xpose.msra.mxu0 0.0
        %5422 = vmatpush.xpose.msra.mxu0 0.0
        %5423 = vmatpush.xpose.msra.mxu0 0.0
        %5424 = vmatpush.xpose.msra.mxu0 0.0
        %5425 = vmatpush.xpose.msra.mxu0 0.0
        %5426 = vmatpush.xpose.msra.mxu0 0.0
        %5427 = vmatpush.xpose.msra.mxu0 0.0
        %5428 = vmatpush.xpose.msra.mxu0 0.0
        %5429 = vmatpush.xpose.msra.mxu0 0.0
        %5430 = vmatpush.xpose.msra.mxu0 0.0
        %5431 = vmatpush.xpose.msra.mxu0 0.0
        %5432 = vmatpush.xpose.msra.mxu0 %v5254
        %5433 = vmatmul.f32.gmra.mxu0 %v431
        %v5434 = vpop.f32.mrf.mxu0
        %v5435 = vadd.f32 0.0, %v5434
        %5436 = vmatmul.f32.gmra.mxu0 %v434
        %v5437 = vpop.f32.mrf.mxu0
        %v5438 = vadd.f32 0.0, %v5437
        %5439 = vdwg.mxu0
        %5440 = vmatpush.xpose.msra.mxu0 0.0
        %5441 = vmatpush.xpose.msra.mxu0 0.0
        %5442 = vmatpush.xpose.msra.mxu0 0.0
        %5443 = vmatpush.xpose.msra.mxu0 0.0
        %5444 = vmatpush.xpose.msra.mxu0 0.0
        %5445 = vmatpush.xpose.msra.mxu0 0.0
        %5446 = vmatpush.xpose.msra.mxu0 0.0
        %5447 = vmatpush.xpose.msra.mxu0 0.0
        %5448 = vmatpush.xpose.msra.mxu0 0.0
        %5449 = vmatpush.xpose.msra.mxu0 0.0
        %5450 = vmatpush.xpose.msra.mxu0 0.0
        %5451 = vmatpush.xpose.msra.mxu0 0.0
        %5452 = vmatpush.xpose.msra.mxu0 0.0
        %5453 = vmatpush.xpose.msra.mxu0 0.0
        %5454 = vmatpush.xpose.msra.mxu0 0.0
        %5455 = vmatpush.xpose.msra.mxu0 %v5254
        %5456 = vmatmul.f32.gmra.mxu0 %v460
        %v5457 = vpop.f32.mrf.mxu0
        %v5458 = vadd.f32 0.0, %v5457
        %5459 = vmatmul.f32.gmra.mxu0 %v463
        %v5460 = vpop.f32.mrf.mxu0
        %v5461 = vadd.f32 0.0, %v5460
        %5462 = vdwg.mxu0
        %5463 = vmatpush.xpose.msra.mxu0 0.0
        %5464 = vmatpush.xpose.msra.mxu0 0.0
        %5465 = vmatpush.xpose.msra.mxu0 0.0
        %5466 = vmatpush.xpose.msra.mxu0 0.0
        %5467 = vmatpush.xpose.msra.mxu0 0.0
        %5468 = vmatpush.xpose.msra.mxu0 0.0
        %5469 = vmatpush.xpose.msra.mxu0 0.0
        %5470 = vmatpush.xpose.msra.mxu0 0.0
        %5471 = vmatpush.xpose.msra.mxu0 0.0
        %5472 = vmatpush.xpose.msra.mxu0 0.0
        %5473 = vmatpush.xpose.msra.mxu0 0.0
        %5474 = vmatpush.xpose.msra.mxu0 0.0
        %5475 = vmatpush.xpose.msra.mxu0 0.0
        %5476 = vmatpush.xpose.msra.mxu0 0.0
        %5477 = vmatpush.xpose.msra.mxu0 0.0
        %5478 = vmatpush.xpose.msra.mxu0 %v5254
        %5479 = vmatmul.f32.gmra.mxu0 %v489
        %v5480 = vpop.f32.mrf.mxu0
        %v5481 = vadd.f32 0.0, %v5480
        %5482 = vmatmul.f32.gmra.mxu0 %v492
        %v5483 = vpop.f32.mrf.mxu0
        %v5484 = vadd.f32 0.0, %v5483
        %5485 = vdwg.mxu0
        %5486 = vmatpush.xpose.msra.mxu0 0.0
        %5487 = vmatpush.xpose.msra.mxu0 0.0
        %5488 = vmatpush.xpose.msra.mxu0 0.0
        %5489 = vmatpush.xpose.msra.mxu0 0.0
        %5490 = vmatpush.xpose.msra.mxu0 0.0
        %5491 = vmatpush.xpose.msra.mxu0 0.0
        %5492 = vmatpush.xpose.msra.mxu0 0.0
        %5493 = vmatpush.xpose.msra.mxu0 0.0
        %5494 = vmatpush.xpose.msra.mxu0 0.0
        %5495 = vmatpush.xpose.msra.mxu0 0.0
        %5496 = vmatpush.xpose.msra.mxu0 0.0
        %5497 = vmatpush.xpose.msra.mxu0 0.0
        %5498 = vmatpush.xpose.msra.mxu0 0.0
        %5499 = vmatpush.xpose.msra.mxu0 0.0
        %5500 = vmatpush.xpose.msra.mxu0 0.0
        %5501 = vmatpush.xpose.msra.mxu0 %v5254
        %5502 = vmatmul.f32.gmra.mxu0 %v518
        %v5503 = vpop.f32.mrf.mxu0
        %v5504 = vadd.f32 0.0, %v5503
        %5505 = vmatmul.f32.gmra.mxu0 %v521
        %v5506 = vpop.f32.mrf.mxu0
        %v5507 = vadd.f32 0.0, %v5506
        %5508 = vdwg.mxu0
        %5509 = vmatpush.xpose.msra.mxu0 0.0
        %5510 = vmatpush.xpose.msra.mxu0 0.0
        %5511 = vmatpush.xpose.msra.mxu0 0.0
        %5512 = vmatpush.xpose.msra.mxu0 0.0
        %5513 = vmatpush.xpose.msra.mxu0 0.0
        %5514 = vmatpush.xpose.msra.mxu0 0.0
        %5515 = vmatpush.xpose.msra.mxu0 0.0
        %5516 = vmatpush.xpose.msra.mxu0 0.0
        %5517 = vmatpush.xpose.msra.mxu0 0.0
        %5518 = vmatpush.xpose.msra.mxu0 0.0
        %5519 = vmatpush.xpose.msra.mxu0 0.0
        %5520 = vmatpush.xpose.msra.mxu0 0.0
        %5521 = vmatpush.xpose.msra.mxu0 0.0
        %5522 = vmatpush.xpose.msra.mxu0 0.0
        %5523 = vmatpush.xpose.msra.mxu0 0.0
        %5524 = vmatpush.xpose.msra.mxu0 %v5254
        %5525 = vmatmul.f32.gmra.mxu0 %v547
        %v5526 = vpop.f32.mrf.mxu0
        %v5527 = vadd.f32 0.0, %v5526
        %5528 = vmatmul.f32.gmra.mxu0 %v550
        %v5529 = vpop.f32.mrf.mxu0
        %v5530 = vadd.f32 0.0, %v5529
        %5531 = vdwg.mxu0
        %5532 = vmatpush.xpose.msra.mxu0 0.0
        %5533 = vmatpush.xpose.msra.mxu0 0.0
        %5534 = vmatpush.xpose.msra.mxu0 0.0
        %5535 = vmatpush.xpose.msra.mxu0 0.0
        %5536 = vmatpush.xpose.msra.mxu0 0.0
        %5537 = vmatpush.xpose.msra.mxu0 0.0
        %5538 = vmatpush.xpose.msra.mxu0 0.0
        %5539 = vmatpush.xpose.msra.mxu0 0.0
        %5540 = vmatpush.xpose.msra.mxu0 0.0
        %5541 = vmatpush.xpose.msra.mxu0 0.0
        %5542 = vmatpush.xpose.msra.mxu0 0.0
        %5543 = vmatpush.xpose.msra.mxu0 0.0
        %5544 = vmatpush.xpose.msra.mxu0 0.0
        %5545 = vmatpush.xpose.msra.mxu0 0.0
        %5546 = vmatpush.xpose.msra.mxu0 0.0
        %5547 = vmatpush.xpose.msra.mxu0 %v5254
        %5548 = vmatmul.f32.gmra.mxu0 %v576
        %v5549 = vpop.f32.mrf.mxu0
        %v5550 = vadd.f32 0.0, %v5549
        %5551 = vmatmul.f32.gmra.mxu0 %v579
        %v5552 = vpop.f32.mrf.mxu0
        %v5553 = vadd.f32 0.0, %v5552
        %5554 = vdwg.mxu0
        %5555 = vmatpush.xpose.msra.mxu0 0.0
        %5556 = vmatpush.xpose.msra.mxu0 0.0
        %5557 = vmatpush.xpose.msra.mxu0 0.0
        %5558 = vmatpush.xpose.msra.mxu0 0.0
        %5559 = vmatpush.xpose.msra.mxu0 0.0
        %5560 = vmatpush.xpose.msra.mxu0 0.0
        %5561 = vmatpush.xpose.msra.mxu0 0.0
        %5562 = vmatpush.xpose.msra.mxu0 0.0
        %5563 = vmatpush.xpose.msra.mxu0 0.0
        %5564 = vmatpush.xpose.msra.mxu0 0.0
        %5565 = vmatpush.xpose.msra.mxu0 0.0
        %5566 = vmatpush.xpose.msra.mxu0 0.0
        %5567 = vmatpush.xpose.msra.mxu0 0.0
        %5568 = vmatpush.xpose.msra.mxu0 0.0
        %5569 = vmatpush.xpose.msra.mxu0 0.0
        %5570 = vmatpush.xpose.msra.mxu0 %v5254
        %5571 = vmatmul.f32.gmra.mxu0 %v605
        %v5572 = vpop.f32.mrf.mxu0
        %v5573 = vadd.f32 0.0, %v5572
        %5574 = vmatmul.f32.gmra.mxu0 %v608
        %v5575 = vpop.f32.mrf.mxu0
        %v5576 = vadd.f32 0.0, %v5575
        %5577 = vdwg.mxu0
        %5578 = vmatpush.xpose.msra.mxu0 0.0
        %5579 = vmatpush.xpose.msra.mxu0 0.0
        %5580 = vmatpush.xpose.msra.mxu0 0.0
        %5581 = vmatpush.xpose.msra.mxu0 0.0
        %5582 = vmatpush.xpose.msra.mxu0 0.0
        %5583 = vmatpush.xpose.msra.mxu0 0.0
        %5584 = vmatpush.xpose.msra.mxu0 0.0
        %5585 = vmatpush.xpose.msra.mxu0 0.0
        %5586 = vmatpush.xpose.msra.mxu0 0.0
        %5587 = vmatpush.xpose.msra.mxu0 0.0
        %5588 = vmatpush.xpose.msra.mxu0 0.0
        %5589 = vmatpush.xpose.msra.mxu0 0.0
        %5590 = vmatpush.xpose.msra.mxu0 0.0
        %5591 = vmatpush.xpose.msra.mxu0 0.0
        %5592 = vmatpush.xpose.msra.mxu0 0.0
        %5593 = vmatpush.xpose.msra.mxu0 %v5254
        %5594 = vmatmul.f32.gmra.mxu0 %v634
        %v5595 = vpop.f32.mrf.mxu0
        %v5596 = vadd.f32 0.0, %v5595
        %5597 = vmatmul.f32.gmra.mxu0 %v637
        %v5598 = vpop.f32.mrf.mxu0
        %v5599 = vadd.f32 0.0, %v5598
        %5600 = vdwg.mxu0
        %5601 = vmatpush.xpose.msra.mxu0 0.0
        %5602 = vmatpush.xpose.msra.mxu0 0.0
        %5603 = vmatpush.xpose.msra.mxu0 0.0
        %5604 = vmatpush.xpose.msra.mxu0 0.0
        %5605 = vmatpush.xpose.msra.mxu0 0.0
        %5606 = vmatpush.xpose.msra.mxu0 0.0
        %5607 = vmatpush.xpose.msra.mxu0 0.0
        %5608 = vmatpush.xpose.msra.mxu0 0.0
        %5609 = vmatpush.xpose.msra.mxu0 0.0
        %5610 = vmatpush.xpose.msra.mxu0 0.0
        %5611 = vmatpush.xpose.msra.mxu0 0.0
        %5612 = vmatpush.xpose.msra.mxu0 0.0
        %5613 = vmatpush.xpose.msra.mxu0 0.0
        %5614 = vmatpush.xpose.msra.mxu0 0.0
        %5615 = vmatpush.xpose.msra.mxu0 0.0
        %5616 = vmatpush.xpose.msra.mxu0 %v5254
        %5617 = vmatmul.f32.gmra.mxu0 %v663
        %v5618 = vpop.f32.mrf.mxu0
        %v5619 = vadd.f32 0.0, %v5618
        %5620 = vmatmul.f32.gmra.mxu0 %v666
        %v5621 = vpop.f32.mrf.mxu0
        %v5622 = vadd.f32 0.0, %v5621
        %5623 = vdwg.mxu0
        %v5624 = vadd.f32 %v5219, %v5274
        %v5625 = vadd.f32 %v5220, %v5277
        %v5626 = vadd.f32 %v5221, %v5297
        %v5627 = vadd.f32 %v5222, %v5300
        %v5628 = vadd.f32 %v5223, %v5320
        %v5629 = vadd.f32 %v5224, %v5323
        %v5630 = vadd.f32 %v5225, %v5343
        %v5631 = vadd.f32 %v5226, %v5346
        %v5632 = vadd.f32 %v5227, %v5366
        %v5633 = vadd.f32 %v5228, %v5369
        %v5634 = vadd.f32 %v5229, %v5389
        %v5635 = vadd.f32 %v5230, %v5392
        %v5636 = vadd.f32 %v5231, %v5412
        %v5637 = vadd.f32 %v5232, %v5415
        %v5638 = vadd.f32 %v5233, %v5435
        %v5639 = vadd.f32 %v5234, %v5438
        %v5640 = vadd.f32 %v5235, %v5458
        %v5641 = vadd.f32 %v5236, %v5461
        %v5642 = vadd.f32 %v5237, %v5481
        %v5643 = vadd.f32 %v5238, %v5484
        %v5644 = vadd.f32 %v5239, %v5504
        %v5645 = vadd.f32 %v5240, %v5507
        %v5646 = vadd.f32 %v5241, %v5527
        %v5647 = vadd.f32 %v5242, %v5530
        %v5648 = vadd.f32 %v5243, %v5550
        %v5649 = vadd.f32 %v5244, %v5553
        %v5650 = vadd.f32 %v5245, %v5573
        %v5651 = vadd.f32 %v5246, %v5576
        %v5652 = vadd.f32 %v5247, %v5596
        %v5653 = vadd.f32 %v5248, %v5599
        %v5654 = vadd.f32 %v5249, %v5619
        %v5655 = vadd.f32 %v5250, %v5622
        %v5656 = vadd.f32 %v5624, %v2050
        %v5657 = vadd.f32 %v5625, %v2050
        %v5658 = vadd.f32 %v5626, %v2050
        %v5659 = vadd.f32 %v5627, %v2050
        %v5660 = vadd.f32 %v5628, %v2050
        %v5661 = vadd.f32 %v5629, %v2050
        %v5662 = vadd.f32 %v5630, %v2050
        %v5663 = vadd.f32 %v5631, %v2050
        %v5664 = vadd.f32 %v5632, %v2050
        %v5665 = vadd.f32 %v5633, %v2050
        %v5666 = vadd.f32 %v5634, %v2050
        %v5667 = vadd.f32 %v5635, %v2050
        %v5668 = vadd.f32 %v5636, %v2050
        %v5669 = vadd.f32 %v5637, %v2050
        %v5670 = vadd.f32 %v5638, %v2050
        %v5671 = vadd.f32 %v5639, %v2050
        %v5672 = vadd.f32 %v5640, %v2050
        %v5673 = vadd.f32 %v5641, %v2050
        %v5674 = vadd.f32 %v5642, %v2050
        %v5675 = vadd.f32 %v5643, %v2050
        %v5676 = vadd.f32 %v5644, %v2050
        %v5677 = vadd.f32 %v5645, %v2050
        %v5678 = vadd.f32 %v5646, %v2050
        %v5679 = vadd.f32 %v5647, %v2050
        %v5680 = vadd.f32 %v5648, %v2050
        %v5681 = vadd.f32 %v5649, %v2050
        %v5682 = vadd.f32 %v5650, %v2050
        %v5683 = vadd.f32 %v5651, %v2050
        %v5684 = vadd.f32 %v5652, %v2050
        %v5685 = vadd.f32 %v5653, %v2050
        %v5686 = vadd.f32 %v5654, %v2050
        %v5687 = vadd.f32 %v5655, %v2050
        %vm5688 = vcmp.ge.f32.partialorder %v5656, 0.0
        %vm5689 = vcmp.ge.f32.partialorder %v5657, 0.0
        %vm5690 = vcmp.ge.f32.partialorder %v5658, 0.0
        %vm5691 = vcmp.ge.f32.partialorder %v5659, 0.0
        %vm5692 = vcmp.ge.f32.partialorder %v5660, 0.0
        %vm5693 = vcmp.ge.f32.partialorder %v5661, 0.0
        %vm5694 = vcmp.ge.f32.partialorder %v5662, 0.0
        %vm5695 = vcmp.ge.f32.partialorder %v5663, 0.0
        %vm5696 = vcmp.ge.f32.partialorder %v5664, 0.0
        %vm5697 = vcmp.ge.f32.partialorder %v5665, 0.0
        %vm5698 = vcmp.ge.f32.partialorder %v5666, 0.0
        %vm5699 = vcmp.ge.f32.partialorder %v5667, 0.0
        %vm5700 = vcmp.ge.f32.partialorder %v5668, 0.0
        %vm5701 = vcmp.ge.f32.partialorder %v5669, 0.0
        %vm5702 = vcmp.ge.f32.partialorder %v5670, 0.0
        %vm5703 = vcmp.ge.f32.partialorder %v5671, 0.0
        %vm5704 = vcmp.ge.f32.partialorder %v5672, 0.0
        %vm5705 = vcmp.ge.f32.partialorder %v5673, 0.0
        %vm5706 = vcmp.ge.f32.partialorder %v5674, 0.0
        %vm5707 = vcmp.ge.f32.partialorder %v5675, 0.0
        %vm5708 = vcmp.ge.f32.partialorder %v5676, 0.0
        %vm5709 = vcmp.ge.f32.partialorder %v5677, 0.0
        %vm5710 = vcmp.ge.f32.partialorder %v5678, 0.0
        %vm5711 = vcmp.ge.f32.partialorder %v5679, 0.0
        %vm5712 = vcmp.ge.f32.partialorder %v5680, 0.0
        %vm5713 = vcmp.ge.f32.partialorder %v5681, 0.0
        %vm5714 = vcmp.ge.f32.partialorder %v5682, 0.0
        %vm5715 = vcmp.ge.f32.partialorder %v5683, 0.0
        %vm5716 = vcmp.ge.f32.partialorder %v5684, 0.0
        %vm5717 = vcmp.ge.f32.partialorder %v5685, 0.0
        %vm5718 = vcmp.ge.f32.partialorder %v5686, 0.0
        %vm5719 = vcmp.ge.f32.partialorder %v5687, 0.0
        %v5720 = vmul.f32 %v5656, 0.01
        %v5721 = vmul.f32 %v5657, 0.01
        %v5722 = vmul.f32 %v5658, 0.01
        %v5723 = vmul.f32 %v5659, 0.01
        %v5724 = vmul.f32 %v5660, 0.01
        %v5725 = vmul.f32 %v5661, 0.01
        %v5726 = vmul.f32 %v5662, 0.01
        %v5727 = vmul.f32 %v5663, 0.01
        %v5728 = vmul.f32 %v5664, 0.01
        %v5729 = vmul.f32 %v5665, 0.01
        %v5730 = vmul.f32 %v5666, 0.01
        %v5731 = vmul.f32 %v5667, 0.01
        %v5732 = vmul.f32 %v5668, 0.01
        %v5733 = vmul.f32 %v5669, 0.01
        %v5734 = vmul.f32 %v5670, 0.01
        %v5735 = vmul.f32 %v5671, 0.01
        %v5736 = vmul.f32 %v5672, 0.01
        %v5737 = vmul.f32 %v5673, 0.01
        %v5738 = vmul.f32 %v5674, 0.01
        %v5739 = vmul.f32 %v5675, 0.01
        %v5740 = vmul.f32 %v5676, 0.01
        %v5741 = vmul.f32 %v5677, 0.01
        %v5742 = vmul.f32 %v5678, 0.01
        %v5743 = vmul.f32 %v5679, 0.01
        %v5744 = vmul.f32 %v5680, 0.01
        %v5745 = vmul.f32 %v5681, 0.01
        %v5746 = vmul.f32 %v5682, 0.01
        %v5747 = vmul.f32 %v5683, 0.01
        %v5748 = vmul.f32 %v5684, 0.01
        %v5749 = vmul.f32 %v5685, 0.01
        %v5750 = vmul.f32 %v5686, 0.01
        %v5751 = vmul.f32 %v5687, 0.01
        %v5752 = vsel %vm5688, %v5656, %v5720
        %v5753 = vsel %vm5689, %v5657, %v5721
        %v5754 = vsel %vm5690, %v5658, %v5722
        %v5755 = vsel %vm5691, %v5659, %v5723
        %v5756 = vsel %vm5692, %v5660, %v5724
        %v5757 = vsel %vm5693, %v5661, %v5725
        %v5758 = vsel %vm5694, %v5662, %v5726
        %v5759 = vsel %vm5695, %v5663, %v5727
        %v5760 = vsel %vm5696, %v5664, %v5728
        %v5761 = vsel %vm5697, %v5665, %v5729
        %v5762 = vsel %vm5698, %v5666, %v5730
        %v5763 = vsel %vm5699, %v5667, %v5731
        %v5764 = vsel %vm5700, %v5668, %v5732
        %v5765 = vsel %vm5701, %v5669, %v5733
        %v5766 = vsel %vm5702, %v5670, %v5734
        %v5767 = vsel %vm5703, %v5671, %v5735
        %v5768 = vsel %vm5704, %v5672, %v5736
        %v5769 = vsel %vm5705, %v5673, %v5737
        %v5770 = vsel %vm5706, %v5674, %v5738
        %v5771 = vsel %vm5707, %v5675, %v5739
        %v5772 = vsel %vm5708, %v5676, %v5740
        %v5773 = vsel %vm5709, %v5677, %v5741
        %v5774 = vsel %vm5710, %v5678, %v5742
        %v5775 = vsel %vm5711, %v5679, %v5743
        %v5776 = vsel %vm5712, %v5680, %v5744
        %v5777 = vsel %vm5713, %v5681, %v5745
        %v5778 = vsel %vm5714, %v5682, %v5746
        %v5779 = vsel %vm5715, %v5683, %v5747
        %v5780 = vsel %vm5716, %v5684, %v5748
        %v5781 = vsel %vm5717, %v5685, %v5749
        %v5782 = vsel %vm5718, %v5686, %v5750
        %v5783 = vsel %vm5719, %v5687, %v5751
        %s5784 = scalar_lea.vmem %s159, 512 [#allocation2]
        %5785 = vst.msk [vmem:[%s5784] sm:$0xff] %vm2180, %v5752
        %5786 = vst.msk [vmem:[%s5784 + $0x8] sm:$0xff] %vm2180, %v5753
        %5787 = vst.msk [vmem:[%s5784 + $0x10] sm:$0xff] %vm2180, %v5754
        %5788 = vst.msk [vmem:[%s5784 + $0x18] sm:$0xff] %vm2180, %v5755
        %5789 = vst.msk [vmem:[%s5784 + $0x20] sm:$0xff] %vm2180, %v5756
        %5790 = vst.msk [vmem:[%s5784 + $0x28] sm:$0xff] %vm2180, %v5757
        %5791 = vst.msk [vmem:[%s5784 + $0x30] sm:$0xff] %vm2180, %v5758
        %5792 = vst.msk [vmem:[%s5784 + $0x38] sm:$0xff] %vm2180, %v5759
        %5793 = vst.msk [vmem:[%s5784 + $0x40] sm:$0xff] %vm2180, %v5760
        %5794 = vst.msk [vmem:[%s5784 + $0x48] sm:$0xff] %vm2180, %v5761
        %5795 = vst.msk [vmem:[%s5784 + $0x50] sm:$0xff] %vm2180, %v5762
        %5796 = vst.msk [vmem:[%s5784 + $0x58] sm:$0xff] %vm2180, %v5763
        %5797 = vst.msk [vmem:[%s5784 + $0x60] sm:$0xff] %vm2180, %v5764
        %5798 = vst.msk [vmem:[%s5784 + $0x68] sm:$0xff] %vm2180, %v5765
        %5799 = vst.msk [vmem:[%s5784 + $0x70] sm:$0xff] %vm2180, %v5766
        %5800 = vst.msk [vmem:[%s5784 + $0x78] sm:$0xff] %vm2180, %v5767
        %5801 = vst.msk [vmem:[%s5784 + $0x80] sm:$0xff] %vm2180, %v5768
        %5802 = vst.msk [vmem:[%s5784 + $0x88] sm:$0xff] %vm2180, %v5769
        %5803 = vst.msk [vmem:[%s5784 + $0x90] sm:$0xff] %vm2180, %v5770
        %5804 = vst.msk [vmem:[%s5784 + $0x98] sm:$0xff] %vm2180, %v5771
        %5805 = vst.msk [vmem:[%s5784 + $0xa0] sm:$0xff] %vm2180, %v5772
        %5806 = vst.msk [vmem:[%s5784 + $0xa8] sm:$0xff] %vm2180, %v5773
        %5807 = vst.msk [vmem:[%s5784 + $0xb0] sm:$0xff] %vm2180, %v5774
        %5808 = vst.msk [vmem:[%s5784 + $0xb8] sm:$0xff] %vm2180, %v5775
        %5809 = vst.msk [vmem:[%s5784 + $0xc0] sm:$0xff] %vm2180, %v5776
        %5810 = vst.msk [vmem:[%s5784 + $0xc8] sm:$0xff] %vm2180, %v5777
        %5811 = vst.msk [vmem:[%s5784 + $0xd0] sm:$0xff] %vm2180, %v5778
        %5812 = vst.msk [vmem:[%s5784 + $0xd8] sm:$0xff] %vm2180, %v5779
        %5813 = vst.msk [vmem:[%s5784 + $0xe0] sm:$0xff] %vm2180, %v5780
        %5814 = vst.msk [vmem:[%s5784 + $0xe8] sm:$0xff] %vm2180, %v5781
        %5815 = vst.msk [vmem:[%s5784 + $0xf0] sm:$0xff] %vm2180, %v5782
        %5816 = vst.msk [vmem:[%s5784 + $0xf8] sm:$0xff] %vm2180, %v5783
        %s5817 = scalar_lea.vmem %s1, 96
        %v5818 = vld [vmem:[%s5817] sm:$0xff]
        %s5819 = scalar_lea.vmem %s1, 104
        %v5820 = vld [vmem:[%s5819] sm:$0xff]
        %v5822 = vsel %vm223, %v5820, 0
        %5824 = vmatpush.xpose.msra.mxu0 0.0
        %5825 = vmatpush.xpose.msra.mxu0 0.0
        %5826 = vmatpush.xpose.msra.mxu0 0.0
        %5827 = vmatpush.xpose.msra.mxu0 0.0
        %5828 = vmatpush.xpose.msra.mxu0 0.0
        %5829 = vmatpush.xpose.msra.mxu0 0.0
        %5830 = vmatpush.xpose.msra.mxu0 0.0
        %5831 = vmatpush.xpose.msra.mxu0 0.0
        %5832 = vmatpush.xpose.msra.mxu0 0.0
        %5833 = vmatpush.xpose.msra.mxu0 0.0
        %5834 = vmatpush.xpose.msra.mxu0 0.0
        %5835 = vmatpush.xpose.msra.mxu0 0.0
        %5836 = vmatpush.xpose.msra.mxu0 0.0
        %5837 = vmatpush.xpose.msra.mxu0 0.0
        %5838 = vmatpush.xpose.msra.mxu0 0.0
        %5839 = vmatpush.xpose.msra.mxu0 %v5822
        %5840 = vmatmul.f32.gmra.mxu0 %v734
        %v5841 = vpop.f32.mrf.mxu0
        %v5842 = vadd.f32 0.0, %v5841
        %5843 = vmatmul.f32.gmra.mxu0 %v736
        %v5844 = vpop.f32.mrf.mxu0
        %v5845 = vadd.f32 0.0, %v5844
        %5846 = vdwg.mxu0
        %5847 = vmatpush.xpose.msra.mxu0 0.0
        %5848 = vmatpush.xpose.msra.mxu0 0.0
        %5849 = vmatpush.xpose.msra.mxu0 0.0
        %5850 = vmatpush.xpose.msra.mxu0 0.0
        %5851 = vmatpush.xpose.msra.mxu0 0.0
        %5852 = vmatpush.xpose.msra.mxu0 0.0
        %5853 = vmatpush.xpose.msra.mxu0 0.0
        %5854 = vmatpush.xpose.msra.mxu0 0.0
        %5855 = vmatpush.xpose.msra.mxu0 0.0
        %5856 = vmatpush.xpose.msra.mxu0 0.0
        %5857 = vmatpush.xpose.msra.mxu0 0.0
        %5858 = vmatpush.xpose.msra.mxu0 0.0
        %5859 = vmatpush.xpose.msra.mxu0 0.0
        %5860 = vmatpush.xpose.msra.mxu0 0.0
        %5861 = vmatpush.xpose.msra.mxu0 0.0
        %5862 = vmatpush.xpose.msra.mxu0 %v5822
        %5863 = vmatmul.f32.gmra.mxu0 %v767
        %v5864 = vpop.f32.mrf.mxu0
        %v5865 = vadd.f32 0.0, %v5864
        %5866 = vmatmul.f32.gmra.mxu0 %v769
        %v5867 = vpop.f32.mrf.mxu0
        %v5868 = vadd.f32 0.0, %v5867
        %5869 = vdwg.mxu0
        %5870 = vmatpush.xpose.msra.mxu0 0.0
        %5871 = vmatpush.xpose.msra.mxu0 0.0
        %5872 = vmatpush.xpose.msra.mxu0 0.0
        %5873 = vmatpush.xpose.msra.mxu0 0.0
        %5874 = vmatpush.xpose.msra.mxu0 0.0
        %5875 = vmatpush.xpose.msra.mxu0 0.0
        %5876 = vmatpush.xpose.msra.mxu0 0.0
        %5877 = vmatpush.xpose.msra.mxu0 0.0
        %5878 = vmatpush.xpose.msra.mxu0 0.0
        %5879 = vmatpush.xpose.msra.mxu0 0.0
        %5880 = vmatpush.xpose.msra.mxu0 0.0
        %5881 = vmatpush.xpose.msra.mxu0 0.0
        %5882 = vmatpush.xpose.msra.mxu0 0.0
        %5883 = vmatpush.xpose.msra.mxu0 0.0
        %5884 = vmatpush.xpose.msra.mxu0 0.0
        %5885 = vmatpush.xpose.msra.mxu0 %v5822
        %5886 = vmatmul.f32.gmra.mxu0 %v800
        %v5887 = vpop.f32.mrf.mxu0
        %v5888 = vadd.f32 0.0, %v5887
        %5889 = vmatmul.f32.gmra.mxu0 %v802
        %v5890 = vpop.f32.mrf.mxu0
        %v5891 = vadd.f32 0.0, %v5890
        %5892 = vdwg.mxu0
        %5893 = vmatpush.xpose.msra.mxu0 0.0
        %5894 = vmatpush.xpose.msra.mxu0 0.0
        %5895 = vmatpush.xpose.msra.mxu0 0.0
        %5896 = vmatpush.xpose.msra.mxu0 0.0
        %5897 = vmatpush.xpose.msra.mxu0 0.0
        %5898 = vmatpush.xpose.msra.mxu0 0.0
        %5899 = vmatpush.xpose.msra.mxu0 0.0
        %5900 = vmatpush.xpose.msra.mxu0 0.0
        %5901 = vmatpush.xpose.msra.mxu0 0.0
        %5902 = vmatpush.xpose.msra.mxu0 0.0
        %5903 = vmatpush.xpose.msra.mxu0 0.0
        %5904 = vmatpush.xpose.msra.mxu0 0.0
        %5905 = vmatpush.xpose.msra.mxu0 0.0
        %5906 = vmatpush.xpose.msra.mxu0 0.0
        %5907 = vmatpush.xpose.msra.mxu0 0.0
        %5908 = vmatpush.xpose.msra.mxu0 %v5822
        %5909 = vmatmul.f32.gmra.mxu0 %v833
        %v5910 = vpop.f32.mrf.mxu0
        %v5911 = vadd.f32 0.0, %v5910
        %5912 = vmatmul.f32.gmra.mxu0 %v835
        %v5913 = vpop.f32.mrf.mxu0
        %v5914 = vadd.f32 0.0, %v5913
        %5915 = vdwg.mxu0
        %5916 = vmatpush.xpose.msra.mxu0 0.0
        %5917 = vmatpush.xpose.msra.mxu0 0.0
        %5918 = vmatpush.xpose.msra.mxu0 0.0
        %5919 = vmatpush.xpose.msra.mxu0 0.0
        %5920 = vmatpush.xpose.msra.mxu0 0.0
        %5921 = vmatpush.xpose.msra.mxu0 0.0
        %5922 = vmatpush.xpose.msra.mxu0 0.0
        %5923 = vmatpush.xpose.msra.mxu0 0.0
        %5924 = vmatpush.xpose.msra.mxu0 0.0
        %5925 = vmatpush.xpose.msra.mxu0 0.0
        %5926 = vmatpush.xpose.msra.mxu0 0.0
        %5927 = vmatpush.xpose.msra.mxu0 0.0
        %5928 = vmatpush.xpose.msra.mxu0 0.0
        %5929 = vmatpush.xpose.msra.mxu0 0.0
        %5930 = vmatpush.xpose.msra.mxu0 0.0
        %5931 = vmatpush.xpose.msra.mxu0 %v5822
        %5932 = vmatmul.f32.gmra.mxu0 %v866
        %v5933 = vpop.f32.mrf.mxu0
        %v5934 = vadd.f32 0.0, %v5933
        %5935 = vmatmul.f32.gmra.mxu0 %v868
        %v5936 = vpop.f32.mrf.mxu0
        %v5937 = vadd.f32 0.0, %v5936
        %5938 = vdwg.mxu0
        %5939 = vmatpush.xpose.msra.mxu0 0.0
        %5940 = vmatpush.xpose.msra.mxu0 0.0
        %5941 = vmatpush.xpose.msra.mxu0 0.0
        %5942 = vmatpush.xpose.msra.mxu0 0.0
        %5943 = vmatpush.xpose.msra.mxu0 0.0
        %5944 = vmatpush.xpose.msra.mxu0 0.0
        %5945 = vmatpush.xpose.msra.mxu0 0.0
        %5946 = vmatpush.xpose.msra.mxu0 0.0
        %5947 = vmatpush.xpose.msra.mxu0 0.0
        %5948 = vmatpush.xpose.msra.mxu0 0.0
        %5949 = vmatpush.xpose.msra.mxu0 0.0
        %5950 = vmatpush.xpose.msra.mxu0 0.0
        %5951 = vmatpush.xpose.msra.mxu0 0.0
        %5952 = vmatpush.xpose.msra.mxu0 0.0
        %5953 = vmatpush.xpose.msra.mxu0 0.0
        %5954 = vmatpush.xpose.msra.mxu0 %v5822
        %5955 = vmatmul.f32.gmra.mxu0 %v899
        %v5956 = vpop.f32.mrf.mxu0
        %v5957 = vadd.f32 0.0, %v5956
        %5958 = vmatmul.f32.gmra.mxu0 %v901
        %v5959 = vpop.f32.mrf.mxu0
        %v5960 = vadd.f32 0.0, %v5959
        %5961 = vdwg.mxu0
        %5962 = vmatpush.xpose.msra.mxu0 0.0
        %5963 = vmatpush.xpose.msra.mxu0 0.0
        %5964 = vmatpush.xpose.msra.mxu0 0.0
        %5965 = vmatpush.xpose.msra.mxu0 0.0
        %5966 = vmatpush.xpose.msra.mxu0 0.0
        %5967 = vmatpush.xpose.msra.mxu0 0.0
        %5968 = vmatpush.xpose.msra.mxu0 0.0
        %5969 = vmatpush.xpose.msra.mxu0 0.0
        %5970 = vmatpush.xpose.msra.mxu0 0.0
        %5971 = vmatpush.xpose.msra.mxu0 0.0
        %5972 = vmatpush.xpose.msra.mxu0 0.0
        %5973 = vmatpush.xpose.msra.mxu0 0.0
        %5974 = vmatpush.xpose.msra.mxu0 0.0
        %5975 = vmatpush.xpose.msra.mxu0 0.0
        %5976 = vmatpush.xpose.msra.mxu0 0.0
        %5977 = vmatpush.xpose.msra.mxu0 %v5822
        %5978 = vmatmul.f32.gmra.mxu0 %v932
        %v5979 = vpop.f32.mrf.mxu0
        %v5980 = vadd.f32 0.0, %v5979
        %5981 = vmatmul.f32.gmra.mxu0 %v934
        %v5982 = vpop.f32.mrf.mxu0
        %v5983 = vadd.f32 0.0, %v5982
        %5984 = vdwg.mxu0
        %5985 = vmatpush.xpose.msra.mxu0 0.0
        %5986 = vmatpush.xpose.msra.mxu0 0.0
        %5987 = vmatpush.xpose.msra.mxu0 0.0
        %5988 = vmatpush.xpose.msra.mxu0 0.0
        %5989 = vmatpush.xpose.msra.mxu0 0.0
        %5990 = vmatpush.xpose.msra.mxu0 0.0
        %5991 = vmatpush.xpose.msra.mxu0 0.0
        %5992 = vmatpush.xpose.msra.mxu0 0.0
        %5993 = vmatpush.xpose.msra.mxu0 0.0
        %5994 = vmatpush.xpose.msra.mxu0 0.0
        %5995 = vmatpush.xpose.msra.mxu0 0.0
        %5996 = vmatpush.xpose.msra.mxu0 0.0
        %5997 = vmatpush.xpose.msra.mxu0 0.0
        %5998 = vmatpush.xpose.msra.mxu0 0.0
        %5999 = vmatpush.xpose.msra.mxu0 0.0
        %6000 = vmatpush.xpose.msra.mxu0 %v5822
        %6001 = vmatmul.f32.gmra.mxu0 %v965
        %v6002 = vpop.f32.mrf.mxu0
        %v6003 = vadd.f32 0.0, %v6002
        %6004 = vmatmul.f32.gmra.mxu0 %v967
        %v6005 = vpop.f32.mrf.mxu0
        %v6006 = vadd.f32 0.0, %v6005
        %6007 = vdwg.mxu0
        %6008 = vmatpush.xpose.msra.mxu0 0.0
        %6009 = vmatpush.xpose.msra.mxu0 0.0
        %6010 = vmatpush.xpose.msra.mxu0 0.0
        %6011 = vmatpush.xpose.msra.mxu0 0.0
        %6012 = vmatpush.xpose.msra.mxu0 0.0
        %6013 = vmatpush.xpose.msra.mxu0 0.0
        %6014 = vmatpush.xpose.msra.mxu0 0.0
        %6015 = vmatpush.xpose.msra.mxu0 0.0
        %6016 = vmatpush.xpose.msra.mxu0 0.0
        %6017 = vmatpush.xpose.msra.mxu0 0.0
        %6018 = vmatpush.xpose.msra.mxu0 0.0
        %6019 = vmatpush.xpose.msra.mxu0 0.0
        %6020 = vmatpush.xpose.msra.mxu0 0.0
        %6021 = vmatpush.xpose.msra.mxu0 0.0
        %6022 = vmatpush.xpose.msra.mxu0 0.0
        %6023 = vmatpush.xpose.msra.mxu0 %v5822
        %6024 = vmatmul.f32.gmra.mxu0 %v998
        %v6025 = vpop.f32.mrf.mxu0
        %v6026 = vadd.f32 0.0, %v6025
        %6027 = vmatmul.f32.gmra.mxu0 %v1000
        %v6028 = vpop.f32.mrf.mxu0
        %v6029 = vadd.f32 0.0, %v6028
        %6030 = vdwg.mxu0
        %6031 = vmatpush.xpose.msra.mxu0 0.0
        %6032 = vmatpush.xpose.msra.mxu0 0.0
        %6033 = vmatpush.xpose.msra.mxu0 0.0
        %6034 = vmatpush.xpose.msra.mxu0 0.0
        %6035 = vmatpush.xpose.msra.mxu0 0.0
        %6036 = vmatpush.xpose.msra.mxu0 0.0
        %6037 = vmatpush.xpose.msra.mxu0 0.0
        %6038 = vmatpush.xpose.msra.mxu0 0.0
        %6039 = vmatpush.xpose.msra.mxu0 0.0
        %6040 = vmatpush.xpose.msra.mxu0 0.0
        %6041 = vmatpush.xpose.msra.mxu0 0.0
        %6042 = vmatpush.xpose.msra.mxu0 0.0
        %6043 = vmatpush.xpose.msra.mxu0 0.0
        %6044 = vmatpush.xpose.msra.mxu0 0.0
        %6045 = vmatpush.xpose.msra.mxu0 0.0
        %6046 = vmatpush.xpose.msra.mxu0 %v5822
        %6047 = vmatmul.f32.gmra.mxu0 %v1031
        %v6048 = vpop.f32.mrf.mxu0
        %v6049 = vadd.f32 0.0, %v6048
        %6050 = vmatmul.f32.gmra.mxu0 %v1033
        %v6051 = vpop.f32.mrf.mxu0
        %v6052 = vadd.f32 0.0, %v6051
        %6053 = vdwg.mxu0
        %6054 = vmatpush.xpose.msra.mxu0 0.0
        %6055 = vmatpush.xpose.msra.mxu0 0.0
        %6056 = vmatpush.xpose.msra.mxu0 0.0
        %6057 = vmatpush.xpose.msra.mxu0 0.0
        %6058 = vmatpush.xpose.msra.mxu0 0.0
        %6059 = vmatpush.xpose.msra.mxu0 0.0
        %6060 = vmatpush.xpose.msra.mxu0 0.0
        %6061 = vmatpush.xpose.msra.mxu0 0.0
        %6062 = vmatpush.xpose.msra.mxu0 0.0
        %6063 = vmatpush.xpose.msra.mxu0 0.0
        %6064 = vmatpush.xpose.msra.mxu0 0.0
        %6065 = vmatpush.xpose.msra.mxu0 0.0
        %6066 = vmatpush.xpose.msra.mxu0 0.0
        %6067 = vmatpush.xpose.msra.mxu0 0.0
        %6068 = vmatpush.xpose.msra.mxu0 0.0
        %6069 = vmatpush.xpose.msra.mxu0 %v5822
        %6070 = vmatmul.f32.gmra.mxu0 %v1064
        %v6071 = vpop.f32.mrf.mxu0
        %v6072 = vadd.f32 0.0, %v6071
        %6073 = vmatmul.f32.gmra.mxu0 %v1066
        %v6074 = vpop.f32.mrf.mxu0
        %v6075 = vadd.f32 0.0, %v6074
        %6076 = vdwg.mxu0
        %6077 = vmatpush.xpose.msra.mxu0 0.0
        %6078 = vmatpush.xpose.msra.mxu0 0.0
        %6079 = vmatpush.xpose.msra.mxu0 0.0
        %6080 = vmatpush.xpose.msra.mxu0 0.0
        %6081 = vmatpush.xpose.msra.mxu0 0.0
        %6082 = vmatpush.xpose.msra.mxu0 0.0
        %6083 = vmatpush.xpose.msra.mxu0 0.0
        %6084 = vmatpush.xpose.msra.mxu0 0.0
        %6085 = vmatpush.xpose.msra.mxu0 0.0
        %6086 = vmatpush.xpose.msra.mxu0 0.0
        %6087 = vmatpush.xpose.msra.mxu0 0.0
        %6088 = vmatpush.xpose.msra.mxu0 0.0
        %6089 = vmatpush.xpose.msra.mxu0 0.0
        %6090 = vmatpush.xpose.msra.mxu0 0.0
        %6091 = vmatpush.xpose.msra.mxu0 0.0
        %6092 = vmatpush.xpose.msra.mxu0 %v5822
        %6093 = vmatmul.f32.gmra.mxu0 %v1097
        %v6094 = vpop.f32.mrf.mxu0
        %v6095 = vadd.f32 0.0, %v6094
        %6096 = vmatmul.f32.gmra.mxu0 %v1099
        %v6097 = vpop.f32.mrf.mxu0
        %v6098 = vadd.f32 0.0, %v6097
        %6099 = vdwg.mxu0
        %6100 = vmatpush.xpose.msra.mxu0 0.0
        %6101 = vmatpush.xpose.msra.mxu0 0.0
        %6102 = vmatpush.xpose.msra.mxu0 0.0
        %6103 = vmatpush.xpose.msra.mxu0 0.0
        %6104 = vmatpush.xpose.msra.mxu0 0.0
        %6105 = vmatpush.xpose.msra.mxu0 0.0
        %6106 = vmatpush.xpose.msra.mxu0 0.0
        %6107 = vmatpush.xpose.msra.mxu0 0.0
        %6108 = vmatpush.xpose.msra.mxu0 0.0
        %6109 = vmatpush.xpose.msra.mxu0 0.0
        %6110 = vmatpush.xpose.msra.mxu0 0.0
        %6111 = vmatpush.xpose.msra.mxu0 0.0
        %6112 = vmatpush.xpose.msra.mxu0 0.0
        %6113 = vmatpush.xpose.msra.mxu0 0.0
        %6114 = vmatpush.xpose.msra.mxu0 0.0
        %6115 = vmatpush.xpose.msra.mxu0 %v5822
        %6116 = vmatmul.f32.gmra.mxu0 %v1130
        %v6117 = vpop.f32.mrf.mxu0
        %v6118 = vadd.f32 0.0, %v6117
        %6119 = vmatmul.f32.gmra.mxu0 %v1132
        %v6120 = vpop.f32.mrf.mxu0
        %v6121 = vadd.f32 0.0, %v6120
        %6122 = vdwg.mxu0
        %6123 = vmatpush.xpose.msra.mxu0 0.0
        %6124 = vmatpush.xpose.msra.mxu0 0.0
        %6125 = vmatpush.xpose.msra.mxu0 0.0
        %6126 = vmatpush.xpose.msra.mxu0 0.0
        %6127 = vmatpush.xpose.msra.mxu0 0.0
        %6128 = vmatpush.xpose.msra.mxu0 0.0
        %6129 = vmatpush.xpose.msra.mxu0 0.0
        %6130 = vmatpush.xpose.msra.mxu0 0.0
        %6131 = vmatpush.xpose.msra.mxu0 0.0
        %6132 = vmatpush.xpose.msra.mxu0 0.0
        %6133 = vmatpush.xpose.msra.mxu0 0.0
        %6134 = vmatpush.xpose.msra.mxu0 0.0
        %6135 = vmatpush.xpose.msra.mxu0 0.0
        %6136 = vmatpush.xpose.msra.mxu0 0.0
        %6137 = vmatpush.xpose.msra.mxu0 0.0
        %6138 = vmatpush.xpose.msra.mxu0 %v5822
        %6139 = vmatmul.f32.gmra.mxu0 %v1163
        %v6140 = vpop.f32.mrf.mxu0
        %v6141 = vadd.f32 0.0, %v6140
        %6142 = vmatmul.f32.gmra.mxu0 %v1165
        %v6143 = vpop.f32.mrf.mxu0
        %v6144 = vadd.f32 0.0, %v6143
        %6145 = vdwg.mxu0
        %6146 = vmatpush.xpose.msra.mxu0 0.0
        %6147 = vmatpush.xpose.msra.mxu0 0.0
        %6148 = vmatpush.xpose.msra.mxu0 0.0
        %6149 = vmatpush.xpose.msra.mxu0 0.0
        %6150 = vmatpush.xpose.msra.mxu0 0.0
        %6151 = vmatpush.xpose.msra.mxu0 0.0
        %6152 = vmatpush.xpose.msra.mxu0 0.0
        %6153 = vmatpush.xpose.msra.mxu0 0.0
        %6154 = vmatpush.xpose.msra.mxu0 0.0
        %6155 = vmatpush.xpose.msra.mxu0 0.0
        %6156 = vmatpush.xpose.msra.mxu0 0.0
        %6157 = vmatpush.xpose.msra.mxu0 0.0
        %6158 = vmatpush.xpose.msra.mxu0 0.0
        %6159 = vmatpush.xpose.msra.mxu0 0.0
        %6160 = vmatpush.xpose.msra.mxu0 0.0
        %6161 = vmatpush.xpose.msra.mxu0 %v5822
        %6162 = vmatmul.f32.gmra.mxu0 %v1196
        %v6163 = vpop.f32.mrf.mxu0
        %v6164 = vadd.f32 0.0, %v6163
        %6165 = vmatmul.f32.gmra.mxu0 %v1198
        %v6166 = vpop.f32.mrf.mxu0
        %v6167 = vadd.f32 0.0, %v6166
        %6168 = vdwg.mxu0
        %6169 = vmatpush.xpose.msra.mxu0 0.0
        %6170 = vmatpush.xpose.msra.mxu0 0.0
        %6171 = vmatpush.xpose.msra.mxu0 0.0
        %6172 = vmatpush.xpose.msra.mxu0 0.0
        %6173 = vmatpush.xpose.msra.mxu0 0.0
        %6174 = vmatpush.xpose.msra.mxu0 0.0
        %6175 = vmatpush.xpose.msra.mxu0 0.0
        %6176 = vmatpush.xpose.msra.mxu0 0.0
        %6177 = vmatpush.xpose.msra.mxu0 0.0
        %6178 = vmatpush.xpose.msra.mxu0 0.0
        %6179 = vmatpush.xpose.msra.mxu0 0.0
        %6180 = vmatpush.xpose.msra.mxu0 0.0
        %6181 = vmatpush.xpose.msra.mxu0 0.0
        %6182 = vmatpush.xpose.msra.mxu0 0.0
        %6183 = vmatpush.xpose.msra.mxu0 0.0
        %6184 = vmatpush.xpose.msra.mxu0 %v5822
        %6185 = vmatmul.f32.gmra.mxu0 %v4819
        %v6186 = vpop.f32.mrf.mxu0
        %v6187 = vadd.f32 0.0, %v6186
        %6188 = vmatmul.f32.gmra.mxu0 %v4821
        %v6189 = vpop.f32.mrf.mxu0
        %v6190 = vadd.f32 0.0, %v6189
        %6191 = vdwg.mxu0
        %v6193 = vsel %vm223, %v5818, 0
        %6195 = vmatpush.xpose.msra.mxu0 0.0
        %6196 = vmatpush.xpose.msra.mxu0 0.0
        %6197 = vmatpush.xpose.msra.mxu0 0.0
        %6198 = vmatpush.xpose.msra.mxu0 0.0
        %6199 = vmatpush.xpose.msra.mxu0 0.0
        %6200 = vmatpush.xpose.msra.mxu0 0.0
        %6201 = vmatpush.xpose.msra.mxu0 0.0
        %6202 = vmatpush.xpose.msra.mxu0 0.0
        %6203 = vmatpush.xpose.msra.mxu0 0.0
        %6204 = vmatpush.xpose.msra.mxu0 0.0
        %6205 = vmatpush.xpose.msra.mxu0 0.0
        %6206 = vmatpush.xpose.msra.mxu0 0.0
        %6207 = vmatpush.xpose.msra.mxu0 0.0
        %6208 = vmatpush.xpose.msra.mxu0 0.0
        %6209 = vmatpush.xpose.msra.mxu0 0.0
        %6210 = vmatpush.xpose.msra.mxu0 %v6193
        %6211 = vmatmul.f32.gmra.mxu0 %v2629
        %v6212 = vpop.f32.mrf.mxu0
        %v6213 = vadd.f32 %v5842, %v6212
        %6214 = vmatmul.f32.gmra.mxu0 %v2631
        %v6215 = vpop.f32.mrf.mxu0
        %v6216 = vadd.f32 %v5845, %v6215
        %6217 = vdwg.mxu0
        %6218 = vmatpush.xpose.msra.mxu0 0.0
        %6219 = vmatpush.xpose.msra.mxu0 0.0
        %6220 = vmatpush.xpose.msra.mxu0 0.0
        %6221 = vmatpush.xpose.msra.mxu0 0.0
        %6222 = vmatpush.xpose.msra.mxu0 0.0
        %6223 = vmatpush.xpose.msra.mxu0 0.0
        %6224 = vmatpush.xpose.msra.mxu0 0.0
        %6225 = vmatpush.xpose.msra.mxu0 0.0
        %6226 = vmatpush.xpose.msra.mxu0 0.0
        %6227 = vmatpush.xpose.msra.mxu0 0.0
        %6228 = vmatpush.xpose.msra.mxu0 0.0
        %6229 = vmatpush.xpose.msra.mxu0 0.0
        %6230 = vmatpush.xpose.msra.mxu0 0.0
        %6231 = vmatpush.xpose.msra.mxu0 0.0
        %6232 = vmatpush.xpose.msra.mxu0 0.0
        %6233 = vmatpush.xpose.msra.mxu0 %v6193
        %6234 = vmatmul.f32.gmra.mxu0 %v2661
        %v6235 = vpop.f32.mrf.mxu0
        %v6236 = vadd.f32 %v5865, %v6235
        %6237 = vmatmul.f32.gmra.mxu0 %v2663
        %v6238 = vpop.f32.mrf.mxu0
        %v6239 = vadd.f32 %v5868, %v6238
        %6240 = vdwg.mxu0
        %6241 = vmatpush.xpose.msra.mxu0 0.0
        %6242 = vmatpush.xpose.msra.mxu0 0.0
        %6243 = vmatpush.xpose.msra.mxu0 0.0
        %6244 = vmatpush.xpose.msra.mxu0 0.0
        %6245 = vmatpush.xpose.msra.mxu0 0.0
        %6246 = vmatpush.xpose.msra.mxu0 0.0
        %6247 = vmatpush.xpose.msra.mxu0 0.0
        %6248 = vmatpush.xpose.msra.mxu0 0.0
        %6249 = vmatpush.xpose.msra.mxu0 0.0
        %6250 = vmatpush.xpose.msra.mxu0 0.0
        %6251 = vmatpush.xpose.msra.mxu0 0.0
        %6252 = vmatpush.xpose.msra.mxu0 0.0
        %6253 = vmatpush.xpose.msra.mxu0 0.0
        %6254 = vmatpush.xpose.msra.mxu0 0.0
        %6255 = vmatpush.xpose.msra.mxu0 0.0
        %6256 = vmatpush.xpose.msra.mxu0 %v6193
        %6257 = vmatmul.f32.gmra.mxu0 %v2693
        %v6258 = vpop.f32.mrf.mxu0
        %v6259 = vadd.f32 %v5888, %v6258
        %6260 = vmatmul.f32.gmra.mxu0 %v2695
        %v6261 = vpop.f32.mrf.mxu0
        %v6262 = vadd.f32 %v5891, %v6261
        %6263 = vdwg.mxu0
        %6264 = vmatpush.xpose.msra.mxu0 0.0
        %6265 = vmatpush.xpose.msra.mxu0 0.0
        %6266 = vmatpush.xpose.msra.mxu0 0.0
        %6267 = vmatpush.xpose.msra.mxu0 0.0
        %6268 = vmatpush.xpose.msra.mxu0 0.0
        %6269 = vmatpush.xpose.msra.mxu0 0.0
        %6270 = vmatpush.xpose.msra.mxu0 0.0
        %6271 = vmatpush.xpose.msra.mxu0 0.0
        %6272 = vmatpush.xpose.msra.mxu0 0.0
        %6273 = vmatpush.xpose.msra.mxu0 0.0
        %6274 = vmatpush.xpose.msra.mxu0 0.0
        %6275 = vmatpush.xpose.msra.mxu0 0.0
        %6276 = vmatpush.xpose.msra.mxu0 0.0
        %6277 = vmatpush.xpose.msra.mxu0 0.0
        %6278 = vmatpush.xpose.msra.mxu0 0.0
        %6279 = vmatpush.xpose.msra.mxu0 %v6193
        %6280 = vmatmul.f32.gmra.mxu0 %v2725
        %v6281 = vpop.f32.mrf.mxu0
        %v6282 = vadd.f32 %v5911, %v6281
        %6283 = vmatmul.f32.gmra.mxu0 %v2727
        %v6284 = vpop.f32.mrf.mxu0
        %v6285 = vadd.f32 %v5914, %v6284
        %6286 = vdwg.mxu0
        %6287 = vmatpush.xpose.msra.mxu0 0.0
        %6288 = vmatpush.xpose.msra.mxu0 0.0
        %6289 = vmatpush.xpose.msra.mxu0 0.0
        %6290 = vmatpush.xpose.msra.mxu0 0.0
        %6291 = vmatpush.xpose.msra.mxu0 0.0
        %6292 = vmatpush.xpose.msra.mxu0 0.0
        %6293 = vmatpush.xpose.msra.mxu0 0.0
        %6294 = vmatpush.xpose.msra.mxu0 0.0
        %6295 = vmatpush.xpose.msra.mxu0 0.0
        %6296 = vmatpush.xpose.msra.mxu0 0.0
        %6297 = vmatpush.xpose.msra.mxu0 0.0
        %6298 = vmatpush.xpose.msra.mxu0 0.0
        %6299 = vmatpush.xpose.msra.mxu0 0.0
        %6300 = vmatpush.xpose.msra.mxu0 0.0
        %6301 = vmatpush.xpose.msra.mxu0 0.0
        %6302 = vmatpush.xpose.msra.mxu0 %v6193
        %6303 = vmatmul.f32.gmra.mxu0 %v2757
        %v6304 = vpop.f32.mrf.mxu0
        %v6305 = vadd.f32 %v5934, %v6304
        %6306 = vmatmul.f32.gmra.mxu0 %v2759
        %v6307 = vpop.f32.mrf.mxu0
        %v6308 = vadd.f32 %v5937, %v6307
        %6309 = vdwg.mxu0
        %6310 = vmatpush.xpose.msra.mxu0 0.0
        %6311 = vmatpush.xpose.msra.mxu0 0.0
        %6312 = vmatpush.xpose.msra.mxu0 0.0
        %6313 = vmatpush.xpose.msra.mxu0 0.0
        %6314 = vmatpush.xpose.msra.mxu0 0.0
        %6315 = vmatpush.xpose.msra.mxu0 0.0
        %6316 = vmatpush.xpose.msra.mxu0 0.0
        %6317 = vmatpush.xpose.msra.mxu0 0.0
        %6318 = vmatpush.xpose.msra.mxu0 0.0
        %6319 = vmatpush.xpose.msra.mxu0 0.0
        %6320 = vmatpush.xpose.msra.mxu0 0.0
        %6321 = vmatpush.xpose.msra.mxu0 0.0
        %6322 = vmatpush.xpose.msra.mxu0 0.0
        %6323 = vmatpush.xpose.msra.mxu0 0.0
        %6324 = vmatpush.xpose.msra.mxu0 0.0
        %6325 = vmatpush.xpose.msra.mxu0 %v6193
        %6326 = vmatmul.f32.gmra.mxu0 %v2789
        %v6327 = vpop.f32.mrf.mxu0
        %v6328 = vadd.f32 %v5957, %v6327
        %6329 = vmatmul.f32.gmra.mxu0 %v2791
        %v6330 = vpop.f32.mrf.mxu0
        %v6331 = vadd.f32 %v5960, %v6330
        %6332 = vdwg.mxu0
        %6333 = vmatpush.xpose.msra.mxu0 0.0
        %6334 = vmatpush.xpose.msra.mxu0 0.0
        %6335 = vmatpush.xpose.msra.mxu0 0.0
        %6336 = vmatpush.xpose.msra.mxu0 0.0
        %6337 = vmatpush.xpose.msra.mxu0 0.0
        %6338 = vmatpush.xpose.msra.mxu0 0.0
        %6339 = vmatpush.xpose.msra.mxu0 0.0
        %6340 = vmatpush.xpose.msra.mxu0 0.0
        %6341 = vmatpush.xpose.msra.mxu0 0.0
        %6342 = vmatpush.xpose.msra.mxu0 0.0
        %6343 = vmatpush.xpose.msra.mxu0 0.0
        %6344 = vmatpush.xpose.msra.mxu0 0.0
        %6345 = vmatpush.xpose.msra.mxu0 0.0
        %6346 = vmatpush.xpose.msra.mxu0 0.0
        %6347 = vmatpush.xpose.msra.mxu0 0.0
        %6348 = vmatpush.xpose.msra.mxu0 %v6193
        %6349 = vmatmul.f32.gmra.mxu0 %v2821
        %v6350 = vpop.f32.mrf.mxu0
        %v6351 = vadd.f32 %v5980, %v6350
        %6352 = vmatmul.f32.gmra.mxu0 %v2823
        %v6353 = vpop.f32.mrf.mxu0
        %v6354 = vadd.f32 %v5983, %v6353
        %6355 = vdwg.mxu0
        %6356 = vmatpush.xpose.msra.mxu0 0.0
        %6357 = vmatpush.xpose.msra.mxu0 0.0
        %6358 = vmatpush.xpose.msra.mxu0 0.0
        %6359 = vmatpush.xpose.msra.mxu0 0.0
        %6360 = vmatpush.xpose.msra.mxu0 0.0
        %6361 = vmatpush.xpose.msra.mxu0 0.0
        %6362 = vmatpush.xpose.msra.mxu0 0.0
        %6363 = vmatpush.xpose.msra.mxu0 0.0
        %6364 = vmatpush.xpose.msra.mxu0 0.0
        %6365 = vmatpush.xpose.msra.mxu0 0.0
        %6366 = vmatpush.xpose.msra.mxu0 0.0
        %6367 = vmatpush.xpose.msra.mxu0 0.0
        %6368 = vmatpush.xpose.msra.mxu0 0.0
        %6369 = vmatpush.xpose.msra.mxu0 0.0
        %6370 = vmatpush.xpose.msra.mxu0 0.0
        %6371 = vmatpush.xpose.msra.mxu0 %v6193
        %6372 = vmatmul.f32.gmra.mxu0 %v2853
        %v6373 = vpop.f32.mrf.mxu0
        %v6374 = vadd.f32 %v6003, %v6373
        %6375 = vmatmul.f32.gmra.mxu0 %v2855
        %v6376 = vpop.f32.mrf.mxu0
        %v6377 = vadd.f32 %v6006, %v6376
        %6378 = vdwg.mxu0
        %6379 = vmatpush.xpose.msra.mxu0 0.0
        %6380 = vmatpush.xpose.msra.mxu0 0.0
        %6381 = vmatpush.xpose.msra.mxu0 0.0
        %6382 = vmatpush.xpose.msra.mxu0 0.0
        %6383 = vmatpush.xpose.msra.mxu0 0.0
        %6384 = vmatpush.xpose.msra.mxu0 0.0
        %6385 = vmatpush.xpose.msra.mxu0 0.0
        %6386 = vmatpush.xpose.msra.mxu0 0.0
        %6387 = vmatpush.xpose.msra.mxu0 0.0
        %6388 = vmatpush.xpose.msra.mxu0 0.0
        %6389 = vmatpush.xpose.msra.mxu0 0.0
        %6390 = vmatpush.xpose.msra.mxu0 0.0
        %6391 = vmatpush.xpose.msra.mxu0 0.0
        %6392 = vmatpush.xpose.msra.mxu0 0.0
        %6393 = vmatpush.xpose.msra.mxu0 0.0
        %6394 = vmatpush.xpose.msra.mxu0 %v6193
        %6395 = vmatmul.f32.gmra.mxu0 %v2885
        %v6396 = vpop.f32.mrf.mxu0
        %v6397 = vadd.f32 %v6026, %v6396
        %6398 = vmatmul.f32.gmra.mxu0 %v2887
        %v6399 = vpop.f32.mrf.mxu0
        %v6400 = vadd.f32 %v6029, %v6399
        %6401 = vdwg.mxu0
        %6402 = vmatpush.xpose.msra.mxu0 0.0
        %6403 = vmatpush.xpose.msra.mxu0 0.0
        %6404 = vmatpush.xpose.msra.mxu0 0.0
        %6405 = vmatpush.xpose.msra.mxu0 0.0
        %6406 = vmatpush.xpose.msra.mxu0 0.0
        %6407 = vmatpush.xpose.msra.mxu0 0.0
        %6408 = vmatpush.xpose.msra.mxu0 0.0
        %6409 = vmatpush.xpose.msra.mxu0 0.0
        %6410 = vmatpush.xpose.msra.mxu0 0.0
        %6411 = vmatpush.xpose.msra.mxu0 0.0
        %6412 = vmatpush.xpose.msra.mxu0 0.0
        %6413 = vmatpush.xpose.msra.mxu0 0.0
        %6414 = vmatpush.xpose.msra.mxu0 0.0
        %6415 = vmatpush.xpose.msra.mxu0 0.0
        %6416 = vmatpush.xpose.msra.mxu0 0.0
        %6417 = vmatpush.xpose.msra.mxu0 %v6193
        %6418 = vmatmul.f32.gmra.mxu0 %v2917
        %v6419 = vpop.f32.mrf.mxu0
        %v6420 = vadd.f32 %v6049, %v6419
        %6421 = vmatmul.f32.gmra.mxu0 %v2919
        %v6422 = vpop.f32.mrf.mxu0
        %v6423 = vadd.f32 %v6052, %v6422
        %6424 = vdwg.mxu0
        %6425 = vmatpush.xpose.msra.mxu0 0.0
        %6426 = vmatpush.xpose.msra.mxu0 0.0
        %6427 = vmatpush.xpose.msra.mxu0 0.0
        %6428 = vmatpush.xpose.msra.mxu0 0.0
        %6429 = vmatpush.xpose.msra.mxu0 0.0
        %6430 = vmatpush.xpose.msra.mxu0 0.0
        %6431 = vmatpush.xpose.msra.mxu0 0.0
        %6432 = vmatpush.xpose.msra.mxu0 0.0
        %6433 = vmatpush.xpose.msra.mxu0 0.0
        %6434 = vmatpush.xpose.msra.mxu0 0.0
        %6435 = vmatpush.xpose.msra.mxu0 0.0
        %6436 = vmatpush.xpose.msra.mxu0 0.0
        %6437 = vmatpush.xpose.msra.mxu0 0.0
        %6438 = vmatpush.xpose.msra.mxu0 0.0
        %6439 = vmatpush.xpose.msra.mxu0 0.0
        %6440 = vmatpush.xpose.msra.mxu0 %v6193
        %6441 = vmatmul.f32.gmra.mxu0 %v2949
        %v6442 = vpop.f32.mrf.mxu0
        %v6443 = vadd.f32 %v6072, %v6442
        %6444 = vmatmul.f32.gmra.mxu0 %v2951
        %v6445 = vpop.f32.mrf.mxu0
        %v6446 = vadd.f32 %v6075, %v6445
        %6447 = vdwg.mxu0
        %6448 = vmatpush.xpose.msra.mxu0 0.0
        %6449 = vmatpush.xpose.msra.mxu0 0.0
        %6450 = vmatpush.xpose.msra.mxu0 0.0
        %6451 = vmatpush.xpose.msra.mxu0 0.0
        %6452 = vmatpush.xpose.msra.mxu0 0.0
        %6453 = vmatpush.xpose.msra.mxu0 0.0
        %6454 = vmatpush.xpose.msra.mxu0 0.0
        %6455 = vmatpush.xpose.msra.mxu0 0.0
        %6456 = vmatpush.xpose.msra.mxu0 0.0
        %6457 = vmatpush.xpose.msra.mxu0 0.0
        %6458 = vmatpush.xpose.msra.mxu0 0.0
        %6459 = vmatpush.xpose.msra.mxu0 0.0
        %6460 = vmatpush.xpose.msra.mxu0 0.0
        %6461 = vmatpush.xpose.msra.mxu0 0.0
        %6462 = vmatpush.xpose.msra.mxu0 0.0
        %6463 = vmatpush.xpose.msra.mxu0 %v6193
        %6464 = vmatmul.f32.gmra.mxu0 %v2981
        %v6465 = vpop.f32.mrf.mxu0
        %v6466 = vadd.f32 %v6095, %v6465
        %6467 = vmatmul.f32.gmra.mxu0 %v2983
        %v6468 = vpop.f32.mrf.mxu0
        %v6469 = vadd.f32 %v6098, %v6468
        %6470 = vdwg.mxu0
        %6471 = vmatpush.xpose.msra.mxu0 0.0
        %6472 = vmatpush.xpose.msra.mxu0 0.0
        %6473 = vmatpush.xpose.msra.mxu0 0.0
        %6474 = vmatpush.xpose.msra.mxu0 0.0
        %6475 = vmatpush.xpose.msra.mxu0 0.0
        %6476 = vmatpush.xpose.msra.mxu0 0.0
        %6477 = vmatpush.xpose.msra.mxu0 0.0
        %6478 = vmatpush.xpose.msra.mxu0 0.0
        %6479 = vmatpush.xpose.msra.mxu0 0.0
        %6480 = vmatpush.xpose.msra.mxu0 0.0
        %6481 = vmatpush.xpose.msra.mxu0 0.0
        %6482 = vmatpush.xpose.msra.mxu0 0.0
        %6483 = vmatpush.xpose.msra.mxu0 0.0
        %6484 = vmatpush.xpose.msra.mxu0 0.0
        %6485 = vmatpush.xpose.msra.mxu0 0.0
        %6486 = vmatpush.xpose.msra.mxu0 %v6193
        %6487 = vmatmul.f32.gmra.mxu0 %v3013
        %v6488 = vpop.f32.mrf.mxu0
        %v6489 = vadd.f32 %v6118, %v6488
        %6490 = vmatmul.f32.gmra.mxu0 %v3015
        %v6491 = vpop.f32.mrf.mxu0
        %v6492 = vadd.f32 %v6121, %v6491
        %6493 = vdwg.mxu0
        %6494 = vmatpush.xpose.msra.mxu0 0.0
        %6495 = vmatpush.xpose.msra.mxu0 0.0
        %6496 = vmatpush.xpose.msra.mxu0 0.0
        %6497 = vmatpush.xpose.msra.mxu0 0.0
        %6498 = vmatpush.xpose.msra.mxu0 0.0
        %6499 = vmatpush.xpose.msra.mxu0 0.0
        %6500 = vmatpush.xpose.msra.mxu0 0.0
        %6501 = vmatpush.xpose.msra.mxu0 0.0
        %6502 = vmatpush.xpose.msra.mxu0 0.0
        %6503 = vmatpush.xpose.msra.mxu0 0.0
        %6504 = vmatpush.xpose.msra.mxu0 0.0
        %6505 = vmatpush.xpose.msra.mxu0 0.0
        %6506 = vmatpush.xpose.msra.mxu0 0.0
        %6507 = vmatpush.xpose.msra.mxu0 0.0
        %6508 = vmatpush.xpose.msra.mxu0 0.0
        %6509 = vmatpush.xpose.msra.mxu0 %v6193
        %6510 = vmatmul.f32.gmra.mxu0 %v3045
        %v6511 = vpop.f32.mrf.mxu0
        %v6512 = vadd.f32 %v6141, %v6511
        %6513 = vmatmul.f32.gmra.mxu0 %v3047
        %v6514 = vpop.f32.mrf.mxu0
        %v6515 = vadd.f32 %v6144, %v6514
        %6516 = vdwg.mxu0
        %6517 = vmatpush.xpose.msra.mxu0 0.0
        %6518 = vmatpush.xpose.msra.mxu0 0.0
        %6519 = vmatpush.xpose.msra.mxu0 0.0
        %6520 = vmatpush.xpose.msra.mxu0 0.0
        %6521 = vmatpush.xpose.msra.mxu0 0.0
        %6522 = vmatpush.xpose.msra.mxu0 0.0
        %6523 = vmatpush.xpose.msra.mxu0 0.0
        %6524 = vmatpush.xpose.msra.mxu0 0.0
        %6525 = vmatpush.xpose.msra.mxu0 0.0
        %6526 = vmatpush.xpose.msra.mxu0 0.0
        %6527 = vmatpush.xpose.msra.mxu0 0.0
        %6528 = vmatpush.xpose.msra.mxu0 0.0
        %6529 = vmatpush.xpose.msra.mxu0 0.0
        %6530 = vmatpush.xpose.msra.mxu0 0.0
        %6531 = vmatpush.xpose.msra.mxu0 0.0
        %6532 = vmatpush.xpose.msra.mxu0 %v6193
        %6533 = vmatmul.f32.gmra.mxu0 %v3077
        %v6534 = vpop.f32.mrf.mxu0
        %v6535 = vadd.f32 %v6164, %v6534
        %6536 = vmatmul.f32.gmra.mxu0 %v3079
        %v6537 = vpop.f32.mrf.mxu0
        %v6538 = vadd.f32 %v6167, %v6537
        %6539 = vdwg.mxu0
        %v6540 = vrot.slane %v216, 2
        %v6541 = vrot.slane %v217, 2
        %v6542 = vsel %vm2588, %v6540, %v6541
        %v6543 = vrot.slane %v218, 2
        %v6544 = vsel %vm2588, %v6541, %v6543
        %v6545 = vsel %vm223, %v6542, 0
        %v6547 = vsel %vm223, %v6544, 0
        %6549 = vmatpush.xpose.msra.mxu0 0.0
        %6550 = vmatpush.xpose.msra.mxu0 0.0
        %6551 = vmatpush.xpose.msra.mxu0 0.0
        %6552 = vmatpush.xpose.msra.mxu0 0.0
        %6553 = vmatpush.xpose.msra.mxu0 0.0
        %6554 = vmatpush.xpose.msra.mxu0 0.0
        %6555 = vmatpush.xpose.msra.mxu0 0.0
        %6556 = vmatpush.xpose.msra.mxu0 0.0
        %6557 = vmatpush.xpose.msra.mxu0 0.0
        %6558 = vmatpush.xpose.msra.mxu0 0.0
        %6559 = vmatpush.xpose.msra.mxu0 0.0
        %6560 = vmatpush.xpose.msra.mxu0 0.0
        %6561 = vmatpush.xpose.msra.mxu0 0.0
        %6562 = vmatpush.xpose.msra.mxu0 0.0
        %6563 = vmatpush.xpose.msra.mxu0 0.0
        %6564 = vmatpush.xpose.msra.mxu0 %v6193
        %6565 = vmatmul.f32.gmra.mxu0 %v6545
        %v6566 = vpop.f32.mrf.mxu0
        %v6567 = vadd.f32 %v6187, %v6566
        %6568 = vmatmul.f32.gmra.mxu0 %v6547
        %v6569 = vpop.f32.mrf.mxu0
        %v6570 = vadd.f32 %v6190, %v6569
        %6571 = vdwg.mxu0
        %s6572 = scalar_lea.vmem %s1, 112
        %v6573 = vld [vmem:[%s6572] sm:$0xff]
        %v6575 = vsel %vm223, %v6573, 0
        %6577 = vmatpush.xpose.msra.mxu0 0.0
        %6578 = vmatpush.xpose.msra.mxu0 0.0
        %6579 = vmatpush.xpose.msra.mxu0 0.0
        %6580 = vmatpush.xpose.msra.mxu0 0.0
        %6581 = vmatpush.xpose.msra.mxu0 0.0
        %6582 = vmatpush.xpose.msra.mxu0 0.0
        %6583 = vmatpush.xpose.msra.mxu0 0.0
        %6584 = vmatpush.xpose.msra.mxu0 0.0
        %6585 = vmatpush.xpose.msra.mxu0 0.0
        %6586 = vmatpush.xpose.msra.mxu0 0.0
        %6587 = vmatpush.xpose.msra.mxu0 0.0
        %6588 = vmatpush.xpose.msra.mxu0 0.0
        %6589 = vmatpush.xpose.msra.mxu0 0.0
        %6590 = vmatpush.xpose.msra.mxu0 0.0
        %6591 = vmatpush.xpose.msra.mxu0 0.0
        %6592 = vmatpush.xpose.msra.mxu0 %v6575
        %6593 = vmatmul.f32.gmra.mxu0 %v2594
        %v6594 = vpop.f32.mrf.mxu0
        %v6595 = vadd.f32 0.0, %v6594
        %6596 = vmatmul.f32.gmra.mxu0 %v2596
        %v6597 = vpop.f32.mrf.mxu0
        %v6598 = vadd.f32 0.0, %v6597
        %6599 = vdwg.mxu0
        %6600 = vmatpush.xpose.msra.mxu0 0.0
        %6601 = vmatpush.xpose.msra.mxu0 0.0
        %6602 = vmatpush.xpose.msra.mxu0 0.0
        %6603 = vmatpush.xpose.msra.mxu0 0.0
        %6604 = vmatpush.xpose.msra.mxu0 0.0
        %6605 = vmatpush.xpose.msra.mxu0 0.0
        %6606 = vmatpush.xpose.msra.mxu0 0.0
        %6607 = vmatpush.xpose.msra.mxu0 0.0
        %6608 = vmatpush.xpose.msra.mxu0 0.0
        %6609 = vmatpush.xpose.msra.mxu0 0.0
        %6610 = vmatpush.xpose.msra.mxu0 0.0
        %6611 = vmatpush.xpose.msra.mxu0 0.0
        %6612 = vmatpush.xpose.msra.mxu0 0.0
        %6613 = vmatpush.xpose.msra.mxu0 0.0
        %6614 = vmatpush.xpose.msra.mxu0 0.0
        %6615 = vmatpush.xpose.msra.mxu0 %v6575
        %6616 = vmatmul.f32.gmra.mxu0 %v2629
        %v6617 = vpop.f32.mrf.mxu0
        %v6618 = vadd.f32 0.0, %v6617
        %6619 = vmatmul.f32.gmra.mxu0 %v2631
        %v6620 = vpop.f32.mrf.mxu0
        %v6621 = vadd.f32 0.0, %v6620
        %6622 = vdwg.mxu0
        %6623 = vmatpush.xpose.msra.mxu0 0.0
        %6624 = vmatpush.xpose.msra.mxu0 0.0
        %6625 = vmatpush.xpose.msra.mxu0 0.0
        %6626 = vmatpush.xpose.msra.mxu0 0.0
        %6627 = vmatpush.xpose.msra.mxu0 0.0
        %6628 = vmatpush.xpose.msra.mxu0 0.0
        %6629 = vmatpush.xpose.msra.mxu0 0.0
        %6630 = vmatpush.xpose.msra.mxu0 0.0
        %6631 = vmatpush.xpose.msra.mxu0 0.0
        %6632 = vmatpush.xpose.msra.mxu0 0.0
        %6633 = vmatpush.xpose.msra.mxu0 0.0
        %6634 = vmatpush.xpose.msra.mxu0 0.0
        %6635 = vmatpush.xpose.msra.mxu0 0.0
        %6636 = vmatpush.xpose.msra.mxu0 0.0
        %6637 = vmatpush.xpose.msra.mxu0 0.0
        %6638 = vmatpush.xpose.msra.mxu0 %v6575
        %6639 = vmatmul.f32.gmra.mxu0 %v2661
        %v6640 = vpop.f32.mrf.mxu0
        %v6641 = vadd.f32 0.0, %v6640
        %6642 = vmatmul.f32.gmra.mxu0 %v2663
        %v6643 = vpop.f32.mrf.mxu0
        %v6644 = vadd.f32 0.0, %v6643
        %6645 = vdwg.mxu0
        %6646 = vmatpush.xpose.msra.mxu0 0.0
        %6647 = vmatpush.xpose.msra.mxu0 0.0
        %6648 = vmatpush.xpose.msra.mxu0 0.0
        %6649 = vmatpush.xpose.msra.mxu0 0.0
        %6650 = vmatpush.xpose.msra.mxu0 0.0
        %6651 = vmatpush.xpose.msra.mxu0 0.0
        %6652 = vmatpush.xpose.msra.mxu0 0.0
        %6653 = vmatpush.xpose.msra.mxu0 0.0
        %6654 = vmatpush.xpose.msra.mxu0 0.0
        %6655 = vmatpush.xpose.msra.mxu0 0.0
        %6656 = vmatpush.xpose.msra.mxu0 0.0
        %6657 = vmatpush.xpose.msra.mxu0 0.0
        %6658 = vmatpush.xpose.msra.mxu0 0.0
        %6659 = vmatpush.xpose.msra.mxu0 0.0
        %6660 = vmatpush.xpose.msra.mxu0 0.0
        %6661 = vmatpush.xpose.msra.mxu0 %v6575
        %6662 = vmatmul.f32.gmra.mxu0 %v2693
        %v6663 = vpop.f32.mrf.mxu0
        %v6664 = vadd.f32 0.0, %v6663
        %6665 = vmatmul.f32.gmra.mxu0 %v2695
        %v6666 = vpop.f32.mrf.mxu0
        %v6667 = vadd.f32 0.0, %v6666
        %6668 = vdwg.mxu0
        %6669 = vmatpush.xpose.msra.mxu0 0.0
        %6670 = vmatpush.xpose.msra.mxu0 0.0
        %6671 = vmatpush.xpose.msra.mxu0 0.0
        %6672 = vmatpush.xpose.msra.mxu0 0.0
        %6673 = vmatpush.xpose.msra.mxu0 0.0
        %6674 = vmatpush.xpose.msra.mxu0 0.0
        %6675 = vmatpush.xpose.msra.mxu0 0.0
        %6676 = vmatpush.xpose.msra.mxu0 0.0
        %6677 = vmatpush.xpose.msra.mxu0 0.0
        %6678 = vmatpush.xpose.msra.mxu0 0.0
        %6679 = vmatpush.xpose.msra.mxu0 0.0
        %6680 = vmatpush.xpose.msra.mxu0 0.0
        %6681 = vmatpush.xpose.msra.mxu0 0.0
        %6682 = vmatpush.xpose.msra.mxu0 0.0
        %6683 = vmatpush.xpose.msra.mxu0 0.0
        %6684 = vmatpush.xpose.msra.mxu0 %v6575
        %6685 = vmatmul.f32.gmra.mxu0 %v2725
        %v6686 = vpop.f32.mrf.mxu0
        %v6687 = vadd.f32 0.0, %v6686
        %6688 = vmatmul.f32.gmra.mxu0 %v2727
        %v6689 = vpop.f32.mrf.mxu0
        %v6690 = vadd.f32 0.0, %v6689
        %6691 = vdwg.mxu0
        %6692 = vmatpush.xpose.msra.mxu0 0.0
        %6693 = vmatpush.xpose.msra.mxu0 0.0
        %6694 = vmatpush.xpose.msra.mxu0 0.0
        %6695 = vmatpush.xpose.msra.mxu0 0.0
        %6696 = vmatpush.xpose.msra.mxu0 0.0
        %6697 = vmatpush.xpose.msra.mxu0 0.0
        %6698 = vmatpush.xpose.msra.mxu0 0.0
        %6699 = vmatpush.xpose.msra.mxu0 0.0
        %6700 = vmatpush.xpose.msra.mxu0 0.0
        %6701 = vmatpush.xpose.msra.mxu0 0.0
        %6702 = vmatpush.xpose.msra.mxu0 0.0
        %6703 = vmatpush.xpose.msra.mxu0 0.0
        %6704 = vmatpush.xpose.msra.mxu0 0.0
        %6705 = vmatpush.xpose.msra.mxu0 0.0
        %6706 = vmatpush.xpose.msra.mxu0 0.0
        %6707 = vmatpush.xpose.msra.mxu0 %v6575
        %6708 = vmatmul.f32.gmra.mxu0 %v2757
        %v6709 = vpop.f32.mrf.mxu0
        %v6710 = vadd.f32 0.0, %v6709
        %6711 = vmatmul.f32.gmra.mxu0 %v2759
        %v6712 = vpop.f32.mrf.mxu0
        %v6713 = vadd.f32 0.0, %v6712
        %6714 = vdwg.mxu0
        %6715 = vmatpush.xpose.msra.mxu0 0.0
        %6716 = vmatpush.xpose.msra.mxu0 0.0
        %6717 = vmatpush.xpose.msra.mxu0 0.0
        %6718 = vmatpush.xpose.msra.mxu0 0.0
        %6719 = vmatpush.xpose.msra.mxu0 0.0
        %6720 = vmatpush.xpose.msra.mxu0 0.0
        %6721 = vmatpush.xpose.msra.mxu0 0.0
        %6722 = vmatpush.xpose.msra.mxu0 0.0
        %6723 = vmatpush.xpose.msra.mxu0 0.0
        %6724 = vmatpush.xpose.msra.mxu0 0.0
        %6725 = vmatpush.xpose.msra.mxu0 0.0
        %6726 = vmatpush.xpose.msra.mxu0 0.0
        %6727 = vmatpush.xpose.msra.mxu0 0.0
        %6728 = vmatpush.xpose.msra.mxu0 0.0
        %6729 = vmatpush.xpose.msra.mxu0 0.0
        %6730 = vmatpush.xpose.msra.mxu0 %v6575
        %6731 = vmatmul.f32.gmra.mxu0 %v2789
        %v6732 = vpop.f32.mrf.mxu0
        %v6733 = vadd.f32 0.0, %v6732
        %6734 = vmatmul.f32.gmra.mxu0 %v2791
        %v6735 = vpop.f32.mrf.mxu0
        %v6736 = vadd.f32 0.0, %v6735
        %6737 = vdwg.mxu0
        %6738 = vmatpush.xpose.msra.mxu0 0.0
        %6739 = vmatpush.xpose.msra.mxu0 0.0
        %6740 = vmatpush.xpose.msra.mxu0 0.0
        %6741 = vmatpush.xpose.msra.mxu0 0.0
        %6742 = vmatpush.xpose.msra.mxu0 0.0
        %6743 = vmatpush.xpose.msra.mxu0 0.0
        %6744 = vmatpush.xpose.msra.mxu0 0.0
        %6745 = vmatpush.xpose.msra.mxu0 0.0
        %6746 = vmatpush.xpose.msra.mxu0 0.0
        %6747 = vmatpush.xpose.msra.mxu0 0.0
        %6748 = vmatpush.xpose.msra.mxu0 0.0
        %6749 = vmatpush.xpose.msra.mxu0 0.0
        %6750 = vmatpush.xpose.msra.mxu0 0.0
        %6751 = vmatpush.xpose.msra.mxu0 0.0
        %6752 = vmatpush.xpose.msra.mxu0 0.0
        %6753 = vmatpush.xpose.msra.mxu0 %v6575
        %6754 = vmatmul.f32.gmra.mxu0 %v2821
        %v6755 = vpop.f32.mrf.mxu0
        %v6756 = vadd.f32 0.0, %v6755
        %6757 = vmatmul.f32.gmra.mxu0 %v2823
        %v6758 = vpop.f32.mrf.mxu0
        %v6759 = vadd.f32 0.0, %v6758
        %6760 = vdwg.mxu0
        %6761 = vmatpush.xpose.msra.mxu0 0.0
        %6762 = vmatpush.xpose.msra.mxu0 0.0
        %6763 = vmatpush.xpose.msra.mxu0 0.0
        %6764 = vmatpush.xpose.msra.mxu0 0.0
        %6765 = vmatpush.xpose.msra.mxu0 0.0
        %6766 = vmatpush.xpose.msra.mxu0 0.0
        %6767 = vmatpush.xpose.msra.mxu0 0.0
        %6768 = vmatpush.xpose.msra.mxu0 0.0
        %6769 = vmatpush.xpose.msra.mxu0 0.0
        %6770 = vmatpush.xpose.msra.mxu0 0.0
        %6771 = vmatpush.xpose.msra.mxu0 0.0
        %6772 = vmatpush.xpose.msra.mxu0 0.0
        %6773 = vmatpush.xpose.msra.mxu0 0.0
        %6774 = vmatpush.xpose.msra.mxu0 0.0
        %6775 = vmatpush.xpose.msra.mxu0 0.0
        %6776 = vmatpush.xpose.msra.mxu0 %v6575
        %6777 = vmatmul.f32.gmra.mxu0 %v2853
        %v6778 = vpop.f32.mrf.mxu0
        %v6779 = vadd.f32 0.0, %v6778
        %6780 = vmatmul.f32.gmra.mxu0 %v2855
        %v6781 = vpop.f32.mrf.mxu0
        %v6782 = vadd.f32 0.0, %v6781
        %6783 = vdwg.mxu0
        %6784 = vmatpush.xpose.msra.mxu0 0.0
        %6785 = vmatpush.xpose.msra.mxu0 0.0
        %6786 = vmatpush.xpose.msra.mxu0 0.0
        %6787 = vmatpush.xpose.msra.mxu0 0.0
        %6788 = vmatpush.xpose.msra.mxu0 0.0
        %6789 = vmatpush.xpose.msra.mxu0 0.0
        %6790 = vmatpush.xpose.msra.mxu0 0.0
        %6791 = vmatpush.xpose.msra.mxu0 0.0
        %6792 = vmatpush.xpose.msra.mxu0 0.0
        %6793 = vmatpush.xpose.msra.mxu0 0.0
        %6794 = vmatpush.xpose.msra.mxu0 0.0
        %6795 = vmatpush.xpose.msra.mxu0 0.0
        %6796 = vmatpush.xpose.msra.mxu0 0.0
        %6797 = vmatpush.xpose.msra.mxu0 0.0
        %6798 = vmatpush.xpose.msra.mxu0 0.0
        %6799 = vmatpush.xpose.msra.mxu0 %v6575
        %6800 = vmatmul.f32.gmra.mxu0 %v2885
        %v6801 = vpop.f32.mrf.mxu0
        %v6802 = vadd.f32 0.0, %v6801
        %6803 = vmatmul.f32.gmra.mxu0 %v2887
        %v6804 = vpop.f32.mrf.mxu0
        %v6805 = vadd.f32 0.0, %v6804
        %6806 = vdwg.mxu0
        %6807 = vmatpush.xpose.msra.mxu0 0.0
        %6808 = vmatpush.xpose.msra.mxu0 0.0
        %6809 = vmatpush.xpose.msra.mxu0 0.0
        %6810 = vmatpush.xpose.msra.mxu0 0.0
        %6811 = vmatpush.xpose.msra.mxu0 0.0
        %6812 = vmatpush.xpose.msra.mxu0 0.0
        %6813 = vmatpush.xpose.msra.mxu0 0.0
        %6814 = vmatpush.xpose.msra.mxu0 0.0
        %6815 = vmatpush.xpose.msra.mxu0 0.0
        %6816 = vmatpush.xpose.msra.mxu0 0.0
        %6817 = vmatpush.xpose.msra.mxu0 0.0
        %6818 = vmatpush.xpose.msra.mxu0 0.0
        %6819 = vmatpush.xpose.msra.mxu0 0.0
        %6820 = vmatpush.xpose.msra.mxu0 0.0
        %6821 = vmatpush.xpose.msra.mxu0 0.0
        %6822 = vmatpush.xpose.msra.mxu0 %v6575
        %6823 = vmatmul.f32.gmra.mxu0 %v2917
        %v6824 = vpop.f32.mrf.mxu0
        %v6825 = vadd.f32 0.0, %v6824
        %6826 = vmatmul.f32.gmra.mxu0 %v2919
        %v6827 = vpop.f32.mrf.mxu0
        %v6828 = vadd.f32 0.0, %v6827
        %6829 = vdwg.mxu0
        %6830 = vmatpush.xpose.msra.mxu0 0.0
        %6831 = vmatpush.xpose.msra.mxu0 0.0
        %6832 = vmatpush.xpose.msra.mxu0 0.0
        %6833 = vmatpush.xpose.msra.mxu0 0.0
        %6834 = vmatpush.xpose.msra.mxu0 0.0
        %6835 = vmatpush.xpose.msra.mxu0 0.0
        %6836 = vmatpush.xpose.msra.mxu0 0.0
        %6837 = vmatpush.xpose.msra.mxu0 0.0
        %6838 = vmatpush.xpose.msra.mxu0 0.0
        %6839 = vmatpush.xpose.msra.mxu0 0.0
        %6840 = vmatpush.xpose.msra.mxu0 0.0
        %6841 = vmatpush.xpose.msra.mxu0 0.0
        %6842 = vmatpush.xpose.msra.mxu0 0.0
        %6843 = vmatpush.xpose.msra.mxu0 0.0
        %6844 = vmatpush.xpose.msra.mxu0 0.0
        %6845 = vmatpush.xpose.msra.mxu0 %v6575
        %6846 = vmatmul.f32.gmra.mxu0 %v2949
        %v6847 = vpop.f32.mrf.mxu0
        %v6848 = vadd.f32 0.0, %v6847
        %6849 = vmatmul.f32.gmra.mxu0 %v2951
        %v6850 = vpop.f32.mrf.mxu0
        %v6851 = vadd.f32 0.0, %v6850
        %6852 = vdwg.mxu0
        %6853 = vmatpush.xpose.msra.mxu0 0.0
        %6854 = vmatpush.xpose.msra.mxu0 0.0
        %6855 = vmatpush.xpose.msra.mxu0 0.0
        %6856 = vmatpush.xpose.msra.mxu0 0.0
        %6857 = vmatpush.xpose.msra.mxu0 0.0
        %6858 = vmatpush.xpose.msra.mxu0 0.0
        %6859 = vmatpush.xpose.msra.mxu0 0.0
        %6860 = vmatpush.xpose.msra.mxu0 0.0
        %6861 = vmatpush.xpose.msra.mxu0 0.0
        %6862 = vmatpush.xpose.msra.mxu0 0.0
        %6863 = vmatpush.xpose.msra.mxu0 0.0
        %6864 = vmatpush.xpose.msra.mxu0 0.0
        %6865 = vmatpush.xpose.msra.mxu0 0.0
        %6866 = vmatpush.xpose.msra.mxu0 0.0
        %6867 = vmatpush.xpose.msra.mxu0 0.0
        %6868 = vmatpush.xpose.msra.mxu0 %v6575
        %6869 = vmatmul.f32.gmra.mxu0 %v2981
        %v6870 = vpop.f32.mrf.mxu0
        %v6871 = vadd.f32 0.0, %v6870
        %6872 = vmatmul.f32.gmra.mxu0 %v2983
        %v6873 = vpop.f32.mrf.mxu0
        %v6874 = vadd.f32 0.0, %v6873
        %6875 = vdwg.mxu0
        %6876 = vmatpush.xpose.msra.mxu0 0.0
        %6877 = vmatpush.xpose.msra.mxu0 0.0
        %6878 = vmatpush.xpose.msra.mxu0 0.0
        %6879 = vmatpush.xpose.msra.mxu0 0.0
        %6880 = vmatpush.xpose.msra.mxu0 0.0
        %6881 = vmatpush.xpose.msra.mxu0 0.0
        %6882 = vmatpush.xpose.msra.mxu0 0.0
        %6883 = vmatpush.xpose.msra.mxu0 0.0
        %6884 = vmatpush.xpose.msra.mxu0 0.0
        %6885 = vmatpush.xpose.msra.mxu0 0.0
        %6886 = vmatpush.xpose.msra.mxu0 0.0
        %6887 = vmatpush.xpose.msra.mxu0 0.0
        %6888 = vmatpush.xpose.msra.mxu0 0.0
        %6889 = vmatpush.xpose.msra.mxu0 0.0
        %6890 = vmatpush.xpose.msra.mxu0 0.0
        %6891 = vmatpush.xpose.msra.mxu0 %v6575
        %6892 = vmatmul.f32.gmra.mxu0 %v3013
        %v6893 = vpop.f32.mrf.mxu0
        %v6894 = vadd.f32 0.0, %v6893
        %6895 = vmatmul.f32.gmra.mxu0 %v3015
        %v6896 = vpop.f32.mrf.mxu0
        %v6897 = vadd.f32 0.0, %v6896
        %6898 = vdwg.mxu0
        %6899 = vmatpush.xpose.msra.mxu0 0.0
        %6900 = vmatpush.xpose.msra.mxu0 0.0
        %6901 = vmatpush.xpose.msra.mxu0 0.0
        %6902 = vmatpush.xpose.msra.mxu0 0.0
        %6903 = vmatpush.xpose.msra.mxu0 0.0
        %6904 = vmatpush.xpose.msra.mxu0 0.0
        %6905 = vmatpush.xpose.msra.mxu0 0.0
        %6906 = vmatpush.xpose.msra.mxu0 0.0
        %6907 = vmatpush.xpose.msra.mxu0 0.0
        %6908 = vmatpush.xpose.msra.mxu0 0.0
        %6909 = vmatpush.xpose.msra.mxu0 0.0
        %6910 = vmatpush.xpose.msra.mxu0 0.0
        %6911 = vmatpush.xpose.msra.mxu0 0.0
        %6912 = vmatpush.xpose.msra.mxu0 0.0
        %6913 = vmatpush.xpose.msra.mxu0 0.0
        %6914 = vmatpush.xpose.msra.mxu0 %v6575
        %6915 = vmatmul.f32.gmra.mxu0 %v3045
        %v6916 = vpop.f32.mrf.mxu0
        %v6917 = vadd.f32 0.0, %v6916
        %6918 = vmatmul.f32.gmra.mxu0 %v3047
        %v6919 = vpop.f32.mrf.mxu0
        %v6920 = vadd.f32 0.0, %v6919
        %6921 = vdwg.mxu0
        %6922 = vmatpush.xpose.msra.mxu0 0.0
        %6923 = vmatpush.xpose.msra.mxu0 0.0
        %6924 = vmatpush.xpose.msra.mxu0 0.0
        %6925 = vmatpush.xpose.msra.mxu0 0.0
        %6926 = vmatpush.xpose.msra.mxu0 0.0
        %6927 = vmatpush.xpose.msra.mxu0 0.0
        %6928 = vmatpush.xpose.msra.mxu0 0.0
        %6929 = vmatpush.xpose.msra.mxu0 0.0
        %6930 = vmatpush.xpose.msra.mxu0 0.0
        %6931 = vmatpush.xpose.msra.mxu0 0.0
        %6932 = vmatpush.xpose.msra.mxu0 0.0
        %6933 = vmatpush.xpose.msra.mxu0 0.0
        %6934 = vmatpush.xpose.msra.mxu0 0.0
        %6935 = vmatpush.xpose.msra.mxu0 0.0
        %6936 = vmatpush.xpose.msra.mxu0 0.0
        %6937 = vmatpush.xpose.msra.mxu0 %v6575
        %6938 = vmatmul.f32.gmra.mxu0 %v3077
        %v6939 = vpop.f32.mrf.mxu0
        %v6940 = vadd.f32 0.0, %v6939
        %6941 = vmatmul.f32.gmra.mxu0 %v3079
        %v6942 = vpop.f32.mrf.mxu0
        %v6943 = vadd.f32 0.0, %v6942
        %6944 = vdwg.mxu0
        %v6945 = vadd.f32 %v6213, %v6595
        %v6946 = vadd.f32 %v6216, %v6598
        %v6947 = vadd.f32 %v6236, %v6618
        %v6948 = vadd.f32 %v6239, %v6621
        %v6949 = vadd.f32 %v6259, %v6641
        %v6950 = vadd.f32 %v6262, %v6644
        %v6951 = vadd.f32 %v6282, %v6664
        %v6952 = vadd.f32 %v6285, %v6667
        %v6953 = vadd.f32 %v6305, %v6687
        %v6954 = vadd.f32 %v6308, %v6690
        %v6955 = vadd.f32 %v6328, %v6710
        %v6956 = vadd.f32 %v6331, %v6713
        %v6957 = vadd.f32 %v6351, %v6733
        %v6958 = vadd.f32 %v6354, %v6736
        %v6959 = vadd.f32 %v6374, %v6756
        %v6960 = vadd.f32 %v6377, %v6759
        %v6961 = vadd.f32 %v6397, %v6779
        %v6962 = vadd.f32 %v6400, %v6782
        %v6963 = vadd.f32 %v6420, %v6802
        %v6964 = vadd.f32 %v6423, %v6805
        %v6965 = vadd.f32 %v6443, %v6825
        %v6966 = vadd.f32 %v6446, %v6828
        %v6967 = vadd.f32 %v6466, %v6848
        %v6968 = vadd.f32 %v6469, %v6851
        %v6969 = vadd.f32 %v6489, %v6871
        %v6970 = vadd.f32 %v6492, %v6874
        %v6971 = vadd.f32 %v6512, %v6894
        %v6972 = vadd.f32 %v6515, %v6897
        %v6973 = vadd.f32 %v6535, %v6917
        %v6974 = vadd.f32 %v6538, %v6920
        %v6975 = vadd.f32 %v6567, %v6940
        %v6976 = vadd.f32 %v6570, %v6943
        %s6977 = scalar_lea.vmem %s1, 120
        %v6978 = vld [vmem:[%s6977] sm:$0xff]
        %v6980 = vsel %vm223, %v6978, 0
        %6982 = vmatpush.xpose.msra.mxu0 0.0
        %6983 = vmatpush.xpose.msra.mxu0 0.0
        %6984 = vmatpush.xpose.msra.mxu0 0.0
        %6985 = vmatpush.xpose.msra.mxu0 0.0
        %6986 = vmatpush.xpose.msra.mxu0 0.0
        %6987 = vmatpush.xpose.msra.mxu0 0.0
        %6988 = vmatpush.xpose.msra.mxu0 0.0
        %6989 = vmatpush.xpose.msra.mxu0 0.0
        %6990 = vmatpush.xpose.msra.mxu0 0.0
        %6991 = vmatpush.xpose.msra.mxu0 0.0
        %6992 = vmatpush.xpose.msra.mxu0 0.0
        %6993 = vmatpush.xpose.msra.mxu0 0.0
        %6994 = vmatpush.xpose.msra.mxu0 0.0
        %6995 = vmatpush.xpose.msra.mxu0 0.0
        %6996 = vmatpush.xpose.msra.mxu0 0.0
        %6997 = vmatpush.xpose.msra.mxu0 %v6980
        %6998 = vmatmul.f32.gmra.mxu0 %v698
        %v6999 = vpop.f32.mrf.mxu0
        %v7000 = vadd.f32 0.0, %v6999
        %7001 = vmatmul.f32.gmra.mxu0 %v700
        %v7002 = vpop.f32.mrf.mxu0
        %v7003 = vadd.f32 0.0, %v7002
        %7004 = vdwg.mxu0
        %7005 = vmatpush.xpose.msra.mxu0 0.0
        %7006 = vmatpush.xpose.msra.mxu0 0.0
        %7007 = vmatpush.xpose.msra.mxu0 0.0
        %7008 = vmatpush.xpose.msra.mxu0 0.0
        %7009 = vmatpush.xpose.msra.mxu0 0.0
        %7010 = vmatpush.xpose.msra.mxu0 0.0
        %7011 = vmatpush.xpose.msra.mxu0 0.0
        %7012 = vmatpush.xpose.msra.mxu0 0.0
        %7013 = vmatpush.xpose.msra.mxu0 0.0
        %7014 = vmatpush.xpose.msra.mxu0 0.0
        %7015 = vmatpush.xpose.msra.mxu0 0.0
        %7016 = vmatpush.xpose.msra.mxu0 0.0
        %7017 = vmatpush.xpose.msra.mxu0 0.0
        %7018 = vmatpush.xpose.msra.mxu0 0.0
        %7019 = vmatpush.xpose.msra.mxu0 0.0
        %7020 = vmatpush.xpose.msra.mxu0 %v6980
        %7021 = vmatmul.f32.gmra.mxu0 %v734
        %v7022 = vpop.f32.mrf.mxu0
        %v7023 = vadd.f32 0.0, %v7022
        %7024 = vmatmul.f32.gmra.mxu0 %v736
        %v7025 = vpop.f32.mrf.mxu0
        %v7026 = vadd.f32 0.0, %v7025
        %7027 = vdwg.mxu0
        %7028 = vmatpush.xpose.msra.mxu0 0.0
        %7029 = vmatpush.xpose.msra.mxu0 0.0
        %7030 = vmatpush.xpose.msra.mxu0 0.0
        %7031 = vmatpush.xpose.msra.mxu0 0.0
        %7032 = vmatpush.xpose.msra.mxu0 0.0
        %7033 = vmatpush.xpose.msra.mxu0 0.0
        %7034 = vmatpush.xpose.msra.mxu0 0.0
        %7035 = vmatpush.xpose.msra.mxu0 0.0
        %7036 = vmatpush.xpose.msra.mxu0 0.0
        %7037 = vmatpush.xpose.msra.mxu0 0.0
        %7038 = vmatpush.xpose.msra.mxu0 0.0
        %7039 = vmatpush.xpose.msra.mxu0 0.0
        %7040 = vmatpush.xpose.msra.mxu0 0.0
        %7041 = vmatpush.xpose.msra.mxu0 0.0
        %7042 = vmatpush.xpose.msra.mxu0 0.0
        %7043 = vmatpush.xpose.msra.mxu0 %v6980
        %7044 = vmatmul.f32.gmra.mxu0 %v767
        %v7045 = vpop.f32.mrf.mxu0
        %v7046 = vadd.f32 0.0, %v7045
        %7047 = vmatmul.f32.gmra.mxu0 %v769
        %v7048 = vpop.f32.mrf.mxu0
        %v7049 = vadd.f32 0.0, %v7048
        %7050 = vdwg.mxu0
        %7051 = vmatpush.xpose.msra.mxu0 0.0
        %7052 = vmatpush.xpose.msra.mxu0 0.0
        %7053 = vmatpush.xpose.msra.mxu0 0.0
        %7054 = vmatpush.xpose.msra.mxu0 0.0
        %7055 = vmatpush.xpose.msra.mxu0 0.0
        %7056 = vmatpush.xpose.msra.mxu0 0.0
        %7057 = vmatpush.xpose.msra.mxu0 0.0
        %7058 = vmatpush.xpose.msra.mxu0 0.0
        %7059 = vmatpush.xpose.msra.mxu0 0.0
        %7060 = vmatpush.xpose.msra.mxu0 0.0
        %7061 = vmatpush.xpose.msra.mxu0 0.0
        %7062 = vmatpush.xpose.msra.mxu0 0.0
        %7063 = vmatpush.xpose.msra.mxu0 0.0
        %7064 = vmatpush.xpose.msra.mxu0 0.0
        %7065 = vmatpush.xpose.msra.mxu0 0.0
        %7066 = vmatpush.xpose.msra.mxu0 %v6980
        %7067 = vmatmul.f32.gmra.mxu0 %v800
        %v7068 = vpop.f32.mrf.mxu0
        %v7069 = vadd.f32 0.0, %v7068
        %7070 = vmatmul.f32.gmra.mxu0 %v802
        %v7071 = vpop.f32.mrf.mxu0
        %v7072 = vadd.f32 0.0, %v7071
        %7073 = vdwg.mxu0
        %7074 = vmatpush.xpose.msra.mxu0 0.0
        %7075 = vmatpush.xpose.msra.mxu0 0.0
        %7076 = vmatpush.xpose.msra.mxu0 0.0
        %7077 = vmatpush.xpose.msra.mxu0 0.0
        %7078 = vmatpush.xpose.msra.mxu0 0.0
        %7079 = vmatpush.xpose.msra.mxu0 0.0
        %7080 = vmatpush.xpose.msra.mxu0 0.0
        %7081 = vmatpush.xpose.msra.mxu0 0.0
        %7082 = vmatpush.xpose.msra.mxu0 0.0
        %7083 = vmatpush.xpose.msra.mxu0 0.0
        %7084 = vmatpush.xpose.msra.mxu0 0.0
        %7085 = vmatpush.xpose.msra.mxu0 0.0
        %7086 = vmatpush.xpose.msra.mxu0 0.0
        %7087 = vmatpush.xpose.msra.mxu0 0.0
        %7088 = vmatpush.xpose.msra.mxu0 0.0
        %7089 = vmatpush.xpose.msra.mxu0 %v6980
        %7090 = vmatmul.f32.gmra.mxu0 %v833
        %v7091 = vpop.f32.mrf.mxu0
        %v7092 = vadd.f32 0.0, %v7091
        %7093 = vmatmul.f32.gmra.mxu0 %v835
        %v7094 = vpop.f32.mrf.mxu0
        %v7095 = vadd.f32 0.0, %v7094
        %7096 = vdwg.mxu0
        %7097 = vmatpush.xpose.msra.mxu0 0.0
        %7098 = vmatpush.xpose.msra.mxu0 0.0
        %7099 = vmatpush.xpose.msra.mxu0 0.0
        %7100 = vmatpush.xpose.msra.mxu0 0.0
        %7101 = vmatpush.xpose.msra.mxu0 0.0
        %7102 = vmatpush.xpose.msra.mxu0 0.0
        %7103 = vmatpush.xpose.msra.mxu0 0.0
        %7104 = vmatpush.xpose.msra.mxu0 0.0
        %7105 = vmatpush.xpose.msra.mxu0 0.0
        %7106 = vmatpush.xpose.msra.mxu0 0.0
        %7107 = vmatpush.xpose.msra.mxu0 0.0
        %7108 = vmatpush.xpose.msra.mxu0 0.0
        %7109 = vmatpush.xpose.msra.mxu0 0.0
        %7110 = vmatpush.xpose.msra.mxu0 0.0
        %7111 = vmatpush.xpose.msra.mxu0 0.0
        %7112 = vmatpush.xpose.msra.mxu0 %v6980
        %7113 = vmatmul.f32.gmra.mxu0 %v866
        %v7114 = vpop.f32.mrf.mxu0
        %v7115 = vadd.f32 0.0, %v7114
        %7116 = vmatmul.f32.gmra.mxu0 %v868
        %v7117 = vpop.f32.mrf.mxu0
        %v7118 = vadd.f32 0.0, %v7117
        %7119 = vdwg.mxu0
        %7120 = vmatpush.xpose.msra.mxu0 0.0
        %7121 = vmatpush.xpose.msra.mxu0 0.0
        %7122 = vmatpush.xpose.msra.mxu0 0.0
        %7123 = vmatpush.xpose.msra.mxu0 0.0
        %7124 = vmatpush.xpose.msra.mxu0 0.0
        %7125 = vmatpush.xpose.msra.mxu0 0.0
        %7126 = vmatpush.xpose.msra.mxu0 0.0
        %7127 = vmatpush.xpose.msra.mxu0 0.0
        %7128 = vmatpush.xpose.msra.mxu0 0.0
        %7129 = vmatpush.xpose.msra.mxu0 0.0
        %7130 = vmatpush.xpose.msra.mxu0 0.0
        %7131 = vmatpush.xpose.msra.mxu0 0.0
        %7132 = vmatpush.xpose.msra.mxu0 0.0
        %7133 = vmatpush.xpose.msra.mxu0 0.0
        %7134 = vmatpush.xpose.msra.mxu0 0.0
        %7135 = vmatpush.xpose.msra.mxu0 %v6980
        %7136 = vmatmul.f32.gmra.mxu0 %v899
        %v7137 = vpop.f32.mrf.mxu0
        %v7138 = vadd.f32 0.0, %v7137
        %7139 = vmatmul.f32.gmra.mxu0 %v901
        %v7140 = vpop.f32.mrf.mxu0
        %v7141 = vadd.f32 0.0, %v7140
        %7142 = vdwg.mxu0
        %7143 = vmatpush.xpose.msra.mxu0 0.0
        %7144 = vmatpush.xpose.msra.mxu0 0.0
        %7145 = vmatpush.xpose.msra.mxu0 0.0
        %7146 = vmatpush.xpose.msra.mxu0 0.0
        %7147 = vmatpush.xpose.msra.mxu0 0.0
        %7148 = vmatpush.xpose.msra.mxu0 0.0
        %7149 = vmatpush.xpose.msra.mxu0 0.0
        %7150 = vmatpush.xpose.msra.mxu0 0.0
        %7151 = vmatpush.xpose.msra.mxu0 0.0
        %7152 = vmatpush.xpose.msra.mxu0 0.0
        %7153 = vmatpush.xpose.msra.mxu0 0.0
        %7154 = vmatpush.xpose.msra.mxu0 0.0
        %7155 = vmatpush.xpose.msra.mxu0 0.0
        %7156 = vmatpush.xpose.msra.mxu0 0.0
        %7157 = vmatpush.xpose.msra.mxu0 0.0
        %7158 = vmatpush.xpose.msra.mxu0 %v6980
        %7159 = vmatmul.f32.gmra.mxu0 %v932
        %v7160 = vpop.f32.mrf.mxu0
        %v7161 = vadd.f32 0.0, %v7160
        %7162 = vmatmul.f32.gmra.mxu0 %v934
        %v7163 = vpop.f32.mrf.mxu0
        %v7164 = vadd.f32 0.0, %v7163
        %7165 = vdwg.mxu0
        %7166 = vmatpush.xpose.msra.mxu0 0.0
        %7167 = vmatpush.xpose.msra.mxu0 0.0
        %7168 = vmatpush.xpose.msra.mxu0 0.0
        %7169 = vmatpush.xpose.msra.mxu0 0.0
        %7170 = vmatpush.xpose.msra.mxu0 0.0
        %7171 = vmatpush.xpose.msra.mxu0 0.0
        %7172 = vmatpush.xpose.msra.mxu0 0.0
        %7173 = vmatpush.xpose.msra.mxu0 0.0
        %7174 = vmatpush.xpose.msra.mxu0 0.0
        %7175 = vmatpush.xpose.msra.mxu0 0.0
        %7176 = vmatpush.xpose.msra.mxu0 0.0
        %7177 = vmatpush.xpose.msra.mxu0 0.0
        %7178 = vmatpush.xpose.msra.mxu0 0.0
        %7179 = vmatpush.xpose.msra.mxu0 0.0
        %7180 = vmatpush.xpose.msra.mxu0 0.0
        %7181 = vmatpush.xpose.msra.mxu0 %v6980
        %7182 = vmatmul.f32.gmra.mxu0 %v965
        %v7183 = vpop.f32.mrf.mxu0
        %v7184 = vadd.f32 0.0, %v7183
        %7185 = vmatmul.f32.gmra.mxu0 %v967
        %v7186 = vpop.f32.mrf.mxu0
        %v7187 = vadd.f32 0.0, %v7186
        %7188 = vdwg.mxu0
        %7189 = vmatpush.xpose.msra.mxu0 0.0
        %7190 = vmatpush.xpose.msra.mxu0 0.0
        %7191 = vmatpush.xpose.msra.mxu0 0.0
        %7192 = vmatpush.xpose.msra.mxu0 0.0
        %7193 = vmatpush.xpose.msra.mxu0 0.0
        %7194 = vmatpush.xpose.msra.mxu0 0.0
        %7195 = vmatpush.xpose.msra.mxu0 0.0
        %7196 = vmatpush.xpose.msra.mxu0 0.0
        %7197 = vmatpush.xpose.msra.mxu0 0.0
        %7198 = vmatpush.xpose.msra.mxu0 0.0
        %7199 = vmatpush.xpose.msra.mxu0 0.0
        %7200 = vmatpush.xpose.msra.mxu0 0.0
        %7201 = vmatpush.xpose.msra.mxu0 0.0
        %7202 = vmatpush.xpose.msra.mxu0 0.0
        %7203 = vmatpush.xpose.msra.mxu0 0.0
        %7204 = vmatpush.xpose.msra.mxu0 %v6980
        %7205 = vmatmul.f32.gmra.mxu0 %v998
        %v7206 = vpop.f32.mrf.mxu0
        %v7207 = vadd.f32 0.0, %v7206
        %7208 = vmatmul.f32.gmra.mxu0 %v1000
        %v7209 = vpop.f32.mrf.mxu0
        %v7210 = vadd.f32 0.0, %v7209
        %7211 = vdwg.mxu0
        %7212 = vmatpush.xpose.msra.mxu0 0.0
        %7213 = vmatpush.xpose.msra.mxu0 0.0
        %7214 = vmatpush.xpose.msra.mxu0 0.0
        %7215 = vmatpush.xpose.msra.mxu0 0.0
        %7216 = vmatpush.xpose.msra.mxu0 0.0
        %7217 = vmatpush.xpose.msra.mxu0 0.0
        %7218 = vmatpush.xpose.msra.mxu0 0.0
        %7219 = vmatpush.xpose.msra.mxu0 0.0
        %7220 = vmatpush.xpose.msra.mxu0 0.0
        %7221 = vmatpush.xpose.msra.mxu0 0.0
        %7222 = vmatpush.xpose.msra.mxu0 0.0
        %7223 = vmatpush.xpose.msra.mxu0 0.0
        %7224 = vmatpush.xpose.msra.mxu0 0.0
        %7225 = vmatpush.xpose.msra.mxu0 0.0
        %7226 = vmatpush.xpose.msra.mxu0 0.0
        %7227 = vmatpush.xpose.msra.mxu0 %v6980
        %7228 = vmatmul.f32.gmra.mxu0 %v1031
        %v7229 = vpop.f32.mrf.mxu0
        %v7230 = vadd.f32 0.0, %v7229
        %7231 = vmatmul.f32.gmra.mxu0 %v1033
        %v7232 = vpop.f32.mrf.mxu0
        %v7233 = vadd.f32 0.0, %v7232
        %7234 = vdwg.mxu0
        %7235 = vmatpush.xpose.msra.mxu0 0.0
        %7236 = vmatpush.xpose.msra.mxu0 0.0
        %7237 = vmatpush.xpose.msra.mxu0 0.0
        %7238 = vmatpush.xpose.msra.mxu0 0.0
        %7239 = vmatpush.xpose.msra.mxu0 0.0
        %7240 = vmatpush.xpose.msra.mxu0 0.0
        %7241 = vmatpush.xpose.msra.mxu0 0.0
        %7242 = vmatpush.xpose.msra.mxu0 0.0
        %7243 = vmatpush.xpose.msra.mxu0 0.0
        %7244 = vmatpush.xpose.msra.mxu0 0.0
        %7245 = vmatpush.xpose.msra.mxu0 0.0
        %7246 = vmatpush.xpose.msra.mxu0 0.0
        %7247 = vmatpush.xpose.msra.mxu0 0.0
        %7248 = vmatpush.xpose.msra.mxu0 0.0
        %7249 = vmatpush.xpose.msra.mxu0 0.0
        %7250 = vmatpush.xpose.msra.mxu0 %v6980
        %7251 = vmatmul.f32.gmra.mxu0 %v1064
        %v7252 = vpop.f32.mrf.mxu0
        %v7253 = vadd.f32 0.0, %v7252
        %7254 = vmatmul.f32.gmra.mxu0 %v1066
        %v7255 = vpop.f32.mrf.mxu0
        %v7256 = vadd.f32 0.0, %v7255
        %7257 = vdwg.mxu0
        %7258 = vmatpush.xpose.msra.mxu0 0.0
        %7259 = vmatpush.xpose.msra.mxu0 0.0
        %7260 = vmatpush.xpose.msra.mxu0 0.0
        %7261 = vmatpush.xpose.msra.mxu0 0.0
        %7262 = vmatpush.xpose.msra.mxu0 0.0
        %7263 = vmatpush.xpose.msra.mxu0 0.0
        %7264 = vmatpush.xpose.msra.mxu0 0.0
        %7265 = vmatpush.xpose.msra.mxu0 0.0
        %7266 = vmatpush.xpose.msra.mxu0 0.0
        %7267 = vmatpush.xpose.msra.mxu0 0.0
        %7268 = vmatpush.xpose.msra.mxu0 0.0
        %7269 = vmatpush.xpose.msra.mxu0 0.0
        %7270 = vmatpush.xpose.msra.mxu0 0.0
        %7271 = vmatpush.xpose.msra.mxu0 0.0
        %7272 = vmatpush.xpose.msra.mxu0 0.0
        %7273 = vmatpush.xpose.msra.mxu0 %v6980
        %7274 = vmatmul.f32.gmra.mxu0 %v1097
        %v7275 = vpop.f32.mrf.mxu0
        %v7276 = vadd.f32 0.0, %v7275
        %7277 = vmatmul.f32.gmra.mxu0 %v1099
        %v7278 = vpop.f32.mrf.mxu0
        %v7279 = vadd.f32 0.0, %v7278
        %7280 = vdwg.mxu0
        %7281 = vmatpush.xpose.msra.mxu0 0.0
        %7282 = vmatpush.xpose.msra.mxu0 0.0
        %7283 = vmatpush.xpose.msra.mxu0 0.0
        %7284 = vmatpush.xpose.msra.mxu0 0.0
        %7285 = vmatpush.xpose.msra.mxu0 0.0
        %7286 = vmatpush.xpose.msra.mxu0 0.0
        %7287 = vmatpush.xpose.msra.mxu0 0.0
        %7288 = vmatpush.xpose.msra.mxu0 0.0
        %7289 = vmatpush.xpose.msra.mxu0 0.0
        %7290 = vmatpush.xpose.msra.mxu0 0.0
        %7291 = vmatpush.xpose.msra.mxu0 0.0
        %7292 = vmatpush.xpose.msra.mxu0 0.0
        %7293 = vmatpush.xpose.msra.mxu0 0.0
        %7294 = vmatpush.xpose.msra.mxu0 0.0
        %7295 = vmatpush.xpose.msra.mxu0 0.0
        %7296 = vmatpush.xpose.msra.mxu0 %v6980
        %7297 = vmatmul.f32.gmra.mxu0 %v1130
        %v7298 = vpop.f32.mrf.mxu0
        %v7299 = vadd.f32 0.0, %v7298
        %7300 = vmatmul.f32.gmra.mxu0 %v1132
        %v7301 = vpop.f32.mrf.mxu0
        %v7302 = vadd.f32 0.0, %v7301
        %7303 = vdwg.mxu0
        %7304 = vmatpush.xpose.msra.mxu0 0.0
        %7305 = vmatpush.xpose.msra.mxu0 0.0
        %7306 = vmatpush.xpose.msra.mxu0 0.0
        %7307 = vmatpush.xpose.msra.mxu0 0.0
        %7308 = vmatpush.xpose.msra.mxu0 0.0
        %7309 = vmatpush.xpose.msra.mxu0 0.0
        %7310 = vmatpush.xpose.msra.mxu0 0.0
        %7311 = vmatpush.xpose.msra.mxu0 0.0
        %7312 = vmatpush.xpose.msra.mxu0 0.0
        %7313 = vmatpush.xpose.msra.mxu0 0.0
        %7314 = vmatpush.xpose.msra.mxu0 0.0
        %7315 = vmatpush.xpose.msra.mxu0 0.0
        %7316 = vmatpush.xpose.msra.mxu0 0.0
        %7317 = vmatpush.xpose.msra.mxu0 0.0
        %7318 = vmatpush.xpose.msra.mxu0 0.0
        %7319 = vmatpush.xpose.msra.mxu0 %v6980
        %7320 = vmatmul.f32.gmra.mxu0 %v1163
        %v7321 = vpop.f32.mrf.mxu0
        %v7322 = vadd.f32 0.0, %v7321
        %7323 = vmatmul.f32.gmra.mxu0 %v1165
        %v7324 = vpop.f32.mrf.mxu0
        %v7325 = vadd.f32 0.0, %v7324
        %7326 = vdwg.mxu0
        %7327 = vmatpush.xpose.msra.mxu0 0.0
        %7328 = vmatpush.xpose.msra.mxu0 0.0
        %7329 = vmatpush.xpose.msra.mxu0 0.0
        %7330 = vmatpush.xpose.msra.mxu0 0.0
        %7331 = vmatpush.xpose.msra.mxu0 0.0
        %7332 = vmatpush.xpose.msra.mxu0 0.0
        %7333 = vmatpush.xpose.msra.mxu0 0.0
        %7334 = vmatpush.xpose.msra.mxu0 0.0
        %7335 = vmatpush.xpose.msra.mxu0 0.0
        %7336 = vmatpush.xpose.msra.mxu0 0.0
        %7337 = vmatpush.xpose.msra.mxu0 0.0
        %7338 = vmatpush.xpose.msra.mxu0 0.0
        %7339 = vmatpush.xpose.msra.mxu0 0.0
        %7340 = vmatpush.xpose.msra.mxu0 0.0
        %7341 = vmatpush.xpose.msra.mxu0 0.0
        %7342 = vmatpush.xpose.msra.mxu0 %v6980
        %7343 = vmatmul.f32.gmra.mxu0 %v1196
        %v7344 = vpop.f32.mrf.mxu0
        %v7345 = vadd.f32 0.0, %v7344
        %7346 = vmatmul.f32.gmra.mxu0 %v1198
        %v7347 = vpop.f32.mrf.mxu0
        %v7348 = vadd.f32 0.0, %v7347
        %7349 = vdwg.mxu0
        %v7350 = vadd.f32 %v6945, %v7000
        %v7351 = vadd.f32 %v6946, %v7003
        %v7352 = vadd.f32 %v6947, %v7023
        %v7353 = vadd.f32 %v6948, %v7026
        %v7354 = vadd.f32 %v6949, %v7046
        %v7355 = vadd.f32 %v6950, %v7049
        %v7356 = vadd.f32 %v6951, %v7069
        %v7357 = vadd.f32 %v6952, %v7072
        %v7358 = vadd.f32 %v6953, %v7092
        %v7359 = vadd.f32 %v6954, %v7095
        %v7360 = vadd.f32 %v6955, %v7115
        %v7361 = vadd.f32 %v6956, %v7118
        %v7362 = vadd.f32 %v6957, %v7138
        %v7363 = vadd.f32 %v6958, %v7141
        %v7364 = vadd.f32 %v6959, %v7161
        %v7365 = vadd.f32 %v6960, %v7164
        %v7366 = vadd.f32 %v6961, %v7184
        %v7367 = vadd.f32 %v6962, %v7187
        %v7368 = vadd.f32 %v6963, %v7207
        %v7369 = vadd.f32 %v6964, %v7210
        %v7370 = vadd.f32 %v6965, %v7230
        %v7371 = vadd.f32 %v6966, %v7233
        %v7372 = vadd.f32 %v6967, %v7253
        %v7373 = vadd.f32 %v6968, %v7256
        %v7374 = vadd.f32 %v6969, %v7276
        %v7375 = vadd.f32 %v6970, %v7279
        %v7376 = vadd.f32 %v6971, %v7299
        %v7377 = vadd.f32 %v6972, %v7302
        %v7378 = vadd.f32 %v6973, %v7322
        %v7379 = vadd.f32 %v6974, %v7325
        %v7380 = vadd.f32 %v6975, %v7345
        %v7381 = vadd.f32 %v6976, %v7348
        %v7382 = vadd.f32 %v7350, %v2050
        %v7383 = vadd.f32 %v7351, %v2050
        %v7384 = vadd.f32 %v7352, %v2050
        %v7385 = vadd.f32 %v7353, %v2050
        %v7386 = vadd.f32 %v7354, %v2050
        %v7387 = vadd.f32 %v7355, %v2050
        %v7388 = vadd.f32 %v7356, %v2050
        %v7389 = vadd.f32 %v7357, %v2050
        %v7390 = vadd.f32 %v7358, %v2050
        %v7391 = vadd.f32 %v7359, %v2050
        %v7392 = vadd.f32 %v7360, %v2050
        %v7393 = vadd.f32 %v7361, %v2050
        %v7394 = vadd.f32 %v7362, %v2050
        %v7395 = vadd.f32 %v7363, %v2050
        %v7396 = vadd.f32 %v7364, %v2050
        %v7397 = vadd.f32 %v7365, %v2050
        %v7398 = vadd.f32 %v7366, %v2050
        %v7399 = vadd.f32 %v7367, %v2050
        %v7400 = vadd.f32 %v7368, %v2050
        %v7401 = vadd.f32 %v7369, %v2050
        %v7402 = vadd.f32 %v7370, %v2050
        %v7403 = vadd.f32 %v7371, %v2050
        %v7404 = vadd.f32 %v7372, %v2050
        %v7405 = vadd.f32 %v7373, %v2050
        %v7406 = vadd.f32 %v7374, %v2050
        %v7407 = vadd.f32 %v7375, %v2050
        %v7408 = vadd.f32 %v7376, %v2050
        %v7409 = vadd.f32 %v7377, %v2050
        %v7410 = vadd.f32 %v7378, %v2050
        %v7411 = vadd.f32 %v7379, %v2050
        %v7412 = vadd.f32 %v7380, %v2050
        %v7413 = vadd.f32 %v7381, %v2050
        %vm7414 = vcmp.ge.f32.partialorder %v7382, 0.0
        %vm7415 = vcmp.ge.f32.partialorder %v7383, 0.0
        %vm7416 = vcmp.ge.f32.partialorder %v7384, 0.0
        %vm7417 = vcmp.ge.f32.partialorder %v7385, 0.0
        %vm7418 = vcmp.ge.f32.partialorder %v7386, 0.0
        %vm7419 = vcmp.ge.f32.partialorder %v7387, 0.0
        %vm7420 = vcmp.ge.f32.partialorder %v7388, 0.0
        %vm7421 = vcmp.ge.f32.partialorder %v7389, 0.0
        %vm7422 = vcmp.ge.f32.partialorder %v7390, 0.0
        %vm7423 = vcmp.ge.f32.partialorder %v7391, 0.0
        %vm7424 = vcmp.ge.f32.partialorder %v7392, 0.0
        %vm7425 = vcmp.ge.f32.partialorder %v7393, 0.0
        %vm7426 = vcmp.ge.f32.partialorder %v7394, 0.0
        %vm7427 = vcmp.ge.f32.partialorder %v7395, 0.0
        %vm7428 = vcmp.ge.f32.partialorder %v7396, 0.0
        %vm7429 = vcmp.ge.f32.partialorder %v7397, 0.0
        %vm7430 = vcmp.ge.f32.partialorder %v7398, 0.0
        %vm7431 = vcmp.ge.f32.partialorder %v7399, 0.0
        %vm7432 = vcmp.ge.f32.partialorder %v7400, 0.0
        %vm7433 = vcmp.ge.f32.partialorder %v7401, 0.0
        %vm7434 = vcmp.ge.f32.partialorder %v7402, 0.0
        %vm7435 = vcmp.ge.f32.partialorder %v7403, 0.0
        %vm7436 = vcmp.ge.f32.partialorder %v7404, 0.0
        %vm7437 = vcmp.ge.f32.partialorder %v7405, 0.0
        %vm7438 = vcmp.ge.f32.partialorder %v7406, 0.0
        %vm7439 = vcmp.ge.f32.partialorder %v7407, 0.0
        %vm7440 = vcmp.ge.f32.partialorder %v7408, 0.0
        %vm7441 = vcmp.ge.f32.partialorder %v7409, 0.0
        %vm7442 = vcmp.ge.f32.partialorder %v7410, 0.0
        %vm7443 = vcmp.ge.f32.partialorder %v7411, 0.0
        %vm7444 = vcmp.ge.f32.partialorder %v7412, 0.0
        %vm7445 = vcmp.ge.f32.partialorder %v7413, 0.0
        %v7446 = vmul.f32 %v7382, 0.01
        %v7447 = vmul.f32 %v7383, 0.01
        %v7448 = vmul.f32 %v7384, 0.01
        %v7449 = vmul.f32 %v7385, 0.01
        %v7450 = vmul.f32 %v7386, 0.01
        %v7451 = vmul.f32 %v7387, 0.01
        %v7452 = vmul.f32 %v7388, 0.01
        %v7453 = vmul.f32 %v7389, 0.01
        %v7454 = vmul.f32 %v7390, 0.01
        %v7455 = vmul.f32 %v7391, 0.01
        %v7456 = vmul.f32 %v7392, 0.01
        %v7457 = vmul.f32 %v7393, 0.01
        %v7458 = vmul.f32 %v7394, 0.01
        %v7459 = vmul.f32 %v7395, 0.01
        %v7460 = vmul.f32 %v7396, 0.01
        %v7461 = vmul.f32 %v7397, 0.01
        %v7462 = vmul.f32 %v7398, 0.01
        %v7463 = vmul.f32 %v7399, 0.01
        %v7464 = vmul.f32 %v7400, 0.01
        %v7465 = vmul.f32 %v7401, 0.01
        %v7466 = vmul.f32 %v7402, 0.01
        %v7467 = vmul.f32 %v7403, 0.01
        %v7468 = vmul.f32 %v7404, 0.01
        %v7469 = vmul.f32 %v7405, 0.01
        %v7470 = vmul.f32 %v7406, 0.01
        %v7471 = vmul.f32 %v7407, 0.01
        %v7472 = vmul.f32 %v7408, 0.01
        %v7473 = vmul.f32 %v7409, 0.01
        %v7474 = vmul.f32 %v7410, 0.01
        %v7475 = vmul.f32 %v7411, 0.01
        %v7476 = vmul.f32 %v7412, 0.01
        %v7477 = vmul.f32 %v7413, 0.01
        %v7478 = vsel %vm7414, %v7382, %v7446
        %v7479 = vsel %vm7415, %v7383, %v7447
        %v7480 = vsel %vm7416, %v7384, %v7448
        %v7481 = vsel %vm7417, %v7385, %v7449
        %v7482 = vsel %vm7418, %v7386, %v7450
        %v7483 = vsel %vm7419, %v7387, %v7451
        %v7484 = vsel %vm7420, %v7388, %v7452
        %v7485 = vsel %vm7421, %v7389, %v7453
        %v7486 = vsel %vm7422, %v7390, %v7454
        %v7487 = vsel %vm7423, %v7391, %v7455
        %v7488 = vsel %vm7424, %v7392, %v7456
        %v7489 = vsel %vm7425, %v7393, %v7457
        %v7490 = vsel %vm7426, %v7394, %v7458
        %v7491 = vsel %vm7427, %v7395, %v7459
        %v7492 = vsel %vm7428, %v7396, %v7460
        %v7493 = vsel %vm7429, %v7397, %v7461
        %v7494 = vsel %vm7430, %v7398, %v7462
        %v7495 = vsel %vm7431, %v7399, %v7463
        %v7496 = vsel %vm7432, %v7400, %v7464
        %v7497 = vsel %vm7433, %v7401, %v7465
        %v7498 = vsel %vm7434, %v7402, %v7466
        %v7499 = vsel %vm7435, %v7403, %v7467
        %v7500 = vsel %vm7436, %v7404, %v7468
        %v7501 = vsel %vm7437, %v7405, %v7469
        %v7502 = vsel %vm7438, %v7406, %v7470
        %v7503 = vsel %vm7439, %v7407, %v7471
        %v7504 = vsel %vm7440, %v7408, %v7472
        %v7505 = vsel %vm7441, %v7409, %v7473
        %v7506 = vsel %vm7442, %v7410, %v7474
        %v7507 = vsel %vm7443, %v7411, %v7475
        %v7508 = vsel %vm7444, %v7412, %v7476
        %v7509 = vsel %vm7445, %v7413, %v7477
        %s7510 = scalar_lea.vmem %s159, 768 [#allocation2]
        %7511 = vst.msk [vmem:[%s7510] sm:$0xff] %vm2180, %v7478
        %7512 = vst.msk [vmem:[%s7510 + $0x8] sm:$0xff] %vm2180, %v7479
        %7513 = vst.msk [vmem:[%s7510 + $0x10] sm:$0xff] %vm2180, %v7480
        %7514 = vst.msk [vmem:[%s7510 + $0x18] sm:$0xff] %vm2180, %v7481
        %7515 = vst.msk [vmem:[%s7510 + $0x20] sm:$0xff] %vm2180, %v7482
        %7516 = vst.msk [vmem:[%s7510 + $0x28] sm:$0xff] %vm2180, %v7483
        %7517 = vst.msk [vmem:[%s7510 + $0x30] sm:$0xff] %vm2180, %v7484
        %7518 = vst.msk [vmem:[%s7510 + $0x38] sm:$0xff] %vm2180, %v7485
        %7519 = vst.msk [vmem:[%s7510 + $0x40] sm:$0xff] %vm2180, %v7486
        %7520 = vst.msk [vmem:[%s7510 + $0x48] sm:$0xff] %vm2180, %v7487
        %7521 = vst.msk [vmem:[%s7510 + $0x50] sm:$0xff] %vm2180, %v7488
        %7522 = vst.msk [vmem:[%s7510 + $0x58] sm:$0xff] %vm2180, %v7489
        %7523 = vst.msk [vmem:[%s7510 + $0x60] sm:$0xff] %vm2180, %v7490
        %7524 = vst.msk [vmem:[%s7510 + $0x68] sm:$0xff] %vm2180, %v7491
        %7525 = vst.msk [vmem:[%s7510 + $0x70] sm:$0xff] %vm2180, %v7492
        %7526 = vst.msk [vmem:[%s7510 + $0x78] sm:$0xff] %vm2180, %v7493
        %7527 = vst.msk [vmem:[%s7510 + $0x80] sm:$0xff] %vm2180, %v7494
        %7528 = vst.msk [vmem:[%s7510 + $0x88] sm:$0xff] %vm2180, %v7495
        %7529 = vst.msk [vmem:[%s7510 + $0x90] sm:$0xff] %vm2180, %v7496
        %7530 = vst.msk [vmem:[%s7510 + $0x98] sm:$0xff] %vm2180, %v7497
        %7531 = vst.msk [vmem:[%s7510 + $0xa0] sm:$0xff] %vm2180, %v7498
        %7532 = vst.msk [vmem:[%s7510 + $0xa8] sm:$0xff] %vm2180, %v7499
        %7533 = vst.msk [vmem:[%s7510 + $0xb0] sm:$0xff] %vm2180, %v7500
        %7534 = vst.msk [vmem:[%s7510 + $0xb8] sm:$0xff] %vm2180, %v7501
        %7535 = vst.msk [vmem:[%s7510 + $0xc0] sm:$0xff] %vm2180, %v7502
        %7536 = vst.msk [vmem:[%s7510 + $0xc8] sm:$0xff] %vm2180, %v7503
        %7537 = vst.msk [vmem:[%s7510 + $0xd0] sm:$0xff] %vm2180, %v7504
        %7538 = vst.msk [vmem:[%s7510 + $0xd8] sm:$0xff] %vm2180, %v7505
        %7539 = vst.msk [vmem:[%s7510 + $0xe0] sm:$0xff] %vm2180, %v7506
        %7540 = vst.msk [vmem:[%s7510 + $0xe8] sm:$0xff] %vm2180, %v7507
        %7541 = vst.msk [vmem:[%s7510 + $0xf0] sm:$0xff] %vm2180, %v7508
        %7542 = vst.msk [vmem:[%s7510 + $0xf8] sm:$0xff] %vm2180, %v7509
        %s7543 = sand.u32 %s90, 1
        %s7544 = sand.u32 %s90, 1
        %s7545 = smul.addr %s7544, 1024
        %s7546 = scalar_lea.vmem [#allocation2], %s7545
        // Predicated region
        $region33: #{tpu_custom_call.1} parent=31 // pred_check
          %p7547 = pneg %p100
        $region34: #{tpu_custom_call.1} parent=31 // pred_check_branch
          %7549 = sbr.rel (%p7547) target = $region36
        $region35: #{tpu_custom_call.1} parent=31 // pred_region
          %s7550 = smul.addr %s14, 32
          %s7551 = smul.addr %s7550, 8
          %s7552 = scalar_lea.vmem %s3, %s7551
          // Predicated region
          $region37: #{tpu_custom_call.1} parent=35 // pred_check
            _
          $region38: #{tpu_custom_call.1} parent=35 // pred_check_branch
            %7554 = sbr.rel (0) target = $region40
          $region39: #{tpu_custom_call.1} parent=35 // pred_region
            // Predicated region
            $region41: #{tpu_custom_call.1} parent=39 // pred_check
              _
            $region42: #{tpu_custom_call.1} parent=39 // pred_check_branch
              %7556 = sbr.rel (0) target = $region44
            $region43: #{tpu_custom_call.1} parent=39 // pred_region
              // Predicated region
              $region56: #{tpu_custom_call.1} parent=43 // pred_check
                _
              $region57: #{tpu_custom_call.1} parent=43 // pred_check_branch
                %7826 = sbr.rel (0) target = $region59
              $region58: #{tpu_custom_call.1} parent=43 // pred_region
                loop: start=0, step=1, limit=1
                $region60: #{tpu_custom_call.1} parent=58 // loop_pre_header
                  _
                $region61: #{tpu_custom_call.1} parent=58 // loop_header
                  %s7828 = sphi 0, %s7832
                  %p7829 = scmp.ge.s32.totalorder %s7828, 1
                  %s7833 = sphi %s7546, %s7546
                  %s7834 = sphi %s7552, %s7552
                $region62: #{tpu_custom_call.1} parent=58 // loop_header_branch
                  %7831 = sbr.rel (%p7829) target = $region66
                $region63: #{tpu_custom_call.1} parent=58 // loop_body
                  %v7835 = vld [vmem:[%s7833] sm:$0xff]
                  %7836 = vst [vmem:[%s7834] sm:$0xff] %v7835
                  %v7837 = vld [vmem:[%s7833 + $0x8] sm:$0xff]
                  %7838 = vst [vmem:[%s7834 + $0x8] sm:$0xff] %v7837
                  %v7839 = vld [vmem:[%s7833 + $0x10] sm:$0xff]
                  %7840 = vst [vmem:[%s7834 + $0x10] sm:$0xff] %v7839
                  %v7841 = vld [vmem:[%s7833 + $0x18] sm:$0xff]
                  %7842 = vst [vmem:[%s7834 + $0x18] sm:$0xff] %v7841
                  %v7843 = vld [vmem:[%s7833 + $0x20] sm:$0xff]
                  %7844 = vst [vmem:[%s7834 + $0x20] sm:$0xff] %v7843
                  %v7845 = vld [vmem:[%s7833 + $0x28] sm:$0xff]
                  %7846 = vst [vmem:[%s7834 + $0x28] sm:$0xff] %v7845
                  %v7847 = vld [vmem:[%s7833 + $0x30] sm:$0xff]
                  %7848 = vst [vmem:[%s7834 + $0x30] sm:$0xff] %v7847
                  %v7849 = vld [vmem:[%s7833 + $0x38] sm:$0xff]
                  %7850 = vst [vmem:[%s7834 + $0x38] sm:$0xff] %v7849
                  %v7851 = vld [vmem:[%s7833 + $0x40] sm:$0xff]
                  %7852 = vst [vmem:[%s7834 + $0x40] sm:$0xff] %v7851
                  %v7853 = vld [vmem:[%s7833 + $0x48] sm:$0xff]
                  %7854 = vst [vmem:[%s7834 + $0x48] sm:$0xff] %v7853
                  %v7855 = vld [vmem:[%s7833 + $0x50] sm:$0xff]
                  %7856 = vst [vmem:[%s7834 + $0x50] sm:$0xff] %v7855
                  %v7857 = vld [vmem:[%s7833 + $0x58] sm:$0xff]
                  %7858 = vst [vmem:[%s7834 + $0x58] sm:$0xff] %v7857
                  %v7859 = vld [vmem:[%s7833 + $0x60] sm:$0xff]
                  %7860 = vst [vmem:[%s7834 + $0x60] sm:$0xff] %v7859
                  %v7861 = vld [vmem:[%s7833 + $0x68] sm:$0xff]
                  %7862 = vst [vmem:[%s7834 + $0x68] sm:$0xff] %v7861
                  %v7863 = vld [vmem:[%s7833 + $0x70] sm:$0xff]
                  %7864 = vst [vmem:[%s7834 + $0x70] sm:$0xff] %v7863
                  %v7865 = vld [vmem:[%s7833 + $0x78] sm:$0xff]
                  %7866 = vst [vmem:[%s7834 + $0x78] sm:$0xff] %v7865
                  %v7867 = vld [vmem:[%s7833 + $0x80] sm:$0xff]
                  %7868 = vst [vmem:[%s7834 + $0x80] sm:$0xff] %v7867
                  %v7869 = vld [vmem:[%s7833 + $0x88] sm:$0xff]
                  %7870 = vst [vmem:[%s7834 + $0x88] sm:$0xff] %v7869
                  %v7871 = vld [vmem:[%s7833 + $0x90] sm:$0xff]
                  %7872 = vst [vmem:[%s7834 + $0x90] sm:$0xff] %v7871
                  %v7873 = vld [vmem:[%s7833 + $0x98] sm:$0xff]
                  %7874 = vst [vmem:[%s7834 + $0x98] sm:$0xff] %v7873
                  %v7875 = vld [vmem:[%s7833 + $0xa0] sm:$0xff]
                  %7876 = vst [vmem:[%s7834 + $0xa0] sm:$0xff] %v7875
                  %v7877 = vld [vmem:[%s7833 + $0xa8] sm:$0xff]
                  %7878 = vst [vmem:[%s7834 + $0xa8] sm:$0xff] %v7877
                  %v7879 = vld [vmem:[%s7833 + $0xb0] sm:$0xff]
                  %7880 = vst [vmem:[%s7834 + $0xb0] sm:$0xff] %v7879
                  %v7881 = vld [vmem:[%s7833 + $0xb8] sm:$0xff]
                  %7882 = vst [vmem:[%s7834 + $0xb8] sm:$0xff] %v7881
                  %v7883 = vld [vmem:[%s7833 + $0xc0] sm:$0xff]
                  %7884 = vst [vmem:[%s7834 + $0xc0] sm:$0xff] %v7883
                  %v7885 = vld [vmem:[%s7833 + $0xc8] sm:$0xff]
                  %7886 = vst [vmem:[%s7834 + $0xc8] sm:$0xff] %v7885
                  %v7887 = vld [vmem:[%s7833 + $0xd0] sm:$0xff]
                  %7888 = vst [vmem:[%s7834 + $0xd0] sm:$0xff] %v7887
                  %v7889 = vld [vmem:[%s7833 + $0xd8] sm:$0xff]
                  %7890 = vst [vmem:[%s7834 + $0xd8] sm:$0xff] %v7889
                  %v7891 = vld [vmem:[%s7833 + $0xe0] sm:$0xff]
                  %7892 = vst [vmem:[%s7834 + $0xe0] sm:$0xff] %v7891
                  %v7893 = vld [vmem:[%s7833 + $0xe8] sm:$0xff]
                  %7894 = vst [vmem:[%s7834 + $0xe8] sm:$0xff] %v7893
                  %v7895 = vld [vmem:[%s7833 + $0xf0] sm:$0xff]
                  %7896 = vst [vmem:[%s7834 + $0xf0] sm:$0xff] %v7895
                  %v7897 = vld [vmem:[%s7833 + $0xf8] sm:$0xff]
                  %7898 = vst [vmem:[%s7834 + $0xf8] sm:$0xff] %v7897
                  %v7899 = vld [vmem:[%s7833 + $0x100] sm:$0xff]
                  %7900 = vst [vmem:[%s7834 + $0x200] sm:$0xff] %v7899
                  %v7901 = vld [vmem:[%s7833 + $0x108] sm:$0xff]
                  %7902 = vst [vmem:[%s7834 + $0x208] sm:$0xff] %v7901
                  %v7903 = vld [vmem:[%s7833 + $0x110] sm:$0xff]
                  %7904 = vst [vmem:[%s7834 + $0x210] sm:$0xff] %v7903
                  %v7905 = vld [vmem:[%s7833 + $0x118] sm:$0xff]
                  %7906 = vst [vmem:[%s7834 + $0x218] sm:$0xff] %v7905
                  %v7907 = vld [vmem:[%s7833 + $0x120] sm:$0xff]
                  %7908 = vst [vmem:[%s7834 + $0x220] sm:$0xff] %v7907
                  %v7909 = vld [vmem:[%s7833 + $0x128] sm:$0xff]
                  %7910 = vst [vmem:[%s7834 + $0x228] sm:$0xff] %v7909
                  %v7911 = vld [vmem:[%s7833 + $0x130] sm:$0xff]
                  %7912 = vst [vmem:[%s7834 + $0x230] sm:$0xff] %v7911
                  %v7913 = vld [vmem:[%s7833 + $0x138] sm:$0xff]
                  %7914 = vst [vmem:[%s7834 + $0x238] sm:$0xff] %v7913
                  %v7915 = vld [vmem:[%s7833 + $0x140] sm:$0xff]
                  %7916 = vst [vmem:[%s7834 + $0x240] sm:$0xff] %v7915
                  %v7917 = vld [vmem:[%s7833 + $0x148] sm:$0xff]
                  %7918 = vst [vmem:[%s7834 + $0x248] sm:$0xff] %v7917
                  %v7919 = vld [vmem:[%s7833 + $0x150] sm:$0xff]
                  %7920 = vst [vmem:[%s7834 + $0x250] sm:$0xff] %v7919
                  %v7921 = vld [vmem:[%s7833 + $0x158] sm:$0xff]
                  %7922 = vst [vmem:[%s7834 + $0x258] sm:$0xff] %v7921
                  %v7923 = vld [vmem:[%s7833 + $0x160] sm:$0xff]
                  %7924 = vst [vmem:[%s7834 + $0x260] sm:$0xff] %v7923
                  %v7925 = vld [vmem:[%s7833 + $0x168] sm:$0xff]
                  %7926 = vst [vmem:[%s7834 + $0x268] sm:$0xff] %v7925
                  %v7927 = vld [vmem:[%s7833 + $0x170] sm:$0xff]
                  %7928 = vst [vmem:[%s7834 + $0x270] sm:$0xff] %v7927
                  %v7929 = vld [vmem:[%s7833 + $0x178] sm:$0xff]
                  %7930 = vst [vmem:[%s7834 + $0x278] sm:$0xff] %v7929
                  %v7931 = vld [vmem:[%s7833 + $0x180] sm:$0xff]
                  %7932 = vst [vmem:[%s7834 + $0x280] sm:$0xff] %v7931
                  %v7933 = vld [vmem:[%s7833 + $0x188] sm:$0xff]
                  %7934 = vst [vmem:[%s7834 + $0x288] sm:$0xff] %v7933
                  %v7935 = vld [vmem:[%s7833 + $0x190] sm:$0xff]
                  %7936 = vst [vmem:[%s7834 + $0x290] sm:$0xff] %v7935
                  %v7937 = vld [vmem:[%s7833 + $0x198] sm:$0xff]
                  %7938 = vst [vmem:[%s7834 + $0x298] sm:$0xff] %v7937
                  %v7939 = vld [vmem:[%s7833 + $0x1a0] sm:$0xff]
                  %7940 = vst [vmem:[%s7834 + $0x2a0] sm:$0xff] %v7939
                  %v7941 = vld [vmem:[%s7833 + $0x1a8] sm:$0xff]
                  %7942 = vst [vmem:[%s7834 + $0x2a8] sm:$0xff] %v7941
                  %v7943 = vld [vmem:[%s7833 + $0x1b0] sm:$0xff]
                  %7944 = vst [vmem:[%s7834 + $0x2b0] sm:$0xff] %v7943
                  %v7945 = vld [vmem:[%s7833 + $0x1b8] sm:$0xff]
                  %7946 = vst [vmem:[%s7834 + $0x2b8] sm:$0xff] %v7945
                  %v7947 = vld [vmem:[%s7833 + $0x1c0] sm:$0xff]
                  %7948 = vst [vmem:[%s7834 + $0x2c0] sm:$0xff] %v7947
                  %v7949 = vld [vmem:[%s7833 + $0x1c8] sm:$0xff]
                  %7950 = vst [vmem:[%s7834 + $0x2c8] sm:$0xff] %v7949
                  %v7951 = vld [vmem:[%s7833 + $0x1d0] sm:$0xff]
                  %7952 = vst [vmem:[%s7834 + $0x2d0] sm:$0xff] %v7951
                  %v7953 = vld [vmem:[%s7833 + $0x1d8] sm:$0xff]
                  %7954 = vst [vmem:[%s7834 + $0x2d8] sm:$0xff] %v7953
                  %v7955 = vld [vmem:[%s7833 + $0x1e0] sm:$0xff]
                  %7956 = vst [vmem:[%s7834 + $0x2e0] sm:$0xff] %v7955
                  %v7957 = vld [vmem:[%s7833 + $0x1e8] sm:$0xff]
                  %7958 = vst [vmem:[%s7834 + $0x2e8] sm:$0xff] %v7957
                  %v7959 = vld [vmem:[%s7833 + $0x1f0] sm:$0xff]
                  %7960 = vst [vmem:[%s7834 + $0x2f0] sm:$0xff] %v7959
                  %v7961 = vld [vmem:[%s7833 + $0x1f8] sm:$0xff]
                  %7962 = vst [vmem:[%s7834 + $0x2f8] sm:$0xff] %v7961
                  %v7963 = vld [vmem:[%s7833 + $0x200] sm:$0xff]
                  %7964 = vst [vmem:[%s7834 + $0x400] sm:$0xff] %v7963
                  %v7965 = vld [vmem:[%s7833 + $0x208] sm:$0xff]
                  %7966 = vst [vmem:[%s7834 + $0x408] sm:$0xff] %v7965
                  %v7967 = vld [vmem:[%s7833 + $0x210] sm:$0xff]
                  %7968 = vst [vmem:[%s7834 + $0x410] sm:$0xff] %v7967
                  %v7969 = vld [vmem:[%s7833 + $0x218] sm:$0xff]
                  %7970 = vst [vmem:[%s7834 + $0x418] sm:$0xff] %v7969
                  %v7971 = vld [vmem:[%s7833 + $0x220] sm:$0xff]
                  %7972 = vst [vmem:[%s7834 + $0x420] sm:$0xff] %v7971
                  %v7973 = vld [vmem:[%s7833 + $0x228] sm:$0xff]
                  %7974 = vst [vmem:[%s7834 + $0x428] sm:$0xff] %v7973
                  %v7975 = vld [vmem:[%s7833 + $0x230] sm:$0xff]
                  %7976 = vst [vmem:[%s7834 + $0x430] sm:$0xff] %v7975
                  %v7977 = vld [vmem:[%s7833 + $0x238] sm:$0xff]
                  %7978 = vst [vmem:[%s7834 + $0x438] sm:$0xff] %v7977
                  %v7979 = vld [vmem:[%s7833 + $0x240] sm:$0xff]
                  %7980 = vst [vmem:[%s7834 + $0x440] sm:$0xff] %v7979
                  %v7981 = vld [vmem:[%s7833 + $0x248] sm:$0xff]
                  %7982 = vst [vmem:[%s7834 + $0x448] sm:$0xff] %v7981
                  %v7983 = vld [vmem:[%s7833 + $0x250] sm:$0xff]
                  %7984 = vst [vmem:[%s7834 + $0x450] sm:$0xff] %v7983
                  %v7985 = vld [vmem:[%s7833 + $0x258] sm:$0xff]
                  %7986 = vst [vmem:[%s7834 + $0x458] sm:$0xff] %v7985
                  %v7987 = vld [vmem:[%s7833 + $0x260] sm:$0xff]
                  %7988 = vst [vmem:[%s7834 + $0x460] sm:$0xff] %v7987
                  %v7989 = vld [vmem:[%s7833 + $0x268] sm:$0xff]
                  %7990 = vst [vmem:[%s7834 + $0x468] sm:$0xff] %v7989
                  %v7991 = vld [vmem:[%s7833 + $0x270] sm:$0xff]
                  %7992 = vst [vmem:[%s7834 + $0x470] sm:$0xff] %v7991
                  %v7993 = vld [vmem:[%s7833 + $0x278] sm:$0xff]
                  %7994 = vst [vmem:[%s7834 + $0x478] sm:$0xff] %v7993
                  %v7995 = vld [vmem:[%s7833 + $0x280] sm:$0xff]
                  %7996 = vst [vmem:[%s7834 + $0x480] sm:$0xff] %v7995
                  %v7997 = vld [vmem:[%s7833 + $0x288] sm:$0xff]
                  %7998 = vst [vmem:[%s7834 + $0x488] sm:$0xff] %v7997
                  %v7999 = vld [vmem:[%s7833 + $0x290] sm:$0xff]
                  %8000 = vst [vmem:[%s7834 + $0x490] sm:$0xff] %v7999
                  %v8001 = vld [vmem:[%s7833 + $0x298] sm:$0xff]
                  %8002 = vst [vmem:[%s7834 + $0x498] sm:$0xff] %v8001
                  %v8003 = vld [vmem:[%s7833 + $0x2a0] sm:$0xff]
                  %8004 = vst [vmem:[%s7834 + $0x4a0] sm:$0xff] %v8003
                  %v8005 = vld [vmem:[%s7833 + $0x2a8] sm:$0xff]
                  %8006 = vst [vmem:[%s7834 + $0x4a8] sm:$0xff] %v8005
                  %v8007 = vld [vmem:[%s7833 + $0x2b0] sm:$0xff]
                  %8008 = vst [vmem:[%s7834 + $0x4b0] sm:$0xff] %v8007
                  %v8009 = vld [vmem:[%s7833 + $0x2b8] sm:$0xff]
                  %8010 = vst [vmem:[%s7834 + $0x4b8] sm:$0xff] %v8009
                  %v8011 = vld [vmem:[%s7833 + $0x2c0] sm:$0xff]
                  %8012 = vst [vmem:[%s7834 + $0x4c0] sm:$0xff] %v8011
                  %v8013 = vld [vmem:[%s7833 + $0x2c8] sm:$0xff]
                  %8014 = vst [vmem:[%s7834 + $0x4c8] sm:$0xff] %v8013
                  %v8015 = vld [vmem:[%s7833 + $0x2d0] sm:$0xff]
                  %8016 = vst [vmem:[%s7834 + $0x4d0] sm:$0xff] %v8015
                  %v8017 = vld [vmem:[%s7833 + $0x2d8] sm:$0xff]
                  %8018 = vst [vmem:[%s7834 + $0x4d8] sm:$0xff] %v8017
                  %v8019 = vld [vmem:[%s7833 + $0x2e0] sm:$0xff]
                  %8020 = vst [vmem:[%s7834 + $0x4e0] sm:$0xff] %v8019
                  %v8021 = vld [vmem:[%s7833 + $0x2e8] sm:$0xff]
                  %8022 = vst [vmem:[%s7834 + $0x4e8] sm:$0xff] %v8021
                  %v8023 = vld [vmem:[%s7833 + $0x2f0] sm:$0xff]
                  %8024 = vst [vmem:[%s7834 + $0x4f0] sm:$0xff] %v8023
                  %v8025 = vld [vmem:[%s7833 + $0x2f8] sm:$0xff]
                  %8026 = vst [vmem:[%s7834 + $0x4f8] sm:$0xff] %v8025
                  %v8027 = vld [vmem:[%s7833 + $0x300] sm:$0xff]
                  %8028 = vst [vmem:[%s7834 + $0x600] sm:$0xff] %v8027
                  %v8029 = vld [vmem:[%s7833 + $0x308] sm:$0xff]
                  %8030 = vst [vmem:[%s7834 + $0x608] sm:$0xff] %v8029
                  %v8031 = vld [vmem:[%s7833 + $0x310] sm:$0xff]
                  %8032 = vst [vmem:[%s7834 + $0x610] sm:$0xff] %v8031
                  %v8033 = vld [vmem:[%s7833 + $0x318] sm:$0xff]
                  %8034 = vst [vmem:[%s7834 + $0x618] sm:$0xff] %v8033
                  %v8035 = vld [vmem:[%s7833 + $0x320] sm:$0xff]
                  %8036 = vst [vmem:[%s7834 + $0x620] sm:$0xff] %v8035
                  %v8037 = vld [vmem:[%s7833 + $0x328] sm:$0xff]
                  %8038 = vst [vmem:[%s7834 + $0x628] sm:$0xff] %v8037
                  %v8039 = vld [vmem:[%s7833 + $0x330] sm:$0xff]
                  %8040 = vst [vmem:[%s7834 + $0x630] sm:$0xff] %v8039
                  %v8041 = vld [vmem:[%s7833 + $0x338] sm:$0xff]
                  %8042 = vst [vmem:[%s7834 + $0x638] sm:$0xff] %v8041
                  %v8043 = vld [vmem:[%s7833 + $0x340] sm:$0xff]
                  %8044 = vst [vmem:[%s7834 + $0x640] sm:$0xff] %v8043
                  %v8045 = vld [vmem:[%s7833 + $0x348] sm:$0xff]
                  %8046 = vst [vmem:[%s7834 + $0x648] sm:$0xff] %v8045
                  %v8047 = vld [vmem:[%s7833 + $0x350] sm:$0xff]
                  %8048 = vst [vmem:[%s7834 + $0x650] sm:$0xff] %v8047
                  %v8049 = vld [vmem:[%s7833 + $0x358] sm:$0xff]
                  %8050 = vst [vmem:[%s7834 + $0x658] sm:$0xff] %v8049
                  %v8051 = vld [vmem:[%s7833 + $0x360] sm:$0xff]
                  %8052 = vst [vmem:[%s7834 + $0x660] sm:$0xff] %v8051
                  %v8053 = vld [vmem:[%s7833 + $0x368] sm:$0xff]
                  %8054 = vst [vmem:[%s7834 + $0x668] sm:$0xff] %v8053
                  %v8055 = vld [vmem:[%s7833 + $0x370] sm:$0xff]
                  %8056 = vst [vmem:[%s7834 + $0x670] sm:$0xff] %v8055
                  %v8057 = vld [vmem:[%s7833 + $0x378] sm:$0xff]
                  %8058 = vst [vmem:[%s7834 + $0x678] sm:$0xff] %v8057
                  %v8059 = vld [vmem:[%s7833 + $0x380] sm:$0xff]
                  %8060 = vst [vmem:[%s7834 + $0x680] sm:$0xff] %v8059
                  %v8061 = vld [vmem:[%s7833 + $0x388] sm:$0xff]
                  %8062 = vst [vmem:[%s7834 + $0x688] sm:$0xff] %v8061
                  %v8063 = vld [vmem:[%s7833 + $0x390] sm:$0xff]
                  %8064 = vst [vmem:[%s7834 + $0x690] sm:$0xff] %v8063
                  %v8065 = vld [vmem:[%s7833 + $0x398] sm:$0xff]
                  %8066 = vst [vmem:[%s7834 + $0x698] sm:$0xff] %v8065
                  %v8067 = vld [vmem:[%s7833 + $0x3a0] sm:$0xff]
                  %8068 = vst [vmem:[%s7834 + $0x6a0] sm:$0xff] %v8067
                  %v8069 = vld [vmem:[%s7833 + $0x3a8] sm:$0xff]
                  %8070 = vst [vmem:[%s7834 + $0x6a8] sm:$0xff] %v8069
                  %v8071 = vld [vmem:[%s7833 + $0x3b0] sm:$0xff]
                  %8072 = vst [vmem:[%s7834 + $0x6b0] sm:$0xff] %v8071
                  %v8073 = vld [vmem:[%s7833 + $0x3b8] sm:$0xff]
                  %8074 = vst [vmem:[%s7834 + $0x6b8] sm:$0xff] %v8073
                  %v8075 = vld [vmem:[%s7833 + $0x3c0] sm:$0xff]
                  %8076 = vst [vmem:[%s7834 + $0x6c0] sm:$0xff] %v8075
                  %v8077 = vld [vmem:[%s7833 + $0x3c8] sm:$0xff]
                  %8078 = vst [vmem:[%s7834 + $0x6c8] sm:$0xff] %v8077
                  %v8079 = vld [vmem:[%s7833 + $0x3d0] sm:$0xff]
                  %8080 = vst [vmem:[%s7834 + $0x6d0] sm:$0xff] %v8079
                  %v8081 = vld [vmem:[%s7833 + $0x3d8] sm:$0xff]
                  %8082 = vst [vmem:[%s7834 + $0x6d8] sm:$0xff] %v8081
                  %v8083 = vld [vmem:[%s7833 + $0x3e0] sm:$0xff]
                  %8084 = vst [vmem:[%s7834 + $0x6e0] sm:$0xff] %v8083
                  %v8085 = vld [vmem:[%s7833 + $0x3e8] sm:$0xff]
                  %8086 = vst [vmem:[%s7834 + $0x6e8] sm:$0xff] %v8085
                  %v8087 = vld [vmem:[%s7833 + $0x3f0] sm:$0xff]
                  %8088 = vst [vmem:[%s7834 + $0x6f0] sm:$0xff] %v8087
                  %v8089 = vld [vmem:[%s7833 + $0x3f8] sm:$0xff]
                  %8090 = vst [vmem:[%s7834 + $0x6f8] sm:$0xff] %v8089
                $region64: #{tpu_custom_call.1} parent=58 // loop_footer
                  %s7832 = sadd.s32 1, %s7828
                $region65: #{tpu_custom_call.1} parent=58 // loop_footer_branch
                  %7827 = sbr.rel target = $region61
                $region66: #{tpu_custom_call.1} parent=58 // loop_exit
                  _
              $region59: #{tpu_custom_call.1} parent=43 // pred_fallthru
                _
              // Predicated region
              $region67: #{tpu_custom_call.1} parent=43 // pred_check
                _
              $region68: #{tpu_custom_call.1} parent=43 // pred_check_branch
                %8092 = sbr.rel target = $region70
              $region69: #{tpu_custom_call.1} parent=43 // pred_region
                _
              $region70: #{tpu_custom_call.1} parent=43 // pred_fallthru
                _
            $region44: #{tpu_custom_call.1} parent=39 // pred_fallthru
              _
            // Predicated region
            $region45: #{tpu_custom_call.1} parent=39 // pred_check
              _
            $region46: #{tpu_custom_call.1} parent=39 // pred_check_branch
              %7558 = sbr.rel target = $region48
            $region47: #{tpu_custom_call.1} parent=39 // pred_region
              %s7560 = ssub.s32 256, 1
              loop: start=0, step=1, limit=1
              $region49: #{tpu_custom_call.1} parent=47 // loop_pre_header
                _
              $region50: #{tpu_custom_call.1} parent=47 // loop_header
                %s7562 = sphi 0, %s7566
                %p7563 = scmp.ge.s32.totalorder %s7562, 1
                %s7567 = sphi %s7546, %s7546
                %s7568 = sphi %s7552, %s7552
              $region51: #{tpu_custom_call.1} parent=47 // loop_header_branch
                %7565 = sbr.rel (%p7563) target = $region55
              $region52: #{tpu_custom_call.1} parent=47 // loop_body
                %v7569 = vld [vmem:[%s7567] sm:%s7560]
                %7570 = vst [vmem:[%s7568] sm:%s7560] %v7569
                %v7571 = vld [vmem:[%s7567 + $0x8] sm:%s7560]
                %7572 = vst [vmem:[%s7568 + $0x8] sm:%s7560] %v7571
                %v7573 = vld [vmem:[%s7567 + $0x10] sm:%s7560]
                %7574 = vst [vmem:[%s7568 + $0x10] sm:%s7560] %v7573
                %v7575 = vld [vmem:[%s7567 + $0x18] sm:%s7560]
                %7576 = vst [vmem:[%s7568 + $0x18] sm:%s7560] %v7575
                %v7577 = vld [vmem:[%s7567 + $0x20] sm:%s7560]
                %7578 = vst [vmem:[%s7568 + $0x20] sm:%s7560] %v7577
                %v7579 = vld [vmem:[%s7567 + $0x28] sm:%s7560]
                %7580 = vst [vmem:[%s7568 + $0x28] sm:%s7560] %v7579
                %v7581 = vld [vmem:[%s7567 + $0x30] sm:%s7560]
                %7582 = vst [vmem:[%s7568 + $0x30] sm:%s7560] %v7581
                %v7583 = vld [vmem:[%s7567 + $0x38] sm:%s7560]
                %7584 = vst [vmem:[%s7568 + $0x38] sm:%s7560] %v7583
                %v7585 = vld [vmem:[%s7567 + $0x40] sm:%s7560]
                %7586 = vst [vmem:[%s7568 + $0x40] sm:%s7560] %v7585
                %v7587 = vld [vmem:[%s7567 + $0x48] sm:%s7560]
                %7588 = vst [vmem:[%s7568 + $0x48] sm:%s7560] %v7587
                %v7589 = vld [vmem:[%s7567 + $0x50] sm:%s7560]
                %7590 = vst [vmem:[%s7568 + $0x50] sm:%s7560] %v7589
                %v7591 = vld [vmem:[%s7567 + $0x58] sm:%s7560]
                %7592 = vst [vmem:[%s7568 + $0x58] sm:%s7560] %v7591
                %v7593 = vld [vmem:[%s7567 + $0x60] sm:%s7560]
                %7594 = vst [vmem:[%s7568 + $0x60] sm:%s7560] %v7593
                %v7595 = vld [vmem:[%s7567 + $0x68] sm:%s7560]
                %7596 = vst [vmem:[%s7568 + $0x68] sm:%s7560] %v7595
                %v7597 = vld [vmem:[%s7567 + $0x70] sm:%s7560]
                %7598 = vst [vmem:[%s7568 + $0x70] sm:%s7560] %v7597
                %v7599 = vld [vmem:[%s7567 + $0x78] sm:%s7560]
                %7600 = vst [vmem:[%s7568 + $0x78] sm:%s7560] %v7599
                %v7601 = vld [vmem:[%s7567 + $0x80] sm:%s7560]
                %7602 = vst [vmem:[%s7568 + $0x80] sm:%s7560] %v7601
                %v7603 = vld [vmem:[%s7567 + $0x88] sm:%s7560]
                %7604 = vst [vmem:[%s7568 + $0x88] sm:%s7560] %v7603
                %v7605 = vld [vmem:[%s7567 + $0x90] sm:%s7560]
                %7606 = vst [vmem:[%s7568 + $0x90] sm:%s7560] %v7605
                %v7607 = vld [vmem:[%s7567 + $0x98] sm:%s7560]
                %7608 = vst [vmem:[%s7568 + $0x98] sm:%s7560] %v7607
                %v7609 = vld [vmem:[%s7567 + $0xa0] sm:%s7560]
                %7610 = vst [vmem:[%s7568 + $0xa0] sm:%s7560] %v7609
                %v7611 = vld [vmem:[%s7567 + $0xa8] sm:%s7560]
                %7612 = vst [vmem:[%s7568 + $0xa8] sm:%s7560] %v7611
                %v7613 = vld [vmem:[%s7567 + $0xb0] sm:%s7560]
                %7614 = vst [vmem:[%s7568 + $0xb0] sm:%s7560] %v7613
                %v7615 = vld [vmem:[%s7567 + $0xb8] sm:%s7560]
                %7616 = vst [vmem:[%s7568 + $0xb8] sm:%s7560] %v7615
                %v7617 = vld [vmem:[%s7567 + $0xc0] sm:%s7560]
                %7618 = vst [vmem:[%s7568 + $0xc0] sm:%s7560] %v7617
                %v7619 = vld [vmem:[%s7567 + $0xc8] sm:%s7560]
                %7620 = vst [vmem:[%s7568 + $0xc8] sm:%s7560] %v7619
                %v7621 = vld [vmem:[%s7567 + $0xd0] sm:%s7560]
                %7622 = vst [vmem:[%s7568 + $0xd0] sm:%s7560] %v7621
                %v7623 = vld [vmem:[%s7567 + $0xd8] sm:%s7560]
                %7624 = vst [vmem:[%s7568 + $0xd8] sm:%s7560] %v7623
                %v7625 = vld [vmem:[%s7567 + $0xe0] sm:%s7560]
                %7626 = vst [vmem:[%s7568 + $0xe0] sm:%s7560] %v7625
                %v7627 = vld [vmem:[%s7567 + $0xe8] sm:%s7560]
                %7628 = vst [vmem:[%s7568 + $0xe8] sm:%s7560] %v7627
                %v7629 = vld [vmem:[%s7567 + $0xf0] sm:%s7560]
                %7630 = vst [vmem:[%s7568 + $0xf0] sm:%s7560] %v7629
                %v7631 = vld [vmem:[%s7567 + $0xf8] sm:%s7560]
                %7632 = vst [vmem:[%s7568 + $0xf8] sm:%s7560] %v7631
                %v7633 = vld [vmem:[%s7567 + $0x100] sm:%s7560]
                %7634 = vst [vmem:[%s7568 + $0x200] sm:%s7560] %v7633
                %v7635 = vld [vmem:[%s7567 + $0x108] sm:%s7560]
                %7636 = vst [vmem:[%s7568 + $0x208] sm:%s7560] %v7635
                %v7637 = vld [vmem:[%s7567 + $0x110] sm:%s7560]
                %7638 = vst [vmem:[%s7568 + $0x210] sm:%s7560] %v7637
                %v7639 = vld [vmem:[%s7567 + $0x118] sm:%s7560]
                %7640 = vst [vmem:[%s7568 + $0x218] sm:%s7560] %v7639
                %v7641 = vld [vmem:[%s7567 + $0x120] sm:%s7560]
                %7642 = vst [vmem:[%s7568 + $0x220] sm:%s7560] %v7641
                %v7643 = vld [vmem:[%s7567 + $0x128] sm:%s7560]
                %7644 = vst [vmem:[%s7568 + $0x228] sm:%s7560] %v7643
                %v7645 = vld [vmem:[%s7567 + $0x130] sm:%s7560]
                %7646 = vst [vmem:[%s7568 + $0x230] sm:%s7560] %v7645
                %v7647 = vld [vmem:[%s7567 + $0x138] sm:%s7560]
                %7648 = vst [vmem:[%s7568 + $0x238] sm:%s7560] %v7647
                %v7649 = vld [vmem:[%s7567 + $0x140] sm:%s7560]
                %7650 = vst [vmem:[%s7568 + $0x240] sm:%s7560] %v7649
                %v7651 = vld [vmem:[%s7567 + $0x148] sm:%s7560]
                %7652 = vst [vmem:[%s7568 + $0x248] sm:%s7560] %v7651
                %v7653 = vld [vmem:[%s7567 + $0x150] sm:%s7560]
                %7654 = vst [vmem:[%s7568 + $0x250] sm:%s7560] %v7653
                %v7655 = vld [vmem:[%s7567 + $0x158] sm:%s7560]
                %7656 = vst [vmem:[%s7568 + $0x258] sm:%s7560] %v7655
                %v7657 = vld [vmem:[%s7567 + $0x160] sm:%s7560]
                %7658 = vst [vmem:[%s7568 + $0x260] sm:%s7560] %v7657
                %v7659 = vld [vmem:[%s7567 + $0x168] sm:%s7560]
                %7660 = vst [vmem:[%s7568 + $0x268] sm:%s7560] %v7659
                %v7661 = vld [vmem:[%s7567 + $0x170] sm:%s7560]
                %7662 = vst [vmem:[%s7568 + $0x270] sm:%s7560] %v7661
                %v7663 = vld [vmem:[%s7567 + $0x178] sm:%s7560]
                %7664 = vst [vmem:[%s7568 + $0x278] sm:%s7560] %v7663
                %v7665 = vld [vmem:[%s7567 + $0x180] sm:%s7560]
                %7666 = vst [vmem:[%s7568 + $0x280] sm:%s7560] %v7665
                %v7667 = vld [vmem:[%s7567 + $0x188] sm:%s7560]
                %7668 = vst [vmem:[%s7568 + $0x288] sm:%s7560] %v7667
                %v7669 = vld [vmem:[%s7567 + $0x190] sm:%s7560]
                %7670 = vst [vmem:[%s7568 + $0x290] sm:%s7560] %v7669
                %v7671 = vld [vmem:[%s7567 + $0x198] sm:%s7560]
                %7672 = vst [vmem:[%s7568 + $0x298] sm:%s7560] %v7671
                %v7673 = vld [vmem:[%s7567 + $0x1a0] sm:%s7560]
                %7674 = vst [vmem:[%s7568 + $0x2a0] sm:%s7560] %v7673
                %v7675 = vld [vmem:[%s7567 + $0x1a8] sm:%s7560]
                %7676 = vst [vmem:[%s7568 + $0x2a8] sm:%s7560] %v7675
                %v7677 = vld [vmem:[%s7567 + $0x1b0] sm:%s7560]
                %7678 = vst [vmem:[%s7568 + $0x2b0] sm:%s7560] %v7677
                %v7679 = vld [vmem:[%s7567 + $0x1b8] sm:%s7560]
                %7680 = vst [vmem:[%s7568 + $0x2b8] sm:%s7560] %v7679
                %v7681 = vld [vmem:[%s7567 + $0x1c0] sm:%s7560]
                %7682 = vst [vmem:[%s7568 + $0x2c0] sm:%s7560] %v7681
                %v7683 = vld [vmem:[%s7567 + $0x1c8] sm:%s7560]
                %7684 = vst [vmem:[%s7568 + $0x2c8] sm:%s7560] %v7683
                %v7685 = vld [vmem:[%s7567 + $0x1d0] sm:%s7560]
                %7686 = vst [vmem:[%s7568 + $0x2d0] sm:%s7560] %v7685
                %v7687 = vld [vmem:[%s7567 + $0x1d8] sm:%s7560]
                %7688 = vst [vmem:[%s7568 + $0x2d8] sm:%s7560] %v7687
                %v7689 = vld [vmem:[%s7567 + $0x1e0] sm:%s7560]
                %7690 = vst [vmem:[%s7568 + $0x2e0] sm:%s7560] %v7689
                %v7691 = vld [vmem:[%s7567 + $0x1e8] sm:%s7560]
                %7692 = vst [vmem:[%s7568 + $0x2e8] sm:%s7560] %v7691
                %v7693 = vld [vmem:[%s7567 + $0x1f0] sm:%s7560]
                %7694 = vst [vmem:[%s7568 + $0x2f0] sm:%s7560] %v7693
                %v7695 = vld [vmem:[%s7567 + $0x1f8] sm:%s7560]
                %7696 = vst [vmem:[%s7568 + $0x2f8] sm:%s7560] %v7695
                %v7697 = vld [vmem:[%s7567 + $0x200] sm:%s7560]
                %7698 = vst [vmem:[%s7568 + $0x400] sm:%s7560] %v7697
                %v7699 = vld [vmem:[%s7567 + $0x208] sm:%s7560]
                %7700 = vst [vmem:[%s7568 + $0x408] sm:%s7560] %v7699
                %v7701 = vld [vmem:[%s7567 + $0x210] sm:%s7560]
                %7702 = vst [vmem:[%s7568 + $0x410] sm:%s7560] %v7701
                %v7703 = vld [vmem:[%s7567 + $0x218] sm:%s7560]
                %7704 = vst [vmem:[%s7568 + $0x418] sm:%s7560] %v7703
                %v7705 = vld [vmem:[%s7567 + $0x220] sm:%s7560]
                %7706 = vst [vmem:[%s7568 + $0x420] sm:%s7560] %v7705
                %v7707 = vld [vmem:[%s7567 + $0x228] sm:%s7560]
                %7708 = vst [vmem:[%s7568 + $0x428] sm:%s7560] %v7707
                %v7709 = vld [vmem:[%s7567 + $0x230] sm:%s7560]
                %7710 = vst [vmem:[%s7568 + $0x430] sm:%s7560] %v7709
                %v7711 = vld [vmem:[%s7567 + $0x238] sm:%s7560]
                %7712 = vst [vmem:[%s7568 + $0x438] sm:%s7560] %v7711
                %v7713 = vld [vmem:[%s7567 + $0x240] sm:%s7560]
                %7714 = vst [vmem:[%s7568 + $0x440] sm:%s7560] %v7713
                %v7715 = vld [vmem:[%s7567 + $0x248] sm:%s7560]
                %7716 = vst [vmem:[%s7568 + $0x448] sm:%s7560] %v7715
                %v7717 = vld [vmem:[%s7567 + $0x250] sm:%s7560]
                %7718 = vst [vmem:[%s7568 + $0x450] sm:%s7560] %v7717
                %v7719 = vld [vmem:[%s7567 + $0x258] sm:%s7560]
                %7720 = vst [vmem:[%s7568 + $0x458] sm:%s7560] %v7719
                %v7721 = vld [vmem:[%s7567 + $0x260] sm:%s7560]
                %7722 = vst [vmem:[%s7568 + $0x460] sm:%s7560] %v7721
                %v7723 = vld [vmem:[%s7567 + $0x268] sm:%s7560]
                %7724 = vst [vmem:[%s7568 + $0x468] sm:%s7560] %v7723
                %v7725 = vld [vmem:[%s7567 + $0x270] sm:%s7560]
                %7726 = vst [vmem:[%s7568 + $0x470] sm:%s7560] %v7725
                %v7727 = vld [vmem:[%s7567 + $0x278] sm:%s7560]
                %7728 = vst [vmem:[%s7568 + $0x478] sm:%s7560] %v7727
                %v7729 = vld [vmem:[%s7567 + $0x280] sm:%s7560]
                %7730 = vst [vmem:[%s7568 + $0x480] sm:%s7560] %v7729
                %v7731 = vld [vmem:[%s7567 + $0x288] sm:%s7560]
                %7732 = vst [vmem:[%s7568 + $0x488] sm:%s7560] %v7731
                %v7733 = vld [vmem:[%s7567 + $0x290] sm:%s7560]
                %7734 = vst [vmem:[%s7568 + $0x490] sm:%s7560] %v7733
                %v7735 = vld [vmem:[%s7567 + $0x298] sm:%s7560]
                %7736 = vst [vmem:[%s7568 + $0x498] sm:%s7560] %v7735
                %v7737 = vld [vmem:[%s7567 + $0x2a0] sm:%s7560]
                %7738 = vst [vmem:[%s7568 + $0x4a0] sm:%s7560] %v7737
                %v7739 = vld [vmem:[%s7567 + $0x2a8] sm:%s7560]
                %7740 = vst [vmem:[%s7568 + $0x4a8] sm:%s7560] %v7739
                %v7741 = vld [vmem:[%s7567 + $0x2b0] sm:%s7560]
                %7742 = vst [vmem:[%s7568 + $0x4b0] sm:%s7560] %v7741
                %v7743 = vld [vmem:[%s7567 + $0x2b8] sm:%s7560]
                %7744 = vst [vmem:[%s7568 + $0x4b8] sm:%s7560] %v7743
                %v7745 = vld [vmem:[%s7567 + $0x2c0] sm:%s7560]
                %7746 = vst [vmem:[%s7568 + $0x4c0] sm:%s7560] %v7745
                %v7747 = vld [vmem:[%s7567 + $0x2c8] sm:%s7560]
                %7748 = vst [vmem:[%s7568 + $0x4c8] sm:%s7560] %v7747
                %v7749 = vld [vmem:[%s7567 + $0x2d0] sm:%s7560]
                %7750 = vst [vmem:[%s7568 + $0x4d0] sm:%s7560] %v7749
                %v7751 = vld [vmem:[%s7567 + $0x2d8] sm:%s7560]
                %7752 = vst [vmem:[%s7568 + $0x4d8] sm:%s7560] %v7751
                %v7753 = vld [vmem:[%s7567 + $0x2e0] sm:%s7560]
                %7754 = vst [vmem:[%s7568 + $0x4e0] sm:%s7560] %v7753
                %v7755 = vld [vmem:[%s7567 + $0x2e8] sm:%s7560]
                %7756 = vst [vmem:[%s7568 + $0x4e8] sm:%s7560] %v7755
                %v7757 = vld [vmem:[%s7567 + $0x2f0] sm:%s7560]
                %7758 = vst [vmem:[%s7568 + $0x4f0] sm:%s7560] %v7757
                %v7759 = vld [vmem:[%s7567 + $0x2f8] sm:%s7560]
                %7760 = vst [vmem:[%s7568 + $0x4f8] sm:%s7560] %v7759
                %v7761 = vld [vmem:[%s7567 + $0x300] sm:%s7560]
                %7762 = vst [vmem:[%s7568 + $0x600] sm:%s7560] %v7761
                %v7763 = vld [vmem:[%s7567 + $0x308] sm:%s7560]
                %7764 = vst [vmem:[%s7568 + $0x608] sm:%s7560] %v7763
                %v7765 = vld [vmem:[%s7567 + $0x310] sm:%s7560]
                %7766 = vst [vmem:[%s7568 + $0x610] sm:%s7560] %v7765
                %v7767 = vld [vmem:[%s7567 + $0x318] sm:%s7560]
                %7768 = vst [vmem:[%s7568 + $0x618] sm:%s7560] %v7767
                %v7769 = vld [vmem:[%s7567 + $0x320] sm:%s7560]
                %7770 = vst [vmem:[%s7568 + $0x620] sm:%s7560] %v7769
                %v7771 = vld [vmem:[%s7567 + $0x328] sm:%s7560]
                %7772 = vst [vmem:[%s7568 + $0x628] sm:%s7560] %v7771
                %v7773 = vld [vmem:[%s7567 + $0x330] sm:%s7560]
                %7774 = vst [vmem:[%s7568 + $0x630] sm:%s7560] %v7773
                %v7775 = vld [vmem:[%s7567 + $0x338] sm:%s7560]
                %7776 = vst [vmem:[%s7568 + $0x638] sm:%s7560] %v7775
                %v7777 = vld [vmem:[%s7567 + $0x340] sm:%s7560]
                %7778 = vst [vmem:[%s7568 + $0x640] sm:%s7560] %v7777
                %v7779 = vld [vmem:[%s7567 + $0x348] sm:%s7560]
                %7780 = vst [vmem:[%s7568 + $0x648] sm:%s7560] %v7779
                %v7781 = vld [vmem:[%s7567 + $0x350] sm:%s7560]
                %7782 = vst [vmem:[%s7568 + $0x650] sm:%s7560] %v7781
                %v7783 = vld [vmem:[%s7567 + $0x358] sm:%s7560]
                %7784 = vst [vmem:[%s7568 + $0x658] sm:%s7560] %v7783
                %v7785 = vld [vmem:[%s7567 + $0x360] sm:%s7560]
                %7786 = vst [vmem:[%s7568 + $0x660] sm:%s7560] %v7785
                %v7787 = vld [vmem:[%s7567 + $0x368] sm:%s7560]
                %7788 = vst [vmem:[%s7568 + $0x668] sm:%s7560] %v7787
                %v7789 = vld [vmem:[%s7567 + $0x370] sm:%s7560]
                %7790 = vst [vmem:[%s7568 + $0x670] sm:%s7560] %v7789
                %v7791 = vld [vmem:[%s7567 + $0x378] sm:%s7560]
                %7792 = vst [vmem:[%s7568 + $0x678] sm:%s7560] %v7791
                %v7793 = vld [vmem:[%s7567 + $0x380] sm:%s7560]
                %7794 = vst [vmem:[%s7568 + $0x680] sm:%s7560] %v7793
                %v7795 = vld [vmem:[%s7567 + $0x388] sm:%s7560]
                %7796 = vst [vmem:[%s7568 + $0x688] sm:%s7560] %v7795
                %v7797 = vld [vmem:[%s7567 + $0x390] sm:%s7560]
                %7798 = vst [vmem:[%s7568 + $0x690] sm:%s7560] %v7797
                %v7799 = vld [vmem:[%s7567 + $0x398] sm:%s7560]
                %7800 = vst [vmem:[%s7568 + $0x698] sm:%s7560] %v7799
                %v7801 = vld [vmem:[%s7567 + $0x3a0] sm:%s7560]
                %7802 = vst [vmem:[%s7568 + $0x6a0] sm:%s7560] %v7801
                %v7803 = vld [vmem:[%s7567 + $0x3a8] sm:%s7560]
                %7804 = vst [vmem:[%s7568 + $0x6a8] sm:%s7560] %v7803
                %v7805 = vld [vmem:[%s7567 + $0x3b0] sm:%s7560]
                %7806 = vst [vmem:[%s7568 + $0x6b0] sm:%s7560] %v7805
                %v7807 = vld [vmem:[%s7567 + $0x3b8] sm:%s7560]
                %7808 = vst [vmem:[%s7568 + $0x6b8] sm:%s7560] %v7807
                %v7809 = vld [vmem:[%s7567 + $0x3c0] sm:%s7560]
                %7810 = vst [vmem:[%s7568 + $0x6c0] sm:%s7560] %v7809
                %v7811 = vld [vmem:[%s7567 + $0x3c8] sm:%s7560]
                %7812 = vst [vmem:[%s7568 + $0x6c8] sm:%s7560] %v7811
                %v7813 = vld [vmem:[%s7567 + $0x3d0] sm:%s7560]
                %7814 = vst [vmem:[%s7568 + $0x6d0] sm:%s7560] %v7813
                %v7815 = vld [vmem:[%s7567 + $0x3d8] sm:%s7560]
                %7816 = vst [vmem:[%s7568 + $0x6d8] sm:%s7560] %v7815
                %v7817 = vld [vmem:[%s7567 + $0x3e0] sm:%s7560]
                %7818 = vst [vmem:[%s7568 + $0x6e0] sm:%s7560] %v7817
                %v7819 = vld [vmem:[%s7567 + $0x3e8] sm:%s7560]
                %7820 = vst [vmem:[%s7568 + $0x6e8] sm:%s7560] %v7819
                %v7821 = vld [vmem:[%s7567 + $0x3f0] sm:%s7560]
                %7822 = vst [vmem:[%s7568 + $0x6f0] sm:%s7560] %v7821
                %v7823 = vld [vmem:[%s7567 + $0x3f8] sm:%s7560]
                %7824 = vst [vmem:[%s7568 + $0x6f8] sm:%s7560] %v7823
              $region53: #{tpu_custom_call.1} parent=47 // loop_footer
                %s7566 = sadd.s32 1, %s7562
              $region54: #{tpu_custom_call.1} parent=47 // loop_footer_branch
                %7561 = sbr.rel target = $region50
              $region55: #{tpu_custom_call.1} parent=47 // loop_exit
                _
            $region48: #{tpu_custom_call.1} parent=39 // pred_fallthru
              _
          $region40: #{tpu_custom_call.1} parent=35 // pred_fallthru
            _
          %8093 = vnop
        $region36: #{tpu_custom_call.1} parent=31 // pred_fallthru
          _
      $region32: #{tpu_custom_call.1} parent=5 // pred_fallthru
        _
      %p8094 = scmp.le.s32.totalorder 2, %s9
      // Predicated region
      $region71: #{tpu_custom_call.1} parent=5 // pred_check
        %p8095 = pneg %p8094
      $region72: #{tpu_custom_call.1} parent=5 // pred_check_branch
        %8097 = sbr.rel (%p8095) target = $region74
      $region73: #{tpu_custom_call.1} parent=5 // pred_region
        %s8098 = ssub.s32 %s9, 2
        // Predicated region
        $region75: #{tpu_custom_call.1} parent=73 // pred_check
          %p8099 = pneg %p106
        $region76: #{tpu_custom_call.1} parent=73 // pred_check_branch
          %8101 = sbr.rel (%p8099) target = $region78
        $region77: #{tpu_custom_call.1} parent=73 // pred_region
          %s8102 = sand.u32 %s91, 1
          %s8103 = sand.u32 %s91, 1
          %s8104 = smul.addr %s8103, 1024
          %s8105 = scalar_lea.vmem [#allocation2], %s8104
        $region78: #{tpu_custom_call.1} parent=73 // pred_fallthru
          _
      $region74: #{tpu_custom_call.1} parent=5 // pred_fallthru
        _
    $region6: #{tpu_custom_call.1} parent=1 // loop_footer
      %s13 = sadd.s32 1, %s9
    $region7: #{tpu_custom_call.1} parent=1 // loop_footer_branch
      %8 = sbr.rel target = $region3
    $region8: #{tpu_custom_call.1} parent=1 // loop_exit
      _

</llo_original>
